<compile_context>
chip_gen: v7x
topology: tpu7x:2x2x1
jax: 0.10.0
libtpu: 0.0.40
codegen_flags: <defaults>
</compile_context>

<pallas_src>
import functools
import math

import numpy as np
import jax
import jax.numpy as jnp
from jax import lax
from jax.experimental import pallas as pl
from jax.experimental.pallas import tpu as pltpu

T_STEPS = 24  # the reference forward hard-codes `for t in range(24)`


def _pew_lstm_recurrence_kernel(astat_ref, zstat_ref, wt2_ref, wzho_ref, wzht_ref,
                                h_out_ref, c_out_ref, *, hidden):
    """Serial 24-step recurrence, everything resident in VMEM.

    astat_ref: (T, B, H)   static part of the h_o pre-activation
    zstat_ref: (T, B, 4H)  static part of the gate pre-activations (+ biases)
    wt2_ref  : (H, H)      2 * w_t^T        (recurrent h_t -> h_o)
    wzho_ref : (H, 4H)     [w_ih^T | w_gh^T | w_fo^T | 0]   (h_o -> gates)
    wzht_ref : (H, 4H)     [0 | 0 | 0 | w_oh^T]             (h_t -> gates)
    h_out_ref: (T, B, H)
    c_out_ref: (T, B, H)
    """
    H = hidden
    T = astat_ref.shape[0]
    B = astat_ref.shape[1]

    # Loop-invariant loads / broadcasts: recurrent weights + gate lane mask.
    wt2 = wt2_ref[...]
    wzho = wzho_ref[...]
    wzht = wzht_ref[...]
    lane = lax.broadcasted_iota(jnp.int32, (B, 4 * H), 1)
    g_mask = (lane >= H) & (lane < 2 * H)          # the tanh (g) gate block

    def step(t, carry):
        h_t, c_t = carry

        # Independent of h_o: can overlap with the h_o chain.
        z_ht = jnp.dot(h_t, wzht, preferred_element_type=jnp.float32)

        pre_ho = astat_ref[t] + jnp.dot(h_t, wt2,
                                        preferred_element_type=jnp.float32)
        h_o = 0.5 * jnp.tanh(0.5 * pre_ho) + 0.5    # sigmoid via tanh (EUP)

        z = zstat_ref[t] + z_ht + jnp.dot(h_o, wzho,
                                          preferred_element_type=jnp.float32)

        # One full-vreg tanh activates all four gates:
        #   sigmoid(x) = 0.5*tanh(0.5*x) + 0.5 for i/f/o, plain tanh for g.
        th = jnp.tanh(jnp.where(g_mask, z, 0.5 * z))
        act = jnp.where(g_mask, th, 0.5 * th + 0.5)

        i = act[:, 0:H]
        g = act[:, H:2 * H]
        f = act[:, 2 * H:3 * H]
        o = act[:, 3 * H:4 * H]

        c_n = f * c_t + i * g
        h_n = o * jnp.tanh(c_n)

        h_out_ref[t] = h_n
        c_out_ref[t] = c_n
        return h_n, c_n

    h0 = jnp.zeros((B, H), jnp.float32)
    c0 = jnp.zeros((B, H), jnp.float32)
    lax.fori_loop(0, T, step, (h0, c0), unroll=True)


def init_params(key, input_size, hidden_size, weather_size):
    """Deterministic uniform(-stdv, stdv) init, mirroring reset_weigths()."""
    stdv = 1.0 / math.sqrt(hidden_size)
    H, I, W = hidden_size, input_size, weather_size
    shapes = dict(
        w_ix=(H, I), w_ih=(H, H), w_ie=(H, H), b_i=(H, 1),
        w_fx=(H, I), w_fo=(H, H), w_fe=(H, H), b_f=(H, 1),
        w_ox=(H, I), w_oh=(H, H), w_oe=(H, H), b_o=(H, 1),
        w_gx=(H, I), w_gh=(H, H), b_g=(H, 1),
        w_d=(H, I), w_w=(H, I), w_m=(H, I),
        w_t=(H, H), w_e=(H, W), b_e=(H, 1),
    )
    params = {}
    for name in sorted(shapes):
        key, sub = jax.random.split(key)
        params[name] = jax.random.uniform(
            sub, shapes[name], jnp.float32, minval=-stdv, maxval=stdv)
    return params


def pew_lstm_forward(params, x_input, x_weather):
    """x_input: (B, S, input_size), x_weather: (B, S, weather_size)."""
    B, S, Din = x_input.shape
    Dw = x_weather.shape[-1]
    H = params["w_ih"].shape[0]
    T = T_STEPS
    assert S >= T, "reference forward indexes t in range(24)"
    f32 = jnp.float32
    p = params

    # --- batch-shifted "history" inputs (zeros where b-k < 0) ----------------
    def shift_batch(a, k):
        if k >= B:
            return jnp.zeros_like(a)
        pad = jnp.zeros((k,) + a.shape[1:], a.dtype)
        return jnp.concatenate([pad, a[:-k]], axis=0)

    x24 = x_input[:, :T, :].astype(f32)        # (B, T, Din)
    wth24 = x_weather[:, :T, :].astype(f32)    # (B, T, Dw)
    hd = shift_batch(x24, 1)
    hw = shift_batch(x24, 7)
    hm = shift_batch(x24, 30)

    # --- static (recurrence-independent) slabs, computed once ----------------
    zHH = jnp.zeros((H, H), f32)

    # e_t = sigmoid(w_e @ weather + b_e)        -> (T, B, H), time-major
    e = jax.nn.sigmoid(
        jnp.einsum("btw,wh->tbh", wth24, p["w_e"].T) + p["b_e"].T)

    # Astat = w_d@h_d + w_w@h_w + w_m@h_m       -> (T, B, H)
    hist = jnp.concatenate([hd, hw, hm], axis=-1)                    # (B,T,3Din)
    W_hist = jnp.concatenate([p["w_d"].T, p["w_w"].T, p["w_m"].T], axis=0)
    astat = jnp.einsum("btk,kh->tbh", hist, W_hist)

    # Zstat = x @ W_Zx + e @ W_Ze + b4          -> (T, B, 4H), gates [i,g,f,o]
    W_Zx = jnp.concatenate(
        [p["w_ix"].T, p["w_gx"].T, p["w_fx"].T, p["w_ox"].T], axis=1)  # (Din,4H)
    W_Ze = jnp.concatenate(
        [p["w_ie"].T, zHH, p["w_fe"].T, p["w_oe"].T], axis=1)          # (H,4H)
    b4 = jnp.concatenate(
        [p["b_i"].T, p["b_g"].T, p["b_f"].T, p["b_o"].T], axis=1)      # (1,4H)
    zstat = (jnp.einsum("btk,kn->tbn", x24, W_Zx)
             + jnp.einsum("tbh,hn->tbn", e, W_Ze)
             + b4)

    # --- recurrent weights (loop-invariant, kept VMEM-resident) --------------
    wt2 = 2.0 * p["w_t"].T                                             # (H, H)
    W_Z_ho = jnp.concatenate(
        [p["w_ih"].T, p["w_gh"].T, p["w_fo"].T, zHH], axis=1)          # (H, 4H)
    W_Z_ht = jnp.concatenate(
        [zHH, zHH, zHH, p["w_oh"].T], axis=1)                          # (H, 4H)

    kernel = functools.partial(_pew_lstm_recurrence_kernel, hidden=H)
    vmem = pl.BlockSpec(memory_space=pltpu.MemorySpace.VMEM)

    h_tm, c_tm = pl.pallas_call(
        kernel,
        out_shape=(jax.ShapeDtypeStruct((T, B, H), f32),
                   jax.ShapeDtypeStruct((T, B, H), f32)),
        in_specs=[vmem, vmem, vmem, vmem, vmem],
        out_specs=(vmem, vmem),
    )(astat, zstat, wt2, W_Z_ho, W_Z_ht)

    # Minimal glue: time-major -> batch-major (tiny 24 KB transposes).
    h24 = jnp.transpose(h_tm, (1, 0, 2))       # (B, T, H)
    c24 = jnp.transpose(c_tm, (1, 0, 2))
    if S == T:
        return h24, c24
    # timesteps >= 24 stay zero, as in the reference
    h_out = jnp.zeros((B, S, H), f32).at[:, :T].set(h24)
    c_out = jnp.zeros((B, S, H), f32).at[:, :T].set(c24)
    return h_out, c_out


def pew_lstm_reference(params, x_input, x_weather):
    """Direct numpy port of the PyTorch forward (for verification)."""
    p = {k: np.asarray(v) for k, v in params.items()}
    x_input = np.asarray(x_input, np.float32)
    x_weather = np.asarray(x_weather, np.float32)
    B, S, Din = x_input.shape
    H = p["w_ih"].shape[0]
    sig = lambda a: 1.0 / (1.0 + np.exp(-a))
    h_out = np.zeros((B, S, H), np.float32)
    c_out = np.zeros((B, S, H), np.float32)
    for b in range(B):
        h_t = np.zeros((H, 1), np.float32)
        c_t = np.zeros((H, 1), np.float32)
        for t in range(24):
            h_d = np.zeros((Din, 1)) if b < 1 else x_input[b - 1, t, :][:, None]
            h_w = np.zeros((Din, 1)) if b < 7 else x_input[b - 7, t, :][:, None]
            h_m = np.zeros((Din, 1)) if b < 30 else x_input[b - 30, t, :][:, None]
            x = x_input[b, t, :][:, None]
            wt = x_weather[b, t, :][:, None]
            h_o = sig(p["w_d"] @ h_d + p["w_w"] @ h_w + p["w_t"] @ h_t +
                      p["w_m"] @ h_m + p["w_t"] @ h_t)
            e_t = sig(p["w_e"] @ wt + p["b_e"])
            i = sig(p["w_ix"] @ x + p["w_ih"] @ h_o + p["w_ie"] @ e_t + p["b_i"])
            g = np.tanh(p["w_gx"] @ x + p["w_gh"] @ h_o + p["b_g"])
            f = sig(p["w_fx"] @ x + p["w_fo"] @ h_o + p["w_fe"] @ e_t + p["b_f"])
            o = sig(p["w_ox"] @ x + p["w_oh"] @ h_t + p["w_oe"] @ e_t + p["b_o"])
            c_next = f * c_t + i * g
            h_next = o * np.tanh(c_next)
            h_out[b, t] = h_next[:, 0]
            c_out[b, t] = c_next[:, 0]
            h_t, c_t = h_next, c_next
    return h_out, c_out


if __name__ == "__main__":
    input_size, hidden_size, weather_size = 16, 32, 8
    batch, seq = 8, T_STEPS  # forward hard-codes 24 timesteps

    key = jax.random.PRNGKey(0)
    kp, kx, kw = jax.random.split(key, 3)
    params = init_params(kp, input_size, hidden_size, weather_size)
    x_input = jax.random.uniform(kx, (batch, seq, input_size), jnp.float32,
                                 minval=-1.0, maxval=1.0)
    x_weather = jax.random.uniform(kw, (batch, seq, weather_size), jnp.float32,
                                   minval=-1.0, maxval=1.0)

    h_out, c_out = jax.jit(pew_lstm_forward)(params, x_input, x_weather)
    h_out = jax.block_until_ready(h_out)
    c_out = jax.block_until_ready(c_out)

    h_ref, c_ref = pew_lstm_reference(params, x_input, x_weather)
    np.testing.assert_allclose(np.asarray(h_out), h_ref, atol=2e-3, rtol=2e-3)
    np.testing.assert_allclose(np.asarray(c_out), c_ref, atol=2e-3, rtol=2e-3)

    print("KERNEL_OK")
</pallas_src>

<mosaic_0001>
module attributes {stable_mosaic.version = 11 : i64} {
  func.func @_pew_lstm_recurrence_kernel(%arg0: memref<24x8x32xf32, #tpu.memory_space<vmem>>, %arg1: memref<24x8x128xf32, #tpu.memory_space<vmem>>, %arg2: memref<32x32xf32, #tpu.memory_space<vmem>>, %arg3: memref<32x128xf32, #tpu.memory_space<vmem>>, %arg4: memref<32x128xf32, #tpu.memory_space<vmem>>, %arg5: memref<24x8x32xf32, #tpu.memory_space<vmem>>, %arg6: memref<24x8x32xf32, #tpu.memory_space<vmem>>) attributes {dimension_semantics = [], scalar_prefetch = 0 : i64, scratch_operands = 0 : i64, tpu.core_type = #tpu.core_type<tc>} {
    %c0 = arith.constant 0 : index
    %c0_0 = arith.constant 0 : index
    %0 = vector.load %arg2[%c0, %c0_0] : memref<32x32xf32, #tpu.memory_space<vmem>>, vector<32x32xf32>
    %c0_1 = arith.constant 0 : index
    %c0_2 = arith.constant 0 : index
    %1 = vector.load %arg3[%c0_1, %c0_2] : memref<32x128xf32, #tpu.memory_space<vmem>>, vector<32x128xf32>
    %c0_3 = arith.constant 0 : index
    %c0_4 = arith.constant 0 : index
    %2 = vector.load %arg4[%c0_3, %c0_4] : memref<32x128xf32, #tpu.memory_space<vmem>>, vector<32x128xf32>
    %3 = tpu.iota {dimensions = array<i32: 1>} : vector<8x128xi32>
    %c32_i32 = arith.constant 32 : i32
    %4 = vector.broadcast %c32_i32 : i32 to vector<8x128xi32>
    %5 = arith.cmpi sge, %3, %4 : vector<8x128xi32>
    %c64_i32 = arith.constant 64 : i32
    %6 = vector.broadcast %c64_i32 : i32 to vector<8x128xi32>
    %7 = arith.cmpi slt, %3, %6 : vector<8x128xi32>
    %8 = arith.andi %5, %7 : vector<8x128xi1>
    %cst = arith.constant 0.000000e+00 : f32
    %9 = vector.broadcast %cst : f32 to vector<8x32xf32>
    %cst_5 = arith.constant 0.000000e+00 : f32
    %10 = vector.broadcast %cst_5 : f32 to vector<8x32xf32>
    %c0_i32 = arith.constant 0 : i32
    %cst_6 = arith.constant dense<0.000000e+00> : vector<8x128xf32>
    %11 = tpu.matmul %9, %2, %cst_6 {dimension_numbers = #tpu.dot_dimension_numbers<[1], [0], [0], [1], [0, 0, 1, 1], [], []>} : vector<8x32xf32>, vector<32x128xf32>, vector<8x128xf32> -> vector<8x128xf32>
    %12 = arith.index_cast %c0_i32 : i32 to index
    %c0_7 = arith.constant 0 : index
    %c0_8 = arith.constant 0 : index
    %13 = vector.load %arg0[%12, %c0_7, %c0_8] : memref<24x8x32xf32, #tpu.memory_space<vmem>>, vector<1x8x32xf32>
    %14 = vector.shape_cast %13 : vector<1x8x32xf32> to vector<8x32xf32>
    %cst_9 = arith.constant dense<0.000000e+00> : vector<8x32xf32>
    %15 = tpu.matmul %9, %0, %cst_9 {dimension_numbers = #tpu.dot_dimension_numbers<[1], [0], [0], [1], [0, 0, 1, 1], [], []>} : vector<8x32xf32>, vector<32x32xf32>, vector<8x32xf32> -> vector<8x32xf32>
    %16 = arith.addf %14, %15 : vector<8x32xf32>
    %cst_10 = arith.constant 5.000000e-01 : f32
    %17 = vector.broadcast %cst_10 : f32 to vector<8x32xf32>
    %18 = arith.mulf %17, %16 : vector<8x32xf32>
    %19 = math.tanh %18 : vector<8x32xf32>
    %cst_11 = arith.constant 5.000000e-01 : f32
    %20 = vector.broadcast %cst_11 : f32 to vector<8x32xf32>
    %21 = arith.mulf %20, %19 : vector<8x32xf32>
    %cst_12 = arith.constant 5.000000e-01 : f32
    %22 = vector.broadcast %cst_12 : f32 to vector<8x32xf32>
    %23 = arith.addf %21, %22 : vector<8x32xf32>
    %24 = arith.index_cast %c0_i32 : i32 to index
    %c0_13 = arith.constant 0 : index
    %c0_14 = arith.constant 0 : index
    %25 = vector.load %arg1[%24, %c0_13, %c0_14] : memref<24x8x128xf32, #tpu.memory_space<vmem>>, vector<1x8x128xf32>
    %26 = vector.shape_cast %25 : vector<1x8x128xf32> to vector<8x128xf32>
    %27 = arith.addf %26, %11 : vector<8x128xf32>
    %cst_15 = arith.constant dense<0.000000e+00> : vector<8x128xf32>
    %28 = tpu.matmul %23, %1, %cst_15 {dimension_numbers = #tpu.dot_dimension_numbers<[1], [0], [0], [1], [0, 0, 1, 1], [], []>} : vector<8x32xf32>, vector<32x128xf32>, vector<8x128xf32> -> vector<8x128xf32>
    %29 = arith.addf %27, %28 : vector<8x128xf32>
    %cst_16 = arith.constant 5.000000e-01 : f32
    %30 = vector.broadcast %cst_16 : f32 to vector<8x128xf32>
    %31 = arith.mulf %30, %29 : vector<8x128xf32>
    %32 = arith.select %8, %29, %31 : vector<8x128xi1>, vector<8x128xf32>
    %33 = math.tanh %32 : vector<8x128xf32>
    %cst_17 = arith.constant 5.000000e-01 : f32
    %34 = vector.broadcast %cst_17 : f32 to vector<8x128xf32>
    %35 = arith.mulf %34, %33 : vector<8x128xf32>
    %cst_18 = arith.constant 5.000000e-01 : f32
    %36 = vector.broadcast %cst_18 : f32 to vector<8x128xf32>
    %37 = arith.addf %35, %36 : vector<8x128xf32>
    %38 = arith.select %8, %33, %37 : vector<8x128xi1>, vector<8x128xf32>
    %39 = vector.extract_strided_slice %38 {offsets = [0, 0], sizes = [8, 32], strides = [1, 1]} : vector<8x128xf32> to vector<8x32xf32>
    %40 = vector.extract_strided_slice %38 {offsets = [0, 32], sizes = [8, 32], strides = [1, 1]} : vector<8x128xf32> to vector<8x32xf32>
    %41 = vector.extract_strided_slice %38 {offsets = [0, 64], sizes = [8, 32], strides = [1, 1]} : vector<8x128xf32> to vector<8x32xf32>
    %42 = vector.extract_strided_slice %38 {offsets = [0, 96], sizes = [8, 32], strides = [1, 1]} : vector<8x128xf32> to vector<8x32xf32>
    %43 = arith.mulf %41, %10 : vector<8x32xf32>
    %44 = arith.mulf %39, %40 : vector<8x32xf32>
    %45 = arith.addf %43, %44 : vector<8x32xf32>
    %46 = math.tanh %45 : vector<8x32xf32>
    %47 = arith.mulf %42, %46 : vector<8x32xf32>
    %48 = arith.index_cast %c0_i32 : i32 to index
    %c0_19 = arith.constant 0 : index
    %c0_20 = arith.constant 0 : index
    %49 = vector.load %arg5[%48, %c0_19, %c0_20] : memref<24x8x32xf32, #tpu.memory_space<vmem>>, vector<1x8x32xf32>
    %50 = vector.shape_cast %49 : vector<1x8x32xf32> to vector<8x32xf32>
    %51 = vector.shape_cast %47 : vector<8x32xf32> to vector<1x8x32xf32>
    tpu.vector_store %arg5[%48, %c0_19, %c0_20], %51 {strides = array<i32>} : memref<24x8x32xf32, #tpu.memory_space<vmem>>, vector<1x8x32xf32>,
    %52 = arith.index_cast %c0_i32 : i32 to index
    %c0_21 = arith.constant 0 : index
    %c0_22 = arith.constant 0 : index
    %53 = vector.load %arg6[%52, %c0_21, %c0_22] : memref<24x8x32xf32, #tpu.memory_space<vmem>>, vector<1x8x32xf32>
    %54 = vector.shape_cast %53 : vector<1x8x32xf32> to vector<8x32xf32>
    %55 = vector.shape_cast %45 : vector<8x32xf32> to vector<1x8x32xf32>
    tpu.vector_store %arg6[%52, %c0_21, %c0_22], %55 {strides = array<i32>} : memref<24x8x32xf32, #tpu.memory_space<vmem>>, vector<1x8x32xf32>,
    %c1_i32 = arith.constant 1 : i32
    %cst_23 = arith.constant dense<0.000000e+00> : vector<8x128xf32>
    %56 = tpu.matmul %47, %2, %cst_23 {dimension_numbers = #tpu.dot_dimension_numbers<[1], [0], [0], [1], [0, 0, 1, 1], [], []>} : vector<8x32xf32>, vector<32x128xf32>, vector<8x128xf32> -> vector<8x128xf32>
    %57 = arith.index_cast %c1_i32 : i32 to index
    %c0_24 = arith.constant 0 : index
    %c0_25 = arith.constant 0 : index
    %58 = vector.load %arg0[%57, %c0_24, %c0_25] : memref<24x8x32xf32, #tpu.memory_space<vmem>>, vector<1x8x32xf32>
    %59 = vector.shape_cast %58 : vector<1x8x32xf32> to vector<8x32xf32>
    %cst_26 = arith.constant dense<0.000000e+00> : vector<8x32xf32>
    %60 = tpu.matmul %47, %0, %cst_26 {dimension_numbers = #tpu.dot_dimension_numbers<[1], [0], [0], [1], [0, 0, 1, 1], [], []>} : vector<8x32xf32>, vector<32x32xf32>, vector<8x32xf32> -> vector<8x32xf32>
    %61 = arith.addf %59, %60 : vector<8x32xf32>
    %cst_27 = arith.constant 5.000000e-01 : f32
    %62 = vector.broadcast %cst_27 : f32 to vector<8x32xf32>
    %63 = arith.mulf %62, %61 : vector<8x32xf32>
    %64 = math.tanh %63 : vector<8x32xf32>
    %cst_28 = arith.constant 5.000000e-01 : f32
    %65 = vector.broadcast %cst_28 : f32 to vector<8x32xf32>
    %66 = arith.mulf %65, %64 : vector<8x32xf32>
    %cst_29 = arith.constant 5.000000e-01 : f32
    %67 = vector.broadcast %cst_29 : f32 to vector<8x32xf32>
    %68 = arith.addf %66, %67 : vector<8x32xf32>
    %69 = arith.index_cast %c1_i32 : i32 to index
    %c0_30 = arith.constant 0 : index
    %c0_31 = arith.constant 0 : index
    %70 = vector.load %arg1[%69, %c0_30, %c0_31] : memref<24x8x128xf32, #tpu.memory_space<vmem>>, vector<1x8x128xf32>
    %71 = vector.shape_cast %70 : vector<1x8x128xf32> to vector<8x128xf32>
    %72 = arith.addf %71, %56 : vector<8x128xf32>
    %cst_32 = arith.constant dense<0.000000e+00> : vector<8x128xf32>
    %73 = tpu.matmul %68, %1, %cst_32 {dimension_numbers = #tpu.dot_dimension_numbers<[1], [0], [0], [1], [0, 0, 1, 1], [], []>} : vector<8x32xf32>, vector<32x128xf32>, vector<8x128xf32> -> vector<8x128xf32>
    %74 = arith.addf %72, %73 : vector<8x128xf32>
    %cst_33 = arith.constant 5.000000e-01 : f32
    %75 = vector.broadcast %cst_33 : f32 to vector<8x128xf32>
    %76 = arith.mulf %75, %74 : vector<8x128xf32>
    %77 = arith.select %8, %74, %76 : vector<8x128xi1>, vector<8x128xf32>
    %78 = math.tanh %77 : vector<8x128xf32>
    %cst_34 = arith.constant 5.000000e-01 : f32
    %79 = vector.broadcast %cst_34 : f32 to vector<8x128xf32>
    %80 = arith.mulf %79, %78 : vector<8x128xf32>
    %cst_35 = arith.constant 5.000000e-01 : f32
    %81 = vector.broadcast %cst_35 : f32 to vector<8x128xf32>
    %82 = arith.addf %80, %81 : vector<8x128xf32>
    %83 = arith.select %8, %78, %82 : vector<8x128xi1>, vector<8x128xf32>
    %84 = vector.extract_strided_slice %83 {offsets = [0, 0], sizes = [8, 32], strides = [1, 1]} : vector<8x128xf32> to vector<8x32xf32>
    %85 = vector.extract_strided_slice %83 {offsets = [0, 32], sizes = [8, 32], strides = [1, 1]} : vector<8x128xf32> to vector<8x32xf32>
    %86 = vector.extract_strided_slice %83 {offsets = [0, 64], sizes = [8, 32], strides = [1, 1]} : vector<8x128xf32> to vector<8x32xf32>
    %87 = vector.extract_strided_slice %83 {offsets = [0, 96], sizes = [8, 32], strides = [1, 1]} : vector<8x128xf32> to vector<8x32xf32>
    %88 = arith.mulf %86, %45 : vector<8x32xf32>
    %89 = arith.mulf %84, %85 : vector<8x32xf32>
    %90 = arith.addf %88, %89 : vector<8x32xf32>
    %91 = math.tanh %90 : vector<8x32xf32>
    %92 = arith.mulf %87, %91 : vector<8x32xf32>
    %93 = arith.index_cast %c1_i32 : i32 to index
    %c0_36 = arith.constant 0 : index
    %c0_37 = arith.constant 0 : index
    %94 = vector.load %arg5[%93, %c0_36, %c0_37] : memref<24x8x32xf32, #tpu.memory_space<vmem>>, vector<1x8x32xf32>
    %95 = vector.shape_cast %94 : vector<1x8x32xf32> to vector<8x32xf32>
    %96 = vector.shape_cast %92 : vector<8x32xf32> to vector<1x8x32xf32>
    tpu.vector_store %arg5[%93, %c0_36, %c0_37], %96 {strides = array<i32>} : memref<24x8x32xf32, #tpu.memory_space<vmem>>, vector<1x8x32xf32>,
    %97 = arith.index_cast %c1_i32 : i32 to index
    %c0_38 = arith.constant 0 : index
    %c0_39 = arith.constant 0 : index
    %98 = vector.load %arg6[%97, %c0_38, %c0_39] : memref<24x8x32xf32, #tpu.memory_space<vmem>>, vector<1x8x32xf32>
    %99 = vector.shape_cast %98 : vector<1x8x32xf32> to vector<8x32xf32>
    %100 = vector.shape_cast %90 : vector<8x32xf32> to vector<1x8x32xf32>
    tpu.vector_store %arg6[%97, %c0_38, %c0_39], %100 {strides = array<i32>} : memref<24x8x32xf32, #tpu.memory_space<vmem>>, vector<1x8x32xf32>,
    %c2_i32 = arith.constant 2 : i32
    %cst_40 = arith.constant dense<0.000000e+00> : vector<8x128xf32>
    %101 = tpu.matmul %92, %2, %cst_40 {dimension_numbers = #tpu.dot_dimension_numbers<[1], [0], [0], [1], [0, 0, 1, 1], [], []>} : vector<8x32xf32>, vector<32x128xf32>, vector<8x128xf32> -> vector<8x128xf32>
    %102 = arith.index_cast %c2_i32 : i32 to index
    %c0_41 = arith.constant 0 : index
    %c0_42 = arith.constant 0 : index
    %103 = vector.load %arg0[%102, %c0_41, %c0_42] : memref<24x8x32xf32, #tpu.memory_space<vmem>>, vector<1x8x32xf32>
    %104 = vector.shape_cast %103 : vector<1x8x32xf32> to vector<8x32xf32>
    %cst_43 = arith.constant dense<0.000000e+00> : vector<8x32xf32>
    %105 = tpu.matmul %92, %0, %cst_43 {dimension_numbers = #tpu.dot_dimension_numbers<[1], [0], [0], [1], [0, 0, 1, 1], [], []>} : vector<8x32xf32>, vector<32x32xf32>, vector<8x32xf32> -> vector<8x32xf32>
    %106 = arith.addf %104, %105 : vector<8x32xf32>
    %cst_44 = arith.constant 5.000000e-01 : f32
    %107 = vector.broadcast %cst_44 : f32 to vector<8x32xf32>
    %108 = arith.mulf %107, %106 : vector<8x32xf32>
    %109 = math.tanh %108 : vector<8x32xf32>
    %cst_45 = arith.constant 5.000000e-01 : f32
    %110 = vector.broadcast %cst_45 : f32 to vector<8x32xf32>
    %111 = arith.mulf %110, %109 : vector<8x32xf32>
    %cst_46 = arith.constant 5.000000e-01 : f32
    %112 = vector.broadcast %cst_46 : f32 to vector<8x32xf32>
    %113 = arith.addf %111, %112 : vector<8x32xf32>
    %114 = arith.index_cast %c2_i32 : i32 to index
    %c0_47 = arith.constant 0 : index
    %c0_48 = arith.constant 0 : index
    %115 = vector.load %arg1[%114, %c0_47, %c0_48] : memref<24x8x128xf32, #tpu.memory_space<vmem>>, vector<1x8x128xf32>
    %116 = vector.shape_cast %115 : vector<1x8x128xf32> to vector<8x128xf32>
    %117 = arith.addf %116, %101 : vector<8x128xf32>
    %cst_49 = arith.constant dense<0.000000e+00> : vector<8x128xf32>
    %118 = tpu.matmul %113, %1, %cst_49 {dimension_numbers = #tpu.dot_dimension_numbers<[1], [0], [0], [1], [0, 0, 1, 1], [], []>} : vector<8x32xf32>, vector<32x128xf32>, vector<8x128xf32> -> vector<8x128xf32>
    %119 = arith.addf %117, %118 : vector<8x128xf32>
    %cst_50 = arith.constant 5.000000e-01 : f32
    %120 = vector.broadcast %cst_50 : f32 to vector<8x128xf32>
    %121 = arith.mulf %120, %119 : vector<8x128xf32>
    %122 = arith.select %8, %119, %121 : vector<8x128xi1>, vector<8x128xf32>
    %123 = math.tanh %122 : vector<8x128xf32>
    %cst_51 = arith.constant 5.000000e-01 : f32
    %124 = vector.broadcast %cst_51 : f32 to vector<8x128xf32>
    %125 = arith.mulf %124, %123 : vector<8x128xf32>
    %cst_52 = arith.constant 5.000000e-01 : f32
    %126 = vector.broadcast %cst_52 : f32 to vector<8x128xf32>
    %127 = arith.addf %125, %126 : vector<8x128xf32>
    %128 = arith.select %8, %123, %127 : vector<8x128xi1>, vector<8x128xf32>
    %129 = vector.extract_strided_slice %128 {offsets = [0, 0], sizes = [8, 32], strides = [1, 1]} : vector<8x128xf32> to vector<8x32xf32>
    %130 = vector.extract_strided_slice %128 {offsets = [0, 32], sizes = [8, 32], strides = [1, 1]} : vector<8x128xf32> to vector<8x32xf32>
    %131 = vector.extract_strided_slice %128 {offsets = [0, 64], sizes = [8, 32], strides = [1, 1]} : vector<8x128xf32> to vector<8x32xf32>
    %132 = vector.extract_strided_slice %128 {offsets = [0, 96], sizes = [8, 32], strides = [1, 1]} : vector<8x128xf32> to vector<8x32xf32>
    %133 = arith.mulf %131, %90 : vector<8x32xf32>
    %134 = arith.mulf %129, %130 : vector<8x32xf32>
    %135 = arith.addf %133, %134 : vector<8x32xf32>
    %136 = math.tanh %135 : vector<8x32xf32>
    %137 = arith.mulf %132, %136 : vector<8x32xf32>
    %138 = arith.index_cast %c2_i32 : i32 to index
    %c0_53 = arith.constant 0 : index
    %c0_54 = arith.constant 0 : index
    %139 = vector.load %arg5[%138, %c0_53, %c0_54] : memref<24x8x32xf32, #tpu.memory_space<vmem>>, vector<1x8x32xf32>
    %140 = vector.shape_cast %139 : vector<1x8x32xf32> to vector<8x32xf32>
    %141 = vector.shape_cast %137 : vector<8x32xf32> to vector<1x8x32xf32>
    tpu.vector_store %arg5[%138, %c0_53, %c0_54], %141 {strides = array<i32>} : memref<24x8x32xf32, #tpu.memory_space<vmem>>, vector<1x8x32xf32>,
    %142 = arith.index_cast %c2_i32 : i32 to index
    %c0_55 = arith.constant 0 : index
    %c0_56 = arith.constant 0 : index
    %143 = vector.load %arg6[%142, %c0_55, %c0_56] : memref<24x8x32xf32, #tpu.memory_space<vmem>>, vector<1x8x32xf32>
    %144 = vector.shape_cast %143 : vector<1x8x32xf32> to vector<8x32xf32>
    %145 = vector.shape_cast %135 : vector<8x32xf32> to vector<1x8x32xf32>
    tpu.vector_store %arg6[%142, %c0_55, %c0_56], %145 {strides = array<i32>} : memref<24x8x32xf32, #tpu.memory_space<vmem>>, vector<1x8x32xf32>,
    %c3_i32 = arith.constant 3 : i32
    %cst_57 = arith.constant dense<0.000000e+00> : vector<8x128xf32>
    %146 = tpu.matmul %137, %2, %cst_57 {dimension_numbers = #tpu.dot_dimension_numbers<[1], [0], [0], [1], [0, 0, 1, 1], [], []>} : vector<8x32xf32>, vector<32x128xf32>, vector<8x128xf32> -> vector<8x128xf32>
    %147 = arith.index_cast %c3_i32 : i32 to index
    %c0_58 = arith.constant 0 : index
    %c0_59 = arith.constant 0 : index
    %148 = vector.load %arg0[%147, %c0_58, %c0_59] : memref<24x8x32xf32, #tpu.memory_space<vmem>>, vector<1x8x32xf32>
    %149 = vector.shape_cast %148 : vector<1x8x32xf32> to vector<8x32xf32>
    %cst_60 = arith.constant dense<0.000000e+00> : vector<8x32xf32>
    %150 = tpu.matmul %137, %0, %cst_60 {dimension_numbers = #tpu.dot_dimension_numbers<[1], [0], [0], [1], [0, 0, 1, 1], [], []>} : vector<8x32xf32>, vector<32x32xf32>, vector<8x32xf32> -> vector<8x32xf32>
    %151 = arith.addf %149, %150 : vector<8x32xf32>
    %cst_61 = arith.constant 5.000000e-01 : f32
    %152 = vector.broadcast %cst_61 : f32 to vector<8x32xf32>
    %153 = arith.mulf %152, %151 : vector<8x32xf32>
    %154 = math.tanh %153 : vector<8x32xf32>
    %cst_62 = arith.constant 5.000000e-01 : f32
    %155 = vector.broadcast %cst_62 : f32 to vector<8x32xf32>
    %156 = arith.mulf %155, %154 : vector<8x32xf32>
    %cst_63 = arith.constant 5.000000e-01 : f32
    %157 = vector.broadcast %cst_63 : f32 to vector<8x32xf32>
    %158 = arith.addf %156, %157 : vector<8x32xf32>
    %159 = arith.index_cast %c3_i32 : i32 to index
    %c0_64 = arith.constant 0 : index
    %c0_65 = arith.constant 0 : index
    %160 = vector.load %arg1[%159, %c0_64, %c0_65] : memref<24x8x128xf32, #tpu.memory_space<vmem>>, vector<1x8x128xf32>
    %161 = vector.shape_cast %160 : vector<1x8x128xf32> to vector<8x128xf32>
    %162 = arith.addf %161, %146 : vector<8x128xf32>
    %cst_66 = arith.constant dense<0.000000e+00> : vector<8x128xf32>
    %163 = tpu.matmul %158, %1, %cst_66 {dimension_numbers = #tpu.dot_dimension_numbers<[1], [0], [0], [1], [0, 0, 1, 1], [], []>} : vector<8x32xf32>, vector<32x128xf32>, vector<8x128xf32> -> vector<8x128xf32>
    %164 = arith.addf %162, %163 : vector<8x128xf32>
    %cst_67 = arith.constant 5.000000e-01 : f32
    %165 = vector.broadcast %cst_67 : f32 to vector<8x128xf32>
    %166 = arith.mulf %165, %164 : vector<8x128xf32>
    %167 = arith.select %8, %164, %166 : vector<8x128xi1>, vector<8x128xf32>
    %168 = math.tanh %167 : vector<8x128xf32>
    %cst_68 = arith.constant 5.000000e-01 : f32
    %169 = vector.broadcast %cst_68 : f32 to vector<8x128xf32>
    %170 = arith.mulf %169, %168 : vector<8x128xf32>
    %cst_69 = arith.constant 5.000000e-01 : f32
    %171 = vector.broadcast %cst_69 : f32 to vector<8x128xf32>
    %172 = arith.addf %170, %171 : vector<8x128xf32>
    %173 = arith.select %8, %168, %172 : vector<8x128xi1>, vector<8x128xf32>
    %174 = vector.extract_strided_slice %173 {offsets = [0, 0], sizes = [8, 32], strides = [1, 1]} : vector<8x128xf32> to vector<8x32xf32>
    %175 = vector.extract_strided_slice %173 {offsets = [0, 32], sizes = [8, 32], strides = [1, 1]} : vector<8x128xf32> to vector<8x32xf32>
    %176 = vector.extract_strided_slice %173 {offsets = [0, 64], sizes = [8, 32], strides = [1, 1]} : vector<8x128xf32> to vector<8x32xf32>
    %177 = vector.extract_strided_slice %173 {offsets = [0, 96], sizes = [8, 32], strides = [1, 1]} : vector<8x128xf32> to vector<8x32xf32>
    %178 = arith.mulf %176, %135 : vector<8x32xf32>
    %179 = arith.mulf %174, %175 : vector<8x32xf32>
    %180 = arith.addf %178, %179 : vector<8x32xf32>
    %181 = math.tanh %180 : vector<8x32xf32>
    %182 = arith.mulf %177, %181 : vector<8x32xf32>
    %183 = arith.index_cast %c3_i32 : i32 to index
    %c0_70 = arith.constant 0 : index
    %c0_71 = arith.constant 0 : index
    %184 = vector.load %arg5[%183, %c0_70, %c0_71] : memref<24x8x32xf32, #tpu.memory_space<vmem>>, vector<1x8x32xf32>
    %185 = vector.shape_cast %184 : vector<1x8x32xf32> to vector<8x32xf32>
    %186 = vector.shape_cast %182 : vector<8x32xf32> to vector<1x8x32xf32>
    tpu.vector_store %arg5[%183, %c0_70, %c0_71], %186 {strides = array<i32>} : memref<24x8x32xf32, #tpu.memory_space<vmem>>, vector<1x8x32xf32>,
    %187 = arith.index_cast %c3_i32 : i32 to index
    %c0_72 = arith.constant 0 : index
    %c0_73 = arith.constant 0 : index
    %188 = vector.load %arg6[%187, %c0_72, %c0_73] : memref<24x8x32xf32, #tpu.memory_space<vmem>>, vector<1x8x32xf32>
    %189 = vector.shape_cast %188 : vector<1x8x32xf32> to vector<8x32xf32>
    %190 = vector.shape_cast %180 : vector<8x32xf32> to vector<1x8x32xf32>
    tpu.vector_store %arg6[%187, %c0_72, %c0_73], %190 {strides = array<i32>} : memref<24x8x32xf32, #tpu.memory_space<vmem>>, vector<1x8x32xf32>,
    %c4_i32 = arith.constant 4 : i32
    %cst_74 = arith.constant dense<0.000000e+00> : vector<8x128xf32>
    %191 = tpu.matmul %182, %2, %cst_74 {dimension_numbers = #tpu.dot_dimension_numbers<[1], [0], [0], [1], [0, 0, 1, 1], [], []>} : vector<8x32xf32>, vector<32x128xf32>, vector<8x128xf32> -> vector<8x128xf32>
    %192 = arith.index_cast %c4_i32 : i32 to index
    %c0_75 = arith.constant 0 : index
    %c0_76 = arith.constant 0 : index
    %193 = vector.load %arg0[%192, %c0_75, %c0_76] : memref<24x8x32xf32, #tpu.memory_space<vmem>>, vector<1x8x32xf32>
    %194 = vector.shape_cast %193 : vector<1x8x32xf32> to vector<8x32xf32>
    %cst_77 = arith.constant dense<0.000000e+00> : vector<8x32xf32>
    %195 = tpu.matmul %182, %0, %cst_77 {dimension_numbers = #tpu.dot_dimension_numbers<[1], [0], [0], [1], [0, 0, 1, 1], [], []>} : vector<8x32xf32>, vector<32x32xf32>, vector<8x32xf32> -> vector<8x32xf32>
    %196 = arith.addf %194, %195 : vector<8x32xf32>
    %cst_78 = arith.constant 5.000000e-01 : f32
    %197 = vector.broadcast %cst_78 : f32 to vector<8x32xf32>
    %198 = arith.mulf %197, %196 : vector<8x32xf32>
    %199 = math.tanh %198 : vector<8x32xf32>
    %cst_79 = arith.constant 5.000000e-01 : f32
    %200 = vector.broadcast %cst_79 : f32 to vector<8x32xf32>
    %201 = arith.mulf %200, %199 : vector<8x32xf32>
    %cst_80 = arith.constant 5.000000e-01 : f32
    %202 = vector.broadcast %cst_80 : f32 to vector<8x32xf32>
    %203 = arith.addf %201, %202 : vector<8x32xf32>
    %204 = arith.index_cast %c4_i32 : i32 to index
    %c0_81 = arith.constant 0 : index
    %c0_82 = arith.constant 0 : index
    %205 = vector.load %arg1[%204, %c0_81, %c0_82] : memref<24x8x128xf32, #tpu.memory_space<vmem>>, vector<1x8x128xf32>
    %206 = vector.shape_cast %205 : vector<1x8x128xf32> to vector<8x128xf32>
    %207 = arith.addf %206, %191 : vector<8x128xf32>
    %cst_83 = arith.constant dense<0.000000e+00> : vector<8x128xf32>
    %208 = tpu.matmul %203, %1, %cst_83 {dimension_numbers = #tpu.dot_dimension_numbers<[1], [0], [0], [1], [0, 0, 1, 1], [], []>} : vector<8x32xf32>, vector<32x128xf32>, vector<8x128xf32> -> vector<8x128xf32>
    %209 = arith.addf %207, %208 : vector<8x128xf32>
    %cst_84 = arith.constant 5.000000e-01 : f32
    %210 = vector.broadcast %cst_84 : f32 to vector<8x128xf32>
    %211 = arith.mulf %210, %209 : vector<8x128xf32>
    %212 = arith.select %8, %209, %211 : vector<8x128xi1>, vector<8x128xf32>
    %213 = math.tanh %212 : vector<8x128xf32>
    %cst_85 = arith.constant 5.000000e-01 : f32
    %214 = vector.broadcast %cst_85 : f32 to vector<8x128xf32>
    %215 = arith.mulf %214, %213 : vector<8x128xf32>
    %cst_86 = arith.constant 5.000000e-01 : f32
    %216 = vector.broadcast %cst_86 : f32 to vector<8x128xf32>
    %217 = arith.addf %215, %216 : vector<8x128xf32>
    %218 = arith.select %8, %213, %217 : vector<8x128xi1>, vector<8x128xf32>
    %219 = vector.extract_strided_slice %218 {offsets = [0, 0], sizes = [8, 32], strides = [1, 1]} : vector<8x128xf32> to vector<8x32xf32>
    %220 = vector.extract_strided_slice %218 {offsets = [0, 32], sizes = [8, 32], strides = [1, 1]} : vector<8x128xf32> to vector<8x32xf32>
    %221 = vector.extract_strided_slice %218 {offsets = [0, 64], sizes = [8, 32], strides = [1, 1]} : vector<8x128xf32> to vector<8x32xf32>
    %222 = vector.extract_strided_slice %218 {offsets = [0, 96], sizes = [8, 32], strides = [1, 1]} : vector<8x128xf32> to vector<8x32xf32>
    %223 = arith.mulf %221, %180 : vector<8x32xf32>
    %224 = arith.mulf %219, %220 : vector<8x32xf32>
    %225 = arith.addf %223, %224 : vector<8x32xf32>
    %226 = math.tanh %225 : vector<8x32xf32>
    %227 = arith.mulf %222, %226 : vector<8x32xf32>
    %228 = arith.index_cast %c4_i32 : i32 to index
    %c0_87 = arith.constant 0 : index
    %c0_88 = arith.constant 0 : index
    %229 = vector.load %arg5[%228, %c0_87, %c0_88] : memref<24x8x32xf32, #tpu.memory_space<vmem>>, vector<1x8x32xf32>
    %230 = vector.shape_cast %229 : vector<1x8x32xf32> to vector<8x32xf32>
    %231 = vector.shape_cast %227 : vector<8x32xf32> to vector<1x8x32xf32>
    tpu.vector_store %arg5[%228, %c0_87, %c0_88], %231 {strides = array<i32>} : memref<24x8x32xf32, #tpu.memory_space<vmem>>, vector<1x8x32xf32>,
    %232 = arith.index_cast %c4_i32 : i32 to index
    %c0_89 = arith.constant 0 : index
    %c0_90 = arith.constant 0 : index
    %233 = vector.load %arg6[%232, %c0_89, %c0_90] : memref<24x8x32xf32, #tpu.memory_space<vmem>>, vector<1x8x32xf32>
    %234 = vector.shape_cast %233 : vector<1x8x32xf32> to vector<8x32xf32>
    %235 = vector.shape_cast %225 : vector<8x32xf32> to vector<1x8x32xf32>
    tpu.vector_store %arg6[%232, %c0_89, %c0_90], %235 {strides = array<i32>} : memref<24x8x32xf32, #tpu.memory_space<vmem>>, vector<1x8x32xf32>,
    %c5_i32 = arith.constant 5 : i32
    %cst_91 = arith.constant dense<0.000000e+00> : vector<8x128xf32>
    %236 = tpu.matmul %227, %2, %cst_91 {dimension_numbers = #tpu.dot_dimension_numbers<[1], [0], [0], [1], [0, 0, 1, 1], [], []>} : vector<8x32xf32>, vector<32x128xf32>, vector<8x128xf32> -> vector<8x128xf32>
    %237 = arith.index_cast %c5_i32 : i32 to index
    %c0_92 = arith.constant 0 : index
    %c0_93 = arith.constant 0 : index
    %238 = vector.load %arg0[%237, %c0_92, %c0_93] : memref<24x8x32xf32, #tpu.memory_space<vmem>>, vector<1x8x32xf32>
    %239 = vector.shape_cast %238 : vector<1x8x32xf32> to vector<8x32xf32>
    %cst_94 = arith.constant dense<0.000000e+00> : vector<8x32xf32>
    %240 = tpu.matmul %227, %0, %cst_94 {dimension_numbers = #tpu.dot_dimension_numbers<[1], [0], [0], [1], [0, 0, 1, 1], [], []>} : vector<8x32xf32>, vector<32x32xf32>, vector<8x32xf32> -> vector<8x32xf32>
    %241 = arith.addf %239, %240 : vector<8x32xf32>
    %cst_95 = arith.constant 5.000000e-01 : f32
    %242 = vector.broadcast %cst_95 : f32 to vector<8x32xf32>
    %243 = arith.mulf %242, %241 : vector<8x32xf32>
    %244 = math.tanh %243 : vector<8x32xf32>
    %cst_96 = arith.constant 5.000000e-01 : f32
    %245 = vector.broadcast %cst_96 : f32 to vector<8x32xf32>
    %246 = arith.mulf %245, %244 : vector<8x32xf32>
    %cst_97 = arith.constant 5.000000e-01 : f32
    %247 = vector.broadcast %cst_97 : f32 to vector<8x32xf32>
    %248 = arith.addf %246, %247 : vector<8x32xf32>
    %249 = arith.index_cast %c5_i32 : i32 to index
    %c0_98 = arith.constant 0 : index
    %c0_99 = arith.constant 0 : index
    %250 = vector.load %arg1[%249, %c0_98, %c0_99] : memref<24x8x128xf32, #tpu.memory_space<vmem>>, vector<1x8x128xf32>
    %251 = vector.shape_cast %250 : vector<1x8x128xf32> to vector<8x128xf32>
    %252 = arith.addf %251, %236 : vector<8x128xf32>
    %cst_100 = arith.constant dense<0.000000e+00> : vector<8x128xf32>
    %253 = tpu.matmul %248, %1, %cst_100 {dimension_numbers = #tpu.dot_dimension_numbers<[1], [0], [0], [1], [0, 0, 1, 1], [], []>} : vector<8x32xf32>, vector<32x128xf32>, vector<8x128xf32> -> vector<8x128xf32>
    %254 = arith.addf %252, %253 : vector<8x128xf32>
    %cst_101 = arith.constant 5.000000e-01 : f32
    %255 = vector.broadcast %cst_101 : f32 to vector<8x128xf32>
    %256 = arith.mulf %255, %254 : vector<8x128xf32>
    %257 = arith.select %8, %254, %256 : vector<8x128xi1>, vector<8x128xf32>
    %258 = math.tanh %257 : vector<8x128xf32>
    %cst_102 = arith.constant 5.000000e-01 : f32
    %259 = vector.broadcast %cst_102 : f32 to vector<8x128xf32>
    %260 = arith.mulf %259, %258 : vector<8x128xf32>
    %cst_103 = arith.constant 5.000000e-01 : f32
    %261 = vector.broadcast %cst_103 : f32 to vector<8x128xf32>
    %262 = arith.addf %260, %261 : vector<8x128xf32>
    %263 = arith.select %8, %258, %262 : vector<8x128xi1>, vector<8x128xf32>
    %264 = vector.extract_strided_slice %263 {offsets = [0, 0], sizes = [8, 32], strides = [1, 1]} : vector<8x128xf32> to vector<8x32xf32>
    %265 = vector.extract_strided_slice %263 {offsets = [0, 32], sizes = [8, 32], strides = [1, 1]} : vector<8x128xf32> to vector<8x32xf32>
    %266 = vector.extract_strided_slice %263 {offsets = [0, 64], sizes = [8, 32], strides = [1, 1]} : vector<8x128xf32> to vector<8x32xf32>
    %267 = vector.extract_strided_slice %263 {offsets = [0, 96], sizes = [8, 32], strides = [1, 1]} : vector<8x128xf32> to vector<8x32xf32>
    %268 = arith.mulf %266, %225 : vector<8x32xf32>
    %269 = arith.mulf %264, %265 : vector<8x32xf32>
    %270 = arith.addf %268, %269 : vector<8x32xf32>
    %271 = math.tanh %270 : vector<8x32xf32>
    %272 = arith.mulf %267, %271 : vector<8x32xf32>
    %273 = arith.index_cast %c5_i32 : i32 to index
    %c0_104 = arith.constant 0 : index
    %c0_105 = arith.constant 0 : index
    %274 = vector.load %arg5[%273, %c0_104, %c0_105] : memref<24x8x32xf32, #tpu.memory_space<vmem>>, vector<1x8x32xf32>
    %275 = vector.shape_cast %274 : vector<1x8x32xf32> to vector<8x32xf32>
    %276 = vector.shape_cast %272 : vector<8x32xf32> to vector<1x8x32xf32>
    tpu.vector_store %arg5[%273, %c0_104, %c0_105], %276 {strides = array<i32>} : memref<24x8x32xf32, #tpu.memory_space<vmem>>, vector<1x8x32xf32>,
    %277 = arith.index_cast %c5_i32 : i32 to index
    %c0_106 = arith.constant 0 : index
    %c0_107 = arith.constant 0 : index
    %278 = vector.load %arg6[%277, %c0_106, %c0_107] : memref<24x8x32xf32, #tpu.memory_space<vmem>>, vector<1x8x32xf32>
    %279 = vector.shape_cast %278 : vector<1x8x32xf32> to vector<8x32xf32>
    %280 = vector.shape_cast %270 : vector<8x32xf32> to vector<1x8x32xf32>
    tpu.vector_store %arg6[%277, %c0_106, %c0_107], %280 {strides = array<i32>} : memref<24x8x32xf32, #tpu.memory_space<vmem>>, vector<1x8x32xf32>,
    %c6_i32 = arith.constant 6 : i32
    %cst_108 = arith.constant dense<0.000000e+00> : vector<8x128xf32>
    %281 = tpu.matmul %272, %2, %cst_108 {dimension_numbers = #tpu.dot_dimension_numbers<[1], [0], [0], [1], [0, 0, 1, 1], [], []>} : vector<8x32xf32>, vector<32x128xf32>, vector<8x128xf32> -> vector<8x128xf32>
    %282 = arith.index_cast %c6_i32 : i32 to index
    %c0_109 = arith.constant 0 : index
    %c0_110 = arith.constant 0 : index
    %283 = vector.load %arg0[%282, %c0_109, %c0_110] : memref<24x8x32xf32, #tpu.memory_space<vmem>>, vector<1x8x32xf32>
    %284 = vector.shape_cast %283 : vector<1x8x32xf32> to vector<8x32xf32>
    %cst_111 = arith.constant dense<0.000000e+00> : vector<8x32xf32>
    %285 = tpu.matmul %272, %0, %cst_111 {dimension_numbers = #tpu.dot_dimension_numbers<[1], [0], [0], [1], [0, 0, 1, 1], [], []>} : vector<8x32xf32>, vector<32x32xf32>, vector<8x32xf32> -> vector<8x32xf32>
    %286 = arith.addf %284, %285 : vector<8x32xf32>
    %cst_112 = arith.constant 5.000000e-01 : f32
    %287 = vector.broadcast %cst_112 : f32 to vector<8x32xf32>
    %288 = arith.mulf %287, %286 : vector<8x32xf32>
    %289 = math.tanh %288 : vector<8x32xf32>
    %cst_113 = arith.constant 5.000000e-01 : f32
    %290 = vector.broadcast %cst_113 : f32 to vector<8x32xf32>
    %291 = arith.mulf %290, %289 : vector<8x32xf32>
    %cst_114 = arith.constant 5.000000e-01 : f32
    %292 = vector.broadcast %cst_114 : f32 to vector<8x32xf32>
    %293 = arith.addf %291, %292 : vector<8x32xf32>
    %294 = arith.index_cast %c6_i32 : i32 to index
    %c0_115 = arith.constant 0 : index
    %c0_116 = arith.constant 0 : index
    %295 = vector.load %arg1[%294, %c0_115, %c0_116] : memref<24x8x128xf32, #tpu.memory_space<vmem>>, vector<1x8x128xf32>
    %296 = vector.shape_cast %295 : vector<1x8x128xf32> to vector<8x128xf32>
    %297 = arith.addf %296, %281 : vector<8x128xf32>
    %cst_117 = arith.constant dense<0.000000e+00> : vector<8x128xf32>
    %298 = tpu.matmul %293, %1, %cst_117 {dimension_numbers = #tpu.dot_dimension_numbers<[1], [0], [0], [1], [0, 0, 1, 1], [], []>} : vector<8x32xf32>, vector<32x128xf32>, vector<8x128xf32> -> vector<8x128xf32>
    %299 = arith.addf %297, %298 : vector<8x128xf32>
    %cst_118 = arith.constant 5.000000e-01 : f32
    %300 = vector.broadcast %cst_118 : f32 to vector<8x128xf32>
    %301 = arith.mulf %300, %299 : vector<8x128xf32>
    %302 = arith.select %8, %299, %301 : vector<8x128xi1>, vector<8x128xf32>
    %303 = math.tanh %302 : vector<8x128xf32>
    %cst_119 = arith.constant 5.000000e-01 : f32
    %304 = vector.broadcast %cst_119 : f32 to vector<8x128xf32>
    %305 = arith.mulf %304, %303 : vector<8x128xf32>
    %cst_120 = arith.constant 5.000000e-01 : f32
    %306 = vector.broadcast %cst_120 : f32 to vector<8x128xf32>
    %307 = arith.addf %305, %306 : vector<8x128xf32>
    %308 = arith.select %8, %303, %307 : vector<8x128xi1>, vector<8x128xf32>
    %309 = vector.extract_strided_slice %308 {offsets = [0, 0], sizes = [8, 32], strides = [1, 1]} : vector<8x128xf32> to vector<8x32xf32>
    %310 = vector.extract_strided_slice %308 {offsets = [0, 32], sizes = [8, 32], strides = [1, 1]} : vector<8x128xf32> to vector<8x32xf32>
    %311 = vector.extract_strided_slice %308 {offsets = [0, 64], sizes = [8, 32], strides = [1, 1]} : vector<8x128xf32> to vector<8x32xf32>
    %312 = vector.extract_strided_slice %308 {offsets = [0, 96], sizes = [8, 32], strides = [1, 1]} : vector<8x128xf32> to vector<8x32xf32>
    %313 = arith.mulf %311, %270 : vector<8x32xf32>
    %314 = arith.mulf %309, %310 : vector<8x32xf32>
    %315 = arith.addf %313, %314 : vector<8x32xf32>
    %316 = math.tanh %315 : vector<8x32xf32>
    %317 = arith.mulf %312, %316 : vector<8x32xf32>
    %318 = arith.index_cast %c6_i32 : i32 to index
    %c0_121 = arith.constant 0 : index
    %c0_122 = arith.constant 0 : index
    %319 = vector.load %arg5[%318, %c0_121, %c0_122] : memref<24x8x32xf32, #tpu.memory_space<vmem>>, vector<1x8x32xf32>
    %320 = vector.shape_cast %319 : vector<1x8x32xf32> to vector<8x32xf32>
    %321 = vector.shape_cast %317 : vector<8x32xf32> to vector<1x8x32xf32>
    tpu.vector_store %arg5[%318, %c0_121, %c0_122], %321 {strides = array<i32>} : memref<24x8x32xf32, #tpu.memory_space<vmem>>, vector<1x8x32xf32>,
    %322 = arith.index_cast %c6_i32 : i32 to index
    %c0_123 = arith.constant 0 : index
    %c0_124 = arith.constant 0 : index
    %323 = vector.load %arg6[%322, %c0_123, %c0_124] : memref<24x8x32xf32, #tpu.memory_space<vmem>>, vector<1x8x32xf32>
    %324 = vector.shape_cast %323 : vector<1x8x32xf32> to vector<8x32xf32>
    %325 = vector.shape_cast %315 : vector<8x32xf32> to vector<1x8x32xf32>
    tpu.vector_store %arg6[%322, %c0_123, %c0_124], %325 {strides = array<i32>} : memref<24x8x32xf32, #tpu.memory_space<vmem>>, vector<1x8x32xf32>,
    %c7_i32 = arith.constant 7 : i32
    %cst_125 = arith.constant dense<0.000000e+00> : vector<8x128xf32>
    %326 = tpu.matmul %317, %2, %cst_125 {dimension_numbers = #tpu.dot_dimension_numbers<[1], [0], [0], [1], [0, 0, 1, 1], [], []>} : vector<8x32xf32>, vector<32x128xf32>, vector<8x128xf32> -> vector<8x128xf32>
    %327 = arith.index_cast %c7_i32 : i32 to index
    %c0_126 = arith.constant 0 : index
    %c0_127 = arith.constant 0 : index
    %328 = vector.load %arg0[%327, %c0_126, %c0_127] : memref<24x8x32xf32, #tpu.memory_space<vmem>>, vector<1x8x32xf32>
    %329 = vector.shape_cast %328 : vector<1x8x32xf32> to vector<8x32xf32>
    %cst_128 = arith.constant dense<0.000000e+00> : vector<8x32xf32>
    %330 = tpu.matmul %317, %0, %cst_128 {dimension_numbers = #tpu.dot_dimension_numbers<[1], [0], [0], [1], [0, 0, 1, 1], [], []>} : vector<8x32xf32>, vector<32x32xf32>, vector<8x32xf32> -> vector<8x32xf32>
    %331 = arith.addf %329, %330 : vector<8x32xf32>
    %cst_129 = arith.constant 5.000000e-01 : f32
    %332 = vector.broadcast %cst_129 : f32 to vector<8x32xf32>
    %333 = arith.mulf %332, %331 : vector<8x32xf32>
    %334 = math.tanh %333 : vector<8x32xf32>
    %cst_130 = arith.constant 5.000000e-01 : f32
    %335 = vector.broadcast %cst_130 : f32 to vector<8x32xf32>
    %336 = arith.mulf %335, %334 : vector<8x32xf32>
    %cst_131 = arith.constant 5.000000e-01 : f32
    %337 = vector.broadcast %cst_131 : f32 to vector<8x32xf32>
    %338 = arith.addf %336, %337 : vector<8x32xf32>
    %339 = arith.index_cast %c7_i32 : i32 to index
    %c0_132 = arith.constant 0 : index
    %c0_133 = arith.constant 0 : index
    %340 = vector.load %arg1[%339, %c0_132, %c0_133] : memref<24x8x128xf32, #tpu.memory_space<vmem>>, vector<1x8x128xf32>
    %341 = vector.shape_cast %340 : vector<1x8x128xf32> to vector<8x128xf32>
    %342 = arith.addf %341, %326 : vector<8x128xf32>
    %cst_134 = arith.constant dense<0.000000e+00> : vector<8x128xf32>
    %343 = tpu.matmul %338, %1, %cst_134 {dimension_numbers = #tpu.dot_dimension_numbers<[1], [0], [0], [1], [0, 0, 1, 1], [], []>} : vector<8x32xf32>, vector<32x128xf32>, vector<8x128xf32> -> vector<8x128xf32>
    %344 = arith.addf %342, %343 : vector<8x128xf32>
    %cst_135 = arith.constant 5.000000e-01 : f32
    %345 = vector.broadcast %cst_135 : f32 to vector<8x128xf32>
    %346 = arith.mulf %345, %344 : vector<8x128xf32>
    %347 = arith.select %8, %344, %346 : vector<8x128xi1>, vector<8x128xf32>
    %348 = math.tanh %347 : vector<8x128xf32>
    %cst_136 = arith.constant 5.000000e-01 : f32
    %349 = vector.broadcast %cst_136 : f32 to vector<8x128xf32>
    %350 = arith.mulf %349, %348 : vector<8x128xf32>
    %cst_137 = arith.constant 5.000000e-01 : f32
    %351 = vector.broadcast %cst_137 : f32 to vector<8x128xf32>
    %352 = arith.addf %350, %351 : vector<8x128xf32>
    %353 = arith.select %8, %348, %352 : vector<8x128xi1>, vector<8x128xf32>
    %354 = vector.extract_strided_slice %353 {offsets = [0, 0], sizes = [8, 32], strides = [1, 1]} : vector<8x128xf32> to vector<8x32xf32>
    %355 = vector.extract_strided_slice %353 {offsets = [0, 32], sizes = [8, 32], strides = [1, 1]} : vector<8x128xf32> to vector<8x32xf32>
    %356 = vector.extract_strided_slice %353 {offsets = [0, 64], sizes = [8, 32], strides = [1, 1]} : vector<8x128xf32> to vector<8x32xf32>
    %357 = vector.extract_strided_slice %353 {offsets = [0, 96], sizes = [8, 32], strides = [1, 1]} : vector<8x128xf32> to vector<8x32xf32>
    %358 = arith.mulf %356, %315 : vector<8x32xf32>
    %359 = arith.mulf %354, %355 : vector<8x32xf32>
    %360 = arith.addf %358, %359 : vector<8x32xf32>
    %361 = math.tanh %360 : vector<8x32xf32>
    %362 = arith.mulf %357, %361 : vector<8x32xf32>
    %363 = arith.index_cast %c7_i32 : i32 to index
    %c0_138 = arith.constant 0 : index
    %c0_139 = arith.constant 0 : index
    %364 = vector.load %arg5[%363, %c0_138, %c0_139] : memref<24x8x32xf32, #tpu.memory_space<vmem>>, vector<1x8x32xf32>
    %365 = vector.shape_cast %364 : vector<1x8x32xf32> to vector<8x32xf32>
    %366 = vector.shape_cast %362 : vector<8x32xf32> to vector<1x8x32xf32>
    tpu.vector_store %arg5[%363, %c0_138, %c0_139], %366 {strides = array<i32>} : memref<24x8x32xf32, #tpu.memory_space<vmem>>, vector<1x8x32xf32>,
    %367 = arith.index_cast %c7_i32 : i32 to index
    %c0_140 = arith.constant 0 : index
    %c0_141 = arith.constant 0 : index
    %368 = vector.load %arg6[%367, %c0_140, %c0_141] : memref<24x8x32xf32, #tpu.memory_space<vmem>>, vector<1x8x32xf32>
    %369 = vector.shape_cast %368 : vector<1x8x32xf32> to vector<8x32xf32>
    %370 = vector.shape_cast %360 : vector<8x32xf32> to vector<1x8x32xf32>
    tpu.vector_store %arg6[%367, %c0_140, %c0_141], %370 {strides = array<i32>} : memref<24x8x32xf32, #tpu.memory_space<vmem>>, vector<1x8x32xf32>,
    %c8_i32 = arith.constant 8 : i32
    %cst_142 = arith.constant dense<0.000000e+00> : vector<8x128xf32>
    %371 = tpu.matmul %362, %2, %cst_142 {dimension_numbers = #tpu.dot_dimension_numbers<[1], [0], [0], [1], [0, 0, 1, 1], [], []>} : vector<8x32xf32>, vector<32x128xf32>, vector<8x128xf32> -> vector<8x128xf32>
    %372 = arith.index_cast %c8_i32 : i32 to index
    %c0_143 = arith.constant 0 : index
    %c0_144 = arith.constant 0 : index
    %373 = vector.load %arg0[%372, %c0_143, %c0_144] : memref<24x8x32xf32, #tpu.memory_space<vmem>>, vector<1x8x32xf32>
    %374 = vector.shape_cast %373 : vector<1x8x32xf32> to vector<8x32xf32>
    %cst_145 = arith.constant dense<0.000000e+00> : vector<8x32xf32>
    %375 = tpu.matmul %362, %0, %cst_145 {dimension_numbers = #tpu.dot_dimension_numbers<[1], [0], [0], [1], [0, 0, 1, 1], [], []>} : vector<8x32xf32>, vector<32x32xf32>, vector<8x32xf32> -> vector<8x32xf32>
    %376 = arith.addf %374, %375 : vector<8x32xf32>
    %cst_146 = arith.constant 5.000000e-01 : f32
    %377 = vector.broadcast %cst_146 : f32 to vector<8x32xf32>
    %378 = arith.mulf %377, %376 : vector<8x32xf32>
    %379 = math.tanh %378 : vector<8x32xf32>
    %cst_147 = arith.constant 5.000000e-01 : f32
    %380 = vector.broadcast %cst_147 : f32 to vector<8x32xf32>
    %381 = arith.mulf %380, %379 : vector<8x32xf32>
    %cst_148 = arith.constant 5.000000e-01 : f32
    %382 = vector.broadcast %cst_148 : f32 to vector<8x32xf32>
    %383 = arith.addf %381, %382 : vector<8x32xf32>
    %384 = arith.index_cast %c8_i32 : i32 to index
    %c0_149 = arith.constant 0 : index
    %c0_150 = arith.constant 0 : index
    %385 = vector.load %arg1[%384, %c0_149, %c0_150] : memref<24x8x128xf32, #tpu.memory_space<vmem>>, vector<1x8x128xf32>
    %386 = vector.shape_cast %385 : vector<1x8x128xf32> to vector<8x128xf32>
    %387 = arith.addf %386, %371 : vector<8x128xf32>
    %cst_151 = arith.constant dense<0.000000e+00> : vector<8x128xf32>
    %388 = tpu.matmul %383, %1, %cst_151 {dimension_numbers = #tpu.dot_dimension_numbers<[1], [0], [0], [1], [0, 0, 1, 1], [], []>} : vector<8x32xf32>, vector<32x128xf32>, vector<8x128xf32> -> vector<8x128xf32>
    %389 = arith.addf %387, %388 : vector<8x128xf32>
    %cst_152 = arith.constant 5.000000e-01 : f32
    %390 = vector.broadcast %cst_152 : f32 to vector<8x128xf32>
    %391 = arith.mulf %390, %389 : vector<8x128xf32>
    %392 = arith.select %8, %389, %391 : vector<8x128xi1>, vector<8x128xf32>
    %393 = math.tanh %392 : vector<8x128xf32>
    %cst_153 = arith.constant 5.000000e-01 : f32
    %394 = vector.broadcast %cst_153 : f32 to vector<8x128xf32>
    %395 = arith.mulf %394, %393 : vector<8x128xf32>
    %cst_154 = arith.constant 5.000000e-01 : f32
    %396 = vector.broadcast %cst_154 : f32 to vector<8x128xf32>
    %397 = arith.addf %395, %396 : vector<8x128xf32>
    %398 = arith.select %8, %393, %397 : vector<8x128xi1>, vector<8x128xf32>
    %399 = vector.extract_strided_slice %398 {offsets = [0, 0], sizes = [8, 32], strides = [1, 1]} : vector<8x128xf32> to vector<8x32xf32>
    %400 = vector.extract_strided_slice %398 {offsets = [0, 32], sizes = [8, 32], strides = [1, 1]} : vector<8x128xf32> to vector<8x32xf32>
    %401 = vector.extract_strided_slice %398 {offsets = [0, 64], sizes = [8, 32], strides = [1, 1]} : vector<8x128xf32> to vector<8x32xf32>
    %402 = vector.extract_strided_slice %398 {offsets = [0, 96], sizes = [8, 32], strides = [1, 1]} : vector<8x128xf32> to vector<8x32xf32>
    %403 = arith.mulf %401, %360 : vector<8x32xf32>
    %404 = arith.mulf %399, %400 : vector<8x32xf32>
    %405 = arith.addf %403, %404 : vector<8x32xf32>
    %406 = math.tanh %405 : vector<8x32xf32>
    %407 = arith.mulf %402, %406 : vector<8x32xf32>
    %408 = arith.index_cast %c8_i32 : i32 to index
    %c0_155 = arith.constant 0 : index
    %c0_156 = arith.constant 0 : index
    %409 = vector.load %arg5[%408, %c0_155, %c0_156] : memref<24x8x32xf32, #tpu.memory_space<vmem>>, vector<1x8x32xf32>
    %410 = vector.shape_cast %409 : vector<1x8x32xf32> to vector<8x32xf32>
    %411 = vector.shape_cast %407 : vector<8x32xf32> to vector<1x8x32xf32>
    tpu.vector_store %arg5[%408, %c0_155, %c0_156], %411 {strides = array<i32>} : memref<24x8x32xf32, #tpu.memory_space<vmem>>, vector<1x8x32xf32>,
    %412 = arith.index_cast %c8_i32 : i32 to index
    %c0_157 = arith.constant 0 : index
    %c0_158 = arith.constant 0 : index
    %413 = vector.load %arg6[%412, %c0_157, %c0_158] : memref<24x8x32xf32, #tpu.memory_space<vmem>>, vector<1x8x32xf32>
    %414 = vector.shape_cast %413 : vector<1x8x32xf32> to vector<8x32xf32>
    %415 = vector.shape_cast %405 : vector<8x32xf32> to vector<1x8x32xf32>
    tpu.vector_store %arg6[%412, %c0_157, %c0_158], %415 {strides = array<i32>} : memref<24x8x32xf32, #tpu.memory_space<vmem>>, vector<1x8x32xf32>,
    %c9_i32 = arith.constant 9 : i32
    %cst_159 = arith.constant dense<0.000000e+00> : vector<8x128xf32>
    %416 = tpu.matmul %407, %2, %cst_159 {dimension_numbers = #tpu.dot_dimension_numbers<[1], [0], [0], [1], [0, 0, 1, 1], [], []>} : vector<8x32xf32>, vector<32x128xf32>, vector<8x128xf32> -> vector<8x128xf32>
    %417 = arith.index_cast %c9_i32 : i32 to index
    %c0_160 = arith.constant 0 : index
    %c0_161 = arith.constant 0 : index
    %418 = vector.load %arg0[%417, %c0_160, %c0_161] : memref<24x8x32xf32, #tpu.memory_space<vmem>>, vector<1x8x32xf32>
    %419 = vector.shape_cast %418 : vector<1x8x32xf32> to vector<8x32xf32>
    %cst_162 = arith.constant dense<0.000000e+00> : vector<8x32xf32>
    %420 = tpu.matmul %407, %0, %cst_162 {dimension_numbers = #tpu.dot_dimension_numbers<[1], [0], [0], [1], [0, 0, 1, 1], [], []>} : vector<8x32xf32>, vector<32x32xf32>, vector<8x32xf32> -> vector<8x32xf32>
    %421 = arith.addf %419, %420 : vector<8x32xf32>
    %cst_163 = arith.constant 5.000000e-01 : f32
    %422 = vector.broadcast %cst_163 : f32 to vector<8x32xf32>
    %423 = arith.mulf %422, %421 : vector<8x32xf32>
    %424 = math.tanh %423 : vector<8x32xf32>
    %cst_164 = arith.constant 5.000000e-01 : f32
    %425 = vector.broadcast %cst_164 : f32 to vector<8x32xf32>
    %426 = arith.mulf %425, %424 : vector<8x32xf32>
    %cst_165 = arith.constant 5.000000e-01 : f32
    %427 = vector.broadcast %cst_165 : f32 to vector<8x32xf32>
    %428 = arith.addf %426, %427 : vector<8x32xf32>
    %429 = arith.index_cast %c9_i32 : i32 to index
    %c0_166 = arith.constant 0 : index
    %c0_167 = arith.constant 0 : index
    %430 = vector.load %arg1[%429, %c0_166, %c0_167] : memref<24x8x128xf32, #tpu.memory_space<vmem>>, vector<1x8x128xf32>
    %431 = vector.shape_cast %430 : vector<1x8x128xf32> to vector<8x128xf32>
    %432 = arith.addf %431, %416 : vector<8x128xf32>
    %cst_168 = arith.constant dense<0.000000e+00> : vector<8x128xf32>
    %433 = tpu.matmul %428, %1, %cst_168 {dimension_numbers = #tpu.dot_dimension_numbers<[1], [0], [0], [1], [0, 0, 1, 1], [], []>} : vector<8x32xf32>, vector<32x128xf32>, vector<8x128xf32> -> vector<8x128xf32>
    %434 = arith.addf %432, %433 : vector<8x128xf32>
    %cst_169 = arith.constant 5.000000e-01 : f32
    %435 = vector.broadcast %cst_169 : f32 to vector<8x128xf32>
    %436 = arith.mulf %435, %434 : vector<8x128xf32>
    %437 = arith.select %8, %434, %436 : vector<8x128xi1>, vector<8x128xf32>
    %438 = math.tanh %437 : vector<8x128xf32>
    %cst_170 = arith.constant 5.000000e-01 : f32
    %439 = vector.broadcast %cst_170 : f32 to vector<8x128xf32>
    %440 = arith.mulf %439, %438 : vector<8x128xf32>
    %cst_171 = arith.constant 5.000000e-01 : f32
    %441 = vector.broadcast %cst_171 : f32 to vector<8x128xf32>
    %442 = arith.addf %440, %441 : vector<8x128xf32>
    %443 = arith.select %8, %438, %442 : vector<8x128xi1>, vector<8x128xf32>
    %444 = vector.extract_strided_slice %443 {offsets = [0, 0], sizes = [8, 32], strides = [1, 1]} : vector<8x128xf32> to vector<8x32xf32>
    %445 = vector.extract_strided_slice %443 {offsets = [0, 32], sizes = [8, 32], strides = [1, 1]} : vector<8x128xf32> to vector<8x32xf32>
    %446 = vector.extract_strided_slice %443 {offsets = [0, 64], sizes = [8, 32], strides = [1, 1]} : vector<8x128xf32> to vector<8x32xf32>
    %447 = vector.extract_strided_slice %443 {offsets = [0, 96], sizes = [8, 32], strides = [1, 1]} : vector<8x128xf32> to vector<8x32xf32>
    %448 = arith.mulf %446, %405 : vector<8x32xf32>
    %449 = arith.mulf %444, %445 : vector<8x32xf32>
    %450 = arith.addf %448, %449 : vector<8x32xf32>
    %451 = math.tanh %450 : vector<8x32xf32>
    %452 = arith.mulf %447, %451 : vector<8x32xf32>
    %453 = arith.index_cast %c9_i32 : i32 to index
    %c0_172 = arith.constant 0 : index
    %c0_173 = arith.constant 0 : index
    %454 = vector.load %arg5[%453, %c0_172, %c0_173] : memref<24x8x32xf32, #tpu.memory_space<vmem>>, vector<1x8x32xf32>
    %455 = vector.shape_cast %454 : vector<1x8x32xf32> to vector<8x32xf32>
    %456 = vector.shape_cast %452 : vector<8x32xf32> to vector<1x8x32xf32>
    tpu.vector_store %arg5[%453, %c0_172, %c0_173], %456 {strides = array<i32>} : memref<24x8x32xf32, #tpu.memory_space<vmem>>, vector<1x8x32xf32>,
    %457 = arith.index_cast %c9_i32 : i32 to index
    %c0_174 = arith.constant 0 : index
    %c0_175 = arith.constant 0 : index
    %458 = vector.load %arg6[%457, %c0_174, %c0_175] : memref<24x8x32xf32, #tpu.memory_space<vmem>>, vector<1x8x32xf32>
    %459 = vector.shape_cast %458 : vector<1x8x32xf32> to vector<8x32xf32>
    %460 = vector.shape_cast %450 : vector<8x32xf32> to vector<1x8x32xf32>
    tpu.vector_store %arg6[%457, %c0_174, %c0_175], %460 {strides = array<i32>} : memref<24x8x32xf32, #tpu.memory_space<vmem>>, vector<1x8x32xf32>,
    %c10_i32 = arith.constant 10 : i32
    %cst_176 = arith.constant dense<0.000000e+00> : vector<8x128xf32>
    %461 = tpu.matmul %452, %2, %cst_176 {dimension_numbers = #tpu.dot_dimension_numbers<[1], [0], [0], [1], [0, 0, 1, 1], [], []>} : vector<8x32xf32>, vector<32x128xf32>, vector<8x128xf32> -> vector<8x128xf32>
    %462 = arith.index_cast %c10_i32 : i32 to index
    %c0_177 = arith.constant 0 : index
    %c0_178 = arith.constant 0 : index
    %463 = vector.load %arg0[%462, %c0_177, %c0_178] : memref<24x8x32xf32, #tpu.memory_space<vmem>>, vector<1x8x32xf32>
    %464 = vector.shape_cast %463 : vector<1x8x32xf32> to vector<8x32xf32>
    %cst_179 = arith.constant dense<0.000000e+00> : vector<8x32xf32>
    %465 = tpu.matmul %452, %0, %cst_179 {dimension_numbers = #tpu.dot_dimension_numbers<[1], [0], [0], [1], [0, 0, 1, 1], [], []>} : vector<8x32xf32>, vector<32x32xf32>, vector<8x32xf32> -> vector<8x32xf32>
    %466 = arith.addf %464, %465 : vector<8x32xf32>
    %cst_180 = arith.constant 5.000000e-01 : f32
    %467 = vector.broadcast %cst_180 : f32 to vector<8x32xf32>
    %468 = arith.mulf %467, %466 : vector<8x32xf32>
    %469 = math.tanh %468 : vector<8x32xf32>
    %cst_181 = arith.constant 5.000000e-01 : f32
    %470 = vector.broadcast %cst_181 : f32 to vector<8x32xf32>
    %471 = arith.mulf %470, %469 : vector<8x32xf32>
    %cst_182 = arith.constant 5.000000e-01 : f32
    %472 = vector.broadcast %cst_182 : f32 to vector<8x32xf32>
    %473 = arith.addf %471, %472 : vector<8x32xf32>
    %474 = arith.index_cast %c10_i32 : i32 to index
    %c0_183 = arith.constant 0 : index
    %c0_184 = arith.constant 0 : index
    %475 = vector.load %arg1[%474, %c0_183, %c0_184] : memref<24x8x128xf32, #tpu.memory_space<vmem>>, vector<1x8x128xf32>
    %476 = vector.shape_cast %475 : vector<1x8x128xf32> to vector<8x128xf32>
    %477 = arith.addf %476, %461 : vector<8x128xf32>
    %cst_185 = arith.constant dense<0.000000e+00> : vector<8x128xf32>
    %478 = tpu.matmul %473, %1, %cst_185 {dimension_numbers = #tpu.dot_dimension_numbers<[1], [0], [0], [1], [0, 0, 1, 1], [], []>} : vector<8x32xf32>, vector<32x128xf32>, vector<8x128xf32> -> vector<8x128xf32>
    %479 = arith.addf %477, %478 : vector<8x128xf32>
    %cst_186 = arith.constant 5.000000e-01 : f32
    %480 = vector.broadcast %cst_186 : f32 to vector<8x128xf32>
    %481 = arith.mulf %480, %479 : vector<8x128xf32>
    %482 = arith.select %8, %479, %481 : vector<8x128xi1>, vector<8x128xf32>
    %483 = math.tanh %482 : vector<8x128xf32>
    %cst_187 = arith.constant 5.000000e-01 : f32
    %484 = vector.broadcast %cst_187 : f32 to vector<8x128xf32>
    %485 = arith.mulf %484, %483 : vector<8x128xf32>
    %cst_188 = arith.constant 5.000000e-01 : f32
    %486 = vector.broadcast %cst_188 : f32 to vector<8x128xf32>
    %487 = arith.addf %485, %486 : vector<8x128xf32>
    %488 = arith.select %8, %483, %487 : vector<8x128xi1>, vector<8x128xf32>
    %489 = vector.extract_strided_slice %488 {offsets = [0, 0], sizes = [8, 32], strides = [1, 1]} : vector<8x128xf32> to vector<8x32xf32>
    %490 = vector.extract_strided_slice %488 {offsets = [0, 32], sizes = [8, 32], strides = [1, 1]} : vector<8x128xf32> to vector<8x32xf32>
    %491 = vector.extract_strided_slice %488 {offsets = [0, 64], sizes = [8, 32], strides = [1, 1]} : vector<8x128xf32> to vector<8x32xf32>
    %492 = vector.extract_strided_slice %488 {offsets = [0, 96], sizes = [8, 32], strides = [1, 1]} : vector<8x128xf32> to vector<8x32xf32>
    %493 = arith.mulf %491, %450 : vector<8x32xf32>
    %494 = arith.mulf %489, %490 : vector<8x32xf32>
    %495 = arith.addf %493, %494 : vector<8x32xf32>
    %496 = math.tanh %495 : vector<8x32xf32>
    %497 = arith.mulf %492, %496 : vector<8x32xf32>
    %498 = arith.index_cast %c10_i32 : i32 to index
    %c0_189 = arith.constant 0 : index
    %c0_190 = arith.constant 0 : index
    %499 = vector.load %arg5[%498, %c0_189, %c0_190] : memref<24x8x32xf32, #tpu.memory_space<vmem>>, vector<1x8x32xf32>
    %500 = vector.shape_cast %499 : vector<1x8x32xf32> to vector<8x32xf32>
    %501 = vector.shape_cast %497 : vector<8x32xf32> to vector<1x8x32xf32>
    tpu.vector_store %arg5[%498, %c0_189, %c0_190], %501 {strides = array<i32>} : memref<24x8x32xf32, #tpu.memory_space<vmem>>, vector<1x8x32xf32>,
    %502 = arith.index_cast %c10_i32 : i32 to index
    %c0_191 = arith.constant 0 : index
    %c0_192 = arith.constant 0 : index
    %503 = vector.load %arg6[%502, %c0_191, %c0_192] : memref<24x8x32xf32, #tpu.memory_space<vmem>>, vector<1x8x32xf32>
    %504 = vector.shape_cast %503 : vector<1x8x32xf32> to vector<8x32xf32>
    %505 = vector.shape_cast %495 : vector<8x32xf32> to vector<1x8x32xf32>
    tpu.vector_store %arg6[%502, %c0_191, %c0_192], %505 {strides = array<i32>} : memref<24x8x32xf32, #tpu.memory_space<vmem>>, vector<1x8x32xf32>,
    %c11_i32 = arith.constant 11 : i32
    %cst_193 = arith.constant dense<0.000000e+00> : vector<8x128xf32>
    %506 = tpu.matmul %497, %2, %cst_193 {dimension_numbers = #tpu.dot_dimension_numbers<[1], [0], [0], [1], [0, 0, 1, 1], [], []>} : vector<8x32xf32>, vector<32x128xf32>, vector<8x128xf32> -> vector<8x128xf32>
    %507 = arith.index_cast %c11_i32 : i32 to index
    %c0_194 = arith.constant 0 : index
    %c0_195 = arith.constant 0 : index
    %508 = vector.load %arg0[%507, %c0_194, %c0_195] : memref<24x8x32xf32, #tpu.memory_space<vmem>>, vector<1x8x32xf32>
    %509 = vector.shape_cast %508 : vector<1x8x32xf32> to vector<8x32xf32>
    %cst_196 = arith.constant dense<0.000000e+00> : vector<8x32xf32>
    %510 = tpu.matmul %497, %0, %cst_196 {dimension_numbers = #tpu.dot_dimension_numbers<[1], [0], [0], [1], [0, 0, 1, 1], [], []>} : vector<8x32xf32>, vector<32x32xf32>, vector<8x32xf32> -> vector<8x32xf32>
    %511 = arith.addf %509, %510 : vector<8x32xf32>
    %cst_197 = arith.constant 5.000000e-01 : f32
    %512 = vector.broadcast %cst_197 : f32 to vector<8x32xf32>
    %513 = arith.mulf %512, %511 : vector<8x32xf32>
    %514 = math.tanh %513 : vector<8x32xf32>
    %cst_198 = arith.constant 5.000000e-01 : f32
    %515 = vector.broadcast %cst_198 : f32 to vector<8x32xf32>
    %516 = arith.mulf %515, %514 : vector<8x32xf32>
    %cst_199 = arith.constant 5.000000e-01 : f32
    %517 = vector.broadcast %cst_199 : f32 to vector<8x32xf32>
    %518 = arith.addf %516, %517 : vector<8x32xf32>
    %519 = arith.index_cast %c11_i32 : i32 to index
    %c0_200 = arith.constant 0 : index
    %c0_201 = arith.constant 0 : index
    %520 = vector.load %arg1[%519, %c0_200, %c0_201] : memref<24x8x128xf32, #tpu.memory_space<vmem>>, vector<1x8x128xf32>
    %521 = vector.shape_cast %520 : vector<1x8x128xf32> to vector<8x128xf32>
    %522 = arith.addf %521, %506 : vector<8x128xf32>
    %cst_202 = arith.constant dense<0.000000e+00> : vector<8x128xf32>
    %523 = tpu.matmul %518, %1, %cst_202 {dimension_numbers = #tpu.dot_dimension_numbers<[1], [0], [0], [1], [0, 0, 1, 1], [], []>} : vector<8x32xf32>, vector<32x128xf32>, vector<8x128xf32> -> vector<8x128xf32>
    %524 = arith.addf %522, %523 : vector<8x128xf32>
    %cst_203 = arith.constant 5.000000e-01 : f32
    %525 = vector.broadcast %cst_203 : f32 to vector<8x128xf32>
    %526 = arith.mulf %525, %524 : vector<8x128xf32>
    %527 = arith.select %8, %524, %526 : vector<8x128xi1>, vector<8x128xf32>
    %528 = math.tanh %527 : vector<8x128xf32>
    %cst_204 = arith.constant 5.000000e-01 : f32
    %529 = vector.broadcast %cst_204 : f32 to vector<8x128xf32>
    %530 = arith.mulf %529, %528 : vector<8x128xf32>
    %cst_205 = arith.constant 5.000000e-01 : f32
    %531 = vector.broadcast %cst_205 : f32 to vector<8x128xf32>
    %532 = arith.addf %530, %531 : vector<8x128xf32>
    %533 = arith.select %8, %528, %532 : vector<8x128xi1>, vector<8x128xf32>
    %534 = vector.extract_strided_slice %533 {offsets = [0, 0], sizes = [8, 32], strides = [1, 1]} : vector<8x128xf32> to vector<8x32xf32>
    %535 = vector.extract_strided_slice %533 {offsets = [0, 32], sizes = [8, 32], strides = [1, 1]} : vector<8x128xf32> to vector<8x32xf32>
    %536 = vector.extract_strided_slice %533 {offsets = [0, 64], sizes = [8, 32], strides = [1, 1]} : vector<8x128xf32> to vector<8x32xf32>
    %537 = vector.extract_strided_slice %533 {offsets = [0, 96], sizes = [8, 32], strides = [1, 1]} : vector<8x128xf32> to vector<8x32xf32>
    %538 = arith.mulf %536, %495 : vector<8x32xf32>
    %539 = arith.mulf %534, %535 : vector<8x32xf32>
    %540 = arith.addf %538, %539 : vector<8x32xf32>
    %541 = math.tanh %540 : vector<8x32xf32>
    %542 = arith.mulf %537, %541 : vector<8x32xf32>
    %543 = arith.index_cast %c11_i32 : i32 to index
    %c0_206 = arith.constant 0 : index
    %c0_207 = arith.constant 0 : index
    %544 = vector.load %arg5[%543, %c0_206, %c0_207] : memref<24x8x32xf32, #tpu.memory_space<vmem>>, vector<1x8x32xf32>
    %545 = vector.shape_cast %544 : vector<1x8x32xf32> to vector<8x32xf32>
    %546 = vector.shape_cast %542 : vector<8x32xf32> to vector<1x8x32xf32>
    tpu.vector_store %arg5[%543, %c0_206, %c0_207], %546 {strides = array<i32>} : memref<24x8x32xf32, #tpu.memory_space<vmem>>, vector<1x8x32xf32>,
    %547 = arith.index_cast %c11_i32 : i32 to index
    %c0_208 = arith.constant 0 : index
    %c0_209 = arith.constant 0 : index
    %548 = vector.load %arg6[%547, %c0_208, %c0_209] : memref<24x8x32xf32, #tpu.memory_space<vmem>>, vector<1x8x32xf32>
    %549 = vector.shape_cast %548 : vector<1x8x32xf32> to vector<8x32xf32>
    %550 = vector.shape_cast %540 : vector<8x32xf32> to vector<1x8x32xf32>
    tpu.vector_store %arg6[%547, %c0_208, %c0_209], %550 {strides = array<i32>} : memref<24x8x32xf32, #tpu.memory_space<vmem>>, vector<1x8x32xf32>,
    %c12_i32 = arith.constant 12 : i32
    %cst_210 = arith.constant dense<0.000000e+00> : vector<8x128xf32>
    %551 = tpu.matmul %542, %2, %cst_210 {dimension_numbers = #tpu.dot_dimension_numbers<[1], [0], [0], [1], [0, 0, 1, 1], [], []>} : vector<8x32xf32>, vector<32x128xf32>, vector<8x128xf32> -> vector<8x128xf32>
    %552 = arith.index_cast %c12_i32 : i32 to index
    %c0_211 = arith.constant 0 : index
    %c0_212 = arith.constant 0 : index
    %553 = vector.load %arg0[%552, %c0_211, %c0_212] : memref<24x8x32xf32, #tpu.memory_space<vmem>>, vector<1x8x32xf32>
    %554 = vector.shape_cast %553 : vector<1x8x32xf32> to vector<8x32xf32>
    %cst_213 = arith.constant dense<0.000000e+00> : vector<8x32xf32>
    %555 = tpu.matmul %542, %0, %cst_213 {dimension_numbers = #tpu.dot_dimension_numbers<[1], [0], [0], [1], [0, 0, 1, 1], [], []>} : vector<8x32xf32>, vector<32x32xf32>, vector<8x32xf32> -> vector<8x32xf32>
    %556 = arith.addf %554, %555 : vector<8x32xf32>
    %cst_214 = arith.constant 5.000000e-01 : f32
    %557 = vector.broadcast %cst_214 : f32 to vector<8x32xf32>
    %558 = arith.mulf %557, %556 : vector<8x32xf32>
    %559 = math.tanh %558 : vector<8x32xf32>
    %cst_215 = arith.constant 5.000000e-01 : f32
    %560 = vector.broadcast %cst_215 : f32 to vector<8x32xf32>
    %561 = arith.mulf %560, %559 : vector<8x32xf32>
    %cst_216 = arith.constant 5.000000e-01 : f32
    %562 = vector.broadcast %cst_216 : f32 to vector<8x32xf32>
    %563 = arith.addf %561, %562 : vector<8x32xf32>
    %564 = arith.index_cast %c12_i32 : i32 to index
    %c0_217 = arith.constant 0 : index
    %c0_218 = arith.constant 0 : index
    %565 = vector.load %arg1[%564, %c0_217, %c0_218] : memref<24x8x128xf32, #tpu.memory_space<vmem>>, vector<1x8x128xf32>
    %566 = vector.shape_cast %565 : vector<1x8x128xf32> to vector<8x128xf32>
    %567 = arith.addf %566, %551 : vector<8x128xf32>
    %cst_219 = arith.constant dense<0.000000e+00> : vector<8x128xf32>
    %568 = tpu.matmul %563, %1, %cst_219 {dimension_numbers = #tpu.dot_dimension_numbers<[1], [0], [0], [1], [0, 0, 1, 1], [], []>} : vector<8x32xf32>, vector<32x128xf32>, vector<8x128xf32> -> vector<8x128xf32>
    %569 = arith.addf %567, %568 : vector<8x128xf32>
    %cst_220 = arith.constant 5.000000e-01 : f32
    %570 = vector.broadcast %cst_220 : f32 to vector<8x128xf32>
    %571 = arith.mulf %570, %569 : vector<8x128xf32>
    %572 = arith.select %8, %569, %571 : vector<8x128xi1>, vector<8x128xf32>
    %573 = math.tanh %572 : vector<8x128xf32>
    %cst_221 = arith.constant 5.000000e-01 : f32
    %574 = vector.broadcast %cst_221 : f32 to vector<8x128xf32>
    %575 = arith.mulf %574, %573 : vector<8x128xf32>
    %cst_222 = arith.constant 5.000000e-01 : f32
    %576 = vector.broadcast %cst_222 : f32 to vector<8x128xf32>
    %577 = arith.addf %575, %576 : vector<8x128xf32>
    %578 = arith.select %8, %573, %577 : vector<8x128xi1>, vector<8x128xf32>
    %579 = vector.extract_strided_slice %578 {offsets = [0, 0], sizes = [8, 32], strides = [1, 1]} : vector<8x128xf32> to vector<8x32xf32>
    %580 = vector.extract_strided_slice %578 {offsets = [0, 32], sizes = [8, 32], strides = [1, 1]} : vector<8x128xf32> to vector<8x32xf32>
    %581 = vector.extract_strided_slice %578 {offsets = [0, 64], sizes = [8, 32], strides = [1, 1]} : vector<8x128xf32> to vector<8x32xf32>
    %582 = vector.extract_strided_slice %578 {offsets = [0, 96], sizes = [8, 32], strides = [1, 1]} : vector<8x128xf32> to vector<8x32xf32>
    %583 = arith.mulf %581, %540 : vector<8x32xf32>
    %584 = arith.mulf %579, %580 : vector<8x32xf32>
    %585 = arith.addf %583, %584 : vector<8x32xf32>
    %586 = math.tanh %585 : vector<8x32xf32>
    %587 = arith.mulf %582, %586 : vector<8x32xf32>
    %588 = arith.index_cast %c12_i32 : i32 to index
    %c0_223 = arith.constant 0 : index
    %c0_224 = arith.constant 0 : index
    %589 = vector.load %arg5[%588, %c0_223, %c0_224] : memref<24x8x32xf32, #tpu.memory_space<vmem>>, vector<1x8x32xf32>
    %590 = vector.shape_cast %589 : vector<1x8x32xf32> to vector<8x32xf32>
    %591 = vector.shape_cast %587 : vector<8x32xf32> to vector<1x8x32xf32>
    tpu.vector_store %arg5[%588, %c0_223, %c0_224], %591 {strides = array<i32>} : memref<24x8x32xf32, #tpu.memory_space<vmem>>, vector<1x8x32xf32>,
    %592 = arith.index_cast %c12_i32 : i32 to index
    %c0_225 = arith.constant 0 : index
    %c0_226 = arith.constant 0 : index
    %593 = vector.load %arg6[%592, %c0_225, %c0_226] : memref<24x8x32xf32, #tpu.memory_space<vmem>>, vector<1x8x32xf32>
    %594 = vector.shape_cast %593 : vector<1x8x32xf32> to vector<8x32xf32>
    %595 = vector.shape_cast %585 : vector<8x32xf32> to vector<1x8x32xf32>
    tpu.vector_store %arg6[%592, %c0_225, %c0_226], %595 {strides = array<i32>} : memref<24x8x32xf32, #tpu.memory_space<vmem>>, vector<1x8x32xf32>,
    %c13_i32 = arith.constant 13 : i32
    %cst_227 = arith.constant dense<0.000000e+00> : vector<8x128xf32>
    %596 = tpu.matmul %587, %2, %cst_227 {dimension_numbers = #tpu.dot_dimension_numbers<[1], [0], [0], [1], [0, 0, 1, 1], [], []>} : vector<8x32xf32>, vector<32x128xf32>, vector<8x128xf32> -> vector<8x128xf32>
    %597 = arith.index_cast %c13_i32 : i32 to index
    %c0_228 = arith.constant 0 : index
    %c0_229 = arith.constant 0 : index
    %598 = vector.load %arg0[%597, %c0_228, %c0_229] : memref<24x8x32xf32, #tpu.memory_space<vmem>>, vector<1x8x32xf32>
    %599 = vector.shape_cast %598 : vector<1x8x32xf32> to vector<8x32xf32>
    %cst_230 = arith.constant dense<0.000000e+00> : vector<8x32xf32>
    %600 = tpu.matmul %587, %0, %cst_230 {dimension_numbers = #tpu.dot_dimension_numbers<[1], [0], [0], [1], [0, 0, 1, 1], [], []>} : vector<8x32xf32>, vector<32x32xf32>, vector<8x32xf32> -> vector<8x32xf32>
    %601 = arith.addf %599, %600 : vector<8x32xf32>
    %cst_231 = arith.constant 5.000000e-01 : f32
    %602 = vector.broadcast %cst_231 : f32 to vector<8x32xf32>
    %603 = arith.mulf %602, %601 : vector<8x32xf32>
    %604 = math.tanh %603 : vector<8x32xf32>
    %cst_232 = arith.constant 5.000000e-01 : f32
    %605 = vector.broadcast %cst_232 : f32 to vector<8x32xf32>
    %606 = arith.mulf %605, %604 : vector<8x32xf32>
    %cst_233 = arith.constant 5.000000e-01 : f32
    %607 = vector.broadcast %cst_233 : f32 to vector<8x32xf32>
    %608 = arith.addf %606, %607 : vector<8x32xf32>
    %609 = arith.index_cast %c13_i32 : i32 to index
    %c0_234 = arith.constant 0 : index
    %c0_235 = arith.constant 0 : index
    %610 = vector.load %arg1[%609, %c0_234, %c0_235] : memref<24x8x128xf32, #tpu.memory_space<vmem>>, vector<1x8x128xf32>
    %611 = vector.shape_cast %610 : vector<1x8x128xf32> to vector<8x128xf32>
    %612 = arith.addf %611, %596 : vector<8x128xf32>
    %cst_236 = arith.constant dense<0.000000e+00> : vector<8x128xf32>
    %613 = tpu.matmul %608, %1, %cst_236 {dimension_numbers = #tpu.dot_dimension_numbers<[1], [0], [0], [1], [0, 0, 1, 1], [], []>} : vector<8x32xf32>, vector<32x128xf32>, vector<8x128xf32> -> vector<8x128xf32>
    %614 = arith.addf %612, %613 : vector<8x128xf32>
    %cst_237 = arith.constant 5.000000e-01 : f32
    %615 = vector.broadcast %cst_237 : f32 to vector<8x128xf32>
    %616 = arith.mulf %615, %614 : vector<8x128xf32>
    %617 = arith.select %8, %614, %616 : vector<8x128xi1>, vector<8x128xf32>
    %618 = math.tanh %617 : vector<8x128xf32>
    %cst_238 = arith.constant 5.000000e-01 : f32
    %619 = vector.broadcast %cst_238 : f32 to vector<8x128xf32>
    %620 = arith.mulf %619, %618 : vector<8x128xf32>
    %cst_239 = arith.constant 5.000000e-01 : f32
    %621 = vector.broadcast %cst_239 : f32 to vector<8x128xf32>
    %622 = arith.addf %620, %621 : vector<8x128xf32>
    %623 = arith.select %8, %618, %622 : vector<8x128xi1>, vector<8x128xf32>
    %624 = vector.extract_strided_slice %623 {offsets = [0, 0], sizes = [8, 32], strides = [1, 1]} : vector<8x128xf32> to vector<8x32xf32>
    %625 = vector.extract_strided_slice %623 {offsets = [0, 32], sizes = [8, 32], strides = [1, 1]} : vector<8x128xf32> to vector<8x32xf32>
    %626 = vector.extract_strided_slice %623 {offsets = [0, 64], sizes = [8, 32], strides = [1, 1]} : vector<8x128xf32> to vector<8x32xf32>
    %627 = vector.extract_strided_slice %623 {offsets = [0, 96], sizes = [8, 32], strides = [1, 1]} : vector<8x128xf32> to vector<8x32xf32>
    %628 = arith.mulf %626, %585 : vector<8x32xf32>
    %629 = arith.mulf %624, %625 : vector<8x32xf32>
    %630 = arith.addf %628, %629 : vector<8x32xf32>
    %631 = math.tanh %630 : vector<8x32xf32>
    %632 = arith.mulf %627, %631 : vector<8x32xf32>
    %633 = arith.index_cast %c13_i32 : i32 to index
    %c0_240 = arith.constant 0 : index
    %c0_241 = arith.constant 0 : index
    %634 = vector.load %arg5[%633, %c0_240, %c0_241] : memref<24x8x32xf32, #tpu.memory_space<vmem>>, vector<1x8x32xf32>
    %635 = vector.shape_cast %634 : vector<1x8x32xf32> to vector<8x32xf32>
    %636 = vector.shape_cast %632 : vector<8x32xf32> to vector<1x8x32xf32>
    tpu.vector_store %arg5[%633, %c0_240, %c0_241], %636 {strides = array<i32>} : memref<24x8x32xf32, #tpu.memory_space<vmem>>, vector<1x8x32xf32>,
    %637 = arith.index_cast %c13_i32 : i32 to index
    %c0_242 = arith.constant 0 : index
    %c0_243 = arith.constant 0 : index
    %638 = vector.load %arg6[%637, %c0_242, %c0_243] : memref<24x8x32xf32, #tpu.memory_space<vmem>>, vector<1x8x32xf32>
    %639 = vector.shape_cast %638 : vector<1x8x32xf32> to vector<8x32xf32>
    %640 = vector.shape_cast %630 : vector<8x32xf32> to vector<1x8x32xf32>
    tpu.vector_store %arg6[%637, %c0_242, %c0_243], %640 {strides = array<i32>} : memref<24x8x32xf32, #tpu.memory_space<vmem>>, vector<1x8x32xf32>,
    %c14_i32 = arith.constant 14 : i32
    %cst_244 = arith.constant dense<0.000000e+00> : vector<8x128xf32>
    %641 = tpu.matmul %632, %2, %cst_244 {dimension_numbers = #tpu.dot_dimension_numbers<[1], [0], [0], [1], [0, 0, 1, 1], [], []>} : vector<8x32xf32>, vector<32x128xf32>, vector<8x128xf32> -> vector<8x128xf32>
    %642 = arith.index_cast %c14_i32 : i32 to index
    %c0_245 = arith.constant 0 : index
    %c0_246 = arith.constant 0 : index
    %643 = vector.load %arg0[%642, %c0_245, %c0_246] : memref<24x8x32xf32, #tpu.memory_space<vmem>>, vector<1x8x32xf32>
    %644 = vector.shape_cast %643 : vector<1x8x32xf32> to vector<8x32xf32>
    %cst_247 = arith.constant dense<0.000000e+00> : vector<8x32xf32>
    %645 = tpu.matmul %632, %0, %cst_247 {dimension_numbers = #tpu.dot_dimension_numbers<[1], [0], [0], [1], [0, 0, 1, 1], [], []>} : vector<8x32xf32>, vector<32x32xf32>, vector<8x32xf32> -> vector<8x32xf32>
    %646 = arith.addf %644, %645 : vector<8x32xf32>
    %cst_248 = arith.constant 5.000000e-01 : f32
    %647 = vector.broadcast %cst_248 : f32 to vector<8x32xf32>
    %648 = arith.mulf %647, %646 : vector<8x32xf32>
    %649 = math.tanh %648 : vector<8x32xf32>
    %cst_249 = arith.constant 5.000000e-01 : f32
    %650 = vector.broadcast %cst_249 : f32 to vector<8x32xf32>
    %651 = arith.mulf %650, %649 : vector<8x32xf32>
    %cst_250 = arith.constant 5.000000e-01 : f32
    %652 = vector.broadcast %cst_250 : f32 to vector<8x32xf32>
    %653 = arith.addf %651, %652 : vector<8x32xf32>
    %654 = arith.index_cast %c14_i32 : i32 to index
    %c0_251 = arith.constant 0 : index
    %c0_252 = arith.constant 0 : index
    %655 = vector.load %arg1[%654, %c0_251, %c0_252] : memref<24x8x128xf32, #tpu.memory_space<vmem>>, vector<1x8x128xf32>
    %656 = vector.shape_cast %655 : vector<1x8x128xf32> to vector<8x128xf32>
    %657 = arith.addf %656, %641 : vector<8x128xf32>
    %cst_253 = arith.constant dense<0.000000e+00> : vector<8x128xf32>
    %658 = tpu.matmul %653, %1, %cst_253 {dimension_numbers = #tpu.dot_dimension_numbers<[1], [0], [0], [1], [0, 0, 1, 1], [], []>} : vector<8x32xf32>, vector<32x128xf32>, vector<8x128xf32> -> vector<8x128xf32>
    %659 = arith.addf %657, %658 : vector<8x128xf32>
    %cst_254 = arith.constant 5.000000e-01 : f32
    %660 = vector.broadcast %cst_254 : f32 to vector<8x128xf32>
    %661 = arith.mulf %660, %659 : vector<8x128xf32>
    %662 = arith.select %8, %659, %661 : vector<8x128xi1>, vector<8x128xf32>
    %663 = math.tanh %662 : vector<8x128xf32>
    %cst_255 = arith.constant 5.000000e-01 : f32
    %664 = vector.broadcast %cst_255 : f32 to vector<8x128xf32>
    %665 = arith.mulf %664, %663 : vector<8x128xf32>
    %cst_256 = arith.constant 5.000000e-01 : f32
    %666 = vector.broadcast %cst_256 : f32 to vector<8x128xf32>
    %667 = arith.addf %665, %666 : vector<8x128xf32>
    %668 = arith.select %8, %663, %667 : vector<8x128xi1>, vector<8x128xf32>
    %669 = vector.extract_strided_slice %668 {offsets = [0, 0], sizes = [8, 32], strides = [1, 1]} : vector<8x128xf32> to vector<8x32xf32>
    %670 = vector.extract_strided_slice %668 {offsets = [0, 32], sizes = [8, 32], strides = [1, 1]} : vector<8x128xf32> to vector<8x32xf32>
    %671 = vector.extract_strided_slice %668 {offsets = [0, 64], sizes = [8, 32], strides = [1, 1]} : vector<8x128xf32> to vector<8x32xf32>
    %672 = vector.extract_strided_slice %668 {offsets = [0, 96], sizes = [8, 32], strides = [1, 1]} : vector<8x128xf32> to vector<8x32xf32>
    %673 = arith.mulf %671, %630 : vector<8x32xf32>
    %674 = arith.mulf %669, %670 : vector<8x32xf32>
    %675 = arith.addf %673, %674 : vector<8x32xf32>
    %676 = math.tanh %675 : vector<8x32xf32>
    %677 = arith.mulf %672, %676 : vector<8x32xf32>
    %678 = arith.index_cast %c14_i32 : i32 to index
    %c0_257 = arith.constant 0 : index
    %c0_258 = arith.constant 0 : index
    %679 = vector.load %arg5[%678, %c0_257, %c0_258] : memref<24x8x32xf32, #tpu.memory_space<vmem>>, vector<1x8x32xf32>
    %680 = vector.shape_cast %679 : vector<1x8x32xf32> to vector<8x32xf32>
    %681 = vector.shape_cast %677 : vector<8x32xf32> to vector<1x8x32xf32>
    tpu.vector_store %arg5[%678, %c0_257, %c0_258], %681 {strides = array<i32>} : memref<24x8x32xf32, #tpu.memory_space<vmem>>, vector<1x8x32xf32>,
    %682 = arith.index_cast %c14_i32 : i32 to index
    %c0_259 = arith.constant 0 : index
    %c0_260 = arith.constant 0 : index
    %683 = vector.load %arg6[%682, %c0_259, %c0_260] : memref<24x8x32xf32, #tpu.memory_space<vmem>>, vector<1x8x32xf32>
    %684 = vector.shape_cast %683 : vector<1x8x32xf32> to vector<8x32xf32>
    %685 = vector.shape_cast %675 : vector<8x32xf32> to vector<1x8x32xf32>
    tpu.vector_store %arg6[%682, %c0_259, %c0_260], %685 {strides = array<i32>} : memref<24x8x32xf32, #tpu.memory_space<vmem>>, vector<1x8x32xf32>,
    %c15_i32 = arith.constant 15 : i32
    %cst_261 = arith.constant dense<0.000000e+00> : vector<8x128xf32>
    %686 = tpu.matmul %677, %2, %cst_261 {dimension_numbers = #tpu.dot_dimension_numbers<[1], [0], [0], [1], [0, 0, 1, 1], [], []>} : vector<8x32xf32>, vector<32x128xf32>, vector<8x128xf32> -> vector<8x128xf32>
    %687 = arith.index_cast %c15_i32 : i32 to index
    %c0_262 = arith.constant 0 : index
    %c0_263 = arith.constant 0 : index
    %688 = vector.load %arg0[%687, %c0_262, %c0_263] : memref<24x8x32xf32, #tpu.memory_space<vmem>>, vector<1x8x32xf32>
    %689 = vector.shape_cast %688 : vector<1x8x32xf32> to vector<8x32xf32>
    %cst_264 = arith.constant dense<0.000000e+00> : vector<8x32xf32>
    %690 = tpu.matmul %677, %0, %cst_264 {dimension_numbers = #tpu.dot_dimension_numbers<[1], [0], [0], [1], [0, 0, 1, 1], [], []>} : vector<8x32xf32>, vector<32x32xf32>, vector<8x32xf32> -> vector<8x32xf32>
    %691 = arith.addf %689, %690 : vector<8x32xf32>
    %cst_265 = arith.constant 5.000000e-01 : f32
    %692 = vector.broadcast %cst_265 : f32 to vector<8x32xf32>
    %693 = arith.mulf %692, %691 : vector<8x32xf32>
    %694 = math.tanh %693 : vector<8x32xf32>
    %cst_266 = arith.constant 5.000000e-01 : f32
    %695 = vector.broadcast %cst_266 : f32 to vector<8x32xf32>
    %696 = arith.mulf %695, %694 : vector<8x32xf32>
    %cst_267 = arith.constant 5.000000e-01 : f32
    %697 = vector.broadcast %cst_267 : f32 to vector<8x32xf32>
    %698 = arith.addf %696, %697 : vector<8x32xf32>
    %699 = arith.index_cast %c15_i32 : i32 to index
    %c0_268 = arith.constant 0 : index
    %c0_269 = arith.constant 0 : index
    %700 = vector.load %arg1[%699, %c0_268, %c0_269] : memref<24x8x128xf32, #tpu.memory_space<vmem>>, vector<1x8x128xf32>
    %701 = vector.shape_cast %700 : vector<1x8x128xf32> to vector<8x128xf32>
    %702 = arith.addf %701, %686 : vector<8x128xf32>
    %cst_270 = arith.constant dense<0.000000e+00> : vector<8x128xf32>
    %703 = tpu.matmul %698, %1, %cst_270 {dimension_numbers = #tpu.dot_dimension_numbers<[1], [0], [0], [1], [0, 0, 1, 1], [], []>} : vector<8x32xf32>, vector<32x128xf32>, vector<8x128xf32> -> vector<8x128xf32>
    %704 = arith.addf %702, %703 : vector<8x128xf32>
    %cst_271 = arith.constant 5.000000e-01 : f32
    %705 = vector.broadcast %cst_271 : f32 to vector<8x128xf32>
    %706 = arith.mulf %705, %704 : vector<8x128xf32>
    %707 = arith.select %8, %704, %706 : vector<8x128xi1>, vector<8x128xf32>
    %708 = math.tanh %707 : vector<8x128xf32>
    %cst_272 = arith.constant 5.000000e-01 : f32
    %709 = vector.broadcast %cst_272 : f32 to vector<8x128xf32>
    %710 = arith.mulf %709, %708 : vector<8x128xf32>
    %cst_273 = arith.constant 5.000000e-01 : f32
    %711 = vector.broadcast %cst_273 : f32 to vector<8x128xf32>
    %712 = arith.addf %710, %711 : vector<8x128xf32>
    %713 = arith.select %8, %708, %712 : vector<8x128xi1>, vector<8x128xf32>
    %714 = vector.extract_strided_slice %713 {offsets = [0, 0], sizes = [8, 32], strides = [1, 1]} : vector<8x128xf32> to vector<8x32xf32>
    %715 = vector.extract_strided_slice %713 {offsets = [0, 32], sizes = [8, 32], strides = [1, 1]} : vector<8x128xf32> to vector<8x32xf32>
    %716 = vector.extract_strided_slice %713 {offsets = [0, 64], sizes = [8, 32], strides = [1, 1]} : vector<8x128xf32> to vector<8x32xf32>
    %717 = vector.extract_strided_slice %713 {offsets = [0, 96], sizes = [8, 32], strides = [1, 1]} : vector<8x128xf32> to vector<8x32xf32>
    %718 = arith.mulf %716, %675 : vector<8x32xf32>
    %719 = arith.mulf %714, %715 : vector<8x32xf32>
    %720 = arith.addf %718, %719 : vector<8x32xf32>
    %721 = math.tanh %720 : vector<8x32xf32>
    %722 = arith.mulf %717, %721 : vector<8x32xf32>
    %723 = arith.index_cast %c15_i32 : i32 to index
    %c0_274 = arith.constant 0 : index
    %c0_275 = arith.constant 0 : index
    %724 = vector.load %arg5[%723, %c0_274, %c0_275] : memref<24x8x32xf32, #tpu.memory_space<vmem>>, vector<1x8x32xf32>
    %725 = vector.shape_cast %724 : vector<1x8x32xf32> to vector<8x32xf32>
    %726 = vector.shape_cast %722 : vector<8x32xf32> to vector<1x8x32xf32>
    tpu.vector_store %arg5[%723, %c0_274, %c0_275], %726 {strides = array<i32>} : memref<24x8x32xf32, #tpu.memory_space<vmem>>, vector<1x8x32xf32>,
    %727 = arith.index_cast %c15_i32 : i32 to index
    %c0_276 = arith.constant 0 : index
    %c0_277 = arith.constant 0 : index
    %728 = vector.load %arg6[%727, %c0_276, %c0_277] : memref<24x8x32xf32, #tpu.memory_space<vmem>>, vector<1x8x32xf32>
    %729 = vector.shape_cast %728 : vector<1x8x32xf32> to vector<8x32xf32>
    %730 = vector.shape_cast %720 : vector<8x32xf32> to vector<1x8x32xf32>
    tpu.vector_store %arg6[%727, %c0_276, %c0_277], %730 {strides = array<i32>} : memref<24x8x32xf32, #tpu.memory_space<vmem>>, vector<1x8x32xf32>,
    %c16_i32 = arith.constant 16 : i32
    %cst_278 = arith.constant dense<0.000000e+00> : vector<8x128xf32>
    %731 = tpu.matmul %722, %2, %cst_278 {dimension_numbers = #tpu.dot_dimension_numbers<[1], [0], [0], [1], [0, 0, 1, 1], [], []>} : vector<8x32xf32>, vector<32x128xf32>, vector<8x128xf32> -> vector<8x128xf32>
    %732 = arith.index_cast %c16_i32 : i32 to index
    %c0_279 = arith.constant 0 : index
    %c0_280 = arith.constant 0 : index
    %733 = vector.load %arg0[%732, %c0_279, %c0_280] : memref<24x8x32xf32, #tpu.memory_space<vmem>>, vector<1x8x32xf32>
    %734 = vector.shape_cast %733 : vector<1x8x32xf32> to vector<8x32xf32>
    %cst_281 = arith.constant dense<0.000000e+00> : vector<8x32xf32>
    %735 = tpu.matmul %722, %0, %cst_281 {dimension_numbers = #tpu.dot_dimension_numbers<[1], [0], [0], [1], [0, 0, 1, 1], [], []>} : vector<8x32xf32>, vector<32x32xf32>, vector<8x32xf32> -> vector<8x32xf32>
    %736 = arith.addf %734, %735 : vector<8x32xf32>
    %cst_282 = arith.constant 5.000000e-01 : f32
    %737 = vector.broadcast %cst_282 : f32 to vector<8x32xf32>
    %738 = arith.mulf %737, %736 : vector<8x32xf32>
    %739 = math.tanh %738 : vector<8x32xf32>
    %cst_283 = arith.constant 5.000000e-01 : f32
    %740 = vector.broadcast %cst_283 : f32 to vector<8x32xf32>
    %741 = arith.mulf %740, %739 : vector<8x32xf32>
    %cst_284 = arith.constant 5.000000e-01 : f32
    %742 = vector.broadcast %cst_284 : f32 to vector<8x32xf32>
    %743 = arith.addf %741, %742 : vector<8x32xf32>
    %744 = arith.index_cast %c16_i32 : i32 to index
    %c0_285 = arith.constant 0 : index
    %c0_286 = arith.constant 0 : index
    %745 = vector.load %arg1[%744, %c0_285, %c0_286] : memref<24x8x128xf32, #tpu.memory_space<vmem>>, vector<1x8x128xf32>
    %746 = vector.shape_cast %745 : vector<1x8x128xf32> to vector<8x128xf32>
    %747 = arith.addf %746, %731 : vector<8x128xf32>
    %cst_287 = arith.constant dense<0.000000e+00> : vector<8x128xf32>
    %748 = tpu.matmul %743, %1, %cst_287 {dimension_numbers = #tpu.dot_dimension_numbers<[1], [0], [0], [1], [0, 0, 1, 1], [], []>} : vector<8x32xf32>, vector<32x128xf32>, vector<8x128xf32> -> vector<8x128xf32>
    %749 = arith.addf %747, %748 : vector<8x128xf32>
    %cst_288 = arith.constant 5.000000e-01 : f32
    %750 = vector.broadcast %cst_288 : f32 to vector<8x128xf32>
    %751 = arith.mulf %750, %749 : vector<8x128xf32>
    %752 = arith.select %8, %749, %751 : vector<8x128xi1>, vector<8x128xf32>
    %753 = math.tanh %752 : vector<8x128xf32>
    %cst_289 = arith.constant 5.000000e-01 : f32
    %754 = vector.broadcast %cst_289 : f32 to vector<8x128xf32>
    %755 = arith.mulf %754, %753 : vector<8x128xf32>
    %cst_290 = arith.constant 5.000000e-01 : f32
    %756 = vector.broadcast %cst_290 : f32 to vector<8x128xf32>
    %757 = arith.addf %755, %756 : vector<8x128xf32>
    %758 = arith.select %8, %753, %757 : vector<8x128xi1>, vector<8x128xf32>
    %759 = vector.extract_strided_slice %758 {offsets = [0, 0], sizes = [8, 32], strides = [1, 1]} : vector<8x128xf32> to vector<8x32xf32>
    %760 = vector.extract_strided_slice %758 {offsets = [0, 32], sizes = [8, 32], strides = [1, 1]} : vector<8x128xf32> to vector<8x32xf32>
    %761 = vector.extract_strided_slice %758 {offsets = [0, 64], sizes = [8, 32], strides = [1, 1]} : vector<8x128xf32> to vector<8x32xf32>
    %762 = vector.extract_strided_slice %758 {offsets = [0, 96], sizes = [8, 32], strides = [1, 1]} : vector<8x128xf32> to vector<8x32xf32>
    %763 = arith.mulf %761, %720 : vector<8x32xf32>
    %764 = arith.mulf %759, %760 : vector<8x32xf32>
    %765 = arith.addf %763, %764 : vector<8x32xf32>
    %766 = math.tanh %765 : vector<8x32xf32>
    %767 = arith.mulf %762, %766 : vector<8x32xf32>
    %768 = arith.index_cast %c16_i32 : i32 to index
    %c0_291 = arith.constant 0 : index
    %c0_292 = arith.constant 0 : index
    %769 = vector.load %arg5[%768, %c0_291, %c0_292] : memref<24x8x32xf32, #tpu.memory_space<vmem>>, vector<1x8x32xf32>
    %770 = vector.shape_cast %769 : vector<1x8x32xf32> to vector<8x32xf32>
    %771 = vector.shape_cast %767 : vector<8x32xf32> to vector<1x8x32xf32>
    tpu.vector_store %arg5[%768, %c0_291, %c0_292], %771 {strides = array<i32>} : memref<24x8x32xf32, #tpu.memory_space<vmem>>, vector<1x8x32xf32>,
    %772 = arith.index_cast %c16_i32 : i32 to index
    %c0_293 = arith.constant 0 : index
    %c0_294 = arith.constant 0 : index
    %773 = vector.load %arg6[%772, %c0_293, %c0_294] : memref<24x8x32xf32, #tpu.memory_space<vmem>>, vector<1x8x32xf32>
    %774 = vector.shape_cast %773 : vector<1x8x32xf32> to vector<8x32xf32>
    %775 = vector.shape_cast %765 : vector<8x32xf32> to vector<1x8x32xf32>
    tpu.vector_store %arg6[%772, %c0_293, %c0_294], %775 {strides = array<i32>} : memref<24x8x32xf32, #tpu.memory_space<vmem>>, vector<1x8x32xf32>,
    %c17_i32 = arith.constant 17 : i32
    %cst_295 = arith.constant dense<0.000000e+00> : vector<8x128xf32>
    %776 = tpu.matmul %767, %2, %cst_295 {dimension_numbers = #tpu.dot_dimension_numbers<[1], [0], [0], [1], [0, 0, 1, 1], [], []>} : vector<8x32xf32>, vector<32x128xf32>, vector<8x128xf32> -> vector<8x128xf32>
    %777 = arith.index_cast %c17_i32 : i32 to index
    %c0_296 = arith.constant 0 : index
    %c0_297 = arith.constant 0 : index
    %778 = vector.load %arg0[%777, %c0_296, %c0_297] : memref<24x8x32xf32, #tpu.memory_space<vmem>>, vector<1x8x32xf32>
    %779 = vector.shape_cast %778 : vector<1x8x32xf32> to vector<8x32xf32>
    %cst_298 = arith.constant dense<0.000000e+00> : vector<8x32xf32>
    %780 = tpu.matmul %767, %0, %cst_298 {dimension_numbers = #tpu.dot_dimension_numbers<[1], [0], [0], [1], [0, 0, 1, 1], [], []>} : vector<8x32xf32>, vector<32x32xf32>, vector<8x32xf32> -> vector<8x32xf32>
    %781 = arith.addf %779, %780 : vector<8x32xf32>
    %cst_299 = arith.constant 5.000000e-01 : f32
    %782 = vector.broadcast %cst_299 : f32 to vector<8x32xf32>
    %783 = arith.mulf %782, %781 : vector<8x32xf32>
    %784 = math.tanh %783 : vector<8x32xf32>
    %cst_300 = arith.constant 5.000000e-01 : f32
    %785 = vector.broadcast %cst_300 : f32 to vector<8x32xf32>
    %786 = arith.mulf %785, %784 : vector<8x32xf32>
    %cst_301 = arith.constant 5.000000e-01 : f32
    %787 = vector.broadcast %cst_301 : f32 to vector<8x32xf32>
    %788 = arith.addf %786, %787 : vector<8x32xf32>
    %789 = arith.index_cast %c17_i32 : i32 to index
    %c0_302 = arith.constant 0 : index
    %c0_303 = arith.constant 0 : index
    %790 = vector.load %arg1[%789, %c0_302, %c0_303] : memref<24x8x128xf32, #tpu.memory_space<vmem>>, vector<1x8x128xf32>
    %791 = vector.shape_cast %790 : vector<1x8x128xf32> to vector<8x128xf32>
    %792 = arith.addf %791, %776 : vector<8x128xf32>
    %cst_304 = arith.constant dense<0.000000e+00> : vector<8x128xf32>
    %793 = tpu.matmul %788, %1, %cst_304 {dimension_numbers = #tpu.dot_dimension_numbers<[1], [0], [0], [1], [0, 0, 1, 1], [], []>} : vector<8x32xf32>, vector<32x128xf32>, vector<8x128xf32> -> vector<8x128xf32>
    %794 = arith.addf %792, %793 : vector<8x128xf32>
    %cst_305 = arith.constant 5.000000e-01 : f32
    %795 = vector.broadcast %cst_305 : f32 to vector<8x128xf32>
    %796 = arith.mulf %795, %794 : vector<8x128xf32>
    %797 = arith.select %8, %794, %796 : vector<8x128xi1>, vector<8x128xf32>
    %798 = math.tanh %797 : vector<8x128xf32>
    %cst_306 = arith.constant 5.000000e-01 : f32
    %799 = vector.broadcast %cst_306 : f32 to vector<8x128xf32>
    %800 = arith.mulf %799, %798 : vector<8x128xf32>
    %cst_307 = arith.constant 5.000000e-01 : f32
    %801 = vector.broadcast %cst_307 : f32 to vector<8x128xf32>
    %802 = arith.addf %800, %801 : vector<8x128xf32>
    %803 = arith.select %8, %798, %802 : vector<8x128xi1>, vector<8x128xf32>
    %804 = vector.extract_strided_slice %803 {offsets = [0, 0], sizes = [8, 32], strides = [1, 1]} : vector<8x128xf32> to vector<8x32xf32>
    %805 = vector.extract_strided_slice %803 {offsets = [0, 32], sizes = [8, 32], strides = [1, 1]} : vector<8x128xf32> to vector<8x32xf32>
    %806 = vector.extract_strided_slice %803 {offsets = [0, 64], sizes = [8, 32], strides = [1, 1]} : vector<8x128xf32> to vector<8x32xf32>
    %807 = vector.extract_strided_slice %803 {offsets = [0, 96], sizes = [8, 32], strides = [1, 1]} : vector<8x128xf32> to vector<8x32xf32>
    %808 = arith.mulf %806, %765 : vector<8x32xf32>
    %809 = arith.mulf %804, %805 : vector<8x32xf32>
    %810 = arith.addf %808, %809 : vector<8x32xf32>
    %811 = math.tanh %810 : vector<8x32xf32>
    %812 = arith.mulf %807, %811 : vector<8x32xf32>
    %813 = arith.index_cast %c17_i32 : i32 to index
    %c0_308 = arith.constant 0 : index
    %c0_309 = arith.constant 0 : index
    %814 = vector.load %arg5[%813, %c0_308, %c0_309] : memref<24x8x32xf32, #tpu.memory_space<vmem>>, vector<1x8x32xf32>
    %815 = vector.shape_cast %814 : vector<1x8x32xf32> to vector<8x32xf32>
    %816 = vector.shape_cast %812 : vector<8x32xf32> to vector<1x8x32xf32>
    tpu.vector_store %arg5[%813, %c0_308, %c0_309], %816 {strides = array<i32>} : memref<24x8x32xf32, #tpu.memory_space<vmem>>, vector<1x8x32xf32>,
    %817 = arith.index_cast %c17_i32 : i32 to index
    %c0_310 = arith.constant 0 : index
    %c0_311 = arith.constant 0 : index
    %818 = vector.load %arg6[%817, %c0_310, %c0_311] : memref<24x8x32xf32, #tpu.memory_space<vmem>>, vector<1x8x32xf32>
    %819 = vector.shape_cast %818 : vector<1x8x32xf32> to vector<8x32xf32>
    %820 = vector.shape_cast %810 : vector<8x32xf32> to vector<1x8x32xf32>
    tpu.vector_store %arg6[%817, %c0_310, %c0_311], %820 {strides = array<i32>} : memref<24x8x32xf32, #tpu.memory_space<vmem>>, vector<1x8x32xf32>,
    %c18_i32 = arith.constant 18 : i32
    %cst_312 = arith.constant dense<0.000000e+00> : vector<8x128xf32>
    %821 = tpu.matmul %812, %2, %cst_312 {dimension_numbers = #tpu.dot_dimension_numbers<[1], [0], [0], [1], [0, 0, 1, 1], [], []>} : vector<8x32xf32>, vector<32x128xf32>, vector<8x128xf32> -> vector<8x128xf32>
    %822 = arith.index_cast %c18_i32 : i32 to index
    %c0_313 = arith.constant 0 : index
    %c0_314 = arith.constant 0 : index
    %823 = vector.load %arg0[%822, %c0_313, %c0_314] : memref<24x8x32xf32, #tpu.memory_space<vmem>>, vector<1x8x32xf32>
    %824 = vector.shape_cast %823 : vector<1x8x32xf32> to vector<8x32xf32>
    %cst_315 = arith.constant dense<0.000000e+00> : vector<8x32xf32>
    %825 = tpu.matmul %812, %0, %cst_315 {dimension_numbers = #tpu.dot_dimension_numbers<[1], [0], [0], [1], [0, 0, 1, 1], [], []>} : vector<8x32xf32>, vector<32x32xf32>, vector<8x32xf32> -> vector<8x32xf32>
    %826 = arith.addf %824, %825 : vector<8x32xf32>
    %cst_316 = arith.constant 5.000000e-01 : f32
    %827 = vector.broadcast %cst_316 : f32 to vector<8x32xf32>
    %828 = arith.mulf %827, %826 : vector<8x32xf32>
    %829 = math.tanh %828 : vector<8x32xf32>
    %cst_317 = arith.constant 5.000000e-01 : f32
    %830 = vector.broadcast %cst_317 : f32 to vector<8x32xf32>
    %831 = arith.mulf %830, %829 : vector<8x32xf32>
    %cst_318 = arith.constant 5.000000e-01 : f32
    %832 = vector.broadcast %cst_318 : f32 to vector<8x32xf32>
    %833 = arith.addf %831, %832 : vector<8x32xf32>
    %834 = arith.index_cast %c18_i32 : i32 to index
    %c0_319 = arith.constant 0 : index
    %c0_320 = arith.constant 0 : index
    %835 = vector.load %arg1[%834, %c0_319, %c0_320] : memref<24x8x128xf32, #tpu.memory_space<vmem>>, vector<1x8x128xf32>
    %836 = vector.shape_cast %835 : vector<1x8x128xf32> to vector<8x128xf32>
    %837 = arith.addf %836, %821 : vector<8x128xf32>
    %cst_321 = arith.constant dense<0.000000e+00> : vector<8x128xf32>
    %838 = tpu.matmul %833, %1, %cst_321 {dimension_numbers = #tpu.dot_dimension_numbers<[1], [0], [0], [1], [0, 0, 1, 1], [], []>} : vector<8x32xf32>, vector<32x128xf32>, vector<8x128xf32> -> vector<8x128xf32>
    %839 = arith.addf %837, %838 : vector<8x128xf32>
    %cst_322 = arith.constant 5.000000e-01 : f32
    %840 = vector.broadcast %cst_322 : f32 to vector<8x128xf32>
    %841 = arith.mulf %840, %839 : vector<8x128xf32>
    %842 = arith.select %8, %839, %841 : vector<8x128xi1>, vector<8x128xf32>
    %843 = math.tanh %842 : vector<8x128xf32>
    %cst_323 = arith.constant 5.000000e-01 : f32
    %844 = vector.broadcast %cst_323 : f32 to vector<8x128xf32>
    %845 = arith.mulf %844, %843 : vector<8x128xf32>
    %cst_324 = arith.constant 5.000000e-01 : f32
    %846 = vector.broadcast %cst_324 : f32 to vector<8x128xf32>
    %847 = arith.addf %845, %846 : vector<8x128xf32>
    %848 = arith.select %8, %843, %847 : vector<8x128xi1>, vector<8x128xf32>
    %849 = vector.extract_strided_slice %848 {offsets = [0, 0], sizes = [8, 32], strides = [1, 1]} : vector<8x128xf32> to vector<8x32xf32>
    %850 = vector.extract_strided_slice %848 {offsets = [0, 32], sizes = [8, 32], strides = [1, 1]} : vector<8x128xf32> to vector<8x32xf32>
    %851 = vector.extract_strided_slice %848 {offsets = [0, 64], sizes = [8, 32], strides = [1, 1]} : vector<8x128xf32> to vector<8x32xf32>
    %852 = vector.extract_strided_slice %848 {offsets = [0, 96], sizes = [8, 32], strides = [1, 1]} : vector<8x128xf32> to vector<8x32xf32>
    %853 = arith.mulf %851, %810 : vector<8x32xf32>
    %854 = arith.mulf %849, %850 : vector<8x32xf32>
    %855 = arith.addf %853, %854 : vector<8x32xf32>
    %856 = math.tanh %855 : vector<8x32xf32>
    %857 = arith.mulf %852, %856 : vector<8x32xf32>
    %858 = arith.index_cast %c18_i32 : i32 to index
    %c0_325 = arith.constant 0 : index
    %c0_326 = arith.constant 0 : index
    %859 = vector.load %arg5[%858, %c0_325, %c0_326] : memref<24x8x32xf32, #tpu.memory_space<vmem>>, vector<1x8x32xf32>
    %860 = vector.shape_cast %859 : vector<1x8x32xf32> to vector<8x32xf32>
    %861 = vector.shape_cast %857 : vector<8x32xf32> to vector<1x8x32xf32>
    tpu.vector_store %arg5[%858, %c0_325, %c0_326], %861 {strides = array<i32>} : memref<24x8x32xf32, #tpu.memory_space<vmem>>, vector<1x8x32xf32>,
    %862 = arith.index_cast %c18_i32 : i32 to index
    %c0_327 = arith.constant 0 : index
    %c0_328 = arith.constant 0 : index
    %863 = vector.load %arg6[%862, %c0_327, %c0_328] : memref<24x8x32xf32, #tpu.memory_space<vmem>>, vector<1x8x32xf32>
    %864 = vector.shape_cast %863 : vector<1x8x32xf32> to vector<8x32xf32>
    %865 = vector.shape_cast %855 : vector<8x32xf32> to vector<1x8x32xf32>
    tpu.vector_store %arg6[%862, %c0_327, %c0_328], %865 {strides = array<i32>} : memref<24x8x32xf32, #tpu.memory_space<vmem>>, vector<1x8x32xf32>,
    %c19_i32 = arith.constant 19 : i32
    %cst_329 = arith.constant dense<0.000000e+00> : vector<8x128xf32>
    %866 = tpu.matmul %857, %2, %cst_329 {dimension_numbers = #tpu.dot_dimension_numbers<[1], [0], [0], [1], [0, 0, 1, 1], [], []>} : vector<8x32xf32>, vector<32x128xf32>, vector<8x128xf32> -> vector<8x128xf32>
    %867 = arith.index_cast %c19_i32 : i32 to index
    %c0_330 = arith.constant 0 : index
    %c0_331 = arith.constant 0 : index
    %868 = vector.load %arg0[%867, %c0_330, %c0_331] : memref<24x8x32xf32, #tpu.memory_space<vmem>>, vector<1x8x32xf32>
    %869 = vector.shape_cast %868 : vector<1x8x32xf32> to vector<8x32xf32>
    %cst_332 = arith.constant dense<0.000000e+00> : vector<8x32xf32>
    %870 = tpu.matmul %857, %0, %cst_332 {dimension_numbers = #tpu.dot_dimension_numbers<[1], [0], [0], [1], [0, 0, 1, 1], [], []>} : vector<8x32xf32>, vector<32x32xf32>, vector<8x32xf32> -> vector<8x32xf32>
    %871 = arith.addf %869, %870 : vector<8x32xf32>
    %cst_333 = arith.constant 5.000000e-01 : f32
    %872 = vector.broadcast %cst_333 : f32 to vector<8x32xf32>
    %873 = arith.mulf %872, %871 : vector<8x32xf32>
    %874 = math.tanh %873 : vector<8x32xf32>
    %cst_334 = arith.constant 5.000000e-01 : f32
    %875 = vector.broadcast %cst_334 : f32 to vector<8x32xf32>
    %876 = arith.mulf %875, %874 : vector<8x32xf32>
    %cst_335 = arith.constant 5.000000e-01 : f32
    %877 = vector.broadcast %cst_335 : f32 to vector<8x32xf32>
    %878 = arith.addf %876, %877 : vector<8x32xf32>
    %879 = arith.index_cast %c19_i32 : i32 to index
    %c0_336 = arith.constant 0 : index
    %c0_337 = arith.constant 0 : index
    %880 = vector.load %arg1[%879, %c0_336, %c0_337] : memref<24x8x128xf32, #tpu.memory_space<vmem>>, vector<1x8x128xf32>
    %881 = vector.shape_cast %880 : vector<1x8x128xf32> to vector<8x128xf32>
    %882 = arith.addf %881, %866 : vector<8x128xf32>
    %cst_338 = arith.constant dense<0.000000e+00> : vector<8x128xf32>
    %883 = tpu.matmul %878, %1, %cst_338 {dimension_numbers = #tpu.dot_dimension_numbers<[1], [0], [0], [1], [0, 0, 1, 1], [], []>} : vector<8x32xf32>, vector<32x128xf32>, vector<8x128xf32> -> vector<8x128xf32>
    %884 = arith.addf %882, %883 : vector<8x128xf32>
    %cst_339 = arith.constant 5.000000e-01 : f32
    %885 = vector.broadcast %cst_339 : f32 to vector<8x128xf32>
    %886 = arith.mulf %885, %884 : vector<8x128xf32>
    %887 = arith.select %8, %884, %886 : vector<8x128xi1>, vector<8x128xf32>
    %888 = math.tanh %887 : vector<8x128xf32>
    %cst_340 = arith.constant 5.000000e-01 : f32
    %889 = vector.broadcast %cst_340 : f32 to vector<8x128xf32>
    %890 = arith.mulf %889, %888 : vector<8x128xf32>
    %cst_341 = arith.constant 5.000000e-01 : f32
    %891 = vector.broadcast %cst_341 : f32 to vector<8x128xf32>
    %892 = arith.addf %890, %891 : vector<8x128xf32>
    %893 = arith.select %8, %888, %892 : vector<8x128xi1>, vector<8x128xf32>
    %894 = vector.extract_strided_slice %893 {offsets = [0, 0], sizes = [8, 32], strides = [1, 1]} : vector<8x128xf32> to vector<8x32xf32>
    %895 = vector.extract_strided_slice %893 {offsets = [0, 32], sizes = [8, 32], strides = [1, 1]} : vector<8x128xf32> to vector<8x32xf32>
    %896 = vector.extract_strided_slice %893 {offsets = [0, 64], sizes = [8, 32], strides = [1, 1]} : vector<8x128xf32> to vector<8x32xf32>
    %897 = vector.extract_strided_slice %893 {offsets = [0, 96], sizes = [8, 32], strides = [1, 1]} : vector<8x128xf32> to vector<8x32xf32>
    %898 = arith.mulf %896, %855 : vector<8x32xf32>
    %899 = arith.mulf %894, %895 : vector<8x32xf32>
    %900 = arith.addf %898, %899 : vector<8x32xf32>
    %901 = math.tanh %900 : vector<8x32xf32>
    %902 = arith.mulf %897, %901 : vector<8x32xf32>
    %903 = arith.index_cast %c19_i32 : i32 to index
    %c0_342 = arith.constant 0 : index
    %c0_343 = arith.constant 0 : index
    %904 = vector.load %arg5[%903, %c0_342, %c0_343] : memref<24x8x32xf32, #tpu.memory_space<vmem>>, vector<1x8x32xf32>
    %905 = vector.shape_cast %904 : vector<1x8x32xf32> to vector<8x32xf32>
    %906 = vector.shape_cast %902 : vector<8x32xf32> to vector<1x8x32xf32>
    tpu.vector_store %arg5[%903, %c0_342, %c0_343], %906 {strides = array<i32>} : memref<24x8x32xf32, #tpu.memory_space<vmem>>, vector<1x8x32xf32>,
    %907 = arith.index_cast %c19_i32 : i32 to index
    %c0_344 = arith.constant 0 : index
    %c0_345 = arith.constant 0 : index
    %908 = vector.load %arg6[%907, %c0_344, %c0_345] : memref<24x8x32xf32, #tpu.memory_space<vmem>>, vector<1x8x32xf32>
    %909 = vector.shape_cast %908 : vector<1x8x32xf32> to vector<8x32xf32>
    %910 = vector.shape_cast %900 : vector<8x32xf32> to vector<1x8x32xf32>
    tpu.vector_store %arg6[%907, %c0_344, %c0_345], %910 {strides = array<i32>} : memref<24x8x32xf32, #tpu.memory_space<vmem>>, vector<1x8x32xf32>,
    %c20_i32 = arith.constant 20 : i32
    %cst_346 = arith.constant dense<0.000000e+00> : vector<8x128xf32>
    %911 = tpu.matmul %902, %2, %cst_346 {dimension_numbers = #tpu.dot_dimension_numbers<[1], [0], [0], [1], [0, 0, 1, 1], [], []>} : vector<8x32xf32>, vector<32x128xf32>, vector<8x128xf32> -> vector<8x128xf32>
    %912 = arith.index_cast %c20_i32 : i32 to index
    %c0_347 = arith.constant 0 : index
    %c0_348 = arith.constant 0 : index
    %913 = vector.load %arg0[%912, %c0_347, %c0_348] : memref<24x8x32xf32, #tpu.memory_space<vmem>>, vector<1x8x32xf32>
    %914 = vector.shape_cast %913 : vector<1x8x32xf32> to vector<8x32xf32>
    %cst_349 = arith.constant dense<0.000000e+00> : vector<8x32xf32>
    %915 = tpu.matmul %902, %0, %cst_349 {dimension_numbers = #tpu.dot_dimension_numbers<[1], [0], [0], [1], [0, 0, 1, 1], [], []>} : vector<8x32xf32>, vector<32x32xf32>, vector<8x32xf32> -> vector<8x32xf32>
    %916 = arith.addf %914, %915 : vector<8x32xf32>
    %cst_350 = arith.constant 5.000000e-01 : f32
    %917 = vector.broadcast %cst_350 : f32 to vector<8x32xf32>
    %918 = arith.mulf %917, %916 : vector<8x32xf32>
    %919 = math.tanh %918 : vector<8x32xf32>
    %cst_351 = arith.constant 5.000000e-01 : f32
    %920 = vector.broadcast %cst_351 : f32 to vector<8x32xf32>
    %921 = arith.mulf %920, %919 : vector<8x32xf32>
    %cst_352 = arith.constant 5.000000e-01 : f32
    %922 = vector.broadcast %cst_352 : f32 to vector<8x32xf32>
    %923 = arith.addf %921, %922 : vector<8x32xf32>
    %924 = arith.index_cast %c20_i32 : i32 to index
    %c0_353 = arith.constant 0 : index
    %c0_354 = arith.constant 0 : index
    %925 = vector.load %arg1[%924, %c0_353, %c0_354] : memref<24x8x128xf32, #tpu.memory_space<vmem>>, vector<1x8x128xf32>
    %926 = vector.shape_cast %925 : vector<1x8x128xf32> to vector<8x128xf32>
    %927 = arith.addf %926, %911 : vector<8x128xf32>
    %cst_355 = arith.constant dense<0.000000e+00> : vector<8x128xf32>
    %928 = tpu.matmul %923, %1, %cst_355 {dimension_numbers = #tpu.dot_dimension_numbers<[1], [0], [0], [1], [0, 0, 1, 1], [], []>} : vector<8x32xf32>, vector<32x128xf32>, vector<8x128xf32> -> vector<8x128xf32>
    %929 = arith.addf %927, %928 : vector<8x128xf32>
    %cst_356 = arith.constant 5.000000e-01 : f32
    %930 = vector.broadcast %cst_356 : f32 to vector<8x128xf32>
    %931 = arith.mulf %930, %929 : vector<8x128xf32>
    %932 = arith.select %8, %929, %931 : vector<8x128xi1>, vector<8x128xf32>
    %933 = math.tanh %932 : vector<8x128xf32>
    %cst_357 = arith.constant 5.000000e-01 : f32
    %934 = vector.broadcast %cst_357 : f32 to vector<8x128xf32>
    %935 = arith.mulf %934, %933 : vector<8x128xf32>
    %cst_358 = arith.constant 5.000000e-01 : f32
    %936 = vector.broadcast %cst_358 : f32 to vector<8x128xf32>
    %937 = arith.addf %935, %936 : vector<8x128xf32>
    %938 = arith.select %8, %933, %937 : vector<8x128xi1>, vector<8x128xf32>
    %939 = vector.extract_strided_slice %938 {offsets = [0, 0], sizes = [8, 32], strides = [1, 1]} : vector<8x128xf32> to vector<8x32xf32>
    %940 = vector.extract_strided_slice %938 {offsets = [0, 32], sizes = [8, 32], strides = [1, 1]} : vector<8x128xf32> to vector<8x32xf32>
    %941 = vector.extract_strided_slice %938 {offsets = [0, 64], sizes = [8, 32], strides = [1, 1]} : vector<8x128xf32> to vector<8x32xf32>
    %942 = vector.extract_strided_slice %938 {offsets = [0, 96], sizes = [8, 32], strides = [1, 1]} : vector<8x128xf32> to vector<8x32xf32>
    %943 = arith.mulf %941, %900 : vector<8x32xf32>
    %944 = arith.mulf %939, %940 : vector<8x32xf32>
    %945 = arith.addf %943, %944 : vector<8x32xf32>
    %946 = math.tanh %945 : vector<8x32xf32>
    %947 = arith.mulf %942, %946 : vector<8x32xf32>
    %948 = arith.index_cast %c20_i32 : i32 to index
    %c0_359 = arith.constant 0 : index
    %c0_360 = arith.constant 0 : index
    %949 = vector.load %arg5[%948, %c0_359, %c0_360] : memref<24x8x32xf32, #tpu.memory_space<vmem>>, vector<1x8x32xf32>
    %950 = vector.shape_cast %949 : vector<1x8x32xf32> to vector<8x32xf32>
    %951 = vector.shape_cast %947 : vector<8x32xf32> to vector<1x8x32xf32>
    tpu.vector_store %arg5[%948, %c0_359, %c0_360], %951 {strides = array<i32>} : memref<24x8x32xf32, #tpu.memory_space<vmem>>, vector<1x8x32xf32>,
    %952 = arith.index_cast %c20_i32 : i32 to index
    %c0_361 = arith.constant 0 : index
    %c0_362 = arith.constant 0 : index
    %953 = vector.load %arg6[%952, %c0_361, %c0_362] : memref<24x8x32xf32, #tpu.memory_space<vmem>>, vector<1x8x32xf32>
    %954 = vector.shape_cast %953 : vector<1x8x32xf32> to vector<8x32xf32>
    %955 = vector.shape_cast %945 : vector<8x32xf32> to vector<1x8x32xf32>
    tpu.vector_store %arg6[%952, %c0_361, %c0_362], %955 {strides = array<i32>} : memref<24x8x32xf32, #tpu.memory_space<vmem>>, vector<1x8x32xf32>,
    %c21_i32 = arith.constant 21 : i32
    %cst_363 = arith.constant dense<0.000000e+00> : vector<8x128xf32>
    %956 = tpu.matmul %947, %2, %cst_363 {dimension_numbers = #tpu.dot_dimension_numbers<[1], [0], [0], [1], [0, 0, 1, 1], [], []>} : vector<8x32xf32>, vector<32x128xf32>, vector<8x128xf32> -> vector<8x128xf32>
    %957 = arith.index_cast %c21_i32 : i32 to index
    %c0_364 = arith.constant 0 : index
    %c0_365 = arith.constant 0 : index
    %958 = vector.load %arg0[%957, %c0_364, %c0_365] : memref<24x8x32xf32, #tpu.memory_space<vmem>>, vector<1x8x32xf32>
    %959 = vector.shape_cast %958 : vector<1x8x32xf32> to vector<8x32xf32>
    %cst_366 = arith.constant dense<0.000000e+00> : vector<8x32xf32>
    %960 = tpu.matmul %947, %0, %cst_366 {dimension_numbers = #tpu.dot_dimension_numbers<[1], [0], [0], [1], [0, 0, 1, 1], [], []>} : vector<8x32xf32>, vector<32x32xf32>, vector<8x32xf32> -> vector<8x32xf32>
    %961 = arith.addf %959, %960 : vector<8x32xf32>
    %cst_367 = arith.constant 5.000000e-01 : f32
    %962 = vector.broadcast %cst_367 : f32 to vector<8x32xf32>
    %963 = arith.mulf %962, %961 : vector<8x32xf32>
    %964 = math.tanh %963 : vector<8x32xf32>
    %cst_368 = arith.constant 5.000000e-01 : f32
    %965 = vector.broadcast %cst_368 : f32 to vector<8x32xf32>
    %966 = arith.mulf %965, %964 : vector<8x32xf32>
    %cst_369 = arith.constant 5.000000e-01 : f32
    %967 = vector.broadcast %cst_369 : f32 to vector<8x32xf32>
    %968 = arith.addf %966, %967 : vector<8x32xf32>
    %969 = arith.index_cast %c21_i32 : i32 to index
    %c0_370 = arith.constant 0 : index
    %c0_371 = arith.constant 0 : index
    %970 = vector.load %arg1[%969, %c0_370, %c0_371] : memref<24x8x128xf32, #tpu.memory_space<vmem>>, vector<1x8x128xf32>
    %971 = vector.shape_cast %970 : vector<1x8x128xf32> to vector<8x128xf32>
    %972 = arith.addf %971, %956 : vector<8x128xf32>
    %cst_372 = arith.constant dense<0.000000e+00> : vector<8x128xf32>
    %973 = tpu.matmul %968, %1, %cst_372 {dimension_numbers = #tpu.dot_dimension_numbers<[1], [0], [0], [1], [0, 0, 1, 1], [], []>} : vector<8x32xf32>, vector<32x128xf32>, vector<8x128xf32> -> vector<8x128xf32>
    %974 = arith.addf %972, %973 : vector<8x128xf32>
    %cst_373 = arith.constant 5.000000e-01 : f32
    %975 = vector.broadcast %cst_373 : f32 to vector<8x128xf32>
    %976 = arith.mulf %975, %974 : vector<8x128xf32>
    %977 = arith.select %8, %974, %976 : vector<8x128xi1>, vector<8x128xf32>
    %978 = math.tanh %977 : vector<8x128xf32>
    %cst_374 = arith.constant 5.000000e-01 : f32
    %979 = vector.broadcast %cst_374 : f32 to vector<8x128xf32>
    %980 = arith.mulf %979, %978 : vector<8x128xf32>
    %cst_375 = arith.constant 5.000000e-01 : f32
    %981 = vector.broadcast %cst_375 : f32 to vector<8x128xf32>
    %982 = arith.addf %980, %981 : vector<8x128xf32>
    %983 = arith.select %8, %978, %982 : vector<8x128xi1>, vector<8x128xf32>
    %984 = vector.extract_strided_slice %983 {offsets = [0, 0], sizes = [8, 32], strides = [1, 1]} : vector<8x128xf32> to vector<8x32xf32>
    %985 = vector.extract_strided_slice %983 {offsets = [0, 32], sizes = [8, 32], strides = [1, 1]} : vector<8x128xf32> to vector<8x32xf32>
    %986 = vector.extract_strided_slice %983 {offsets = [0, 64], sizes = [8, 32], strides = [1, 1]} : vector<8x128xf32> to vector<8x32xf32>
    %987 = vector.extract_strided_slice %983 {offsets = [0, 96], sizes = [8, 32], strides = [1, 1]} : vector<8x128xf32> to vector<8x32xf32>
    %988 = arith.mulf %986, %945 : vector<8x32xf32>
    %989 = arith.mulf %984, %985 : vector<8x32xf32>
    %990 = arith.addf %988, %989 : vector<8x32xf32>
    %991 = math.tanh %990 : vector<8x32xf32>
    %992 = arith.mulf %987, %991 : vector<8x32xf32>
    %993 = arith.index_cast %c21_i32 : i32 to index
    %c0_376 = arith.constant 0 : index
    %c0_377 = arith.constant 0 : index
    %994 = vector.load %arg5[%993, %c0_376, %c0_377] : memref<24x8x32xf32, #tpu.memory_space<vmem>>, vector<1x8x32xf32>
    %995 = vector.shape_cast %994 : vector<1x8x32xf32> to vector<8x32xf32>
    %996 = vector.shape_cast %992 : vector<8x32xf32> to vector<1x8x32xf32>
    tpu.vector_store %arg5[%993, %c0_376, %c0_377], %996 {strides = array<i32>} : memref<24x8x32xf32, #tpu.memory_space<vmem>>, vector<1x8x32xf32>,
    %997 = arith.index_cast %c21_i32 : i32 to index
    %c0_378 = arith.constant 0 : index
    %c0_379 = arith.constant 0 : index
    %998 = vector.load %arg6[%997, %c0_378, %c0_379] : memref<24x8x32xf32, #tpu.memory_space<vmem>>, vector<1x8x32xf32>
    %999 = vector.shape_cast %998 : vector<1x8x32xf32> to vector<8x32xf32>
    %1000 = vector.shape_cast %990 : vector<8x32xf32> to vector<1x8x32xf32>
    tpu.vector_store %arg6[%997, %c0_378, %c0_379], %1000 {strides = array<i32>} : memref<24x8x32xf32, #tpu.memory_space<vmem>>, vector<1x8x32xf32>,
    %c22_i32 = arith.constant 22 : i32
    %cst_380 = arith.constant dense<0.000000e+00> : vector<8x128xf32>
    %1001 = tpu.matmul %992, %2, %cst_380 {dimension_numbers = #tpu.dot_dimension_numbers<[1], [0], [0], [1], [0, 0, 1, 1], [], []>} : vector<8x32xf32>, vector<32x128xf32>, vector<8x128xf32> -> vector<8x128xf32>
    %1002 = arith.index_cast %c22_i32 : i32 to index
    %c0_381 = arith.constant 0 : index
    %c0_382 = arith.constant 0 : index
    %1003 = vector.load %arg0[%1002, %c0_381, %c0_382] : memref<24x8x32xf32, #tpu.memory_space<vmem>>, vector<1x8x32xf32>
    %1004 = vector.shape_cast %1003 : vector<1x8x32xf32> to vector<8x32xf32>
    %cst_383 = arith.constant dense<0.000000e+00> : vector<8x32xf32>
    %1005 = tpu.matmul %992, %0, %cst_383 {dimension_numbers = #tpu.dot_dimension_numbers<[1], [0], [0], [1], [0, 0, 1, 1], [], []>} : vector<8x32xf32>, vector<32x32xf32>, vector<8x32xf32> -> vector<8x32xf32>
    %1006 = arith.addf %1004, %1005 : vector<8x32xf32>
    %cst_384 = arith.constant 5.000000e-01 : f32
    %1007 = vector.broadcast %cst_384 : f32 to vector<8x32xf32>
    %1008 = arith.mulf %1007, %1006 : vector<8x32xf32>
    %1009 = math.tanh %1008 : vector<8x32xf32>
    %cst_385 = arith.constant 5.000000e-01 : f32
    %1010 = vector.broadcast %cst_385 : f32 to vector<8x32xf32>
    %1011 = arith.mulf %1010, %1009 : vector<8x32xf32>
    %cst_386 = arith.constant 5.000000e-01 : f32
    %1012 = vector.broadcast %cst_386 : f32 to vector<8x32xf32>
    %1013 = arith.addf %1011, %1012 : vector<8x32xf32>
    %1014 = arith.index_cast %c22_i32 : i32 to index
    %c0_387 = arith.constant 0 : index
    %c0_388 = arith.constant 0 : index
    %1015 = vector.load %arg1[%1014, %c0_387, %c0_388] : memref<24x8x128xf32, #tpu.memory_space<vmem>>, vector<1x8x128xf32>
    %1016 = vector.shape_cast %1015 : vector<1x8x128xf32> to vector<8x128xf32>
    %1017 = arith.addf %1016, %1001 : vector<8x128xf32>
    %cst_389 = arith.constant dense<0.000000e+00> : vector<8x128xf32>
    %1018 = tpu.matmul %1013, %1, %cst_389 {dimension_numbers = #tpu.dot_dimension_numbers<[1], [0], [0], [1], [0, 0, 1, 1], [], []>} : vector<8x32xf32>, vector<32x128xf32>, vector<8x128xf32> -> vector<8x128xf32>
    %1019 = arith.addf %1017, %1018 : vector<8x128xf32>
    %cst_390 = arith.constant 5.000000e-01 : f32
    %1020 = vector.broadcast %cst_390 : f32 to vector<8x128xf32>
    %1021 = arith.mulf %1020, %1019 : vector<8x128xf32>
    %1022 = arith.select %8, %1019, %1021 : vector<8x128xi1>, vector<8x128xf32>
    %1023 = math.tanh %1022 : vector<8x128xf32>
    %cst_391 = arith.constant 5.000000e-01 : f32
    %1024 = vector.broadcast %cst_391 : f32 to vector<8x128xf32>
    %1025 = arith.mulf %1024, %1023 : vector<8x128xf32>
    %cst_392 = arith.constant 5.000000e-01 : f32
    %1026 = vector.broadcast %cst_392 : f32 to vector<8x128xf32>
    %1027 = arith.addf %1025, %1026 : vector<8x128xf32>
    %1028 = arith.select %8, %1023, %1027 : vector<8x128xi1>, vector<8x128xf32>
    %1029 = vector.extract_strided_slice %1028 {offsets = [0, 0], sizes = [8, 32], strides = [1, 1]} : vector<8x128xf32> to vector<8x32xf32>
    %1030 = vector.extract_strided_slice %1028 {offsets = [0, 32], sizes = [8, 32], strides = [1, 1]} : vector<8x128xf32> to vector<8x32xf32>
    %1031 = vector.extract_strided_slice %1028 {offsets = [0, 64], sizes = [8, 32], strides = [1, 1]} : vector<8x128xf32> to vector<8x32xf32>
    %1032 = vector.extract_strided_slice %1028 {offsets = [0, 96], sizes = [8, 32], strides = [1, 1]} : vector<8x128xf32> to vector<8x32xf32>
    %1033 = arith.mulf %1031, %990 : vector<8x32xf32>
    %1034 = arith.mulf %1029, %1030 : vector<8x32xf32>
    %1035 = arith.addf %1033, %1034 : vector<8x32xf32>
    %1036 = math.tanh %1035 : vector<8x32xf32>
    %1037 = arith.mulf %1032, %1036 : vector<8x32xf32>
    %1038 = arith.index_cast %c22_i32 : i32 to index
    %c0_393 = arith.constant 0 : index
    %c0_394 = arith.constant 0 : index
    %1039 = vector.load %arg5[%1038, %c0_393, %c0_394] : memref<24x8x32xf32, #tpu.memory_space<vmem>>, vector<1x8x32xf32>
    %1040 = vector.shape_cast %1039 : vector<1x8x32xf32> to vector<8x32xf32>
    %1041 = vector.shape_cast %1037 : vector<8x32xf32> to vector<1x8x32xf32>
    tpu.vector_store %arg5[%1038, %c0_393, %c0_394], %1041 {strides = array<i32>} : memref<24x8x32xf32, #tpu.memory_space<vmem>>, vector<1x8x32xf32>,
    %1042 = arith.index_cast %c22_i32 : i32 to index
    %c0_395 = arith.constant 0 : index
    %c0_396 = arith.constant 0 : index
    %1043 = vector.load %arg6[%1042, %c0_395, %c0_396] : memref<24x8x32xf32, #tpu.memory_space<vmem>>, vector<1x8x32xf32>
    %1044 = vector.shape_cast %1043 : vector<1x8x32xf32> to vector<8x32xf32>
    %1045 = vector.shape_cast %1035 : vector<8x32xf32> to vector<1x8x32xf32>
    tpu.vector_store %arg6[%1042, %c0_395, %c0_396], %1045 {strides = array<i32>} : memref<24x8x32xf32, #tpu.memory_space<vmem>>, vector<1x8x32xf32>,
    %c23_i32 = arith.constant 23 : i32
    %cst_397 = arith.constant dense<0.000000e+00> : vector<8x128xf32>
    %1046 = tpu.matmul %1037, %2, %cst_397 {dimension_numbers = #tpu.dot_dimension_numbers<[1], [0], [0], [1], [0, 0, 1, 1], [], []>} : vector<8x32xf32>, vector<32x128xf32>, vector<8x128xf32> -> vector<8x128xf32>
    %1047 = arith.index_cast %c23_i32 : i32 to index
    %c0_398 = arith.constant 0 : index
    %c0_399 = arith.constant 0 : index
    %1048 = vector.load %arg0[%1047, %c0_398, %c0_399] : memref<24x8x32xf32, #tpu.memory_space<vmem>>, vector<1x8x32xf32>
    %1049 = vector.shape_cast %1048 : vector<1x8x32xf32> to vector<8x32xf32>
    %cst_400 = arith.constant dense<0.000000e+00> : vector<8x32xf32>
    %1050 = tpu.matmul %1037, %0, %cst_400 {dimension_numbers = #tpu.dot_dimension_numbers<[1], [0], [0], [1], [0, 0, 1, 1], [], []>} : vector<8x32xf32>, vector<32x32xf32>, vector<8x32xf32> -> vector<8x32xf32>
    %1051 = arith.addf %1049, %1050 : vector<8x32xf32>
    %cst_401 = arith.constant 5.000000e-01 : f32
    %1052 = vector.broadcast %cst_401 : f32 to vector<8x32xf32>
    %1053 = arith.mulf %1052, %1051 : vector<8x32xf32>
    %1054 = math.tanh %1053 : vector<8x32xf32>
    %cst_402 = arith.constant 5.000000e-01 : f32
    %1055 = vector.broadcast %cst_402 : f32 to vector<8x32xf32>
    %1056 = arith.mulf %1055, %1054 : vector<8x32xf32>
    %cst_403 = arith.constant 5.000000e-01 : f32
    %1057 = vector.broadcast %cst_403 : f32 to vector<8x32xf32>
    %1058 = arith.addf %1056, %1057 : vector<8x32xf32>
    %1059 = arith.index_cast %c23_i32 : i32 to index
    %c0_404 = arith.constant 0 : index
    %c0_405 = arith.constant 0 : index
    %1060 = vector.load %arg1[%1059, %c0_404, %c0_405] : memref<24x8x128xf32, #tpu.memory_space<vmem>>, vector<1x8x128xf32>
    %1061 = vector.shape_cast %1060 : vector<1x8x128xf32> to vector<8x128xf32>
    %1062 = arith.addf %1061, %1046 : vector<8x128xf32>
    %cst_406 = arith.constant dense<0.000000e+00> : vector<8x128xf32>
    %1063 = tpu.matmul %1058, %1, %cst_406 {dimension_numbers = #tpu.dot_dimension_numbers<[1], [0], [0], [1], [0, 0, 1, 1], [], []>} : vector<8x32xf32>, vector<32x128xf32>, vector<8x128xf32> -> vector<8x128xf32>
    %1064 = arith.addf %1062, %1063 : vector<8x128xf32>
    %cst_407 = arith.constant 5.000000e-01 : f32
    %1065 = vector.broadcast %cst_407 : f32 to vector<8x128xf32>
    %1066 = arith.mulf %1065, %1064 : vector<8x128xf32>
    %1067 = arith.select %8, %1064, %1066 : vector<8x128xi1>, vector<8x128xf32>
    %1068 = math.tanh %1067 : vector<8x128xf32>
    %cst_408 = arith.constant 5.000000e-01 : f32
    %1069 = vector.broadcast %cst_408 : f32 to vector<8x128xf32>
    %1070 = arith.mulf %1069, %1068 : vector<8x128xf32>
    %cst_409 = arith.constant 5.000000e-01 : f32
    %1071 = vector.broadcast %cst_409 : f32 to vector<8x128xf32>
    %1072 = arith.addf %1070, %1071 : vector<8x128xf32>
    %1073 = arith.select %8, %1068, %1072 : vector<8x128xi1>, vector<8x128xf32>
    %1074 = vector.extract_strided_slice %1073 {offsets = [0, 0], sizes = [8, 32], strides = [1, 1]} : vector<8x128xf32> to vector<8x32xf32>
    %1075 = vector.extract_strided_slice %1073 {offsets = [0, 32], sizes = [8, 32], strides = [1, 1]} : vector<8x128xf32> to vector<8x32xf32>
    %1076 = vector.extract_strided_slice %1073 {offsets = [0, 64], sizes = [8, 32], strides = [1, 1]} : vector<8x128xf32> to vector<8x32xf32>
    %1077 = vector.extract_strided_slice %1073 {offsets = [0, 96], sizes = [8, 32], strides = [1, 1]} : vector<8x128xf32> to vector<8x32xf32>
    %1078 = arith.mulf %1076, %1035 : vector<8x32xf32>
    %1079 = arith.mulf %1074, %1075 : vector<8x32xf32>
    %1080 = arith.addf %1078, %1079 : vector<8x32xf32>
    %1081 = math.tanh %1080 : vector<8x32xf32>
    %1082 = arith.mulf %1077, %1081 : vector<8x32xf32>
    %1083 = arith.index_cast %c23_i32 : i32 to index
    %c0_410 = arith.constant 0 : index
    %c0_411 = arith.constant 0 : index
    %1084 = vector.load %arg5[%1083, %c0_410, %c0_411] : memref<24x8x32xf32, #tpu.memory_space<vmem>>, vector<1x8x32xf32>
    %1085 = vector.shape_cast %1084 : vector<1x8x32xf32> to vector<8x32xf32>
    %1086 = vector.shape_cast %1082 : vector<8x32xf32> to vector<1x8x32xf32>
    tpu.vector_store %arg5[%1083, %c0_410, %c0_411], %1086 {strides = array<i32>} : memref<24x8x32xf32, #tpu.memory_space<vmem>>, vector<1x8x32xf32>,
    %1087 = arith.index_cast %c23_i32 : i32 to index
    %c0_412 = arith.constant 0 : index
    %c0_413 = arith.constant 0 : index
    %1088 = vector.load %arg6[%1087, %c0_412, %c0_413] : memref<24x8x32xf32, #tpu.memory_space<vmem>>, vector<1x8x32xf32>
    %1089 = vector.shape_cast %1088 : vector<1x8x32xf32> to vector<8x32xf32>
    %1090 = vector.shape_cast %1080 : vector<8x32xf32> to vector<1x8x32xf32>
    tpu.vector_store %arg6[%1087, %c0_412, %c0_413], %1090 {strides = array<i32>} : memref<24x8x32xf32, #tpu.memory_space<vmem>>, vector<1x8x32xf32>,
    %c24_i32 = arith.constant 24 : i32
    return
  }
}

</mosaic_0001>

<llo_original>
// kernel: pew_lstm_forward.1
$region0: #{pew_lstm_forward.1}
  #allocation0 [shape = 'u32[]', space=smem, size = 0x4, offset = 0x4, fixed_abs, tag = 'smem constant byte address 0x4 - core index']
  #allocation1 [shape = 'u32[144,128]{1,0:T(1,128)}', space=vmem, size = 0x12000, scoped, tag = 'internal scratch']
  %s0 = inlined_call_operand.vmem [shape: f32[24,8,32], index: 0, kind: input, shape index: {}]
  %s1 = inlined_call_operand.vmem [shape: f32[24,8,128], index: 1, kind: input, shape index: {}]
  %s2 = inlined_call_operand.vmem [shape: f32[32,32], index: 2, kind: input, shape index: {}]
  %s3 = inlined_call_operand.vmem [shape: f32[32,128], index: 3, kind: input, shape index: {}]
  %s4 = inlined_call_operand.vmem [shape: f32[32,128], index: 4, kind: input, shape index: {}]
  %s5 = inlined_call_operand.vmem [shape: f32[24,8,32], index: 5, kind: output, shape index: {0}]
  %s6 = inlined_call_operand.vmem [shape: f32[24,8,32], index: 6, kind: output, shape index: {1}]
  %7 = xla_tuple %s5, %s6
  %s8 = sld [smem:[#allocation0]]
  $region38: #{pew_lstm_forward.1} parent=0
    _
  %s10 = ssub.s32 1, %s8
  %s11 = scalar_select 0, %s10, %s8
  // Predicated region
  $region2: #{pew_lstm_forward.1} parent=0 // pred_check
    _
  $region3: #{pew_lstm_forward.1} parent=0 // pred_check_branch
    %13 = sbr.rel (0) target = $region5
  $region4: #{pew_lstm_forward.1} parent=0 // pred_region
    _
  $region5: #{pew_lstm_forward.1} parent=0 // pred_fallthru
    _
  // Predicated region
  $region6: #{pew_lstm_forward.1} parent=0 // pred_check
    _
  $region7: #{pew_lstm_forward.1} parent=0 // pred_check_branch
    %15 = sbr.rel (0) target = $region9
  $region8: #{pew_lstm_forward.1} parent=0 // pred_region
    _
  $region9: #{pew_lstm_forward.1} parent=0 // pred_fallthru
    _
  // Predicated region
  $region10: #{pew_lstm_forward.1} parent=0 // pred_check
    _
  $region11: #{pew_lstm_forward.1} parent=0 // pred_check_branch
    %17 = sbr.rel (0) target = $region13
  $region12: #{pew_lstm_forward.1} parent=0 // pred_region
    _
  $region13: #{pew_lstm_forward.1} parent=0 // pred_fallthru
    _
  // Predicated region
  $region14: #{pew_lstm_forward.1} parent=0 // pred_check
    _
  $region15: #{pew_lstm_forward.1} parent=0 // pred_check_branch
    %19 = sbr.rel (0) target = $region17
  $region16: #{pew_lstm_forward.1} parent=0 // pred_region
    _
  $region17: #{pew_lstm_forward.1} parent=0 // pred_fallthru
    _
  // Predicated region
  $region18: #{pew_lstm_forward.1} parent=0 // pred_check
    _
  $region19: #{pew_lstm_forward.1} parent=0 // pred_check_branch
    %21 = sbr.rel (0) target = $region21
  $region20: #{pew_lstm_forward.1} parent=0 // pred_region
    _
  $region21: #{pew_lstm_forward.1} parent=0 // pred_fallthru
    _
  %v22 = vld [vmem:[%s2] sm:$0xff]
  %v23 = vld [vmem:[%s2 + $0x8] sm:$0xff]
  %v24 = vld [vmem:[%s2 + $0x10] sm:$0xff]
  %v25 = vld [vmem:[%s2 + $0x18] sm:$0xff]
  %v26 = vld [vmem:[%s3] sm:$0xff]
  %v27 = vld [vmem:[%s3 + $0x8] sm:$0xff]
  %v28 = vld [vmem:[%s3 + $0x10] sm:$0xff]
  %v29 = vld [vmem:[%s3 + $0x18] sm:$0xff]
  %v30 = vld [vmem:[%s4] sm:$0xff]
  %v31 = vld [vmem:[%s4 + $0x8] sm:$0xff]
  %v32 = vld [vmem:[%s4 + $0x10] sm:$0xff]
  %v33 = vld [vmem:[%s4 + $0x18] sm:$0xff]
  %v34 = vlaneseq
  %v35 = vand.u32 %v34, 127
  %vm36 = vcmp.ge.s32.totalorder %v35, 32
  %vm37 = vcmp.lt.s32.totalorder %v35, 64
  %vm38 = vmand %vm36, %vm37
  %vm39 = vcmask 261120
  %v41 = vsel %vm39, 0.0, 0
  %43 = vmatprep.subr.mxu0 0.0
  %44 = vmatpush1.msra.mxu0 %v30
  %45 = vmatprep.subr.mxu0 0.0
  %46 = vmatpush1.msra.mxu0 %v31
  %47 = vmatprep.subr.mxu0 0.0
  %48 = vmatpush1.msra.mxu0 %v32
  %49 = vmatprep.subr.mxu0 0.0
  %50 = vmatpush1.msra.mxu0 %v33
  %51 = vmatprep.subr.mxu0 0.0
  %52 = vmatpush1.msra.mxu0 0.0
  %53 = vmatprep.subr.mxu0 0.0
  %54 = vmatpush1.msra.mxu0 0.0
  %55 = vmatprep.subr.mxu0 0.0
  %56 = vmatpush1.msra.mxu0 0.0
  %57 = vmatprep.subr.mxu0 0.0
  %58 = vmatpush1.msra.mxu0 0.0
  %59 = vmatprep.subr.mxu0 0.0
  %60 = vmatpush1.msra.mxu0 0.0
  %61 = vmatprep.subr.mxu0 0.0
  %62 = vmatpush1.msra.mxu0 0.0
  %63 = vmatprep.subr.mxu0 0.0
  %64 = vmatpush1.msra.mxu0 0.0
  %65 = vmatprep.subr.mxu0 0.0
  %66 = vmatpush1.msra.mxu0 0.0
  %67 = vmatprep.subr.mxu0 0.0
  %68 = vmatpush1.msra.mxu0 0.0
  %69 = vmatprep.subr.mxu0 0.0
  %70 = vmatpush1.msra.mxu0 0.0
  %71 = vmatprep.subr.mxu0 0.0
  %72 = vmatpush1.msra.mxu0 0.0
  %73 = vmatprep.subr.mxu0 0.0
  %74 = vmatpush1.msra.mxu0 0.0
  %75 = vmatprep.subr.mxu0 0.0
  %76 = vmatpush1.msra.mxu0 0.0
  %77 = vmatprep.subr.mxu0 0.0
  %78 = vmatpush1.msra.mxu0 0.0
  %79 = vmatprep.subr.mxu0 0.0
  %80 = vmatpush1.msra.mxu0 0.0
  %81 = vmatprep.subr.mxu0 0.0
  %82 = vmatpush1.msra.mxu0 0.0
  %83 = vmatprep.subr.mxu0 0.0
  %84 = vmatpush1.msra.mxu0 0.0
  %85 = vmatprep.subr.mxu0 0.0
  %86 = vmatpush1.msra.mxu0 0.0
  %87 = vmatprep.subr.mxu0 0.0
  %88 = vmatpush1.msra.mxu0 0.0
  %89 = vmatprep.subr.mxu0 0.0
  %90 = vmatpush1.msra.mxu0 0.0
  %91 = vmatprep.subr.mxu0 0.0
  %92 = vmatpush1.msra.mxu0 0.0
  %93 = vmatprep.subr.mxu0 0.0
  %94 = vmatpush1.msra.mxu0 0.0
  %95 = vmatprep.subr.mxu0 0.0
  %96 = vmatpush1.msra.mxu0 0.0
  %97 = vmatprep.subr.mxu0 0.0
  %98 = vmatpush1.msra.mxu0 0.0
  %99 = vmatprep.subr.mxu0 0.0
  %100 = vmatpush1.msra.mxu0 0.0
  %101 = vmatprep.subr.mxu0 0.0
  %102 = vmatpush1.msra.mxu0 0.0
  %103 = vmatprep.subr.mxu0 0.0
  %104 = vmatpush1.msra.mxu0 0.0
  %105 = vmatprep.subr.mxu0 0.0
  %106 = vmatpush1.msra.mxu0 0.0
  %107 = vmatprep.mubr.f32.mxu0 0.0
  %108 = vmatmul.mubr.f32.gmra.mrb[0].mxu0 %v41
  %v109 = vpop.f32.mrb[0].mxu0
  %v110 = vadd.f32 0.0, %v109
  %v111 = vpop.f32.mrb[0].mxu0
  %112 = vdwg.mxu0
  %v113 = vld [vmem:[%s0] sm:$0xff]
  %114 = vmatprep.subr.mxu0 0.0
  %115 = vmatpush1.msra.mxu0 %v22
  %116 = vmatprep.subr.mxu0 0.0
  %117 = vmatpush1.msra.mxu0 %v23
  %118 = vmatprep.subr.mxu0 0.0
  %119 = vmatpush1.msra.mxu0 %v24
  %120 = vmatprep.subr.mxu0 0.0
  %121 = vmatpush1.msra.mxu0 %v25
  %122 = vmatprep.subr.mxu0 0.0
  %123 = vmatpush1.msra.mxu0 0.0
  %124 = vmatprep.subr.mxu0 0.0
  %125 = vmatpush1.msra.mxu0 0.0
  %126 = vmatprep.subr.mxu0 0.0
  %127 = vmatpush1.msra.mxu0 0.0
  %128 = vmatprep.subr.mxu0 0.0
  %129 = vmatpush1.msra.mxu0 0.0
  %130 = vmatprep.subr.mxu0 0.0
  %131 = vmatpush1.msra.mxu0 0.0
  %132 = vmatprep.subr.mxu0 0.0
  %133 = vmatpush1.msra.mxu0 0.0
  %134 = vmatprep.subr.mxu0 0.0
  %135 = vmatpush1.msra.mxu0 0.0
  %136 = vmatprep.subr.mxu0 0.0
  %137 = vmatpush1.msra.mxu0 0.0
  %138 = vmatprep.subr.mxu0 0.0
  %139 = vmatpush1.msra.mxu0 0.0
  %140 = vmatprep.subr.mxu0 0.0
  %141 = vmatpush1.msra.mxu0 0.0
  %142 = vmatprep.subr.mxu0 0.0
  %143 = vmatpush1.msra.mxu0 0.0
  %144 = vmatprep.subr.mxu0 0.0
  %145 = vmatpush1.msra.mxu0 0.0
  %146 = vmatprep.subr.mxu0 0.0
  %147 = vmatpush1.msra.mxu0 0.0
  %148 = vmatprep.subr.mxu0 0.0
  %149 = vmatpush1.msra.mxu0 0.0
  %150 = vmatprep.subr.mxu0 0.0
  %151 = vmatpush1.msra.mxu0 0.0
  %152 = vmatprep.subr.mxu0 0.0
  %153 = vmatpush1.msra.mxu0 0.0
  %154 = vmatprep.subr.mxu0 0.0
  %155 = vmatpush1.msra.mxu0 0.0
  %156 = vmatprep.subr.mxu0 0.0
  %157 = vmatpush1.msra.mxu0 0.0
  %158 = vmatprep.subr.mxu0 0.0
  %159 = vmatpush1.msra.mxu0 0.0
  %160 = vmatprep.subr.mxu0 0.0
  %161 = vmatpush1.msra.mxu0 0.0
  %162 = vmatprep.subr.mxu0 0.0
  %163 = vmatpush1.msra.mxu0 0.0
  %164 = vmatprep.subr.mxu0 0.0
  %165 = vmatpush1.msra.mxu0 0.0
  %166 = vmatprep.subr.mxu0 0.0
  %167 = vmatpush1.msra.mxu0 0.0
  %168 = vmatprep.subr.mxu0 0.0
  %169 = vmatpush1.msra.mxu0 0.0
  %170 = vmatprep.subr.mxu0 0.0
  %171 = vmatpush1.msra.mxu0 0.0
  %172 = vmatprep.subr.mxu0 0.0
  %173 = vmatpush1.msra.mxu0 0.0
  %174 = vmatprep.subr.mxu0 0.0
  %175 = vmatpush1.msra.mxu0 0.0
  %176 = vmatprep.subr.mxu0 0.0
  %177 = vmatpush1.msra.mxu0 0.0
  %178 = vmatprep.mubr.f32.mxu0 0.0
  %179 = vmatmul.mubr.f32.gmra.mrb[0].mxu0 %v41
  %v180 = vpop.f32.mrb[0].mxu0
  %v181 = vadd.f32 0.0, %v180
  %v182 = vpop.f32.mrb[0].mxu0
  %183 = vdwg.mxu0
  %v184 = vadd.f32 %v113, %v181
  %v185 = vmul.f32 %v184, 0.5
  %v186 = vtanh.pop %v185
  %v187 = vmul.f32 %v186, 0.5
  %v188 = vadd.f32 %v187, 0.5
  %v189 = vld [vmem:[%s1] sm:$0xff]
  %v190 = vadd.f32 %v189, %v110
  %v192 = vsel %vm39, %v188, 0
  %194 = vmatprep.subr.mxu0 0.0
  %195 = vmatpush1.msra.mxu0 %v26
  %196 = vmatprep.subr.mxu0 0.0
  %197 = vmatpush1.msra.mxu0 %v27
  %198 = vmatprep.subr.mxu0 0.0
  %199 = vmatpush1.msra.mxu0 %v28
  %200 = vmatprep.subr.mxu0 0.0
  %201 = vmatpush1.msra.mxu0 %v29
  %202 = vmatprep.subr.mxu0 0.0
  %203 = vmatpush1.msra.mxu0 0.0
  %204 = vmatprep.subr.mxu0 0.0
  %205 = vmatpush1.msra.mxu0 0.0
  %206 = vmatprep.subr.mxu0 0.0
  %207 = vmatpush1.msra.mxu0 0.0
  %208 = vmatprep.subr.mxu0 0.0
  %209 = vmatpush1.msra.mxu0 0.0
  %210 = vmatprep.subr.mxu0 0.0
  %211 = vmatpush1.msra.mxu0 0.0
  %212 = vmatprep.subr.mxu0 0.0
  %213 = vmatpush1.msra.mxu0 0.0
  %214 = vmatprep.subr.mxu0 0.0
  %215 = vmatpush1.msra.mxu0 0.0
  %216 = vmatprep.subr.mxu0 0.0
  %217 = vmatpush1.msra.mxu0 0.0
  %218 = vmatprep.subr.mxu0 0.0
  %219 = vmatpush1.msra.mxu0 0.0
  %220 = vmatprep.subr.mxu0 0.0
  %221 = vmatpush1.msra.mxu0 0.0
  %222 = vmatprep.subr.mxu0 0.0
  %223 = vmatpush1.msra.mxu0 0.0
  %224 = vmatprep.subr.mxu0 0.0
  %225 = vmatpush1.msra.mxu0 0.0
  %226 = vmatprep.subr.mxu0 0.0
  %227 = vmatpush1.msra.mxu0 0.0
  %228 = vmatprep.subr.mxu0 0.0
  %229 = vmatpush1.msra.mxu0 0.0
  %230 = vmatprep.subr.mxu0 0.0
  %231 = vmatpush1.msra.mxu0 0.0
  %232 = vmatprep.subr.mxu0 0.0
  %233 = vmatpush1.msra.mxu0 0.0
  %234 = vmatprep.subr.mxu0 0.0
  %235 = vmatpush1.msra.mxu0 0.0
  %236 = vmatprep.subr.mxu0 0.0
  %237 = vmatpush1.msra.mxu0 0.0
  %238 = vmatprep.subr.mxu0 0.0
  %239 = vmatpush1.msra.mxu0 0.0
  %240 = vmatprep.subr.mxu0 0.0
  %241 = vmatpush1.msra.mxu0 0.0
  %242 = vmatprep.subr.mxu0 0.0
  %243 = vmatpush1.msra.mxu0 0.0
  %244 = vmatprep.subr.mxu0 0.0
  %245 = vmatpush1.msra.mxu0 0.0
  %246 = vmatprep.subr.mxu0 0.0
  %247 = vmatpush1.msra.mxu0 0.0
  %248 = vmatprep.subr.mxu0 0.0
  %249 = vmatpush1.msra.mxu0 0.0
  %250 = vmatprep.subr.mxu0 0.0
  %251 = vmatpush1.msra.mxu0 0.0
  %252 = vmatprep.subr.mxu0 0.0
  %253 = vmatpush1.msra.mxu0 0.0
  %254 = vmatprep.subr.mxu0 0.0
  %255 = vmatpush1.msra.mxu0 0.0
  %256 = vmatprep.subr.mxu0 0.0
  %257 = vmatpush1.msra.mxu0 0.0
  %258 = vmatprep.mubr.f32.mxu0 0.0
  %259 = vmatmul.mubr.f32.gmra.mrb[0].mxu0 %v192
  %v260 = vpop.f32.mrb[0].mxu0
  %v261 = vadd.f32 0.0, %v260
  %v262 = vpop.f32.mrb[0].mxu0
  %263 = vdwg.mxu0
  %v264 = vadd.f32 %v190, %v261
  %v265 = vmul.f32 %v264, 0.5
  %v266 = vsel %vm38, %v264, %v265
  %v267 = vtanh.pop %v266
  %v268 = vmul.f32 %v267, 0.5
  %v269 = vadd.f32 %v268, 0.5
  %v270 = vsel %vm38, %v267, %v269
  %v271 = vmul.f32 %v270, 0.0
  %273 = vrot.lane.b32.xlu0 %v270, 96
  %v274 = vpop.permute.xlu0 %273
  %v276 = vmul.f32 %v270, %v274
  %278 = vrot.lane.b32.xlu0 %v276, 64
  %v279 = vpop.permute.xlu0 %278
  %v281 = vadd.f32 %v271, %v279
  %v282 = vtanh.pop %v281
  %284 = vrot.lane.b32.xlu0 %v282, 32
  %v285 = vpop.permute.xlu0 %284
  %v287 = vmul.f32 %v270, %v285
  %289 = vrot.lane.b32.xlu0 %v287, 32
  %v290 = vpop.permute.xlu0 %289
  %292 = vst.msk [vmem:[%s5] sm:$0xff] %vm39, %v290
  %294 = vrot.lane.b32.xlu0 %v281, 64
  %v295 = vpop.permute.xlu0 %294
  %297 = vst.msk [vmem:[%s6] sm:$0xff] %vm39, %v295
  %v298 = vsel %vm39, %v290, 0
  %300 = vmatprep.subr.mxu0 0.0
  %301 = vmatpush1.msra.mxu0 %v30
  %302 = vmatprep.subr.mxu0 0.0
  %303 = vmatpush1.msra.mxu0 %v31
  %304 = vmatprep.subr.mxu0 0.0
  %305 = vmatpush1.msra.mxu0 %v32
  %306 = vmatprep.subr.mxu0 0.0
  %307 = vmatpush1.msra.mxu0 %v33
  %308 = vmatprep.subr.mxu0 0.0
  %309 = vmatpush1.msra.mxu0 0.0
  %310 = vmatprep.subr.mxu0 0.0
  %311 = vmatpush1.msra.mxu0 0.0
  %312 = vmatprep.subr.mxu0 0.0
  %313 = vmatpush1.msra.mxu0 0.0
  %314 = vmatprep.subr.mxu0 0.0
  %315 = vmatpush1.msra.mxu0 0.0
  %316 = vmatprep.subr.mxu0 0.0
  %317 = vmatpush1.msra.mxu0 0.0
  %318 = vmatprep.subr.mxu0 0.0
  %319 = vmatpush1.msra.mxu0 0.0
  %320 = vmatprep.subr.mxu0 0.0
  %321 = vmatpush1.msra.mxu0 0.0
  %322 = vmatprep.subr.mxu0 0.0
  %323 = vmatpush1.msra.mxu0 0.0
  %324 = vmatprep.subr.mxu0 0.0
  %325 = vmatpush1.msra.mxu0 0.0
  %326 = vmatprep.subr.mxu0 0.0
  %327 = vmatpush1.msra.mxu0 0.0
  %328 = vmatprep.subr.mxu0 0.0
  %329 = vmatpush1.msra.mxu0 0.0
  %330 = vmatprep.subr.mxu0 0.0
  %331 = vmatpush1.msra.mxu0 0.0
  %332 = vmatprep.subr.mxu0 0.0
  %333 = vmatpush1.msra.mxu0 0.0
  %334 = vmatprep.subr.mxu0 0.0
  %335 = vmatpush1.msra.mxu0 0.0
  %336 = vmatprep.subr.mxu0 0.0
  %337 = vmatpush1.msra.mxu0 0.0
  %338 = vmatprep.subr.mxu0 0.0
  %339 = vmatpush1.msra.mxu0 0.0
  %340 = vmatprep.subr.mxu0 0.0
  %341 = vmatpush1.msra.mxu0 0.0
  %342 = vmatprep.subr.mxu0 0.0
  %343 = vmatpush1.msra.mxu0 0.0
  %344 = vmatprep.subr.mxu0 0.0
  %345 = vmatpush1.msra.mxu0 0.0
  %346 = vmatprep.subr.mxu0 0.0
  %347 = vmatpush1.msra.mxu0 0.0
  %348 = vmatprep.subr.mxu0 0.0
  %349 = vmatpush1.msra.mxu0 0.0
  %350 = vmatprep.subr.mxu0 0.0
  %351 = vmatpush1.msra.mxu0 0.0
  %352 = vmatprep.subr.mxu0 0.0
  %353 = vmatpush1.msra.mxu0 0.0
  %354 = vmatprep.subr.mxu0 0.0
  %355 = vmatpush1.msra.mxu0 0.0
  %356 = vmatprep.subr.mxu0 0.0
  %357 = vmatpush1.msra.mxu0 0.0
  %358 = vmatprep.subr.mxu0 0.0
  %359 = vmatpush1.msra.mxu0 0.0
  %360 = vmatprep.subr.mxu0 0.0
  %361 = vmatpush1.msra.mxu0 0.0
  %362 = vmatprep.subr.mxu0 0.0
  %363 = vmatpush1.msra.mxu0 0.0
  %364 = vmatprep.mubr.f32.mxu0 0.0
  %365 = vmatmul.mubr.f32.gmra.mrb[0].mxu0 %v298
  %v366 = vpop.f32.mrb[0].mxu0
  %v367 = vadd.f32 0.0, %v366
  %v368 = vpop.f32.mrb[0].mxu0
  %369 = vdwg.mxu0
  %s370 = scalar_lea.vmem %s0, 8
  %v371 = vld [vmem:[%s370] sm:$0xff]
  %372 = vmatprep.subr.mxu0 0.0
  %373 = vmatpush1.msra.mxu0 %v22
  %374 = vmatprep.subr.mxu0 0.0
  %375 = vmatpush1.msra.mxu0 %v23
  %376 = vmatprep.subr.mxu0 0.0
  %377 = vmatpush1.msra.mxu0 %v24
  %378 = vmatprep.subr.mxu0 0.0
  %379 = vmatpush1.msra.mxu0 %v25
  %380 = vmatprep.subr.mxu0 0.0
  %381 = vmatpush1.msra.mxu0 0.0
  %382 = vmatprep.subr.mxu0 0.0
  %383 = vmatpush1.msra.mxu0 0.0
  %384 = vmatprep.subr.mxu0 0.0
  %385 = vmatpush1.msra.mxu0 0.0
  %386 = vmatprep.subr.mxu0 0.0
  %387 = vmatpush1.msra.mxu0 0.0
  %388 = vmatprep.subr.mxu0 0.0
  %389 = vmatpush1.msra.mxu0 0.0
  %390 = vmatprep.subr.mxu0 0.0
  %391 = vmatpush1.msra.mxu0 0.0
  %392 = vmatprep.subr.mxu0 0.0
  %393 = vmatpush1.msra.mxu0 0.0
  %394 = vmatprep.subr.mxu0 0.0
  %395 = vmatpush1.msra.mxu0 0.0
  %396 = vmatprep.subr.mxu0 0.0
  %397 = vmatpush1.msra.mxu0 0.0
  %398 = vmatprep.subr.mxu0 0.0
  %399 = vmatpush1.msra.mxu0 0.0
  %400 = vmatprep.subr.mxu0 0.0
  %401 = vmatpush1.msra.mxu0 0.0
  %402 = vmatprep.subr.mxu0 0.0
  %403 = vmatpush1.msra.mxu0 0.0
  %404 = vmatprep.subr.mxu0 0.0
  %405 = vmatpush1.msra.mxu0 0.0
  %406 = vmatprep.subr.mxu0 0.0
  %407 = vmatpush1.msra.mxu0 0.0
  %408 = vmatprep.subr.mxu0 0.0
  %409 = vmatpush1.msra.mxu0 0.0
  %410 = vmatprep.subr.mxu0 0.0
  %411 = vmatpush1.msra.mxu0 0.0
  %412 = vmatprep.subr.mxu0 0.0
  %413 = vmatpush1.msra.mxu0 0.0
  %414 = vmatprep.subr.mxu0 0.0
  %415 = vmatpush1.msra.mxu0 0.0
  %416 = vmatprep.subr.mxu0 0.0
  %417 = vmatpush1.msra.mxu0 0.0
  %418 = vmatprep.subr.mxu0 0.0
  %419 = vmatpush1.msra.mxu0 0.0
  %420 = vmatprep.subr.mxu0 0.0
  %421 = vmatpush1.msra.mxu0 0.0
  %422 = vmatprep.subr.mxu0 0.0
  %423 = vmatpush1.msra.mxu0 0.0
  %424 = vmatprep.subr.mxu0 0.0
  %425 = vmatpush1.msra.mxu0 0.0
  %426 = vmatprep.subr.mxu0 0.0
  %427 = vmatpush1.msra.mxu0 0.0
  %428 = vmatprep.subr.mxu0 0.0
  %429 = vmatpush1.msra.mxu0 0.0
  %430 = vmatprep.subr.mxu0 0.0
  %431 = vmatpush1.msra.mxu0 0.0
  %432 = vmatprep.subr.mxu0 0.0
  %433 = vmatpush1.msra.mxu0 0.0
  %434 = vmatprep.subr.mxu0 0.0
  %435 = vmatpush1.msra.mxu0 0.0
  %436 = vmatprep.mubr.f32.mxu0 0.0
  %437 = vmatmul.mubr.f32.gmra.mrb[0].mxu0 %v298
  %v438 = vpop.f32.mrb[0].mxu0
  %v439 = vadd.f32 0.0, %v438
  %v440 = vpop.f32.mrb[0].mxu0
  %441 = vdwg.mxu0
  %v442 = vadd.f32 %v371, %v439
  %v443 = vmul.f32 %v442, 0.5
  %v444 = vtanh.pop %v443
  %v445 = vmul.f32 %v444, 0.5
  %v446 = vadd.f32 %v445, 0.5
  %s447 = scalar_lea.vmem %s1, 8
  %v448 = vld [vmem:[%s447] sm:$0xff]
  %v449 = vadd.f32 %v448, %v367
  %v451 = vsel %vm39, %v446, 0
  %453 = vmatprep.subr.mxu0 0.0
  %454 = vmatpush1.msra.mxu0 %v26
  %455 = vmatprep.subr.mxu0 0.0
  %456 = vmatpush1.msra.mxu0 %v27
  %457 = vmatprep.subr.mxu0 0.0
  %458 = vmatpush1.msra.mxu0 %v28
  %459 = vmatprep.subr.mxu0 0.0
  %460 = vmatpush1.msra.mxu0 %v29
  %461 = vmatprep.subr.mxu0 0.0
  %462 = vmatpush1.msra.mxu0 0.0
  %463 = vmatprep.subr.mxu0 0.0
  %464 = vmatpush1.msra.mxu0 0.0
  %465 = vmatprep.subr.mxu0 0.0
  %466 = vmatpush1.msra.mxu0 0.0
  %467 = vmatprep.subr.mxu0 0.0
  %468 = vmatpush1.msra.mxu0 0.0
  %469 = vmatprep.subr.mxu0 0.0
  %470 = vmatpush1.msra.mxu0 0.0
  %471 = vmatprep.subr.mxu0 0.0
  %472 = vmatpush1.msra.mxu0 0.0
  %473 = vmatprep.subr.mxu0 0.0
  %474 = vmatpush1.msra.mxu0 0.0
  %475 = vmatprep.subr.mxu0 0.0
  %476 = vmatpush1.msra.mxu0 0.0
  %477 = vmatprep.subr.mxu0 0.0
  %478 = vmatpush1.msra.mxu0 0.0
  %479 = vmatprep.subr.mxu0 0.0
  %480 = vmatpush1.msra.mxu0 0.0
  %481 = vmatprep.subr.mxu0 0.0
  %482 = vmatpush1.msra.mxu0 0.0
  %483 = vmatprep.subr.mxu0 0.0
  %484 = vmatpush1.msra.mxu0 0.0
  %485 = vmatprep.subr.mxu0 0.0
  %486 = vmatpush1.msra.mxu0 0.0
  %487 = vmatprep.subr.mxu0 0.0
  %488 = vmatpush1.msra.mxu0 0.0
  %489 = vmatprep.subr.mxu0 0.0
  %490 = vmatpush1.msra.mxu0 0.0
  %491 = vmatprep.subr.mxu0 0.0
  %492 = vmatpush1.msra.mxu0 0.0
  %493 = vmatprep.subr.mxu0 0.0
  %494 = vmatpush1.msra.mxu0 0.0
  %495 = vmatprep.subr.mxu0 0.0
  %496 = vmatpush1.msra.mxu0 0.0
  %497 = vmatprep.subr.mxu0 0.0
  %498 = vmatpush1.msra.mxu0 0.0
  %499 = vmatprep.subr.mxu0 0.0
  %500 = vmatpush1.msra.mxu0 0.0
  %501 = vmatprep.subr.mxu0 0.0
  %502 = vmatpush1.msra.mxu0 0.0
  %503 = vmatprep.subr.mxu0 0.0
  %504 = vmatpush1.msra.mxu0 0.0
  %505 = vmatprep.subr.mxu0 0.0
  %506 = vmatpush1.msra.mxu0 0.0
  %507 = vmatprep.subr.mxu0 0.0
  %508 = vmatpush1.msra.mxu0 0.0
  %509 = vmatprep.subr.mxu0 0.0
  %510 = vmatpush1.msra.mxu0 0.0
  %511 = vmatprep.subr.mxu0 0.0
  %512 = vmatpush1.msra.mxu0 0.0
  %513 = vmatprep.subr.mxu0 0.0
  %514 = vmatpush1.msra.mxu0 0.0
  %515 = vmatprep.subr.mxu0 0.0
  %516 = vmatpush1.msra.mxu0 0.0
  %517 = vmatprep.mubr.f32.mxu0 0.0
  %518 = vmatmul.mubr.f32.gmra.mrb[0].mxu0 %v451
  %v519 = vpop.f32.mrb[0].mxu0
  %v520 = vadd.f32 0.0, %v519
  %v521 = vpop.f32.mrb[0].mxu0
  %522 = vdwg.mxu0
  %v523 = vadd.f32 %v449, %v520
  %v524 = vmul.f32 %v523, 0.5
  %v525 = vsel %vm38, %v523, %v524
  %v526 = vtanh.pop %v525
  %v527 = vmul.f32 %v526, 0.5
  %v528 = vadd.f32 %v527, 0.5
  %v529 = vsel %vm38, %v526, %v528
  %v530 = vmul.f32 %v529, %v281
  %532 = vrot.lane.b32.xlu0 %v529, 96
  %v533 = vpop.permute.xlu0 %532
  %v535 = vmul.f32 %v529, %v533
  %537 = vrot.lane.b32.xlu0 %v535, 64
  %v538 = vpop.permute.xlu0 %537
  %v540 = vadd.f32 %v530, %v538
  %v541 = vtanh.pop %v540
  %543 = vrot.lane.b32.xlu0 %v541, 32
  %v544 = vpop.permute.xlu0 %543
  %v546 = vmul.f32 %v529, %v544
  %548 = vrot.lane.b32.xlu0 %v546, 32
  %v549 = vpop.permute.xlu0 %548
  %s551 = scalar_lea.vmem %s5, 8
  %552 = vst.msk [vmem:[%s551] sm:$0xff] %vm39, %v549
  %554 = vrot.lane.b32.xlu0 %v540, 64
  %v555 = vpop.permute.xlu0 %554
  %s557 = scalar_lea.vmem %s6, 8
  %558 = vst.msk [vmem:[%s557] sm:$0xff] %vm39, %v555
  %v559 = vsel %vm39, %v549, 0
  %561 = vmatprep.subr.mxu0 0.0
  %562 = vmatpush1.msra.mxu0 %v30
  %563 = vmatprep.subr.mxu0 0.0
  %564 = vmatpush1.msra.mxu0 %v31
  %565 = vmatprep.subr.mxu0 0.0
  %566 = vmatpush1.msra.mxu0 %v32
  %567 = vmatprep.subr.mxu0 0.0
  %568 = vmatpush1.msra.mxu0 %v33
  %569 = vmatprep.subr.mxu0 0.0
  %570 = vmatpush1.msra.mxu0 0.0
  %571 = vmatprep.subr.mxu0 0.0
  %572 = vmatpush1.msra.mxu0 0.0
  %573 = vmatprep.subr.mxu0 0.0
  %574 = vmatpush1.msra.mxu0 0.0
  %575 = vmatprep.subr.mxu0 0.0
  %576 = vmatpush1.msra.mxu0 0.0
  %577 = vmatprep.subr.mxu0 0.0
  %578 = vmatpush1.msra.mxu0 0.0
  %579 = vmatprep.subr.mxu0 0.0
  %580 = vmatpush1.msra.mxu0 0.0
  %581 = vmatprep.subr.mxu0 0.0
  %582 = vmatpush1.msra.mxu0 0.0
  %583 = vmatprep.subr.mxu0 0.0
  %584 = vmatpush1.msra.mxu0 0.0
  %585 = vmatprep.subr.mxu0 0.0
  %586 = vmatpush1.msra.mxu0 0.0
  %587 = vmatprep.subr.mxu0 0.0
  %588 = vmatpush1.msra.mxu0 0.0
  %589 = vmatprep.subr.mxu0 0.0
  %590 = vmatpush1.msra.mxu0 0.0
  %591 = vmatprep.subr.mxu0 0.0
  %592 = vmatpush1.msra.mxu0 0.0
  %593 = vmatprep.subr.mxu0 0.0
  %594 = vmatpush1.msra.mxu0 0.0
  %595 = vmatprep.subr.mxu0 0.0
  %596 = vmatpush1.msra.mxu0 0.0
  %597 = vmatprep.subr.mxu0 0.0
  %598 = vmatpush1.msra.mxu0 0.0
  %599 = vmatprep.subr.mxu0 0.0
  %600 = vmatpush1.msra.mxu0 0.0
  %601 = vmatprep.subr.mxu0 0.0
  %602 = vmatpush1.msra.mxu0 0.0
  %603 = vmatprep.subr.mxu0 0.0
  %604 = vmatpush1.msra.mxu0 0.0
  %605 = vmatprep.subr.mxu0 0.0
  %606 = vmatpush1.msra.mxu0 0.0
  %607 = vmatprep.subr.mxu0 0.0
  %608 = vmatpush1.msra.mxu0 0.0
  %609 = vmatprep.subr.mxu0 0.0
  %610 = vmatpush1.msra.mxu0 0.0
  %611 = vmatprep.subr.mxu0 0.0
  %612 = vmatpush1.msra.mxu0 0.0
  %613 = vmatprep.subr.mxu0 0.0
  %614 = vmatpush1.msra.mxu0 0.0
  %615 = vmatprep.subr.mxu0 0.0
  %616 = vmatpush1.msra.mxu0 0.0
  %617 = vmatprep.subr.mxu0 0.0
  %618 = vmatpush1.msra.mxu0 0.0
  %619 = vmatprep.subr.mxu0 0.0
  %620 = vmatpush1.msra.mxu0 0.0
  %621 = vmatprep.subr.mxu0 0.0
  %622 = vmatpush1.msra.mxu0 0.0
  %623 = vmatprep.subr.mxu0 0.0
  %624 = vmatpush1.msra.mxu0 0.0
  %625 = vmatprep.mubr.f32.mxu0 0.0
  %626 = vmatmul.mubr.f32.gmra.mrb[0].mxu0 %v559
  %v627 = vpop.f32.mrb[0].mxu0
  %v628 = vadd.f32 0.0, %v627
  %v629 = vpop.f32.mrb[0].mxu0
  %630 = vdwg.mxu0
  %s631 = scalar_lea.vmem %s0, 16
  %v632 = vld [vmem:[%s631] sm:$0xff]
  %633 = vmatprep.subr.mxu0 0.0
  %634 = vmatpush1.msra.mxu0 %v22
  %635 = vmatprep.subr.mxu0 0.0
  %636 = vmatpush1.msra.mxu0 %v23
  %637 = vmatprep.subr.mxu0 0.0
  %638 = vmatpush1.msra.mxu0 %v24
  %639 = vmatprep.subr.mxu0 0.0
  %640 = vmatpush1.msra.mxu0 %v25
  %641 = vmatprep.subr.mxu0 0.0
  %642 = vmatpush1.msra.mxu0 0.0
  %643 = vmatprep.subr.mxu0 0.0
  %644 = vmatpush1.msra.mxu0 0.0
  %645 = vmatprep.subr.mxu0 0.0
  %646 = vmatpush1.msra.mxu0 0.0
  %647 = vmatprep.subr.mxu0 0.0
  %648 = vmatpush1.msra.mxu0 0.0
  %649 = vmatprep.subr.mxu0 0.0
  %650 = vmatpush1.msra.mxu0 0.0
  %651 = vmatprep.subr.mxu0 0.0
  %652 = vmatpush1.msra.mxu0 0.0
  %653 = vmatprep.subr.mxu0 0.0
  %654 = vmatpush1.msra.mxu0 0.0
  %655 = vmatprep.subr.mxu0 0.0
  %656 = vmatpush1.msra.mxu0 0.0
  %657 = vmatprep.subr.mxu0 0.0
  %658 = vmatpush1.msra.mxu0 0.0
  %659 = vmatprep.subr.mxu0 0.0
  %660 = vmatpush1.msra.mxu0 0.0
  %661 = vmatprep.subr.mxu0 0.0
  %662 = vmatpush1.msra.mxu0 0.0
  %663 = vmatprep.subr.mxu0 0.0
  %664 = vmatpush1.msra.mxu0 0.0
  %665 = vmatprep.subr.mxu0 0.0
  %666 = vmatpush1.msra.mxu0 0.0
  %667 = vmatprep.subr.mxu0 0.0
  %668 = vmatpush1.msra.mxu0 0.0
  %669 = vmatprep.subr.mxu0 0.0
  %670 = vmatpush1.msra.mxu0 0.0
  %671 = vmatprep.subr.mxu0 0.0
  %672 = vmatpush1.msra.mxu0 0.0
  %673 = vmatprep.subr.mxu0 0.0
  %674 = vmatpush1.msra.mxu0 0.0
  %675 = vmatprep.subr.mxu0 0.0
  %676 = vmatpush1.msra.mxu0 0.0
  %677 = vmatprep.subr.mxu0 0.0
  %678 = vmatpush1.msra.mxu0 0.0
  %679 = vmatprep.subr.mxu0 0.0
  %680 = vmatpush1.msra.mxu0 0.0
  %681 = vmatprep.subr.mxu0 0.0
  %682 = vmatpush1.msra.mxu0 0.0
  %683 = vmatprep.subr.mxu0 0.0
  %684 = vmatpush1.msra.mxu0 0.0
  %685 = vmatprep.subr.mxu0 0.0
  %686 = vmatpush1.msra.mxu0 0.0
  %687 = vmatprep.subr.mxu0 0.0
  %688 = vmatpush1.msra.mxu0 0.0
  %689 = vmatprep.subr.mxu0 0.0
  %690 = vmatpush1.msra.mxu0 0.0
  %691 = vmatprep.subr.mxu0 0.0
  %692 = vmatpush1.msra.mxu0 0.0
  %693 = vmatprep.subr.mxu0 0.0
  %694 = vmatpush1.msra.mxu0 0.0
  %695 = vmatprep.subr.mxu0 0.0
  %696 = vmatpush1.msra.mxu0 0.0
  %697 = vmatprep.mubr.f32.mxu0 0.0
  %698 = vmatmul.mubr.f32.gmra.mrb[0].mxu0 %v559
  %v699 = vpop.f32.mrb[0].mxu0
  %v700 = vadd.f32 0.0, %v699
  %v701 = vpop.f32.mrb[0].mxu0
  %702 = vdwg.mxu0
  %v703 = vadd.f32 %v632, %v700
  %v704 = vmul.f32 %v703, 0.5
  %v705 = vtanh.pop %v704
  %v706 = vmul.f32 %v705, 0.5
  %v707 = vadd.f32 %v706, 0.5
  %s708 = scalar_lea.vmem %s1, 16
  %v709 = vld [vmem:[%s708] sm:$0xff]
  %v710 = vadd.f32 %v709, %v628
  %v712 = vsel %vm39, %v707, 0
  %714 = vmatprep.subr.mxu0 0.0
  %715 = vmatpush1.msra.mxu0 %v26
  %716 = vmatprep.subr.mxu0 0.0
  %717 = vmatpush1.msra.mxu0 %v27
  %718 = vmatprep.subr.mxu0 0.0
  %719 = vmatpush1.msra.mxu0 %v28
  %720 = vmatprep.subr.mxu0 0.0
  %721 = vmatpush1.msra.mxu0 %v29
  %722 = vmatprep.subr.mxu0 0.0
  %723 = vmatpush1.msra.mxu0 0.0
  %724 = vmatprep.subr.mxu0 0.0
  %725 = vmatpush1.msra.mxu0 0.0
  %726 = vmatprep.subr.mxu0 0.0
  %727 = vmatpush1.msra.mxu0 0.0
  %728 = vmatprep.subr.mxu0 0.0
  %729 = vmatpush1.msra.mxu0 0.0
  %730 = vmatprep.subr.mxu0 0.0
  %731 = vmatpush1.msra.mxu0 0.0
  %732 = vmatprep.subr.mxu0 0.0
  %733 = vmatpush1.msra.mxu0 0.0
  %734 = vmatprep.subr.mxu0 0.0
  %735 = vmatpush1.msra.mxu0 0.0
  %736 = vmatprep.subr.mxu0 0.0
  %737 = vmatpush1.msra.mxu0 0.0
  %738 = vmatprep.subr.mxu0 0.0
  %739 = vmatpush1.msra.mxu0 0.0
  %740 = vmatprep.subr.mxu0 0.0
  %741 = vmatpush1.msra.mxu0 0.0
  %742 = vmatprep.subr.mxu0 0.0
  %743 = vmatpush1.msra.mxu0 0.0
  %744 = vmatprep.subr.mxu0 0.0
  %745 = vmatpush1.msra.mxu0 0.0
  %746 = vmatprep.subr.mxu0 0.0
  %747 = vmatpush1.msra.mxu0 0.0
  %748 = vmatprep.subr.mxu0 0.0
  %749 = vmatpush1.msra.mxu0 0.0
  %750 = vmatprep.subr.mxu0 0.0
  %751 = vmatpush1.msra.mxu0 0.0
  %752 = vmatprep.subr.mxu0 0.0
  %753 = vmatpush1.msra.mxu0 0.0
  %754 = vmatprep.subr.mxu0 0.0
  %755 = vmatpush1.msra.mxu0 0.0
  %756 = vmatprep.subr.mxu0 0.0
  %757 = vmatpush1.msra.mxu0 0.0
  %758 = vmatprep.subr.mxu0 0.0
  %759 = vmatpush1.msra.mxu0 0.0
  %760 = vmatprep.subr.mxu0 0.0
  %761 = vmatpush1.msra.mxu0 0.0
  %762 = vmatprep.subr.mxu0 0.0
  %763 = vmatpush1.msra.mxu0 0.0
  %764 = vmatprep.subr.mxu0 0.0
  %765 = vmatpush1.msra.mxu0 0.0
  %766 = vmatprep.subr.mxu0 0.0
  %767 = vmatpush1.msra.mxu0 0.0
  %768 = vmatprep.subr.mxu0 0.0
  %769 = vmatpush1.msra.mxu0 0.0
  %770 = vmatprep.subr.mxu0 0.0
  %771 = vmatpush1.msra.mxu0 0.0
  %772 = vmatprep.subr.mxu0 0.0
  %773 = vmatpush1.msra.mxu0 0.0
  %774 = vmatprep.subr.mxu0 0.0
  %775 = vmatpush1.msra.mxu0 0.0
  %776 = vmatprep.subr.mxu0 0.0
  %777 = vmatpush1.msra.mxu0 0.0
  %778 = vmatprep.mubr.f32.mxu0 0.0
  %779 = vmatmul.mubr.f32.gmra.mrb[0].mxu0 %v712
  %v780 = vpop.f32.mrb[0].mxu0
  %v781 = vadd.f32 0.0, %v780
  %v782 = vpop.f32.mrb[0].mxu0
  %783 = vdwg.mxu0
  %v784 = vadd.f32 %v710, %v781
  %v785 = vmul.f32 %v784, 0.5
  %v786 = vsel %vm38, %v784, %v785
  %v787 = vtanh.pop %v786
  %v788 = vmul.f32 %v787, 0.5
  %v789 = vadd.f32 %v788, 0.5
  %v790 = vsel %vm38, %v787, %v789
  %v791 = vmul.f32 %v790, %v540
  %793 = vrot.lane.b32.xlu0 %v790, 96
  %v794 = vpop.permute.xlu0 %793
  %v796 = vmul.f32 %v790, %v794
  %798 = vrot.lane.b32.xlu0 %v796, 64
  %v799 = vpop.permute.xlu0 %798
  %v801 = vadd.f32 %v791, %v799
  %v802 = vtanh.pop %v801
  %804 = vrot.lane.b32.xlu0 %v802, 32
  %v805 = vpop.permute.xlu0 %804
  %v807 = vmul.f32 %v790, %v805
  %809 = vrot.lane.b32.xlu0 %v807, 32
  %v810 = vpop.permute.xlu0 %809
  %s812 = scalar_lea.vmem %s5, 16
  %813 = vst.msk [vmem:[%s812] sm:$0xff] %vm39, %v810
  %815 = vrot.lane.b32.xlu0 %v801, 64
  %v816 = vpop.permute.xlu0 %815
  %s818 = scalar_lea.vmem %s6, 16
  %819 = vst.msk [vmem:[%s818] sm:$0xff] %vm39, %v816
  %v820 = vsel %vm39, %v810, 0
  %822 = vmatprep.subr.mxu0 0.0
  %823 = vmatpush1.msra.mxu0 %v30
  %824 = vmatprep.subr.mxu0 0.0
  %825 = vmatpush1.msra.mxu0 %v31
  %826 = vmatprep.subr.mxu0 0.0
  %827 = vmatpush1.msra.mxu0 %v32
  %828 = vmatprep.subr.mxu0 0.0
  %829 = vmatpush1.msra.mxu0 %v33
  %830 = vmatprep.subr.mxu0 0.0
  %831 = vmatpush1.msra.mxu0 0.0
  %832 = vmatprep.subr.mxu0 0.0
  %833 = vmatpush1.msra.mxu0 0.0
  %834 = vmatprep.subr.mxu0 0.0
  %835 = vmatpush1.msra.mxu0 0.0
  %836 = vmatprep.subr.mxu0 0.0
  %837 = vmatpush1.msra.mxu0 0.0
  %838 = vmatprep.subr.mxu0 0.0
  %839 = vmatpush1.msra.mxu0 0.0
  %840 = vmatprep.subr.mxu0 0.0
  %841 = vmatpush1.msra.mxu0 0.0
  %842 = vmatprep.subr.mxu0 0.0
  %843 = vmatpush1.msra.mxu0 0.0
  %844 = vmatprep.subr.mxu0 0.0
  %845 = vmatpush1.msra.mxu0 0.0
  %846 = vmatprep.subr.mxu0 0.0
  %847 = vmatpush1.msra.mxu0 0.0
  %848 = vmatprep.subr.mxu0 0.0
  %849 = vmatpush1.msra.mxu0 0.0
  %850 = vmatprep.subr.mxu0 0.0
  %851 = vmatpush1.msra.mxu0 0.0
  %852 = vmatprep.subr.mxu0 0.0
  %853 = vmatpush1.msra.mxu0 0.0
  %854 = vmatprep.subr.mxu0 0.0
  %855 = vmatpush1.msra.mxu0 0.0
  %856 = vmatprep.subr.mxu0 0.0
  %857 = vmatpush1.msra.mxu0 0.0
  %858 = vmatprep.subr.mxu0 0.0
  %859 = vmatpush1.msra.mxu0 0.0
  %860 = vmatprep.subr.mxu0 0.0
  %861 = vmatpush1.msra.mxu0 0.0
  %862 = vmatprep.subr.mxu0 0.0
  %863 = vmatpush1.msra.mxu0 0.0
  %864 = vmatprep.subr.mxu0 0.0
  %865 = vmatpush1.msra.mxu0 0.0
  %866 = vmatprep.subr.mxu0 0.0
  %867 = vmatpush1.msra.mxu0 0.0
  %868 = vmatprep.subr.mxu0 0.0
  %869 = vmatpush1.msra.mxu0 0.0
  %870 = vmatprep.subr.mxu0 0.0
  %871 = vmatpush1.msra.mxu0 0.0
  %872 = vmatprep.subr.mxu0 0.0
  %873 = vmatpush1.msra.mxu0 0.0
  %874 = vmatprep.subr.mxu0 0.0
  %875 = vmatpush1.msra.mxu0 0.0
  %876 = vmatprep.subr.mxu0 0.0
  %877 = vmatpush1.msra.mxu0 0.0
  %878 = vmatprep.subr.mxu0 0.0
  %879 = vmatpush1.msra.mxu0 0.0
  %880 = vmatprep.subr.mxu0 0.0
  %881 = vmatpush1.msra.mxu0 0.0
  %882 = vmatprep.subr.mxu0 0.0
  %883 = vmatpush1.msra.mxu0 0.0
  %884 = vmatprep.subr.mxu0 0.0
  %885 = vmatpush1.msra.mxu0 0.0
  %886 = vmatprep.mubr.f32.mxu0 0.0
  %887 = vmatmul.mubr.f32.gmra.mrb[0].mxu0 %v820
  %v888 = vpop.f32.mrb[0].mxu0
  %v889 = vadd.f32 0.0, %v888
  %v890 = vpop.f32.mrb[0].mxu0
  %891 = vdwg.mxu0
  %s892 = scalar_lea.vmem %s0, 24
  %v893 = vld [vmem:[%s892] sm:$0xff]
  %894 = vmatprep.subr.mxu0 0.0
  %895 = vmatpush1.msra.mxu0 %v22
  %896 = vmatprep.subr.mxu0 0.0
  %897 = vmatpush1.msra.mxu0 %v23
  %898 = vmatprep.subr.mxu0 0.0
  %899 = vmatpush1.msra.mxu0 %v24
  %900 = vmatprep.subr.mxu0 0.0
  %901 = vmatpush1.msra.mxu0 %v25
  %902 = vmatprep.subr.mxu0 0.0
  %903 = vmatpush1.msra.mxu0 0.0
  %904 = vmatprep.subr.mxu0 0.0
  %905 = vmatpush1.msra.mxu0 0.0
  %906 = vmatprep.subr.mxu0 0.0
  %907 = vmatpush1.msra.mxu0 0.0
  %908 = vmatprep.subr.mxu0 0.0
  %909 = vmatpush1.msra.mxu0 0.0
  %910 = vmatprep.subr.mxu0 0.0
  %911 = vmatpush1.msra.mxu0 0.0
  %912 = vmatprep.subr.mxu0 0.0
  %913 = vmatpush1.msra.mxu0 0.0
  %914 = vmatprep.subr.mxu0 0.0
  %915 = vmatpush1.msra.mxu0 0.0
  %916 = vmatprep.subr.mxu0 0.0
  %917 = vmatpush1.msra.mxu0 0.0
  %918 = vmatprep.subr.mxu0 0.0
  %919 = vmatpush1.msra.mxu0 0.0
  %920 = vmatprep.subr.mxu0 0.0
  %921 = vmatpush1.msra.mxu0 0.0
  %922 = vmatprep.subr.mxu0 0.0
  %923 = vmatpush1.msra.mxu0 0.0
  %924 = vmatprep.subr.mxu0 0.0
  %925 = vmatpush1.msra.mxu0 0.0
  %926 = vmatprep.subr.mxu0 0.0
  %927 = vmatpush1.msra.mxu0 0.0
  %928 = vmatprep.subr.mxu0 0.0
  %929 = vmatpush1.msra.mxu0 0.0
  %930 = vmatprep.subr.mxu0 0.0
  %931 = vmatpush1.msra.mxu0 0.0
  %932 = vmatprep.subr.mxu0 0.0
  %933 = vmatpush1.msra.mxu0 0.0
  %934 = vmatprep.subr.mxu0 0.0
  %935 = vmatpush1.msra.mxu0 0.0
  %936 = vmatprep.subr.mxu0 0.0
  %937 = vmatpush1.msra.mxu0 0.0
  %938 = vmatprep.subr.mxu0 0.0
  %939 = vmatpush1.msra.mxu0 0.0
  %940 = vmatprep.subr.mxu0 0.0
  %941 = vmatpush1.msra.mxu0 0.0
  %942 = vmatprep.subr.mxu0 0.0
  %943 = vmatpush1.msra.mxu0 0.0
  %944 = vmatprep.subr.mxu0 0.0
  %945 = vmatpush1.msra.mxu0 0.0
  %946 = vmatprep.subr.mxu0 0.0
  %947 = vmatpush1.msra.mxu0 0.0
  %948 = vmatprep.subr.mxu0 0.0
  %949 = vmatpush1.msra.mxu0 0.0
  %950 = vmatprep.subr.mxu0 0.0
  %951 = vmatpush1.msra.mxu0 0.0
  %952 = vmatprep.subr.mxu0 0.0
  %953 = vmatpush1.msra.mxu0 0.0
  %954 = vmatprep.subr.mxu0 0.0
  %955 = vmatpush1.msra.mxu0 0.0
  %956 = vmatprep.subr.mxu0 0.0
  %957 = vmatpush1.msra.mxu0 0.0
  %958 = vmatprep.mubr.f32.mxu0 0.0
  %959 = vmatmul.mubr.f32.gmra.mrb[0].mxu0 %v820
  %v960 = vpop.f32.mrb[0].mxu0
  %v961 = vadd.f32 0.0, %v960
  %v962 = vpop.f32.mrb[0].mxu0
  %963 = vdwg.mxu0
  %v964 = vadd.f32 %v893, %v961
  %v965 = vmul.f32 %v964, 0.5
  %v966 = vtanh.pop %v965
  %v967 = vmul.f32 %v966, 0.5
  %v968 = vadd.f32 %v967, 0.5
  %s969 = scalar_lea.vmem %s1, 24
  %v970 = vld [vmem:[%s969] sm:$0xff]
  %v971 = vadd.f32 %v970, %v889
  %v973 = vsel %vm39, %v968, 0
  %975 = vmatprep.subr.mxu0 0.0
  %976 = vmatpush1.msra.mxu0 %v26
  %977 = vmatprep.subr.mxu0 0.0
  %978 = vmatpush1.msra.mxu0 %v27
  %979 = vmatprep.subr.mxu0 0.0
  %980 = vmatpush1.msra.mxu0 %v28
  %981 = vmatprep.subr.mxu0 0.0
  %982 = vmatpush1.msra.mxu0 %v29
  %983 = vmatprep.subr.mxu0 0.0
  %984 = vmatpush1.msra.mxu0 0.0
  %985 = vmatprep.subr.mxu0 0.0
  %986 = vmatpush1.msra.mxu0 0.0
  %987 = vmatprep.subr.mxu0 0.0
  %988 = vmatpush1.msra.mxu0 0.0
  %989 = vmatprep.subr.mxu0 0.0
  %990 = vmatpush1.msra.mxu0 0.0
  %991 = vmatprep.subr.mxu0 0.0
  %992 = vmatpush1.msra.mxu0 0.0
  %993 = vmatprep.subr.mxu0 0.0
  %994 = vmatpush1.msra.mxu0 0.0
  %995 = vmatprep.subr.mxu0 0.0
  %996 = vmatpush1.msra.mxu0 0.0
  %997 = vmatprep.subr.mxu0 0.0
  %998 = vmatpush1.msra.mxu0 0.0
  %999 = vmatprep.subr.mxu0 0.0
  %1000 = vmatpush1.msra.mxu0 0.0
  %1001 = vmatprep.subr.mxu0 0.0
  %1002 = vmatpush1.msra.mxu0 0.0
  %1003 = vmatprep.subr.mxu0 0.0
  %1004 = vmatpush1.msra.mxu0 0.0
  %1005 = vmatprep.subr.mxu0 0.0
  %1006 = vmatpush1.msra.mxu0 0.0
  %1007 = vmatprep.subr.mxu0 0.0
  %1008 = vmatpush1.msra.mxu0 0.0
  %1009 = vmatprep.subr.mxu0 0.0
  %1010 = vmatpush1.msra.mxu0 0.0
  %1011 = vmatprep.subr.mxu0 0.0
  %1012 = vmatpush1.msra.mxu0 0.0
  %1013 = vmatprep.subr.mxu0 0.0
  %1014 = vmatpush1.msra.mxu0 0.0
  %1015 = vmatprep.subr.mxu0 0.0
  %1016 = vmatpush1.msra.mxu0 0.0
  %1017 = vmatprep.subr.mxu0 0.0
  %1018 = vmatpush1.msra.mxu0 0.0
  %1019 = vmatprep.subr.mxu0 0.0
  %1020 = vmatpush1.msra.mxu0 0.0
  %1021 = vmatprep.subr.mxu0 0.0
  %1022 = vmatpush1.msra.mxu0 0.0
  %1023 = vmatprep.subr.mxu0 0.0
  %1024 = vmatpush1.msra.mxu0 0.0
  %1025 = vmatprep.subr.mxu0 0.0
  %1026 = vmatpush1.msra.mxu0 0.0
  %1027 = vmatprep.subr.mxu0 0.0
  %1028 = vmatpush1.msra.mxu0 0.0
  %1029 = vmatprep.subr.mxu0 0.0
  %1030 = vmatpush1.msra.mxu0 0.0
  %1031 = vmatprep.subr.mxu0 0.0
  %1032 = vmatpush1.msra.mxu0 0.0
  %1033 = vmatprep.subr.mxu0 0.0
  %1034 = vmatpush1.msra.mxu0 0.0
  %1035 = vmatprep.subr.mxu0 0.0
  %1036 = vmatpush1.msra.mxu0 0.0
  %1037 = vmatprep.subr.mxu0 0.0
  %1038 = vmatpush1.msra.mxu0 0.0
  %1039 = vmatprep.mubr.f32.mxu0 0.0
  %1040 = vmatmul.mubr.f32.gmra.mrb[0].mxu0 %v973
  %v1041 = vpop.f32.mrb[0].mxu0
  %v1042 = vadd.f32 0.0, %v1041
  %v1043 = vpop.f32.mrb[0].mxu0
  %1044 = vdwg.mxu0
  %v1045 = vadd.f32 %v971, %v1042
  %v1046 = vmul.f32 %v1045, 0.5
  %v1047 = vsel %vm38, %v1045, %v1046
  %v1048 = vtanh.pop %v1047
  %v1049 = vmul.f32 %v1048, 0.5
  %v1050 = vadd.f32 %v1049, 0.5
  %v1051 = vsel %vm38, %v1048, %v1050
  %v1052 = vmul.f32 %v1051, %v801
  %1054 = vrot.lane.b32.xlu0 %v1051, 96
  %v1055 = vpop.permute.xlu0 %1054
  %v1057 = vmul.f32 %v1051, %v1055
  %1059 = vrot.lane.b32.xlu0 %v1057, 64
  %v1060 = vpop.permute.xlu0 %1059
  %v1062 = vadd.f32 %v1052, %v1060
  %v1063 = vtanh.pop %v1062
  %1065 = vrot.lane.b32.xlu0 %v1063, 32
  %v1066 = vpop.permute.xlu0 %1065
  %v1068 = vmul.f32 %v1051, %v1066
  %1070 = vrot.lane.b32.xlu0 %v1068, 32
  %v1071 = vpop.permute.xlu0 %1070
  %s1073 = scalar_lea.vmem %s5, 24
  %1074 = vst.msk [vmem:[%s1073] sm:$0xff] %vm39, %v1071
  %1076 = vrot.lane.b32.xlu0 %v1062, 64
  %v1077 = vpop.permute.xlu0 %1076
  %s1079 = scalar_lea.vmem %s6, 24
  %1080 = vst.msk [vmem:[%s1079] sm:$0xff] %vm39, %v1077
  %v1081 = vsel %vm39, %v1071, 0
  %1083 = vmatprep.subr.mxu0 0.0
  %1084 = vmatpush1.msra.mxu0 %v30
  %1085 = vmatprep.subr.mxu0 0.0
  %1086 = vmatpush1.msra.mxu0 %v31
  %1087 = vmatprep.subr.mxu0 0.0
  %1088 = vmatpush1.msra.mxu0 %v32
  %1089 = vmatprep.subr.mxu0 0.0
  %1090 = vmatpush1.msra.mxu0 %v33
  %1091 = vmatprep.subr.mxu0 0.0
  %1092 = vmatpush1.msra.mxu0 0.0
  %1093 = vmatprep.subr.mxu0 0.0
  %1094 = vmatpush1.msra.mxu0 0.0
  %1095 = vmatprep.subr.mxu0 0.0
  %1096 = vmatpush1.msra.mxu0 0.0
  %1097 = vmatprep.subr.mxu0 0.0
  %1098 = vmatpush1.msra.mxu0 0.0
  %1099 = vmatprep.subr.mxu0 0.0
  %1100 = vmatpush1.msra.mxu0 0.0
  %1101 = vmatprep.subr.mxu0 0.0
  %1102 = vmatpush1.msra.mxu0 0.0
  %1103 = vmatprep.subr.mxu0 0.0
  %1104 = vmatpush1.msra.mxu0 0.0
  %1105 = vmatprep.subr.mxu0 0.0
  %1106 = vmatpush1.msra.mxu0 0.0
  %1107 = vmatprep.subr.mxu0 0.0
  %1108 = vmatpush1.msra.mxu0 0.0
  %1109 = vmatprep.subr.mxu0 0.0
  %1110 = vmatpush1.msra.mxu0 0.0
  %1111 = vmatprep.subr.mxu0 0.0
  %1112 = vmatpush1.msra.mxu0 0.0
  %1113 = vmatprep.subr.mxu0 0.0
  %1114 = vmatpush1.msra.mxu0 0.0
  %1115 = vmatprep.subr.mxu0 0.0
  %1116 = vmatpush1.msra.mxu0 0.0
  %1117 = vmatprep.subr.mxu0 0.0
  %1118 = vmatpush1.msra.mxu0 0.0
  %1119 = vmatprep.subr.mxu0 0.0
  %1120 = vmatpush1.msra.mxu0 0.0
  %1121 = vmatprep.subr.mxu0 0.0
  %1122 = vmatpush1.msra.mxu0 0.0
  %1123 = vmatprep.subr.mxu0 0.0
  %1124 = vmatpush1.msra.mxu0 0.0
  %1125 = vmatprep.subr.mxu0 0.0
  %1126 = vmatpush1.msra.mxu0 0.0
  %1127 = vmatprep.subr.mxu0 0.0
  %1128 = vmatpush1.msra.mxu0 0.0
  %1129 = vmatprep.subr.mxu0 0.0
  %1130 = vmatpush1.msra.mxu0 0.0
  %1131 = vmatprep.subr.mxu0 0.0
  %1132 = vmatpush1.msra.mxu0 0.0
  %1133 = vmatprep.subr.mxu0 0.0
  %1134 = vmatpush1.msra.mxu0 0.0
  %1135 = vmatprep.subr.mxu0 0.0
  %1136 = vmatpush1.msra.mxu0 0.0
  %1137 = vmatprep.subr.mxu0 0.0
  %1138 = vmatpush1.msra.mxu0 0.0
  %1139 = vmatprep.subr.mxu0 0.0
  %1140 = vmatpush1.msra.mxu0 0.0
  %1141 = vmatprep.subr.mxu0 0.0
  %1142 = vmatpush1.msra.mxu0 0.0
  %1143 = vmatprep.subr.mxu0 0.0
  %1144 = vmatpush1.msra.mxu0 0.0
  %1145 = vmatprep.subr.mxu0 0.0
  %1146 = vmatpush1.msra.mxu0 0.0
  %1147 = vmatprep.mubr.f32.mxu0 0.0
  %1148 = vmatmul.mubr.f32.gmra.mrb[0].mxu0 %v1081
  %v1149 = vpop.f32.mrb[0].mxu0
  %v1150 = vadd.f32 0.0, %v1149
  %v1151 = vpop.f32.mrb[0].mxu0
  %1152 = vdwg.mxu0
  %s1153 = scalar_lea.vmem %s0, 32
  %v1154 = vld [vmem:[%s1153] sm:$0xff]
  %1155 = vmatprep.subr.mxu0 0.0
  %1156 = vmatpush1.msra.mxu0 %v22
  %1157 = vmatprep.subr.mxu0 0.0
  %1158 = vmatpush1.msra.mxu0 %v23
  %1159 = vmatprep.subr.mxu0 0.0
  %1160 = vmatpush1.msra.mxu0 %v24
  %1161 = vmatprep.subr.mxu0 0.0
  %1162 = vmatpush1.msra.mxu0 %v25
  %1163 = vmatprep.subr.mxu0 0.0
  %1164 = vmatpush1.msra.mxu0 0.0
  %1165 = vmatprep.subr.mxu0 0.0
  %1166 = vmatpush1.msra.mxu0 0.0
  %1167 = vmatprep.subr.mxu0 0.0
  %1168 = vmatpush1.msra.mxu0 0.0
  %1169 = vmatprep.subr.mxu0 0.0
  %1170 = vmatpush1.msra.mxu0 0.0
  %1171 = vmatprep.subr.mxu0 0.0
  %1172 = vmatpush1.msra.mxu0 0.0
  %1173 = vmatprep.subr.mxu0 0.0
  %1174 = vmatpush1.msra.mxu0 0.0
  %1175 = vmatprep.subr.mxu0 0.0
  %1176 = vmatpush1.msra.mxu0 0.0
  %1177 = vmatprep.subr.mxu0 0.0
  %1178 = vmatpush1.msra.mxu0 0.0
  %1179 = vmatprep.subr.mxu0 0.0
  %1180 = vmatpush1.msra.mxu0 0.0
  %1181 = vmatprep.subr.mxu0 0.0
  %1182 = vmatpush1.msra.mxu0 0.0
  %1183 = vmatprep.subr.mxu0 0.0
  %1184 = vmatpush1.msra.mxu0 0.0
  %1185 = vmatprep.subr.mxu0 0.0
  %1186 = vmatpush1.msra.mxu0 0.0
  %1187 = vmatprep.subr.mxu0 0.0
  %1188 = vmatpush1.msra.mxu0 0.0
  %1189 = vmatprep.subr.mxu0 0.0
  %1190 = vmatpush1.msra.mxu0 0.0
  %1191 = vmatprep.subr.mxu0 0.0
  %1192 = vmatpush1.msra.mxu0 0.0
  %1193 = vmatprep.subr.mxu0 0.0
  %1194 = vmatpush1.msra.mxu0 0.0
  %1195 = vmatprep.subr.mxu0 0.0
  %1196 = vmatpush1.msra.mxu0 0.0
  %1197 = vmatprep.subr.mxu0 0.0
  %1198 = vmatpush1.msra.mxu0 0.0
  %1199 = vmatprep.subr.mxu0 0.0
  %1200 = vmatpush1.msra.mxu0 0.0
  %1201 = vmatprep.subr.mxu0 0.0
  %1202 = vmatpush1.msra.mxu0 0.0
  %1203 = vmatprep.subr.mxu0 0.0
  %1204 = vmatpush1.msra.mxu0 0.0
  %1205 = vmatprep.subr.mxu0 0.0
  %1206 = vmatpush1.msra.mxu0 0.0
  %1207 = vmatprep.subr.mxu0 0.0
  %1208 = vmatpush1.msra.mxu0 0.0
  %1209 = vmatprep.subr.mxu0 0.0
  %1210 = vmatpush1.msra.mxu0 0.0
  %1211 = vmatprep.subr.mxu0 0.0
  %1212 = vmatpush1.msra.mxu0 0.0
  %1213 = vmatprep.subr.mxu0 0.0
  %1214 = vmatpush1.msra.mxu0 0.0
  %1215 = vmatprep.subr.mxu0 0.0
  %1216 = vmatpush1.msra.mxu0 0.0
  %1217 = vmatprep.subr.mxu0 0.0
  %1218 = vmatpush1.msra.mxu0 0.0
  %1219 = vmatprep.mubr.f32.mxu0 0.0
  %1220 = vmatmul.mubr.f32.gmra.mrb[0].mxu0 %v1081
  %v1221 = vpop.f32.mrb[0].mxu0
  %v1222 = vadd.f32 0.0, %v1221
  %v1223 = vpop.f32.mrb[0].mxu0
  %1224 = vdwg.mxu0
  %v1225 = vadd.f32 %v1154, %v1222
  %v1226 = vmul.f32 %v1225, 0.5
  %v1227 = vtanh.pop %v1226
  %v1228 = vmul.f32 %v1227, 0.5
  %v1229 = vadd.f32 %v1228, 0.5
  %s1230 = scalar_lea.vmem %s1, 32
  %v1231 = vld [vmem:[%s1230] sm:$0xff]
  %v1232 = vadd.f32 %v1231, %v1150
  %v1234 = vsel %vm39, %v1229, 0
  %1236 = vmatprep.subr.mxu0 0.0
  %1237 = vmatpush1.msra.mxu0 %v26
  %1238 = vmatprep.subr.mxu0 0.0
  %1239 = vmatpush1.msra.mxu0 %v27
  %1240 = vmatprep.subr.mxu0 0.0
  %1241 = vmatpush1.msra.mxu0 %v28
  %1242 = vmatprep.subr.mxu0 0.0
  %1243 = vmatpush1.msra.mxu0 %v29
  %1244 = vmatprep.subr.mxu0 0.0
  %1245 = vmatpush1.msra.mxu0 0.0
  %1246 = vmatprep.subr.mxu0 0.0
  %1247 = vmatpush1.msra.mxu0 0.0
  %1248 = vmatprep.subr.mxu0 0.0
  %1249 = vmatpush1.msra.mxu0 0.0
  %1250 = vmatprep.subr.mxu0 0.0
  %1251 = vmatpush1.msra.mxu0 0.0
  %1252 = vmatprep.subr.mxu0 0.0
  %1253 = vmatpush1.msra.mxu0 0.0
  %1254 = vmatprep.subr.mxu0 0.0
  %1255 = vmatpush1.msra.mxu0 0.0
  %1256 = vmatprep.subr.mxu0 0.0
  %1257 = vmatpush1.msra.mxu0 0.0
  %1258 = vmatprep.subr.mxu0 0.0
  %1259 = vmatpush1.msra.mxu0 0.0
  %1260 = vmatprep.subr.mxu0 0.0
  %1261 = vmatpush1.msra.mxu0 0.0
  %1262 = vmatprep.subr.mxu0 0.0
  %1263 = vmatpush1.msra.mxu0 0.0
  %1264 = vmatprep.subr.mxu0 0.0
  %1265 = vmatpush1.msra.mxu0 0.0
  %1266 = vmatprep.subr.mxu0 0.0
  %1267 = vmatpush1.msra.mxu0 0.0
  %1268 = vmatprep.subr.mxu0 0.0
  %1269 = vmatpush1.msra.mxu0 0.0
  %1270 = vmatprep.subr.mxu0 0.0
  %1271 = vmatpush1.msra.mxu0 0.0
  %1272 = vmatprep.subr.mxu0 0.0
  %1273 = vmatpush1.msra.mxu0 0.0
  %1274 = vmatprep.subr.mxu0 0.0
  %1275 = vmatpush1.msra.mxu0 0.0
  %1276 = vmatprep.subr.mxu0 0.0
  %1277 = vmatpush1.msra.mxu0 0.0
  %1278 = vmatprep.subr.mxu0 0.0
  %1279 = vmatpush1.msra.mxu0 0.0
  %1280 = vmatprep.subr.mxu0 0.0
  %1281 = vmatpush1.msra.mxu0 0.0
  %1282 = vmatprep.subr.mxu0 0.0
  %1283 = vmatpush1.msra.mxu0 0.0
  %1284 = vmatprep.subr.mxu0 0.0
  %1285 = vmatpush1.msra.mxu0 0.0
  %1286 = vmatprep.subr.mxu0 0.0
  %1287 = vmatpush1.msra.mxu0 0.0
  %1288 = vmatprep.subr.mxu0 0.0
  %1289 = vmatpush1.msra.mxu0 0.0
  %1290 = vmatprep.subr.mxu0 0.0
  %1291 = vmatpush1.msra.mxu0 0.0
  %1292 = vmatprep.subr.mxu0 0.0
  %1293 = vmatpush1.msra.mxu0 0.0
  %1294 = vmatprep.subr.mxu0 0.0
  %1295 = vmatpush1.msra.mxu0 0.0
  %1296 = vmatprep.subr.mxu0 0.0
  %1297 = vmatpush1.msra.mxu0 0.0
  %1298 = vmatprep.subr.mxu0 0.0
  %1299 = vmatpush1.msra.mxu0 0.0
  %1300 = vmatprep.mubr.f32.mxu0 0.0
  %1301 = vmatmul.mubr.f32.gmra.mrb[0].mxu0 %v1234
  %v1302 = vpop.f32.mrb[0].mxu0
  %v1303 = vadd.f32 0.0, %v1302
  %v1304 = vpop.f32.mrb[0].mxu0
  %1305 = vdwg.mxu0
  %v1306 = vadd.f32 %v1232, %v1303
  %v1307 = vmul.f32 %v1306, 0.5
  %v1308 = vsel %vm38, %v1306, %v1307
  %v1309 = vtanh.pop %v1308
  %v1310 = vmul.f32 %v1309, 0.5
  %v1311 = vadd.f32 %v1310, 0.5
  %v1312 = vsel %vm38, %v1309, %v1311
  %v1313 = vmul.f32 %v1312, %v1062
  %1315 = vrot.lane.b32.xlu0 %v1312, 96
  %v1316 = vpop.permute.xlu0 %1315
  %v1318 = vmul.f32 %v1312, %v1316
  %1320 = vrot.lane.b32.xlu0 %v1318, 64
  %v1321 = vpop.permute.xlu0 %1320
  %v1323 = vadd.f32 %v1313, %v1321
  %v1324 = vtanh.pop %v1323
  %1326 = vrot.lane.b32.xlu0 %v1324, 32
  %v1327 = vpop.permute.xlu0 %1326
  %v1329 = vmul.f32 %v1312, %v1327
  %1331 = vrot.lane.b32.xlu0 %v1329, 32
  %v1332 = vpop.permute.xlu0 %1331
  %s1334 = scalar_lea.vmem %s5, 32
  %1335 = vst.msk [vmem:[%s1334] sm:$0xff] %vm39, %v1332
  %1337 = vrot.lane.b32.xlu0 %v1323, 64
  %v1338 = vpop.permute.xlu0 %1337
  %s1340 = scalar_lea.vmem %s6, 32
  %1341 = vst.msk [vmem:[%s1340] sm:$0xff] %vm39, %v1338
  %v1342 = vsel %vm39, %v1332, 0
  %1344 = vmatprep.subr.mxu0 0.0
  %1345 = vmatpush1.msra.mxu0 %v30
  %1346 = vmatprep.subr.mxu0 0.0
  %1347 = vmatpush1.msra.mxu0 %v31
  %1348 = vmatprep.subr.mxu0 0.0
  %1349 = vmatpush1.msra.mxu0 %v32
  %1350 = vmatprep.subr.mxu0 0.0
  %1351 = vmatpush1.msra.mxu0 %v33
  %1352 = vmatprep.subr.mxu0 0.0
  %1353 = vmatpush1.msra.mxu0 0.0
  %1354 = vmatprep.subr.mxu0 0.0
  %1355 = vmatpush1.msra.mxu0 0.0
  %1356 = vmatprep.subr.mxu0 0.0
  %1357 = vmatpush1.msra.mxu0 0.0
  %1358 = vmatprep.subr.mxu0 0.0
  %1359 = vmatpush1.msra.mxu0 0.0
  %1360 = vmatprep.subr.mxu0 0.0
  %1361 = vmatpush1.msra.mxu0 0.0
  %1362 = vmatprep.subr.mxu0 0.0
  %1363 = vmatpush1.msra.mxu0 0.0
  %1364 = vmatprep.subr.mxu0 0.0
  %1365 = vmatpush1.msra.mxu0 0.0
  %1366 = vmatprep.subr.mxu0 0.0
  %1367 = vmatpush1.msra.mxu0 0.0
  %1368 = vmatprep.subr.mxu0 0.0
  %1369 = vmatpush1.msra.mxu0 0.0
  %1370 = vmatprep.subr.mxu0 0.0
  %1371 = vmatpush1.msra.mxu0 0.0
  %1372 = vmatprep.subr.mxu0 0.0
  %1373 = vmatpush1.msra.mxu0 0.0
  %1374 = vmatprep.subr.mxu0 0.0
  %1375 = vmatpush1.msra.mxu0 0.0
  %1376 = vmatprep.subr.mxu0 0.0
  %1377 = vmatpush1.msra.mxu0 0.0
  %1378 = vmatprep.subr.mxu0 0.0
  %1379 = vmatpush1.msra.mxu0 0.0
  %1380 = vmatprep.subr.mxu0 0.0
  %1381 = vmatpush1.msra.mxu0 0.0
  %1382 = vmatprep.subr.mxu0 0.0
  %1383 = vmatpush1.msra.mxu0 0.0
  %1384 = vmatprep.subr.mxu0 0.0
  %1385 = vmatpush1.msra.mxu0 0.0
  %1386 = vmatprep.subr.mxu0 0.0
  %1387 = vmatpush1.msra.mxu0 0.0
  %1388 = vmatprep.subr.mxu0 0.0
  %1389 = vmatpush1.msra.mxu0 0.0
  %1390 = vmatprep.subr.mxu0 0.0
  %1391 = vmatpush1.msra.mxu0 0.0
  %1392 = vmatprep.subr.mxu0 0.0
  %1393 = vmatpush1.msra.mxu0 0.0
  %1394 = vmatprep.subr.mxu0 0.0
  %1395 = vmatpush1.msra.mxu0 0.0
  %1396 = vmatprep.subr.mxu0 0.0
  %1397 = vmatpush1.msra.mxu0 0.0
  %1398 = vmatprep.subr.mxu0 0.0
  %1399 = vmatpush1.msra.mxu0 0.0
  %1400 = vmatprep.subr.mxu0 0.0
  %1401 = vmatpush1.msra.mxu0 0.0
  %1402 = vmatprep.subr.mxu0 0.0
  %1403 = vmatpush1.msra.mxu0 0.0
  %1404 = vmatprep.subr.mxu0 0.0
  %1405 = vmatpush1.msra.mxu0 0.0
  %1406 = vmatprep.subr.mxu0 0.0
  %1407 = vmatpush1.msra.mxu0 0.0
  %1408 = vmatprep.mubr.f32.mxu0 0.0
  %1409 = vmatmul.mubr.f32.gmra.mrb[0].mxu0 %v1342
  %v1410 = vpop.f32.mrb[0].mxu0
  %v1411 = vadd.f32 0.0, %v1410
  %v1412 = vpop.f32.mrb[0].mxu0
  %1413 = vdwg.mxu0
  %s1414 = scalar_lea.vmem %s0, 40
  %v1415 = vld [vmem:[%s1414] sm:$0xff]
  %1416 = vmatprep.subr.mxu0 0.0
  %1417 = vmatpush1.msra.mxu0 %v22
  %1418 = vmatprep.subr.mxu0 0.0
  %1419 = vmatpush1.msra.mxu0 %v23
  %1420 = vmatprep.subr.mxu0 0.0
  %1421 = vmatpush1.msra.mxu0 %v24
  %1422 = vmatprep.subr.mxu0 0.0
  %1423 = vmatpush1.msra.mxu0 %v25
  %1424 = vmatprep.subr.mxu0 0.0
  %1425 = vmatpush1.msra.mxu0 0.0
  %1426 = vmatprep.subr.mxu0 0.0
  %1427 = vmatpush1.msra.mxu0 0.0
  %1428 = vmatprep.subr.mxu0 0.0
  %1429 = vmatpush1.msra.mxu0 0.0
  %1430 = vmatprep.subr.mxu0 0.0
  %1431 = vmatpush1.msra.mxu0 0.0
  %1432 = vmatprep.subr.mxu0 0.0
  %1433 = vmatpush1.msra.mxu0 0.0
  %1434 = vmatprep.subr.mxu0 0.0
  %1435 = vmatpush1.msra.mxu0 0.0
  %1436 = vmatprep.subr.mxu0 0.0
  %1437 = vmatpush1.msra.mxu0 0.0
  %1438 = vmatprep.subr.mxu0 0.0
  %1439 = vmatpush1.msra.mxu0 0.0
  %1440 = vmatprep.subr.mxu0 0.0
  %1441 = vmatpush1.msra.mxu0 0.0
  %1442 = vmatprep.subr.mxu0 0.0
  %1443 = vmatpush1.msra.mxu0 0.0
  %1444 = vmatprep.subr.mxu0 0.0
  %1445 = vmatpush1.msra.mxu0 0.0
  %1446 = vmatprep.subr.mxu0 0.0
  %1447 = vmatpush1.msra.mxu0 0.0
  %1448 = vmatprep.subr.mxu0 0.0
  %1449 = vmatpush1.msra.mxu0 0.0
  %1450 = vmatprep.subr.mxu0 0.0
  %1451 = vmatpush1.msra.mxu0 0.0
  %1452 = vmatprep.subr.mxu0 0.0
  %1453 = vmatpush1.msra.mxu0 0.0
  %1454 = vmatprep.subr.mxu0 0.0
  %1455 = vmatpush1.msra.mxu0 0.0
  %1456 = vmatprep.subr.mxu0 0.0
  %1457 = vmatpush1.msra.mxu0 0.0
  %1458 = vmatprep.subr.mxu0 0.0
  %1459 = vmatpush1.msra.mxu0 0.0
  %1460 = vmatprep.subr.mxu0 0.0
  %1461 = vmatpush1.msra.mxu0 0.0
  %1462 = vmatprep.subr.mxu0 0.0
  %1463 = vmatpush1.msra.mxu0 0.0
  %1464 = vmatprep.subr.mxu0 0.0
  %1465 = vmatpush1.msra.mxu0 0.0
  %1466 = vmatprep.subr.mxu0 0.0
  %1467 = vmatpush1.msra.mxu0 0.0
  %1468 = vmatprep.subr.mxu0 0.0
  %1469 = vmatpush1.msra.mxu0 0.0
  %1470 = vmatprep.subr.mxu0 0.0
  %1471 = vmatpush1.msra.mxu0 0.0
  %1472 = vmatprep.subr.mxu0 0.0
  %1473 = vmatpush1.msra.mxu0 0.0
  %1474 = vmatprep.subr.mxu0 0.0
  %1475 = vmatpush1.msra.mxu0 0.0
  %1476 = vmatprep.subr.mxu0 0.0
  %1477 = vmatpush1.msra.mxu0 0.0
  %1478 = vmatprep.subr.mxu0 0.0
  %1479 = vmatpush1.msra.mxu0 0.0
  %1480 = vmatprep.mubr.f32.mxu0 0.0
  %1481 = vmatmul.mubr.f32.gmra.mrb[0].mxu0 %v1342
  %v1482 = vpop.f32.mrb[0].mxu0
  %v1483 = vadd.f32 0.0, %v1482
  %v1484 = vpop.f32.mrb[0].mxu0
  %1485 = vdwg.mxu0
  %v1486 = vadd.f32 %v1415, %v1483
  %v1487 = vmul.f32 %v1486, 0.5
  %v1488 = vtanh.pop %v1487
  %v1489 = vmul.f32 %v1488, 0.5
  %v1490 = vadd.f32 %v1489, 0.5
  %s1491 = scalar_lea.vmem %s1, 40
  %v1492 = vld [vmem:[%s1491] sm:$0xff]
  %v1493 = vadd.f32 %v1492, %v1411
  %v1495 = vsel %vm39, %v1490, 0
  %1497 = vmatprep.subr.mxu0 0.0
  %1498 = vmatpush1.msra.mxu0 %v26
  %1499 = vmatprep.subr.mxu0 0.0
  %1500 = vmatpush1.msra.mxu0 %v27
  %1501 = vmatprep.subr.mxu0 0.0
  %1502 = vmatpush1.msra.mxu0 %v28
  %1503 = vmatprep.subr.mxu0 0.0
  %1504 = vmatpush1.msra.mxu0 %v29
  %1505 = vmatprep.subr.mxu0 0.0
  %1506 = vmatpush1.msra.mxu0 0.0
  %1507 = vmatprep.subr.mxu0 0.0
  %1508 = vmatpush1.msra.mxu0 0.0
  %1509 = vmatprep.subr.mxu0 0.0
  %1510 = vmatpush1.msra.mxu0 0.0
  %1511 = vmatprep.subr.mxu0 0.0
  %1512 = vmatpush1.msra.mxu0 0.0
  %1513 = vmatprep.subr.mxu0 0.0
  %1514 = vmatpush1.msra.mxu0 0.0
  %1515 = vmatprep.subr.mxu0 0.0
  %1516 = vmatpush1.msra.mxu0 0.0
  %1517 = vmatprep.subr.mxu0 0.0
  %1518 = vmatpush1.msra.mxu0 0.0
  %1519 = vmatprep.subr.mxu0 0.0
  %1520 = vmatpush1.msra.mxu0 0.0
  %1521 = vmatprep.subr.mxu0 0.0
  %1522 = vmatpush1.msra.mxu0 0.0
  %1523 = vmatprep.subr.mxu0 0.0
  %1524 = vmatpush1.msra.mxu0 0.0
  %1525 = vmatprep.subr.mxu0 0.0
  %1526 = vmatpush1.msra.mxu0 0.0
  %1527 = vmatprep.subr.mxu0 0.0
  %1528 = vmatpush1.msra.mxu0 0.0
  %1529 = vmatprep.subr.mxu0 0.0
  %1530 = vmatpush1.msra.mxu0 0.0
  %1531 = vmatprep.subr.mxu0 0.0
  %1532 = vmatpush1.msra.mxu0 0.0
  %1533 = vmatprep.subr.mxu0 0.0
  %1534 = vmatpush1.msra.mxu0 0.0
  %1535 = vmatprep.subr.mxu0 0.0
  %1536 = vmatpush1.msra.mxu0 0.0
  %1537 = vmatprep.subr.mxu0 0.0
  %1538 = vmatpush1.msra.mxu0 0.0
  %1539 = vmatprep.subr.mxu0 0.0
  %1540 = vmatpush1.msra.mxu0 0.0
  %1541 = vmatprep.subr.mxu0 0.0
  %1542 = vmatpush1.msra.mxu0 0.0
  %1543 = vmatprep.subr.mxu0 0.0
  %1544 = vmatpush1.msra.mxu0 0.0
  %1545 = vmatprep.subr.mxu0 0.0
  %1546 = vmatpush1.msra.mxu0 0.0
  %1547 = vmatprep.subr.mxu0 0.0
  %1548 = vmatpush1.msra.mxu0 0.0
  %1549 = vmatprep.subr.mxu0 0.0
  %1550 = vmatpush1.msra.mxu0 0.0
  %1551 = vmatprep.subr.mxu0 0.0
  %1552 = vmatpush1.msra.mxu0 0.0
  %1553 = vmatprep.subr.mxu0 0.0
  %1554 = vmatpush1.msra.mxu0 0.0
  %1555 = vmatprep.subr.mxu0 0.0
  %1556 = vmatpush1.msra.mxu0 0.0
  %1557 = vmatprep.subr.mxu0 0.0
  %1558 = vmatpush1.msra.mxu0 0.0
  %1559 = vmatprep.subr.mxu0 0.0
  %1560 = vmatpush1.msra.mxu0 0.0
  %1561 = vmatprep.mubr.f32.mxu0 0.0
  %1562 = vmatmul.mubr.f32.gmra.mrb[0].mxu0 %v1495
  %v1563 = vpop.f32.mrb[0].mxu0
  %v1564 = vadd.f32 0.0, %v1563
  %v1565 = vpop.f32.mrb[0].mxu0
  %1566 = vdwg.mxu0
  %v1567 = vadd.f32 %v1493, %v1564
  %v1568 = vmul.f32 %v1567, 0.5
  %v1569 = vsel %vm38, %v1567, %v1568
  %v1570 = vtanh.pop %v1569
  %v1571 = vmul.f32 %v1570, 0.5
  %v1572 = vadd.f32 %v1571, 0.5
  %v1573 = vsel %vm38, %v1570, %v1572
  %v1574 = vmul.f32 %v1573, %v1323
  %1576 = vrot.lane.b32.xlu0 %v1573, 96
  %v1577 = vpop.permute.xlu0 %1576
  %v1579 = vmul.f32 %v1573, %v1577
  %1581 = vrot.lane.b32.xlu0 %v1579, 64
  %v1582 = vpop.permute.xlu0 %1581
  %v1584 = vadd.f32 %v1574, %v1582
  %v1585 = vtanh.pop %v1584
  %1587 = vrot.lane.b32.xlu0 %v1585, 32
  %v1588 = vpop.permute.xlu0 %1587
  %v1590 = vmul.f32 %v1573, %v1588
  %1592 = vrot.lane.b32.xlu0 %v1590, 32
  %v1593 = vpop.permute.xlu0 %1592
  %s1595 = scalar_lea.vmem %s5, 40
  %1596 = vst.msk [vmem:[%s1595] sm:$0xff] %vm39, %v1593
  %1598 = vrot.lane.b32.xlu0 %v1584, 64
  %v1599 = vpop.permute.xlu0 %1598
  %s1601 = scalar_lea.vmem %s6, 40
  %1602 = vst.msk [vmem:[%s1601] sm:$0xff] %vm39, %v1599
  %v1603 = vsel %vm39, %v1593, 0
  %1605 = vmatprep.subr.mxu0 0.0
  %1606 = vmatpush1.msra.mxu0 %v30
  %1607 = vmatprep.subr.mxu0 0.0
  %1608 = vmatpush1.msra.mxu0 %v31
  %1609 = vmatprep.subr.mxu0 0.0
  %1610 = vmatpush1.msra.mxu0 %v32
  %1611 = vmatprep.subr.mxu0 0.0
  %1612 = vmatpush1.msra.mxu0 %v33
  %1613 = vmatprep.subr.mxu0 0.0
  %1614 = vmatpush1.msra.mxu0 0.0
  %1615 = vmatprep.subr.mxu0 0.0
  %1616 = vmatpush1.msra.mxu0 0.0
  %1617 = vmatprep.subr.mxu0 0.0
  %1618 = vmatpush1.msra.mxu0 0.0
  %1619 = vmatprep.subr.mxu0 0.0
  %1620 = vmatpush1.msra.mxu0 0.0
  %1621 = vmatprep.subr.mxu0 0.0
  %1622 = vmatpush1.msra.mxu0 0.0
  %1623 = vmatprep.subr.mxu0 0.0
  %1624 = vmatpush1.msra.mxu0 0.0
  %1625 = vmatprep.subr.mxu0 0.0
  %1626 = vmatpush1.msra.mxu0 0.0
  %1627 = vmatprep.subr.mxu0 0.0
  %1628 = vmatpush1.msra.mxu0 0.0
  %1629 = vmatprep.subr.mxu0 0.0
  %1630 = vmatpush1.msra.mxu0 0.0
  %1631 = vmatprep.subr.mxu0 0.0
  %1632 = vmatpush1.msra.mxu0 0.0
  %1633 = vmatprep.subr.mxu0 0.0
  %1634 = vmatpush1.msra.mxu0 0.0
  %1635 = vmatprep.subr.mxu0 0.0
  %1636 = vmatpush1.msra.mxu0 0.0
  %1637 = vmatprep.subr.mxu0 0.0
  %1638 = vmatpush1.msra.mxu0 0.0
  %1639 = vmatprep.subr.mxu0 0.0
  %1640 = vmatpush1.msra.mxu0 0.0
  %1641 = vmatprep.subr.mxu0 0.0
  %1642 = vmatpush1.msra.mxu0 0.0
  %1643 = vmatprep.subr.mxu0 0.0
  %1644 = vmatpush1.msra.mxu0 0.0
  %1645 = vmatprep.subr.mxu0 0.0
  %1646 = vmatpush1.msra.mxu0 0.0
  %1647 = vmatprep.subr.mxu0 0.0
  %1648 = vmatpush1.msra.mxu0 0.0
  %1649 = vmatprep.subr.mxu0 0.0
  %1650 = vmatpush1.msra.mxu0 0.0
  %1651 = vmatprep.subr.mxu0 0.0
  %1652 = vmatpush1.msra.mxu0 0.0
  %1653 = vmatprep.subr.mxu0 0.0
  %1654 = vmatpush1.msra.mxu0 0.0
  %1655 = vmatprep.subr.mxu0 0.0
  %1656 = vmatpush1.msra.mxu0 0.0
  %1657 = vmatprep.subr.mxu0 0.0
  %1658 = vmatpush1.msra.mxu0 0.0
  %1659 = vmatprep.subr.mxu0 0.0
  %1660 = vmatpush1.msra.mxu0 0.0
  %1661 = vmatprep.subr.mxu0 0.0
  %1662 = vmatpush1.msra.mxu0 0.0
  %1663 = vmatprep.subr.mxu0 0.0
  %1664 = vmatpush1.msra.mxu0 0.0
  %1665 = vmatprep.subr.mxu0 0.0
  %1666 = vmatpush1.msra.mxu0 0.0
  %1667 = vmatprep.subr.mxu0 0.0
  %1668 = vmatpush1.msra.mxu0 0.0
  %1669 = vmatprep.mubr.f32.mxu0 0.0
  %1670 = vmatmul.mubr.f32.gmra.mrb[0].mxu0 %v1603
  %v1671 = vpop.f32.mrb[0].mxu0
  %v1672 = vadd.f32 0.0, %v1671
  %v1673 = vpop.f32.mrb[0].mxu0
  %1674 = vdwg.mxu0
  %s1675 = scalar_lea.vmem %s0, 48
  %v1676 = vld [vmem:[%s1675] sm:$0xff]
  %1677 = vmatprep.subr.mxu0 0.0
  %1678 = vmatpush1.msra.mxu0 %v22
  %1679 = vmatprep.subr.mxu0 0.0
  %1680 = vmatpush1.msra.mxu0 %v23
  %1681 = vmatprep.subr.mxu0 0.0
  %1682 = vmatpush1.msra.mxu0 %v24
  %1683 = vmatprep.subr.mxu0 0.0
  %1684 = vmatpush1.msra.mxu0 %v25
  %1685 = vmatprep.subr.mxu0 0.0
  %1686 = vmatpush1.msra.mxu0 0.0
  %1687 = vmatprep.subr.mxu0 0.0
  %1688 = vmatpush1.msra.mxu0 0.0
  %1689 = vmatprep.subr.mxu0 0.0
  %1690 = vmatpush1.msra.mxu0 0.0
  %1691 = vmatprep.subr.mxu0 0.0
  %1692 = vmatpush1.msra.mxu0 0.0
  %1693 = vmatprep.subr.mxu0 0.0
  %1694 = vmatpush1.msra.mxu0 0.0
  %1695 = vmatprep.subr.mxu0 0.0
  %1696 = vmatpush1.msra.mxu0 0.0
  %1697 = vmatprep.subr.mxu0 0.0
  %1698 = vmatpush1.msra.mxu0 0.0
  %1699 = vmatprep.subr.mxu0 0.0
  %1700 = vmatpush1.msra.mxu0 0.0
  %1701 = vmatprep.subr.mxu0 0.0
  %1702 = vmatpush1.msra.mxu0 0.0
  %1703 = vmatprep.subr.mxu0 0.0
  %1704 = vmatpush1.msra.mxu0 0.0
  %1705 = vmatprep.subr.mxu0 0.0
  %1706 = vmatpush1.msra.mxu0 0.0
  %1707 = vmatprep.subr.mxu0 0.0
  %1708 = vmatpush1.msra.mxu0 0.0
  %1709 = vmatprep.subr.mxu0 0.0
  %1710 = vmatpush1.msra.mxu0 0.0
  %1711 = vmatprep.subr.mxu0 0.0
  %1712 = vmatpush1.msra.mxu0 0.0
  %1713 = vmatprep.subr.mxu0 0.0
  %1714 = vmatpush1.msra.mxu0 0.0
  %1715 = vmatprep.subr.mxu0 0.0
  %1716 = vmatpush1.msra.mxu0 0.0
  %1717 = vmatprep.subr.mxu0 0.0
  %1718 = vmatpush1.msra.mxu0 0.0
  %1719 = vmatprep.subr.mxu0 0.0
  %1720 = vmatpush1.msra.mxu0 0.0
  %1721 = vmatprep.subr.mxu0 0.0
  %1722 = vmatpush1.msra.mxu0 0.0
  %1723 = vmatprep.subr.mxu0 0.0
  %1724 = vmatpush1.msra.mxu0 0.0
  %1725 = vmatprep.subr.mxu0 0.0
  %1726 = vmatpush1.msra.mxu0 0.0
  %1727 = vmatprep.subr.mxu0 0.0
  %1728 = vmatpush1.msra.mxu0 0.0
  %1729 = vmatprep.subr.mxu0 0.0
  %1730 = vmatpush1.msra.mxu0 0.0
  %1731 = vmatprep.subr.mxu0 0.0
  %1732 = vmatpush1.msra.mxu0 0.0
  %1733 = vmatprep.subr.mxu0 0.0
  %1734 = vmatpush1.msra.mxu0 0.0
  %1735 = vmatprep.subr.mxu0 0.0
  %1736 = vmatpush1.msra.mxu0 0.0
  %1737 = vmatprep.subr.mxu0 0.0
  %1738 = vmatpush1.msra.mxu0 0.0
  %1739 = vmatprep.subr.mxu0 0.0
  %1740 = vmatpush1.msra.mxu0 0.0
  %1741 = vmatprep.mubr.f32.mxu0 0.0
  %1742 = vmatmul.mubr.f32.gmra.mrb[0].mxu0 %v1603
  %v1743 = vpop.f32.mrb[0].mxu0
  %v1744 = vadd.f32 0.0, %v1743
  %v1745 = vpop.f32.mrb[0].mxu0
  %1746 = vdwg.mxu0
  %v1747 = vadd.f32 %v1676, %v1744
  %v1748 = vmul.f32 %v1747, 0.5
  %v1749 = vtanh.pop %v1748
  %v1750 = vmul.f32 %v1749, 0.5
  %v1751 = vadd.f32 %v1750, 0.5
  %s1752 = scalar_lea.vmem %s1, 48
  %v1753 = vld [vmem:[%s1752] sm:$0xff]
  %v1754 = vadd.f32 %v1753, %v1672
  %v1756 = vsel %vm39, %v1751, 0
  %1758 = vmatprep.subr.mxu0 0.0
  %1759 = vmatpush1.msra.mxu0 %v26
  %1760 = vmatprep.subr.mxu0 0.0
  %1761 = vmatpush1.msra.mxu0 %v27
  %1762 = vmatprep.subr.mxu0 0.0
  %1763 = vmatpush1.msra.mxu0 %v28
  %1764 = vmatprep.subr.mxu0 0.0
  %1765 = vmatpush1.msra.mxu0 %v29
  %1766 = vmatprep.subr.mxu0 0.0
  %1767 = vmatpush1.msra.mxu0 0.0
  %1768 = vmatprep.subr.mxu0 0.0
  %1769 = vmatpush1.msra.mxu0 0.0
  %1770 = vmatprep.subr.mxu0 0.0
  %1771 = vmatpush1.msra.mxu0 0.0
  %1772 = vmatprep.subr.mxu0 0.0
  %1773 = vmatpush1.msra.mxu0 0.0
  %1774 = vmatprep.subr.mxu0 0.0
  %1775 = vmatpush1.msra.mxu0 0.0
  %1776 = vmatprep.subr.mxu0 0.0
  %1777 = vmatpush1.msra.mxu0 0.0
  %1778 = vmatprep.subr.mxu0 0.0
  %1779 = vmatpush1.msra.mxu0 0.0
  %1780 = vmatprep.subr.mxu0 0.0
  %1781 = vmatpush1.msra.mxu0 0.0
  %1782 = vmatprep.subr.mxu0 0.0
  %1783 = vmatpush1.msra.mxu0 0.0
  %1784 = vmatprep.subr.mxu0 0.0
  %1785 = vmatpush1.msra.mxu0 0.0
  %1786 = vmatprep.subr.mxu0 0.0
  %1787 = vmatpush1.msra.mxu0 0.0
  %1788 = vmatprep.subr.mxu0 0.0
  %1789 = vmatpush1.msra.mxu0 0.0
  %1790 = vmatprep.subr.mxu0 0.0
  %1791 = vmatpush1.msra.mxu0 0.0
  %1792 = vmatprep.subr.mxu0 0.0
  %1793 = vmatpush1.msra.mxu0 0.0
  %1794 = vmatprep.subr.mxu0 0.0
  %1795 = vmatpush1.msra.mxu0 0.0
  %1796 = vmatprep.subr.mxu0 0.0
  %1797 = vmatpush1.msra.mxu0 0.0
  %1798 = vmatprep.subr.mxu0 0.0
  %1799 = vmatpush1.msra.mxu0 0.0
  %1800 = vmatprep.subr.mxu0 0.0
  %1801 = vmatpush1.msra.mxu0 0.0
  %1802 = vmatprep.subr.mxu0 0.0
  %1803 = vmatpush1.msra.mxu0 0.0
  %1804 = vmatprep.subr.mxu0 0.0
  %1805 = vmatpush1.msra.mxu0 0.0
  %1806 = vmatprep.subr.mxu0 0.0
  %1807 = vmatpush1.msra.mxu0 0.0
  %1808 = vmatprep.subr.mxu0 0.0
  %1809 = vmatpush1.msra.mxu0 0.0
  %1810 = vmatprep.subr.mxu0 0.0
  %1811 = vmatpush1.msra.mxu0 0.0
  %1812 = vmatprep.subr.mxu0 0.0
  %1813 = vmatpush1.msra.mxu0 0.0
  %1814 = vmatprep.subr.mxu0 0.0
  %1815 = vmatpush1.msra.mxu0 0.0
  %1816 = vmatprep.subr.mxu0 0.0
  %1817 = vmatpush1.msra.mxu0 0.0
  %1818 = vmatprep.subr.mxu0 0.0
  %1819 = vmatpush1.msra.mxu0 0.0
  %1820 = vmatprep.subr.mxu0 0.0
  %1821 = vmatpush1.msra.mxu0 0.0
  %1822 = vmatprep.mubr.f32.mxu0 0.0
  %1823 = vmatmul.mubr.f32.gmra.mrb[0].mxu0 %v1756
  %v1824 = vpop.f32.mrb[0].mxu0
  %v1825 = vadd.f32 0.0, %v1824
  %v1826 = vpop.f32.mrb[0].mxu0
  %1827 = vdwg.mxu0
  %v1828 = vadd.f32 %v1754, %v1825
  %v1829 = vmul.f32 %v1828, 0.5
  %v1830 = vsel %vm38, %v1828, %v1829
  %v1831 = vtanh.pop %v1830
  %v1832 = vmul.f32 %v1831, 0.5
  %v1833 = vadd.f32 %v1832, 0.5
  %v1834 = vsel %vm38, %v1831, %v1833
  %v1835 = vmul.f32 %v1834, %v1584
  %1837 = vrot.lane.b32.xlu0 %v1834, 96
  %v1838 = vpop.permute.xlu0 %1837
  %v1840 = vmul.f32 %v1834, %v1838
  %1842 = vrot.lane.b32.xlu0 %v1840, 64
  %v1843 = vpop.permute.xlu0 %1842
  %v1845 = vadd.f32 %v1835, %v1843
  %v1846 = vtanh.pop %v1845
  %1848 = vrot.lane.b32.xlu0 %v1846, 32
  %v1849 = vpop.permute.xlu0 %1848
  %v1851 = vmul.f32 %v1834, %v1849
  %1853 = vrot.lane.b32.xlu0 %v1851, 32
  %v1854 = vpop.permute.xlu0 %1853
  %s1856 = scalar_lea.vmem %s5, 48
  %1857 = vst.msk [vmem:[%s1856] sm:$0xff] %vm39, %v1854
  %1859 = vrot.lane.b32.xlu0 %v1845, 64
  %v1860 = vpop.permute.xlu0 %1859
  %s1862 = scalar_lea.vmem %s6, 48
  %1863 = vst.msk [vmem:[%s1862] sm:$0xff] %vm39, %v1860
  %v1864 = vsel %vm39, %v1854, 0
  %1866 = vmatprep.subr.mxu0 0.0
  %1867 = vmatpush1.msra.mxu0 %v30
  %1868 = vmatprep.subr.mxu0 0.0
  %1869 = vmatpush1.msra.mxu0 %v31
  %1870 = vmatprep.subr.mxu0 0.0
  %1871 = vmatpush1.msra.mxu0 %v32
  %1872 = vmatprep.subr.mxu0 0.0
  %1873 = vmatpush1.msra.mxu0 %v33
  %1874 = vmatprep.subr.mxu0 0.0
  %1875 = vmatpush1.msra.mxu0 0.0
  %1876 = vmatprep.subr.mxu0 0.0
  %1877 = vmatpush1.msra.mxu0 0.0
  %1878 = vmatprep.subr.mxu0 0.0
  %1879 = vmatpush1.msra.mxu0 0.0
  %1880 = vmatprep.subr.mxu0 0.0
  %1881 = vmatpush1.msra.mxu0 0.0
  %1882 = vmatprep.subr.mxu0 0.0
  %1883 = vmatpush1.msra.mxu0 0.0
  %1884 = vmatprep.subr.mxu0 0.0
  %1885 = vmatpush1.msra.mxu0 0.0
  %1886 = vmatprep.subr.mxu0 0.0
  %1887 = vmatpush1.msra.mxu0 0.0
  %1888 = vmatprep.subr.mxu0 0.0
  %1889 = vmatpush1.msra.mxu0 0.0
  %1890 = vmatprep.subr.mxu0 0.0
  %1891 = vmatpush1.msra.mxu0 0.0
  %1892 = vmatprep.subr.mxu0 0.0
  %1893 = vmatpush1.msra.mxu0 0.0
  %1894 = vmatprep.subr.mxu0 0.0
  %1895 = vmatpush1.msra.mxu0 0.0
  %1896 = vmatprep.subr.mxu0 0.0
  %1897 = vmatpush1.msra.mxu0 0.0
  %1898 = vmatprep.subr.mxu0 0.0
  %1899 = vmatpush1.msra.mxu0 0.0
  %1900 = vmatprep.subr.mxu0 0.0
  %1901 = vmatpush1.msra.mxu0 0.0
  %1902 = vmatprep.subr.mxu0 0.0
  %1903 = vmatpush1.msra.mxu0 0.0
  %1904 = vmatprep.subr.mxu0 0.0
  %1905 = vmatpush1.msra.mxu0 0.0
  %1906 = vmatprep.subr.mxu0 0.0
  %1907 = vmatpush1.msra.mxu0 0.0
  %1908 = vmatprep.subr.mxu0 0.0
  %1909 = vmatpush1.msra.mxu0 0.0
  %1910 = vmatprep.subr.mxu0 0.0
  %1911 = vmatpush1.msra.mxu0 0.0
  %1912 = vmatprep.subr.mxu0 0.0
  %1913 = vmatpush1.msra.mxu0 0.0
  %1914 = vmatprep.subr.mxu0 0.0
  %1915 = vmatpush1.msra.mxu0 0.0
  %1916 = vmatprep.subr.mxu0 0.0
  %1917 = vmatpush1.msra.mxu0 0.0
  %1918 = vmatprep.subr.mxu0 0.0
  %1919 = vmatpush1.msra.mxu0 0.0
  %1920 = vmatprep.subr.mxu0 0.0
  %1921 = vmatpush1.msra.mxu0 0.0
  %1922 = vmatprep.subr.mxu0 0.0
  %1923 = vmatpush1.msra.mxu0 0.0
  %1924 = vmatprep.subr.mxu0 0.0
  %1925 = vmatpush1.msra.mxu0 0.0
  %1926 = vmatprep.subr.mxu0 0.0
  %1927 = vmatpush1.msra.mxu0 0.0
  %1928 = vmatprep.subr.mxu0 0.0
  %1929 = vmatpush1.msra.mxu0 0.0
  %1930 = vmatprep.mubr.f32.mxu0 0.0
  %1931 = vmatmul.mubr.f32.gmra.mrb[0].mxu0 %v1864
  %v1932 = vpop.f32.mrb[0].mxu0
  %v1933 = vadd.f32 0.0, %v1932
  %v1934 = vpop.f32.mrb[0].mxu0
  %1935 = vdwg.mxu0
  %s1936 = scalar_lea.vmem %s0, 56
  %v1937 = vld [vmem:[%s1936] sm:$0xff]
  %1938 = vmatprep.subr.mxu0 0.0
  %1939 = vmatpush1.msra.mxu0 %v22
  %1940 = vmatprep.subr.mxu0 0.0
  %1941 = vmatpush1.msra.mxu0 %v23
  %1942 = vmatprep.subr.mxu0 0.0
  %1943 = vmatpush1.msra.mxu0 %v24
  %1944 = vmatprep.subr.mxu0 0.0
  %1945 = vmatpush1.msra.mxu0 %v25
  %1946 = vmatprep.subr.mxu0 0.0
  %1947 = vmatpush1.msra.mxu0 0.0
  %1948 = vmatprep.subr.mxu0 0.0
  %1949 = vmatpush1.msra.mxu0 0.0
  %1950 = vmatprep.subr.mxu0 0.0
  %1951 = vmatpush1.msra.mxu0 0.0
  %1952 = vmatprep.subr.mxu0 0.0
  %1953 = vmatpush1.msra.mxu0 0.0
  %1954 = vmatprep.subr.mxu0 0.0
  %1955 = vmatpush1.msra.mxu0 0.0
  %1956 = vmatprep.subr.mxu0 0.0
  %1957 = vmatpush1.msra.mxu0 0.0
  %1958 = vmatprep.subr.mxu0 0.0
  %1959 = vmatpush1.msra.mxu0 0.0
  %1960 = vmatprep.subr.mxu0 0.0
  %1961 = vmatpush1.msra.mxu0 0.0
  %1962 = vmatprep.subr.mxu0 0.0
  %1963 = vmatpush1.msra.mxu0 0.0
  %1964 = vmatprep.subr.mxu0 0.0
  %1965 = vmatpush1.msra.mxu0 0.0
  %1966 = vmatprep.subr.mxu0 0.0
  %1967 = vmatpush1.msra.mxu0 0.0
  %1968 = vmatprep.subr.mxu0 0.0
  %1969 = vmatpush1.msra.mxu0 0.0
  %1970 = vmatprep.subr.mxu0 0.0
  %1971 = vmatpush1.msra.mxu0 0.0
  %1972 = vmatprep.subr.mxu0 0.0
  %1973 = vmatpush1.msra.mxu0 0.0
  %1974 = vmatprep.subr.mxu0 0.0
  %1975 = vmatpush1.msra.mxu0 0.0
  %1976 = vmatprep.subr.mxu0 0.0
  %1977 = vmatpush1.msra.mxu0 0.0
  %1978 = vmatprep.subr.mxu0 0.0
  %1979 = vmatpush1.msra.mxu0 0.0
  %1980 = vmatprep.subr.mxu0 0.0
  %1981 = vmatpush1.msra.mxu0 0.0
  %1982 = vmatprep.subr.mxu0 0.0
  %1983 = vmatpush1.msra.mxu0 0.0
  %1984 = vmatprep.subr.mxu0 0.0
  %1985 = vmatpush1.msra.mxu0 0.0
  %1986 = vmatprep.subr.mxu0 0.0
  %1987 = vmatpush1.msra.mxu0 0.0
  %1988 = vmatprep.subr.mxu0 0.0
  %1989 = vmatpush1.msra.mxu0 0.0
  %1990 = vmatprep.subr.mxu0 0.0
  %1991 = vmatpush1.msra.mxu0 0.0
  %1992 = vmatprep.subr.mxu0 0.0
  %1993 = vmatpush1.msra.mxu0 0.0
  %1994 = vmatprep.subr.mxu0 0.0
  %1995 = vmatpush1.msra.mxu0 0.0
  %1996 = vmatprep.subr.mxu0 0.0
  %1997 = vmatpush1.msra.mxu0 0.0
  %1998 = vmatprep.subr.mxu0 0.0
  %1999 = vmatpush1.msra.mxu0 0.0
  %2000 = vmatprep.subr.mxu0 0.0
  %2001 = vmatpush1.msra.mxu0 0.0
  %2002 = vmatprep.mubr.f32.mxu0 0.0
  %2003 = vmatmul.mubr.f32.gmra.mrb[0].mxu0 %v1864
  %v2004 = vpop.f32.mrb[0].mxu0
  %v2005 = vadd.f32 0.0, %v2004
  %v2006 = vpop.f32.mrb[0].mxu0
  %2007 = vdwg.mxu0
  %v2008 = vadd.f32 %v1937, %v2005
  %v2009 = vmul.f32 %v2008, 0.5
  %v2010 = vtanh.pop %v2009
  %v2011 = vmul.f32 %v2010, 0.5
  %v2012 = vadd.f32 %v2011, 0.5
  %s2013 = scalar_lea.vmem %s1, 56
  %v2014 = vld [vmem:[%s2013] sm:$0xff]
  %v2015 = vadd.f32 %v2014, %v1933
  %v2017 = vsel %vm39, %v2012, 0
  %2019 = vmatprep.subr.mxu0 0.0
  %2020 = vmatpush1.msra.mxu0 %v26
  %2021 = vmatprep.subr.mxu0 0.0
  %2022 = vmatpush1.msra.mxu0 %v27
  %2023 = vmatprep.subr.mxu0 0.0
  %2024 = vmatpush1.msra.mxu0 %v28
  %2025 = vmatprep.subr.mxu0 0.0
  %2026 = vmatpush1.msra.mxu0 %v29
  %2027 = vmatprep.subr.mxu0 0.0
  %2028 = vmatpush1.msra.mxu0 0.0
  %2029 = vmatprep.subr.mxu0 0.0
  %2030 = vmatpush1.msra.mxu0 0.0
  %2031 = vmatprep.subr.mxu0 0.0
  %2032 = vmatpush1.msra.mxu0 0.0
  %2033 = vmatprep.subr.mxu0 0.0
  %2034 = vmatpush1.msra.mxu0 0.0
  %2035 = vmatprep.subr.mxu0 0.0
  %2036 = vmatpush1.msra.mxu0 0.0
  %2037 = vmatprep.subr.mxu0 0.0
  %2038 = vmatpush1.msra.mxu0 0.0
  %2039 = vmatprep.subr.mxu0 0.0
  %2040 = vmatpush1.msra.mxu0 0.0
  %2041 = vmatprep.subr.mxu0 0.0
  %2042 = vmatpush1.msra.mxu0 0.0
  %2043 = vmatprep.subr.mxu0 0.0
  %2044 = vmatpush1.msra.mxu0 0.0
  %2045 = vmatprep.subr.mxu0 0.0
  %2046 = vmatpush1.msra.mxu0 0.0
  %2047 = vmatprep.subr.mxu0 0.0
  %2048 = vmatpush1.msra.mxu0 0.0
  %2049 = vmatprep.subr.mxu0 0.0
  %2050 = vmatpush1.msra.mxu0 0.0
  %2051 = vmatprep.subr.mxu0 0.0
  %2052 = vmatpush1.msra.mxu0 0.0
  %2053 = vmatprep.subr.mxu0 0.0
  %2054 = vmatpush1.msra.mxu0 0.0
  %2055 = vmatprep.subr.mxu0 0.0
  %2056 = vmatpush1.msra.mxu0 0.0
  %2057 = vmatprep.subr.mxu0 0.0
  %2058 = vmatpush1.msra.mxu0 0.0
  %2059 = vmatprep.subr.mxu0 0.0
  %2060 = vmatpush1.msra.mxu0 0.0
  %2061 = vmatprep.subr.mxu0 0.0
  %2062 = vmatpush1.msra.mxu0 0.0
  %2063 = vmatprep.subr.mxu0 0.0
  %2064 = vmatpush1.msra.mxu0 0.0
  %2065 = vmatprep.subr.mxu0 0.0
  %2066 = vmatpush1.msra.mxu0 0.0
  %2067 = vmatprep.subr.mxu0 0.0
  %2068 = vmatpush1.msra.mxu0 0.0
  %2069 = vmatprep.subr.mxu0 0.0
  %2070 = vmatpush1.msra.mxu0 0.0
  %2071 = vmatprep.subr.mxu0 0.0
  %2072 = vmatpush1.msra.mxu0 0.0
  %2073 = vmatprep.subr.mxu0 0.0
  %2074 = vmatpush1.msra.mxu0 0.0
  %2075 = vmatprep.subr.mxu0 0.0
  %2076 = vmatpush1.msra.mxu0 0.0
  %2077 = vmatprep.subr.mxu0 0.0
  %2078 = vmatpush1.msra.mxu0 0.0
  %2079 = vmatprep.subr.mxu0 0.0
  %2080 = vmatpush1.msra.mxu0 0.0
  %2081 = vmatprep.subr.mxu0 0.0
  %2082 = vmatpush1.msra.mxu0 0.0
  %2083 = vmatprep.mubr.f32.mxu0 0.0
  %2084 = vmatmul.mubr.f32.gmra.mrb[0].mxu0 %v2017
  %v2085 = vpop.f32.mrb[0].mxu0
  %v2086 = vadd.f32 0.0, %v2085
  %v2087 = vpop.f32.mrb[0].mxu0
  %2088 = vdwg.mxu0
  %v2089 = vadd.f32 %v2015, %v2086
  %v2090 = vmul.f32 %v2089, 0.5
  %v2091 = vsel %vm38, %v2089, %v2090
  %v2092 = vtanh.pop %v2091
  %v2093 = vmul.f32 %v2092, 0.5
  %v2094 = vadd.f32 %v2093, 0.5
  %v2095 = vsel %vm38, %v2092, %v2094
  %v2096 = vmul.f32 %v2095, %v1845
  %2098 = vrot.lane.b32.xlu0 %v2095, 96
  %v2099 = vpop.permute.xlu0 %2098
  %v2101 = vmul.f32 %v2095, %v2099
  %2103 = vrot.lane.b32.xlu0 %v2101, 64
  %v2104 = vpop.permute.xlu0 %2103
  %v2106 = vadd.f32 %v2096, %v2104
  %v2107 = vtanh.pop %v2106
  %2109 = vrot.lane.b32.xlu0 %v2107, 32
  %v2110 = vpop.permute.xlu0 %2109
  %v2112 = vmul.f32 %v2095, %v2110
  %2114 = vrot.lane.b32.xlu0 %v2112, 32
  %v2115 = vpop.permute.xlu0 %2114
  %s2117 = scalar_lea.vmem %s5, 56
  %2118 = vst.msk [vmem:[%s2117] sm:$0xff] %vm39, %v2115
  %2120 = vrot.lane.b32.xlu0 %v2106, 64
  %v2121 = vpop.permute.xlu0 %2120
  %s2123 = scalar_lea.vmem %s6, 56
  %2124 = vst.msk [vmem:[%s2123] sm:$0xff] %vm39, %v2121
  %v2125 = vsel %vm39, %v2115, 0
  %2127 = vmatprep.subr.mxu0 0.0
  %2128 = vmatpush1.msra.mxu0 %v30
  %2129 = vmatprep.subr.mxu0 0.0
  %2130 = vmatpush1.msra.mxu0 %v31
  %2131 = vmatprep.subr.mxu0 0.0
  %2132 = vmatpush1.msra.mxu0 %v32
  %2133 = vmatprep.subr.mxu0 0.0
  %2134 = vmatpush1.msra.mxu0 %v33
  %2135 = vmatprep.subr.mxu0 0.0
  %2136 = vmatpush1.msra.mxu0 0.0
  %2137 = vmatprep.subr.mxu0 0.0
  %2138 = vmatpush1.msra.mxu0 0.0
  %2139 = vmatprep.subr.mxu0 0.0
  %2140 = vmatpush1.msra.mxu0 0.0
  %2141 = vmatprep.subr.mxu0 0.0
  %2142 = vmatpush1.msra.mxu0 0.0
  %2143 = vmatprep.subr.mxu0 0.0
  %2144 = vmatpush1.msra.mxu0 0.0
  %2145 = vmatprep.subr.mxu0 0.0
  %2146 = vmatpush1.msra.mxu0 0.0
  %2147 = vmatprep.subr.mxu0 0.0
  %2148 = vmatpush1.msra.mxu0 0.0
  %2149 = vmatprep.subr.mxu0 0.0
  %2150 = vmatpush1.msra.mxu0 0.0
  %2151 = vmatprep.subr.mxu0 0.0
  %2152 = vmatpush1.msra.mxu0 0.0
  %2153 = vmatprep.subr.mxu0 0.0
  %2154 = vmatpush1.msra.mxu0 0.0
  %2155 = vmatprep.subr.mxu0 0.0
  %2156 = vmatpush1.msra.mxu0 0.0
  %2157 = vmatprep.subr.mxu0 0.0
  %2158 = vmatpush1.msra.mxu0 0.0
  %2159 = vmatprep.subr.mxu0 0.0
  %2160 = vmatpush1.msra.mxu0 0.0
  %2161 = vmatprep.subr.mxu0 0.0
  %2162 = vmatpush1.msra.mxu0 0.0
  %2163 = vmatprep.subr.mxu0 0.0
  %2164 = vmatpush1.msra.mxu0 0.0
  %2165 = vmatprep.subr.mxu0 0.0
  %2166 = vmatpush1.msra.mxu0 0.0
  %2167 = vmatprep.subr.mxu0 0.0
  %2168 = vmatpush1.msra.mxu0 0.0
  %2169 = vmatprep.subr.mxu0 0.0
  %2170 = vmatpush1.msra.mxu0 0.0
  %2171 = vmatprep.subr.mxu0 0.0
  %2172 = vmatpush1.msra.mxu0 0.0
  %2173 = vmatprep.subr.mxu0 0.0
  %2174 = vmatpush1.msra.mxu0 0.0
  %2175 = vmatprep.subr.mxu0 0.0
  %2176 = vmatpush1.msra.mxu0 0.0
  %2177 = vmatprep.subr.mxu0 0.0
  %2178 = vmatpush1.msra.mxu0 0.0
  %2179 = vmatprep.subr.mxu0 0.0
  %2180 = vmatpush1.msra.mxu0 0.0
  %2181 = vmatprep.subr.mxu0 0.0
  %2182 = vmatpush1.msra.mxu0 0.0
  %2183 = vmatprep.subr.mxu0 0.0
  %2184 = vmatpush1.msra.mxu0 0.0
  %2185 = vmatprep.subr.mxu0 0.0
  %2186 = vmatpush1.msra.mxu0 0.0
  %2187 = vmatprep.subr.mxu0 0.0
  %2188 = vmatpush1.msra.mxu0 0.0
  %2189 = vmatprep.subr.mxu0 0.0
  %2190 = vmatpush1.msra.mxu0 0.0
  %2191 = vmatprep.mubr.f32.mxu0 0.0
  %2192 = vmatmul.mubr.f32.gmra.mrb[0].mxu0 %v2125
  %v2193 = vpop.f32.mrb[0].mxu0
  %v2194 = vadd.f32 0.0, %v2193
  %v2195 = vpop.f32.mrb[0].mxu0
  %2196 = vdwg.mxu0
  %s2197 = scalar_lea.vmem %s0, 64
  %v2198 = vld [vmem:[%s2197] sm:$0xff]
  %2199 = vmatprep.subr.mxu0 0.0
  %2200 = vmatpush1.msra.mxu0 %v22
  %2201 = vmatprep.subr.mxu0 0.0
  %2202 = vmatpush1.msra.mxu0 %v23
  %2203 = vmatprep.subr.mxu0 0.0
  %2204 = vmatpush1.msra.mxu0 %v24
  %2205 = vmatprep.subr.mxu0 0.0
  %2206 = vmatpush1.msra.mxu0 %v25
  %2207 = vmatprep.subr.mxu0 0.0
  %2208 = vmatpush1.msra.mxu0 0.0
  %2209 = vmatprep.subr.mxu0 0.0
  %2210 = vmatpush1.msra.mxu0 0.0
  %2211 = vmatprep.subr.mxu0 0.0
  %2212 = vmatpush1.msra.mxu0 0.0
  %2213 = vmatprep.subr.mxu0 0.0
  %2214 = vmatpush1.msra.mxu0 0.0
  %2215 = vmatprep.subr.mxu0 0.0
  %2216 = vmatpush1.msra.mxu0 0.0
  %2217 = vmatprep.subr.mxu0 0.0
  %2218 = vmatpush1.msra.mxu0 0.0
  %2219 = vmatprep.subr.mxu0 0.0
  %2220 = vmatpush1.msra.mxu0 0.0
  %2221 = vmatprep.subr.mxu0 0.0
  %2222 = vmatpush1.msra.mxu0 0.0
  %2223 = vmatprep.subr.mxu0 0.0
  %2224 = vmatpush1.msra.mxu0 0.0
  %2225 = vmatprep.subr.mxu0 0.0
  %2226 = vmatpush1.msra.mxu0 0.0
  %2227 = vmatprep.subr.mxu0 0.0
  %2228 = vmatpush1.msra.mxu0 0.0
  %2229 = vmatprep.subr.mxu0 0.0
  %2230 = vmatpush1.msra.mxu0 0.0
  %2231 = vmatprep.subr.mxu0 0.0
  %2232 = vmatpush1.msra.mxu0 0.0
  %2233 = vmatprep.subr.mxu0 0.0
  %2234 = vmatpush1.msra.mxu0 0.0
  %2235 = vmatprep.subr.mxu0 0.0
  %2236 = vmatpush1.msra.mxu0 0.0
  %2237 = vmatprep.subr.mxu0 0.0
  %2238 = vmatpush1.msra.mxu0 0.0
  %2239 = vmatprep.subr.mxu0 0.0
  %2240 = vmatpush1.msra.mxu0 0.0
  %2241 = vmatprep.subr.mxu0 0.0
  %2242 = vmatpush1.msra.mxu0 0.0
  %2243 = vmatprep.subr.mxu0 0.0
  %2244 = vmatpush1.msra.mxu0 0.0
  %2245 = vmatprep.subr.mxu0 0.0
  %2246 = vmatpush1.msra.mxu0 0.0
  %2247 = vmatprep.subr.mxu0 0.0
  %2248 = vmatpush1.msra.mxu0 0.0
  %2249 = vmatprep.subr.mxu0 0.0
  %2250 = vmatpush1.msra.mxu0 0.0
  %2251 = vmatprep.subr.mxu0 0.0
  %2252 = vmatpush1.msra.mxu0 0.0
  %2253 = vmatprep.subr.mxu0 0.0
  %2254 = vmatpush1.msra.mxu0 0.0
  %2255 = vmatprep.subr.mxu0 0.0
  %2256 = vmatpush1.msra.mxu0 0.0
  %2257 = vmatprep.subr.mxu0 0.0
  %2258 = vmatpush1.msra.mxu0 0.0
  %2259 = vmatprep.subr.mxu0 0.0
  %2260 = vmatpush1.msra.mxu0 0.0
  %2261 = vmatprep.subr.mxu0 0.0
  %2262 = vmatpush1.msra.mxu0 0.0
  %2263 = vmatprep.mubr.f32.mxu0 0.0
  %2264 = vmatmul.mubr.f32.gmra.mrb[0].mxu0 %v2125
  %v2265 = vpop.f32.mrb[0].mxu0
  %v2266 = vadd.f32 0.0, %v2265
  %v2267 = vpop.f32.mrb[0].mxu0
  %2268 = vdwg.mxu0
  %v2269 = vadd.f32 %v2198, %v2266
  %v2270 = vmul.f32 %v2269, 0.5
  %v2271 = vtanh.pop %v2270
  %v2272 = vmul.f32 %v2271, 0.5
  %v2273 = vadd.f32 %v2272, 0.5
  %s2274 = scalar_lea.vmem %s1, 64
  %v2275 = vld [vmem:[%s2274] sm:$0xff]
  %v2276 = vadd.f32 %v2275, %v2194
  %v2278 = vsel %vm39, %v2273, 0
  %2280 = vmatprep.subr.mxu0 0.0
  %2281 = vmatpush1.msra.mxu0 %v26
  %2282 = vmatprep.subr.mxu0 0.0
  %2283 = vmatpush1.msra.mxu0 %v27
  %2284 = vmatprep.subr.mxu0 0.0
  %2285 = vmatpush1.msra.mxu0 %v28
  %2286 = vmatprep.subr.mxu0 0.0
  %2287 = vmatpush1.msra.mxu0 %v29
  %2288 = vmatprep.subr.mxu0 0.0
  %2289 = vmatpush1.msra.mxu0 0.0
  %2290 = vmatprep.subr.mxu0 0.0
  %2291 = vmatpush1.msra.mxu0 0.0
  %2292 = vmatprep.subr.mxu0 0.0
  %2293 = vmatpush1.msra.mxu0 0.0
  %2294 = vmatprep.subr.mxu0 0.0
  %2295 = vmatpush1.msra.mxu0 0.0
  %2296 = vmatprep.subr.mxu0 0.0
  %2297 = vmatpush1.msra.mxu0 0.0
  %2298 = vmatprep.subr.mxu0 0.0
  %2299 = vmatpush1.msra.mxu0 0.0
  %2300 = vmatprep.subr.mxu0 0.0
  %2301 = vmatpush1.msra.mxu0 0.0
  %2302 = vmatprep.subr.mxu0 0.0
  %2303 = vmatpush1.msra.mxu0 0.0
  %2304 = vmatprep.subr.mxu0 0.0
  %2305 = vmatpush1.msra.mxu0 0.0
  %2306 = vmatprep.subr.mxu0 0.0
  %2307 = vmatpush1.msra.mxu0 0.0
  %2308 = vmatprep.subr.mxu0 0.0
  %2309 = vmatpush1.msra.mxu0 0.0
  %2310 = vmatprep.subr.mxu0 0.0
  %2311 = vmatpush1.msra.mxu0 0.0
  %2312 = vmatprep.subr.mxu0 0.0
  %2313 = vmatpush1.msra.mxu0 0.0
  %2314 = vmatprep.subr.mxu0 0.0
  %2315 = vmatpush1.msra.mxu0 0.0
  %2316 = vmatprep.subr.mxu0 0.0
  %2317 = vmatpush1.msra.mxu0 0.0
  %2318 = vmatprep.subr.mxu0 0.0
  %2319 = vmatpush1.msra.mxu0 0.0
  %2320 = vmatprep.subr.mxu0 0.0
  %2321 = vmatpush1.msra.mxu0 0.0
  %2322 = vmatprep.subr.mxu0 0.0
  %2323 = vmatpush1.msra.mxu0 0.0
  %2324 = vmatprep.subr.mxu0 0.0
  %2325 = vmatpush1.msra.mxu0 0.0
  %2326 = vmatprep.subr.mxu0 0.0
  %2327 = vmatpush1.msra.mxu0 0.0
  %2328 = vmatprep.subr.mxu0 0.0
  %2329 = vmatpush1.msra.mxu0 0.0
  %2330 = vmatprep.subr.mxu0 0.0
  %2331 = vmatpush1.msra.mxu0 0.0
  %2332 = vmatprep.subr.mxu0 0.0
  %2333 = vmatpush1.msra.mxu0 0.0
  %2334 = vmatprep.subr.mxu0 0.0
  %2335 = vmatpush1.msra.mxu0 0.0
  %2336 = vmatprep.subr.mxu0 0.0
  %2337 = vmatpush1.msra.mxu0 0.0
  %2338 = vmatprep.subr.mxu0 0.0
  %2339 = vmatpush1.msra.mxu0 0.0
  %2340 = vmatprep.subr.mxu0 0.0
  %2341 = vmatpush1.msra.mxu0 0.0
  %2342 = vmatprep.subr.mxu0 0.0
  %2343 = vmatpush1.msra.mxu0 0.0
  %2344 = vmatprep.mubr.f32.mxu0 0.0
  %2345 = vmatmul.mubr.f32.gmra.mrb[0].mxu0 %v2278
  %v2346 = vpop.f32.mrb[0].mxu0
  %v2347 = vadd.f32 0.0, %v2346
  %v2348 = vpop.f32.mrb[0].mxu0
  %2349 = vdwg.mxu0
  %v2350 = vadd.f32 %v2276, %v2347
  %v2351 = vmul.f32 %v2350, 0.5
  %v2352 = vsel %vm38, %v2350, %v2351
  %v2353 = vtanh.pop %v2352
  %v2354 = vmul.f32 %v2353, 0.5
  %v2355 = vadd.f32 %v2354, 0.5
  %v2356 = vsel %vm38, %v2353, %v2355
  %v2357 = vmul.f32 %v2356, %v2106
  %2359 = vrot.lane.b32.xlu0 %v2356, 96
  %v2360 = vpop.permute.xlu0 %2359
  %v2362 = vmul.f32 %v2356, %v2360
  %2364 = vrot.lane.b32.xlu0 %v2362, 64
  %v2365 = vpop.permute.xlu0 %2364
  %v2367 = vadd.f32 %v2357, %v2365
  %v2368 = vtanh.pop %v2367
  %2370 = vrot.lane.b32.xlu0 %v2368, 32
  %v2371 = vpop.permute.xlu0 %2370
  %v2373 = vmul.f32 %v2356, %v2371
  %2375 = vrot.lane.b32.xlu0 %v2373, 32
  %v2376 = vpop.permute.xlu0 %2375
  %s2378 = scalar_lea.vmem %s5, 64
  %2379 = vst.msk [vmem:[%s2378] sm:$0xff] %vm39, %v2376
  %2381 = vrot.lane.b32.xlu0 %v2367, 64
  %v2382 = vpop.permute.xlu0 %2381
  %s2384 = scalar_lea.vmem %s6, 64
  %2385 = vst.msk [vmem:[%s2384] sm:$0xff] %vm39, %v2382
  %v2386 = vsel %vm39, %v2376, 0
  %2388 = vmatprep.subr.mxu0 0.0
  %2389 = vmatpush1.msra.mxu0 %v30
  %2390 = vmatprep.subr.mxu0 0.0
  %2391 = vmatpush1.msra.mxu0 %v31
  %2392 = vmatprep.subr.mxu0 0.0
  %2393 = vmatpush1.msra.mxu0 %v32
  %2394 = vmatprep.subr.mxu0 0.0
  %2395 = vmatpush1.msra.mxu0 %v33
  %2396 = vmatprep.subr.mxu0 0.0
  %2397 = vmatpush1.msra.mxu0 0.0
  %2398 = vmatprep.subr.mxu0 0.0
  %2399 = vmatpush1.msra.mxu0 0.0
  %2400 = vmatprep.subr.mxu0 0.0
  %2401 = vmatpush1.msra.mxu0 0.0
  %2402 = vmatprep.subr.mxu0 0.0
  %2403 = vmatpush1.msra.mxu0 0.0
  %2404 = vmatprep.subr.mxu0 0.0
  %2405 = vmatpush1.msra.mxu0 0.0
  %2406 = vmatprep.subr.mxu0 0.0
  %2407 = vmatpush1.msra.mxu0 0.0
  %2408 = vmatprep.subr.mxu0 0.0
  %2409 = vmatpush1.msra.mxu0 0.0
  %2410 = vmatprep.subr.mxu0 0.0
  %2411 = vmatpush1.msra.mxu0 0.0
  %2412 = vmatprep.subr.mxu0 0.0
  %2413 = vmatpush1.msra.mxu0 0.0
  %2414 = vmatprep.subr.mxu0 0.0
  %2415 = vmatpush1.msra.mxu0 0.0
  %2416 = vmatprep.subr.mxu0 0.0
  %2417 = vmatpush1.msra.mxu0 0.0
  %2418 = vmatprep.subr.mxu0 0.0
  %2419 = vmatpush1.msra.mxu0 0.0
  %2420 = vmatprep.subr.mxu0 0.0
  %2421 = vmatpush1.msra.mxu0 0.0
  %2422 = vmatprep.subr.mxu0 0.0
  %2423 = vmatpush1.msra.mxu0 0.0
  %2424 = vmatprep.subr.mxu0 0.0
  %2425 = vmatpush1.msra.mxu0 0.0
  %2426 = vmatprep.subr.mxu0 0.0
  %2427 = vmatpush1.msra.mxu0 0.0
  %2428 = vmatprep.subr.mxu0 0.0
  %2429 = vmatpush1.msra.mxu0 0.0
  %2430 = vmatprep.subr.mxu0 0.0
  %2431 = vmatpush1.msra.mxu0 0.0
  %2432 = vmatprep.subr.mxu0 0.0
  %2433 = vmatpush1.msra.mxu0 0.0
  %2434 = vmatprep.subr.mxu0 0.0
  %2435 = vmatpush1.msra.mxu0 0.0
  %2436 = vmatprep.subr.mxu0 0.0
  %2437 = vmatpush1.msra.mxu0 0.0
  %2438 = vmatprep.subr.mxu0 0.0
  %2439 = vmatpush1.msra.mxu0 0.0
  %2440 = vmatprep.subr.mxu0 0.0
  %2441 = vmatpush1.msra.mxu0 0.0
  %2442 = vmatprep.subr.mxu0 0.0
  %2443 = vmatpush1.msra.mxu0 0.0
  %2444 = vmatprep.subr.mxu0 0.0
  %2445 = vmatpush1.msra.mxu0 0.0
  %2446 = vmatprep.subr.mxu0 0.0
  %2447 = vmatpush1.msra.mxu0 0.0
  %2448 = vmatprep.subr.mxu0 0.0
  %2449 = vmatpush1.msra.mxu0 0.0
  %2450 = vmatprep.subr.mxu0 0.0
  %2451 = vmatpush1.msra.mxu0 0.0
  %2452 = vmatprep.mubr.f32.mxu0 0.0
  %2453 = vmatmul.mubr.f32.gmra.mrb[0].mxu0 %v2386
  %v2454 = vpop.f32.mrb[0].mxu0
  %v2455 = vadd.f32 0.0, %v2454
  %v2456 = vpop.f32.mrb[0].mxu0
  %2457 = vdwg.mxu0
  %s2458 = scalar_lea.vmem %s0, 72
  %v2459 = vld [vmem:[%s2458] sm:$0xff]
  %2460 = vmatprep.subr.mxu0 0.0
  %2461 = vmatpush1.msra.mxu0 %v22
  %2462 = vmatprep.subr.mxu0 0.0
  %2463 = vmatpush1.msra.mxu0 %v23
  %2464 = vmatprep.subr.mxu0 0.0
  %2465 = vmatpush1.msra.mxu0 %v24
  %2466 = vmatprep.subr.mxu0 0.0
  %2467 = vmatpush1.msra.mxu0 %v25
  %2468 = vmatprep.subr.mxu0 0.0
  %2469 = vmatpush1.msra.mxu0 0.0
  %2470 = vmatprep.subr.mxu0 0.0
  %2471 = vmatpush1.msra.mxu0 0.0
  %2472 = vmatprep.subr.mxu0 0.0
  %2473 = vmatpush1.msra.mxu0 0.0
  %2474 = vmatprep.subr.mxu0 0.0
  %2475 = vmatpush1.msra.mxu0 0.0
  %2476 = vmatprep.subr.mxu0 0.0
  %2477 = vmatpush1.msra.mxu0 0.0
  %2478 = vmatprep.subr.mxu0 0.0
  %2479 = vmatpush1.msra.mxu0 0.0
  %2480 = vmatprep.subr.mxu0 0.0
  %2481 = vmatpush1.msra.mxu0 0.0
  %2482 = vmatprep.subr.mxu0 0.0
  %2483 = vmatpush1.msra.mxu0 0.0
  %2484 = vmatprep.subr.mxu0 0.0
  %2485 = vmatpush1.msra.mxu0 0.0
  %2486 = vmatprep.subr.mxu0 0.0
  %2487 = vmatpush1.msra.mxu0 0.0
  %2488 = vmatprep.subr.mxu0 0.0
  %2489 = vmatpush1.msra.mxu0 0.0
  %2490 = vmatprep.subr.mxu0 0.0
  %2491 = vmatpush1.msra.mxu0 0.0
  %2492 = vmatprep.subr.mxu0 0.0
  %2493 = vmatpush1.msra.mxu0 0.0
  %2494 = vmatprep.subr.mxu0 0.0
  %2495 = vmatpush1.msra.mxu0 0.0
  %2496 = vmatprep.subr.mxu0 0.0
  %2497 = vmatpush1.msra.mxu0 0.0
  %2498 = vmatprep.subr.mxu0 0.0
  %2499 = vmatpush1.msra.mxu0 0.0
  %2500 = vmatprep.subr.mxu0 0.0
  %2501 = vmatpush1.msra.mxu0 0.0
  %2502 = vmatprep.subr.mxu0 0.0
  %2503 = vmatpush1.msra.mxu0 0.0
  %2504 = vmatprep.subr.mxu0 0.0
  %2505 = vmatpush1.msra.mxu0 0.0
  %2506 = vmatprep.subr.mxu0 0.0
  %2507 = vmatpush1.msra.mxu0 0.0
  %2508 = vmatprep.subr.mxu0 0.0
  %2509 = vmatpush1.msra.mxu0 0.0
  %2510 = vmatprep.subr.mxu0 0.0
  %2511 = vmatpush1.msra.mxu0 0.0
  %2512 = vmatprep.subr.mxu0 0.0
  %2513 = vmatpush1.msra.mxu0 0.0
  %2514 = vmatprep.subr.mxu0 0.0
  %2515 = vmatpush1.msra.mxu0 0.0
  %2516 = vmatprep.subr.mxu0 0.0
  %2517 = vmatpush1.msra.mxu0 0.0
  %2518 = vmatprep.subr.mxu0 0.0
  %2519 = vmatpush1.msra.mxu0 0.0
  %2520 = vmatprep.subr.mxu0 0.0
  %2521 = vmatpush1.msra.mxu0 0.0
  %2522 = vmatprep.subr.mxu0 0.0
  %2523 = vmatpush1.msra.mxu0 0.0
  %2524 = vmatprep.mubr.f32.mxu0 0.0
  %2525 = vmatmul.mubr.f32.gmra.mrb[0].mxu0 %v2386
  %v2526 = vpop.f32.mrb[0].mxu0
  %v2527 = vadd.f32 0.0, %v2526
  %v2528 = vpop.f32.mrb[0].mxu0
  %2529 = vdwg.mxu0
  %v2530 = vadd.f32 %v2459, %v2527
  %v2531 = vmul.f32 %v2530, 0.5
  %v2532 = vtanh.pop %v2531
  %v2533 = vmul.f32 %v2532, 0.5
  %v2534 = vadd.f32 %v2533, 0.5
  %s2535 = scalar_lea.vmem %s1, 72
  %v2536 = vld [vmem:[%s2535] sm:$0xff]
  %v2537 = vadd.f32 %v2536, %v2455
  %v2539 = vsel %vm39, %v2534, 0
  %2541 = vmatprep.subr.mxu0 0.0
  %2542 = vmatpush1.msra.mxu0 %v26
  %2543 = vmatprep.subr.mxu0 0.0
  %2544 = vmatpush1.msra.mxu0 %v27
  %2545 = vmatprep.subr.mxu0 0.0
  %2546 = vmatpush1.msra.mxu0 %v28
  %2547 = vmatprep.subr.mxu0 0.0
  %2548 = vmatpush1.msra.mxu0 %v29
  %2549 = vmatprep.subr.mxu0 0.0
  %2550 = vmatpush1.msra.mxu0 0.0
  %2551 = vmatprep.subr.mxu0 0.0
  %2552 = vmatpush1.msra.mxu0 0.0
  %2553 = vmatprep.subr.mxu0 0.0
  %2554 = vmatpush1.msra.mxu0 0.0
  %2555 = vmatprep.subr.mxu0 0.0
  %2556 = vmatpush1.msra.mxu0 0.0
  %2557 = vmatprep.subr.mxu0 0.0
  %2558 = vmatpush1.msra.mxu0 0.0
  %2559 = vmatprep.subr.mxu0 0.0
  %2560 = vmatpush1.msra.mxu0 0.0
  %2561 = vmatprep.subr.mxu0 0.0
  %2562 = vmatpush1.msra.mxu0 0.0
  %2563 = vmatprep.subr.mxu0 0.0
  %2564 = vmatpush1.msra.mxu0 0.0
  %2565 = vmatprep.subr.mxu0 0.0
  %2566 = vmatpush1.msra.mxu0 0.0
  %2567 = vmatprep.subr.mxu0 0.0
  %2568 = vmatpush1.msra.mxu0 0.0
  %2569 = vmatprep.subr.mxu0 0.0
  %2570 = vmatpush1.msra.mxu0 0.0
  %2571 = vmatprep.subr.mxu0 0.0
  %2572 = vmatpush1.msra.mxu0 0.0
  %2573 = vmatprep.subr.mxu0 0.0
  %2574 = vmatpush1.msra.mxu0 0.0
  %2575 = vmatprep.subr.mxu0 0.0
  %2576 = vmatpush1.msra.mxu0 0.0
  %2577 = vmatprep.subr.mxu0 0.0
  %2578 = vmatpush1.msra.mxu0 0.0
  %2579 = vmatprep.subr.mxu0 0.0
  %2580 = vmatpush1.msra.mxu0 0.0
  %2581 = vmatprep.subr.mxu0 0.0
  %2582 = vmatpush1.msra.mxu0 0.0
  %2583 = vmatprep.subr.mxu0 0.0
  %2584 = vmatpush1.msra.mxu0 0.0
  %2585 = vmatprep.subr.mxu0 0.0
  %2586 = vmatpush1.msra.mxu0 0.0
  %2587 = vmatprep.subr.mxu0 0.0
  %2588 = vmatpush1.msra.mxu0 0.0
  %2589 = vmatprep.subr.mxu0 0.0
  %2590 = vmatpush1.msra.mxu0 0.0
  %2591 = vmatprep.subr.mxu0 0.0
  %2592 = vmatpush1.msra.mxu0 0.0
  %2593 = vmatprep.subr.mxu0 0.0
  %2594 = vmatpush1.msra.mxu0 0.0
  %2595 = vmatprep.subr.mxu0 0.0
  %2596 = vmatpush1.msra.mxu0 0.0
  %2597 = vmatprep.subr.mxu0 0.0
  %2598 = vmatpush1.msra.mxu0 0.0
  %2599 = vmatprep.subr.mxu0 0.0
  %2600 = vmatpush1.msra.mxu0 0.0
  %2601 = vmatprep.subr.mxu0 0.0
  %2602 = vmatpush1.msra.mxu0 0.0
  %2603 = vmatprep.subr.mxu0 0.0
  %2604 = vmatpush1.msra.mxu0 0.0
  %2605 = vmatprep.mubr.f32.mxu0 0.0
  %2606 = vmatmul.mubr.f32.gmra.mrb[0].mxu0 %v2539
  %v2607 = vpop.f32.mrb[0].mxu0
  %v2608 = vadd.f32 0.0, %v2607
  %v2609 = vpop.f32.mrb[0].mxu0
  %2610 = vdwg.mxu0
  %v2611 = vadd.f32 %v2537, %v2608
  %v2612 = vmul.f32 %v2611, 0.5
  %v2613 = vsel %vm38, %v2611, %v2612
  %v2614 = vtanh.pop %v2613
  %v2615 = vmul.f32 %v2614, 0.5
  %v2616 = vadd.f32 %v2615, 0.5
  %v2617 = vsel %vm38, %v2614, %v2616
  %v2618 = vmul.f32 %v2617, %v2367
  %2620 = vrot.lane.b32.xlu0 %v2617, 96
  %v2621 = vpop.permute.xlu0 %2620
  %v2623 = vmul.f32 %v2617, %v2621
  %2625 = vrot.lane.b32.xlu0 %v2623, 64
  %v2626 = vpop.permute.xlu0 %2625
  %v2628 = vadd.f32 %v2618, %v2626
  %v2629 = vtanh.pop %v2628
  %2631 = vrot.lane.b32.xlu0 %v2629, 32
  %v2632 = vpop.permute.xlu0 %2631
  %v2634 = vmul.f32 %v2617, %v2632
  %2636 = vrot.lane.b32.xlu0 %v2634, 32
  %v2637 = vpop.permute.xlu0 %2636
  %s2639 = scalar_lea.vmem %s5, 72
  %2640 = vst.msk [vmem:[%s2639] sm:$0xff] %vm39, %v2637
  %2642 = vrot.lane.b32.xlu0 %v2628, 64
  %v2643 = vpop.permute.xlu0 %2642
  %s2645 = scalar_lea.vmem %s6, 72
  %2646 = vst.msk [vmem:[%s2645] sm:$0xff] %vm39, %v2643
  %v2647 = vsel %vm39, %v2637, 0
  %2649 = vmatprep.subr.mxu0 0.0
  %2650 = vmatpush1.msra.mxu0 %v30
  %2651 = vmatprep.subr.mxu0 0.0
  %2652 = vmatpush1.msra.mxu0 %v31
  %2653 = vmatprep.subr.mxu0 0.0
  %2654 = vmatpush1.msra.mxu0 %v32
  %2655 = vmatprep.subr.mxu0 0.0
  %2656 = vmatpush1.msra.mxu0 %v33
  %2657 = vmatprep.subr.mxu0 0.0
  %2658 = vmatpush1.msra.mxu0 0.0
  %2659 = vmatprep.subr.mxu0 0.0
  %2660 = vmatpush1.msra.mxu0 0.0
  %2661 = vmatprep.subr.mxu0 0.0
  %2662 = vmatpush1.msra.mxu0 0.0
  %2663 = vmatprep.subr.mxu0 0.0
  %2664 = vmatpush1.msra.mxu0 0.0
  %2665 = vmatprep.subr.mxu0 0.0
  %2666 = vmatpush1.msra.mxu0 0.0
  %2667 = vmatprep.subr.mxu0 0.0
  %2668 = vmatpush1.msra.mxu0 0.0
  %2669 = vmatprep.subr.mxu0 0.0
  %2670 = vmatpush1.msra.mxu0 0.0
  %2671 = vmatprep.subr.mxu0 0.0
  %2672 = vmatpush1.msra.mxu0 0.0
  %2673 = vmatprep.subr.mxu0 0.0
  %2674 = vmatpush1.msra.mxu0 0.0
  %2675 = vmatprep.subr.mxu0 0.0
  %2676 = vmatpush1.msra.mxu0 0.0
  %2677 = vmatprep.subr.mxu0 0.0
  %2678 = vmatpush1.msra.mxu0 0.0
  %2679 = vmatprep.subr.mxu0 0.0
  %2680 = vmatpush1.msra.mxu0 0.0
  %2681 = vmatprep.subr.mxu0 0.0
  %2682 = vmatpush1.msra.mxu0 0.0
  %2683 = vmatprep.subr.mxu0 0.0
  %2684 = vmatpush1.msra.mxu0 0.0
  %2685 = vmatprep.subr.mxu0 0.0
  %2686 = vmatpush1.msra.mxu0 0.0
  %2687 = vmatprep.subr.mxu0 0.0
  %2688 = vmatpush1.msra.mxu0 0.0
  %2689 = vmatprep.subr.mxu0 0.0
  %2690 = vmatpush1.msra.mxu0 0.0
  %2691 = vmatprep.subr.mxu0 0.0
  %2692 = vmatpush1.msra.mxu0 0.0
  %2693 = vmatprep.subr.mxu0 0.0
  %2694 = vmatpush1.msra.mxu0 0.0
  %2695 = vmatprep.subr.mxu0 0.0
  %2696 = vmatpush1.msra.mxu0 0.0
  %2697 = vmatprep.subr.mxu0 0.0
  %2698 = vmatpush1.msra.mxu0 0.0
  %2699 = vmatprep.subr.mxu0 0.0
  %2700 = vmatpush1.msra.mxu0 0.0
  %2701 = vmatprep.subr.mxu0 0.0
  %2702 = vmatpush1.msra.mxu0 0.0
  %2703 = vmatprep.subr.mxu0 0.0
  %2704 = vmatpush1.msra.mxu0 0.0
  %2705 = vmatprep.subr.mxu0 0.0
  %2706 = vmatpush1.msra.mxu0 0.0
  %2707 = vmatprep.subr.mxu0 0.0
  %2708 = vmatpush1.msra.mxu0 0.0
  %2709 = vmatprep.subr.mxu0 0.0
  %2710 = vmatpush1.msra.mxu0 0.0
  %2711 = vmatprep.subr.mxu0 0.0
  %2712 = vmatpush1.msra.mxu0 0.0
  %2713 = vmatprep.mubr.f32.mxu0 0.0
  %2714 = vmatmul.mubr.f32.gmra.mrb[0].mxu0 %v2647
  %v2715 = vpop.f32.mrb[0].mxu0
  %v2716 = vadd.f32 0.0, %v2715
  %v2717 = vpop.f32.mrb[0].mxu0
  %2718 = vdwg.mxu0
  %s2719 = scalar_lea.vmem %s0, 80
  %v2720 = vld [vmem:[%s2719] sm:$0xff]
  %2721 = vmatprep.subr.mxu0 0.0
  %2722 = vmatpush1.msra.mxu0 %v22
  %2723 = vmatprep.subr.mxu0 0.0
  %2724 = vmatpush1.msra.mxu0 %v23
  %2725 = vmatprep.subr.mxu0 0.0
  %2726 = vmatpush1.msra.mxu0 %v24
  %2727 = vmatprep.subr.mxu0 0.0
  %2728 = vmatpush1.msra.mxu0 %v25
  %2729 = vmatprep.subr.mxu0 0.0
  %2730 = vmatpush1.msra.mxu0 0.0
  %2731 = vmatprep.subr.mxu0 0.0
  %2732 = vmatpush1.msra.mxu0 0.0
  %2733 = vmatprep.subr.mxu0 0.0
  %2734 = vmatpush1.msra.mxu0 0.0
  %2735 = vmatprep.subr.mxu0 0.0
  %2736 = vmatpush1.msra.mxu0 0.0
  %2737 = vmatprep.subr.mxu0 0.0
  %2738 = vmatpush1.msra.mxu0 0.0
  %2739 = vmatprep.subr.mxu0 0.0
  %2740 = vmatpush1.msra.mxu0 0.0
  %2741 = vmatprep.subr.mxu0 0.0
  %2742 = vmatpush1.msra.mxu0 0.0
  %2743 = vmatprep.subr.mxu0 0.0
  %2744 = vmatpush1.msra.mxu0 0.0
  %2745 = vmatprep.subr.mxu0 0.0
  %2746 = vmatpush1.msra.mxu0 0.0
  %2747 = vmatprep.subr.mxu0 0.0
  %2748 = vmatpush1.msra.mxu0 0.0
  %2749 = vmatprep.subr.mxu0 0.0
  %2750 = vmatpush1.msra.mxu0 0.0
  %2751 = vmatprep.subr.mxu0 0.0
  %2752 = vmatpush1.msra.mxu0 0.0
  %2753 = vmatprep.subr.mxu0 0.0
  %2754 = vmatpush1.msra.mxu0 0.0
  %2755 = vmatprep.subr.mxu0 0.0
  %2756 = vmatpush1.msra.mxu0 0.0
  %2757 = vmatprep.subr.mxu0 0.0
  %2758 = vmatpush1.msra.mxu0 0.0
  %2759 = vmatprep.subr.mxu0 0.0
  %2760 = vmatpush1.msra.mxu0 0.0
  %2761 = vmatprep.subr.mxu0 0.0
  %2762 = vmatpush1.msra.mxu0 0.0
  %2763 = vmatprep.subr.mxu0 0.0
  %2764 = vmatpush1.msra.mxu0 0.0
  %2765 = vmatprep.subr.mxu0 0.0
  %2766 = vmatpush1.msra.mxu0 0.0
  %2767 = vmatprep.subr.mxu0 0.0
  %2768 = vmatpush1.msra.mxu0 0.0
  %2769 = vmatprep.subr.mxu0 0.0
  %2770 = vmatpush1.msra.mxu0 0.0
  %2771 = vmatprep.subr.mxu0 0.0
  %2772 = vmatpush1.msra.mxu0 0.0
  %2773 = vmatprep.subr.mxu0 0.0
  %2774 = vmatpush1.msra.mxu0 0.0
  %2775 = vmatprep.subr.mxu0 0.0
  %2776 = vmatpush1.msra.mxu0 0.0
  %2777 = vmatprep.subr.mxu0 0.0
  %2778 = vmatpush1.msra.mxu0 0.0
  %2779 = vmatprep.subr.mxu0 0.0
  %2780 = vmatpush1.msra.mxu0 0.0
  %2781 = vmatprep.subr.mxu0 0.0
  %2782 = vmatpush1.msra.mxu0 0.0
  %2783 = vmatprep.subr.mxu0 0.0
  %2784 = vmatpush1.msra.mxu0 0.0
  %2785 = vmatprep.mubr.f32.mxu0 0.0
  %2786 = vmatmul.mubr.f32.gmra.mrb[0].mxu0 %v2647
  %v2787 = vpop.f32.mrb[0].mxu0
  %v2788 = vadd.f32 0.0, %v2787
  %v2789 = vpop.f32.mrb[0].mxu0
  %2790 = vdwg.mxu0
  %v2791 = vadd.f32 %v2720, %v2788
  %v2792 = vmul.f32 %v2791, 0.5
  %v2793 = vtanh.pop %v2792
  %v2794 = vmul.f32 %v2793, 0.5
  %v2795 = vadd.f32 %v2794, 0.5
  %s2796 = scalar_lea.vmem %s1, 80
  %v2797 = vld [vmem:[%s2796] sm:$0xff]
  %v2798 = vadd.f32 %v2797, %v2716
  %v2800 = vsel %vm39, %v2795, 0
  %2802 = vmatprep.subr.mxu0 0.0
  %2803 = vmatpush1.msra.mxu0 %v26
  %2804 = vmatprep.subr.mxu0 0.0
  %2805 = vmatpush1.msra.mxu0 %v27
  %2806 = vmatprep.subr.mxu0 0.0
  %2807 = vmatpush1.msra.mxu0 %v28
  %2808 = vmatprep.subr.mxu0 0.0
  %2809 = vmatpush1.msra.mxu0 %v29
  %2810 = vmatprep.subr.mxu0 0.0
  %2811 = vmatpush1.msra.mxu0 0.0
  %2812 = vmatprep.subr.mxu0 0.0
  %2813 = vmatpush1.msra.mxu0 0.0
  %2814 = vmatprep.subr.mxu0 0.0
  %2815 = vmatpush1.msra.mxu0 0.0
  %2816 = vmatprep.subr.mxu0 0.0
  %2817 = vmatpush1.msra.mxu0 0.0
  %2818 = vmatprep.subr.mxu0 0.0
  %2819 = vmatpush1.msra.mxu0 0.0
  %2820 = vmatprep.subr.mxu0 0.0
  %2821 = vmatpush1.msra.mxu0 0.0
  %2822 = vmatprep.subr.mxu0 0.0
  %2823 = vmatpush1.msra.mxu0 0.0
  %2824 = vmatprep.subr.mxu0 0.0
  %2825 = vmatpush1.msra.mxu0 0.0
  %2826 = vmatprep.subr.mxu0 0.0
  %2827 = vmatpush1.msra.mxu0 0.0
  %2828 = vmatprep.subr.mxu0 0.0
  %2829 = vmatpush1.msra.mxu0 0.0
  %2830 = vmatprep.subr.mxu0 0.0
  %2831 = vmatpush1.msra.mxu0 0.0
  %2832 = vmatprep.subr.mxu0 0.0
  %2833 = vmatpush1.msra.mxu0 0.0
  %2834 = vmatprep.subr.mxu0 0.0
  %2835 = vmatpush1.msra.mxu0 0.0
  %2836 = vmatprep.subr.mxu0 0.0
  %2837 = vmatpush1.msra.mxu0 0.0
  %2838 = vmatprep.subr.mxu0 0.0
  %2839 = vmatpush1.msra.mxu0 0.0
  %2840 = vmatprep.subr.mxu0 0.0
  %2841 = vmatpush1.msra.mxu0 0.0
  %2842 = vmatprep.subr.mxu0 0.0
  %2843 = vmatpush1.msra.mxu0 0.0
  %2844 = vmatprep.subr.mxu0 0.0
  %2845 = vmatpush1.msra.mxu0 0.0
  %2846 = vmatprep.subr.mxu0 0.0
  %2847 = vmatpush1.msra.mxu0 0.0
  %2848 = vmatprep.subr.mxu0 0.0
  %2849 = vmatpush1.msra.mxu0 0.0
  %2850 = vmatprep.subr.mxu0 0.0
  %2851 = vmatpush1.msra.mxu0 0.0
  %2852 = vmatprep.subr.mxu0 0.0
  %2853 = vmatpush1.msra.mxu0 0.0
  %2854 = vmatprep.subr.mxu0 0.0
  %2855 = vmatpush1.msra.mxu0 0.0
  %2856 = vmatprep.subr.mxu0 0.0
  %2857 = vmatpush1.msra.mxu0 0.0
  %2858 = vmatprep.subr.mxu0 0.0
  %2859 = vmatpush1.msra.mxu0 0.0
  %2860 = vmatprep.subr.mxu0 0.0
  %2861 = vmatpush1.msra.mxu0 0.0
  %2862 = vmatprep.subr.mxu0 0.0
  %2863 = vmatpush1.msra.mxu0 0.0
  %2864 = vmatprep.subr.mxu0 0.0
  %2865 = vmatpush1.msra.mxu0 0.0
  %2866 = vmatprep.mubr.f32.mxu0 0.0
  %2867 = vmatmul.mubr.f32.gmra.mrb[0].mxu0 %v2800
  %v2868 = vpop.f32.mrb[0].mxu0
  %v2869 = vadd.f32 0.0, %v2868
  %v2870 = vpop.f32.mrb[0].mxu0
  %2871 = vdwg.mxu0
  %v2872 = vadd.f32 %v2798, %v2869
  %v2873 = vmul.f32 %v2872, 0.5
  %v2874 = vsel %vm38, %v2872, %v2873
  %v2875 = vtanh.pop %v2874
  %v2876 = vmul.f32 %v2875, 0.5
  %v2877 = vadd.f32 %v2876, 0.5
  %v2878 = vsel %vm38, %v2875, %v2877
  %v2879 = vmul.f32 %v2878, %v2628
  %2881 = vrot.lane.b32.xlu0 %v2878, 96
  %v2882 = vpop.permute.xlu0 %2881
  %v2884 = vmul.f32 %v2878, %v2882
  %2886 = vrot.lane.b32.xlu0 %v2884, 64
  %v2887 = vpop.permute.xlu0 %2886
  %v2889 = vadd.f32 %v2879, %v2887
  %v2890 = vtanh.pop %v2889
  %2892 = vrot.lane.b32.xlu0 %v2890, 32
  %v2893 = vpop.permute.xlu0 %2892
  %v2895 = vmul.f32 %v2878, %v2893
  %2897 = vrot.lane.b32.xlu0 %v2895, 32
  %v2898 = vpop.permute.xlu0 %2897
  %s2900 = scalar_lea.vmem %s5, 80
  %2901 = vst.msk [vmem:[%s2900] sm:$0xff] %vm39, %v2898
  %2903 = vrot.lane.b32.xlu0 %v2889, 64
  %v2904 = vpop.permute.xlu0 %2903
  %s2906 = scalar_lea.vmem %s6, 80
  %2907 = vst.msk [vmem:[%s2906] sm:$0xff] %vm39, %v2904
  %v2908 = vsel %vm39, %v2898, 0
  %2910 = vmatprep.subr.mxu0 0.0
  %2911 = vmatpush1.msra.mxu0 %v30
  %2912 = vmatprep.subr.mxu0 0.0
  %2913 = vmatpush1.msra.mxu0 %v31
  %2914 = vmatprep.subr.mxu0 0.0
  %2915 = vmatpush1.msra.mxu0 %v32
  %2916 = vmatprep.subr.mxu0 0.0
  %2917 = vmatpush1.msra.mxu0 %v33
  %2918 = vmatprep.subr.mxu0 0.0
  %2919 = vmatpush1.msra.mxu0 0.0
  %2920 = vmatprep.subr.mxu0 0.0
  %2921 = vmatpush1.msra.mxu0 0.0
  %2922 = vmatprep.subr.mxu0 0.0
  %2923 = vmatpush1.msra.mxu0 0.0
  %2924 = vmatprep.subr.mxu0 0.0
  %2925 = vmatpush1.msra.mxu0 0.0
  %2926 = vmatprep.subr.mxu0 0.0
  %2927 = vmatpush1.msra.mxu0 0.0
  %2928 = vmatprep.subr.mxu0 0.0
  %2929 = vmatpush1.msra.mxu0 0.0
  %2930 = vmatprep.subr.mxu0 0.0
  %2931 = vmatpush1.msra.mxu0 0.0
  %2932 = vmatprep.subr.mxu0 0.0
  %2933 = vmatpush1.msra.mxu0 0.0
  %2934 = vmatprep.subr.mxu0 0.0
  %2935 = vmatpush1.msra.mxu0 0.0
  %2936 = vmatprep.subr.mxu0 0.0
  %2937 = vmatpush1.msra.mxu0 0.0
  %2938 = vmatprep.subr.mxu0 0.0
  %2939 = vmatpush1.msra.mxu0 0.0
  %2940 = vmatprep.subr.mxu0 0.0
  %2941 = vmatpush1.msra.mxu0 0.0
  %2942 = vmatprep.subr.mxu0 0.0
  %2943 = vmatpush1.msra.mxu0 0.0
  %2944 = vmatprep.subr.mxu0 0.0
  %2945 = vmatpush1.msra.mxu0 0.0
  %2946 = vmatprep.subr.mxu0 0.0
  %2947 = vmatpush1.msra.mxu0 0.0
  %2948 = vmatprep.subr.mxu0 0.0
  %2949 = vmatpush1.msra.mxu0 0.0
  %2950 = vmatprep.subr.mxu0 0.0
  %2951 = vmatpush1.msra.mxu0 0.0
  %2952 = vmatprep.subr.mxu0 0.0
  %2953 = vmatpush1.msra.mxu0 0.0
  %2954 = vmatprep.subr.mxu0 0.0
  %2955 = vmatpush1.msra.mxu0 0.0
  %2956 = vmatprep.subr.mxu0 0.0
  %2957 = vmatpush1.msra.mxu0 0.0
  %2958 = vmatprep.subr.mxu0 0.0
  %2959 = vmatpush1.msra.mxu0 0.0
  %2960 = vmatprep.subr.mxu0 0.0
  %2961 = vmatpush1.msra.mxu0 0.0
  %2962 = vmatprep.subr.mxu0 0.0
  %2963 = vmatpush1.msra.mxu0 0.0
  %2964 = vmatprep.subr.mxu0 0.0
  %2965 = vmatpush1.msra.mxu0 0.0
  %2966 = vmatprep.subr.mxu0 0.0
  %2967 = vmatpush1.msra.mxu0 0.0
  %2968 = vmatprep.subr.mxu0 0.0
  %2969 = vmatpush1.msra.mxu0 0.0
  %2970 = vmatprep.subr.mxu0 0.0
  %2971 = vmatpush1.msra.mxu0 0.0
  %2972 = vmatprep.subr.mxu0 0.0
  %2973 = vmatpush1.msra.mxu0 0.0
  %2974 = vmatprep.mubr.f32.mxu0 0.0
  %2975 = vmatmul.mubr.f32.gmra.mrb[0].mxu0 %v2908
  %v2976 = vpop.f32.mrb[0].mxu0
  %v2977 = vadd.f32 0.0, %v2976
  %v2978 = vpop.f32.mrb[0].mxu0
  %2979 = vdwg.mxu0
  %s2980 = scalar_lea.vmem %s0, 88
  %v2981 = vld [vmem:[%s2980] sm:$0xff]
  %2982 = vmatprep.subr.mxu0 0.0
  %2983 = vmatpush1.msra.mxu0 %v22
  %2984 = vmatprep.subr.mxu0 0.0
  %2985 = vmatpush1.msra.mxu0 %v23
  %2986 = vmatprep.subr.mxu0 0.0
  %2987 = vmatpush1.msra.mxu0 %v24
  %2988 = vmatprep.subr.mxu0 0.0
  %2989 = vmatpush1.msra.mxu0 %v25
  %2990 = vmatprep.subr.mxu0 0.0
  %2991 = vmatpush1.msra.mxu0 0.0
  %2992 = vmatprep.subr.mxu0 0.0
  %2993 = vmatpush1.msra.mxu0 0.0
  %2994 = vmatprep.subr.mxu0 0.0
  %2995 = vmatpush1.msra.mxu0 0.0
  %2996 = vmatprep.subr.mxu0 0.0
  %2997 = vmatpush1.msra.mxu0 0.0
  %2998 = vmatprep.subr.mxu0 0.0
  %2999 = vmatpush1.msra.mxu0 0.0
  %3000 = vmatprep.subr.mxu0 0.0
  %3001 = vmatpush1.msra.mxu0 0.0
  %3002 = vmatprep.subr.mxu0 0.0
  %3003 = vmatpush1.msra.mxu0 0.0
  %3004 = vmatprep.subr.mxu0 0.0
  %3005 = vmatpush1.msra.mxu0 0.0
  %3006 = vmatprep.subr.mxu0 0.0
  %3007 = vmatpush1.msra.mxu0 0.0
  %3008 = vmatprep.subr.mxu0 0.0
  %3009 = vmatpush1.msra.mxu0 0.0
  %3010 = vmatprep.subr.mxu0 0.0
  %3011 = vmatpush1.msra.mxu0 0.0
  %3012 = vmatprep.subr.mxu0 0.0
  %3013 = vmatpush1.msra.mxu0 0.0
  %3014 = vmatprep.subr.mxu0 0.0
  %3015 = vmatpush1.msra.mxu0 0.0
  %3016 = vmatprep.subr.mxu0 0.0
  %3017 = vmatpush1.msra.mxu0 0.0
  %3018 = vmatprep.subr.mxu0 0.0
  %3019 = vmatpush1.msra.mxu0 0.0
  %3020 = vmatprep.subr.mxu0 0.0
  %3021 = vmatpush1.msra.mxu0 0.0
  %3022 = vmatprep.subr.mxu0 0.0
  %3023 = vmatpush1.msra.mxu0 0.0
  %3024 = vmatprep.subr.mxu0 0.0
  %3025 = vmatpush1.msra.mxu0 0.0
  %3026 = vmatprep.subr.mxu0 0.0
  %3027 = vmatpush1.msra.mxu0 0.0
  %3028 = vmatprep.subr.mxu0 0.0
  %3029 = vmatpush1.msra.mxu0 0.0
  %3030 = vmatprep.subr.mxu0 0.0
  %3031 = vmatpush1.msra.mxu0 0.0
  %3032 = vmatprep.subr.mxu0 0.0
  %3033 = vmatpush1.msra.mxu0 0.0
  %3034 = vmatprep.subr.mxu0 0.0
  %3035 = vmatpush1.msra.mxu0 0.0
  %3036 = vmatprep.subr.mxu0 0.0
  %3037 = vmatpush1.msra.mxu0 0.0
  %3038 = vmatprep.subr.mxu0 0.0
  %3039 = vmatpush1.msra.mxu0 0.0
  %3040 = vmatprep.subr.mxu0 0.0
  %3041 = vmatpush1.msra.mxu0 0.0
  %3042 = vmatprep.subr.mxu0 0.0
  %3043 = vmatpush1.msra.mxu0 0.0
  %3044 = vmatprep.subr.mxu0 0.0
  %3045 = vmatpush1.msra.mxu0 0.0
  %3046 = vmatprep.mubr.f32.mxu0 0.0
  %3047 = vmatmul.mubr.f32.gmra.mrb[0].mxu0 %v2908
  %v3048 = vpop.f32.mrb[0].mxu0
  %v3049 = vadd.f32 0.0, %v3048
  %v3050 = vpop.f32.mrb[0].mxu0
  %3051 = vdwg.mxu0
  %v3052 = vadd.f32 %v2981, %v3049
  %v3053 = vmul.f32 %v3052, 0.5
  %v3054 = vtanh.pop %v3053
  %v3055 = vmul.f32 %v3054, 0.5
  %v3056 = vadd.f32 %v3055, 0.5
  %s3057 = scalar_lea.vmem %s1, 88
  %v3058 = vld [vmem:[%s3057] sm:$0xff]
  %v3059 = vadd.f32 %v3058, %v2977
  %v3061 = vsel %vm39, %v3056, 0
  %3063 = vmatprep.subr.mxu0 0.0
  %3064 = vmatpush1.msra.mxu0 %v26
  %3065 = vmatprep.subr.mxu0 0.0
  %3066 = vmatpush1.msra.mxu0 %v27
  %3067 = vmatprep.subr.mxu0 0.0
  %3068 = vmatpush1.msra.mxu0 %v28
  %3069 = vmatprep.subr.mxu0 0.0
  %3070 = vmatpush1.msra.mxu0 %v29
  %3071 = vmatprep.subr.mxu0 0.0
  %3072 = vmatpush1.msra.mxu0 0.0
  %3073 = vmatprep.subr.mxu0 0.0
  %3074 = vmatpush1.msra.mxu0 0.0
  %3075 = vmatprep.subr.mxu0 0.0
  %3076 = vmatpush1.msra.mxu0 0.0
  %3077 = vmatprep.subr.mxu0 0.0
  %3078 = vmatpush1.msra.mxu0 0.0
  %3079 = vmatprep.subr.mxu0 0.0
  %3080 = vmatpush1.msra.mxu0 0.0
  %3081 = vmatprep.subr.mxu0 0.0
  %3082 = vmatpush1.msra.mxu0 0.0
  %3083 = vmatprep.subr.mxu0 0.0
  %3084 = vmatpush1.msra.mxu0 0.0
  %3085 = vmatprep.subr.mxu0 0.0
  %3086 = vmatpush1.msra.mxu0 0.0
  %3087 = vmatprep.subr.mxu0 0.0
  %3088 = vmatpush1.msra.mxu0 0.0
  %3089 = vmatprep.subr.mxu0 0.0
  %3090 = vmatpush1.msra.mxu0 0.0
  %3091 = vmatprep.subr.mxu0 0.0
  %3092 = vmatpush1.msra.mxu0 0.0
  %3093 = vmatprep.subr.mxu0 0.0
  %3094 = vmatpush1.msra.mxu0 0.0
  %3095 = vmatprep.subr.mxu0 0.0
  %3096 = vmatpush1.msra.mxu0 0.0
  %3097 = vmatprep.subr.mxu0 0.0
  %3098 = vmatpush1.msra.mxu0 0.0
  %3099 = vmatprep.subr.mxu0 0.0
  %3100 = vmatpush1.msra.mxu0 0.0
  %3101 = vmatprep.subr.mxu0 0.0
  %3102 = vmatpush1.msra.mxu0 0.0
  %3103 = vmatprep.subr.mxu0 0.0
  %3104 = vmatpush1.msra.mxu0 0.0
  %3105 = vmatprep.subr.mxu0 0.0
  %3106 = vmatpush1.msra.mxu0 0.0
  %3107 = vmatprep.subr.mxu0 0.0
  %3108 = vmatpush1.msra.mxu0 0.0
  %3109 = vmatprep.subr.mxu0 0.0
  %3110 = vmatpush1.msra.mxu0 0.0
  %3111 = vmatprep.subr.mxu0 0.0
  %3112 = vmatpush1.msra.mxu0 0.0
  %3113 = vmatprep.subr.mxu0 0.0
  %3114 = vmatpush1.msra.mxu0 0.0
  %3115 = vmatprep.subr.mxu0 0.0
  %3116 = vmatpush1.msra.mxu0 0.0
  %3117 = vmatprep.subr.mxu0 0.0
  %3118 = vmatpush1.msra.mxu0 0.0
  %3119 = vmatprep.subr.mxu0 0.0
  %3120 = vmatpush1.msra.mxu0 0.0
  %3121 = vmatprep.subr.mxu0 0.0
  %3122 = vmatpush1.msra.mxu0 0.0
  %3123 = vmatprep.subr.mxu0 0.0
  %3124 = vmatpush1.msra.mxu0 0.0
  %3125 = vmatprep.subr.mxu0 0.0
  %3126 = vmatpush1.msra.mxu0 0.0
  %3127 = vmatprep.mubr.f32.mxu0 0.0
  %3128 = vmatmul.mubr.f32.gmra.mrb[0].mxu0 %v3061
  %v3129 = vpop.f32.mrb[0].mxu0
  %v3130 = vadd.f32 0.0, %v3129
  %v3131 = vpop.f32.mrb[0].mxu0
  %3132 = vdwg.mxu0
  %v3133 = vadd.f32 %v3059, %v3130
  %v3134 = vmul.f32 %v3133, 0.5
  %v3135 = vsel %vm38, %v3133, %v3134
  %v3136 = vtanh.pop %v3135
  %v3137 = vmul.f32 %v3136, 0.5
  %v3138 = vadd.f32 %v3137, 0.5
  %v3139 = vsel %vm38, %v3136, %v3138
  %v3140 = vmul.f32 %v3139, %v2889
  %3142 = vrot.lane.b32.xlu0 %v3139, 96
  %v3143 = vpop.permute.xlu0 %3142
  %v3145 = vmul.f32 %v3139, %v3143
  %3147 = vrot.lane.b32.xlu0 %v3145, 64
  %v3148 = vpop.permute.xlu0 %3147
  %v3150 = vadd.f32 %v3140, %v3148
  %v3151 = vtanh.pop %v3150
  %3153 = vrot.lane.b32.xlu0 %v3151, 32
  %v3154 = vpop.permute.xlu0 %3153
  %v3156 = vmul.f32 %v3139, %v3154
  %3158 = vrot.lane.b32.xlu0 %v3156, 32
  %v3159 = vpop.permute.xlu0 %3158
  %s3161 = scalar_lea.vmem %s5, 88
  %3162 = vst.msk [vmem:[%s3161] sm:$0xff] %vm39, %v3159
  %3164 = vrot.lane.b32.xlu0 %v3150, 64
  %v3165 = vpop.permute.xlu0 %3164
  %s3167 = scalar_lea.vmem %s6, 88
  %3168 = vst.msk [vmem:[%s3167] sm:$0xff] %vm39, %v3165
  %v3169 = vsel %vm39, %v3159, 0
  %3171 = vmatprep.subr.mxu0 0.0
  %3172 = vmatpush1.msra.mxu0 %v30
  %3173 = vmatprep.subr.mxu0 0.0
  %3174 = vmatpush1.msra.mxu0 %v31
  %3175 = vmatprep.subr.mxu0 0.0
  %3176 = vmatpush1.msra.mxu0 %v32
  %3177 = vmatprep.subr.mxu0 0.0
  %3178 = vmatpush1.msra.mxu0 %v33
  %3179 = vmatprep.subr.mxu0 0.0
  %3180 = vmatpush1.msra.mxu0 0.0
  %3181 = vmatprep.subr.mxu0 0.0
  %3182 = vmatpush1.msra.mxu0 0.0
  %3183 = vmatprep.subr.mxu0 0.0
  %3184 = vmatpush1.msra.mxu0 0.0
  %3185 = vmatprep.subr.mxu0 0.0
  %3186 = vmatpush1.msra.mxu0 0.0
  %3187 = vmatprep.subr.mxu0 0.0
  %3188 = vmatpush1.msra.mxu0 0.0
  %3189 = vmatprep.subr.mxu0 0.0
  %3190 = vmatpush1.msra.mxu0 0.0
  %3191 = vmatprep.subr.mxu0 0.0
  %3192 = vmatpush1.msra.mxu0 0.0
  %3193 = vmatprep.subr.mxu0 0.0
  %3194 = vmatpush1.msra.mxu0 0.0
  %3195 = vmatprep.subr.mxu0 0.0
  %3196 = vmatpush1.msra.mxu0 0.0
  %3197 = vmatprep.subr.mxu0 0.0
  %3198 = vmatpush1.msra.mxu0 0.0
  %3199 = vmatprep.subr.mxu0 0.0
  %3200 = vmatpush1.msra.mxu0 0.0
  %3201 = vmatprep.subr.mxu0 0.0
  %3202 = vmatpush1.msra.mxu0 0.0
  %3203 = vmatprep.subr.mxu0 0.0
  %3204 = vmatpush1.msra.mxu0 0.0
  %3205 = vmatprep.subr.mxu0 0.0
  %3206 = vmatpush1.msra.mxu0 0.0
  %3207 = vmatprep.subr.mxu0 0.0
  %3208 = vmatpush1.msra.mxu0 0.0
  %3209 = vmatprep.subr.mxu0 0.0
  %3210 = vmatpush1.msra.mxu0 0.0
  %3211 = vmatprep.subr.mxu0 0.0
  %3212 = vmatpush1.msra.mxu0 0.0
  %3213 = vmatprep.subr.mxu0 0.0
  %3214 = vmatpush1.msra.mxu0 0.0
  %3215 = vmatprep.subr.mxu0 0.0
  %3216 = vmatpush1.msra.mxu0 0.0
  %3217 = vmatprep.subr.mxu0 0.0
  %3218 = vmatpush1.msra.mxu0 0.0
  %3219 = vmatprep.subr.mxu0 0.0
  %3220 = vmatpush1.msra.mxu0 0.0
  %3221 = vmatprep.subr.mxu0 0.0
  %3222 = vmatpush1.msra.mxu0 0.0
  %3223 = vmatprep.subr.mxu0 0.0
  %3224 = vmatpush1.msra.mxu0 0.0
  %3225 = vmatprep.subr.mxu0 0.0
  %3226 = vmatpush1.msra.mxu0 0.0
  %3227 = vmatprep.subr.mxu0 0.0
  %3228 = vmatpush1.msra.mxu0 0.0
  %3229 = vmatprep.subr.mxu0 0.0
  %3230 = vmatpush1.msra.mxu0 0.0
  %3231 = vmatprep.subr.mxu0 0.0
  %3232 = vmatpush1.msra.mxu0 0.0
  %3233 = vmatprep.subr.mxu0 0.0
  %3234 = vmatpush1.msra.mxu0 0.0
  %3235 = vmatprep.mubr.f32.mxu0 0.0
  %3236 = vmatmul.mubr.f32.gmra.mrb[0].mxu0 %v3169
  %v3237 = vpop.f32.mrb[0].mxu0
  %v3238 = vadd.f32 0.0, %v3237
  %v3239 = vpop.f32.mrb[0].mxu0
  %3240 = vdwg.mxu0
  %s3241 = scalar_lea.vmem %s0, 96
  %v3242 = vld [vmem:[%s3241] sm:$0xff]
  %3243 = vmatprep.subr.mxu0 0.0
  %3244 = vmatpush1.msra.mxu0 %v22
  %3245 = vmatprep.subr.mxu0 0.0
  %3246 = vmatpush1.msra.mxu0 %v23
  %3247 = vmatprep.subr.mxu0 0.0
  %3248 = vmatpush1.msra.mxu0 %v24
  %3249 = vmatprep.subr.mxu0 0.0
  %3250 = vmatpush1.msra.mxu0 %v25
  %3251 = vmatprep.subr.mxu0 0.0
  %3252 = vmatpush1.msra.mxu0 0.0
  %3253 = vmatprep.subr.mxu0 0.0
  %3254 = vmatpush1.msra.mxu0 0.0
  %3255 = vmatprep.subr.mxu0 0.0
  %3256 = vmatpush1.msra.mxu0 0.0
  %3257 = vmatprep.subr.mxu0 0.0
  %3258 = vmatpush1.msra.mxu0 0.0
  %3259 = vmatprep.subr.mxu0 0.0
  %3260 = vmatpush1.msra.mxu0 0.0
  %3261 = vmatprep.subr.mxu0 0.0
  %3262 = vmatpush1.msra.mxu0 0.0
  %3263 = vmatprep.subr.mxu0 0.0
  %3264 = vmatpush1.msra.mxu0 0.0
  %3265 = vmatprep.subr.mxu0 0.0
  %3266 = vmatpush1.msra.mxu0 0.0
  %3267 = vmatprep.subr.mxu0 0.0
  %3268 = vmatpush1.msra.mxu0 0.0
  %3269 = vmatprep.subr.mxu0 0.0
  %3270 = vmatpush1.msra.mxu0 0.0
  %3271 = vmatprep.subr.mxu0 0.0
  %3272 = vmatpush1.msra.mxu0 0.0
  %3273 = vmatprep.subr.mxu0 0.0
  %3274 = vmatpush1.msra.mxu0 0.0
  %3275 = vmatprep.subr.mxu0 0.0
  %3276 = vmatpush1.msra.mxu0 0.0
  %3277 = vmatprep.subr.mxu0 0.0
  %3278 = vmatpush1.msra.mxu0 0.0
  %3279 = vmatprep.subr.mxu0 0.0
  %3280 = vmatpush1.msra.mxu0 0.0
  %3281 = vmatprep.subr.mxu0 0.0
  %3282 = vmatpush1.msra.mxu0 0.0
  %3283 = vmatprep.subr.mxu0 0.0
  %3284 = vmatpush1.msra.mxu0 0.0
  %3285 = vmatprep.subr.mxu0 0.0
  %3286 = vmatpush1.msra.mxu0 0.0
  %3287 = vmatprep.subr.mxu0 0.0
  %3288 = vmatpush1.msra.mxu0 0.0
  %3289 = vmatprep.subr.mxu0 0.0
  %3290 = vmatpush1.msra.mxu0 0.0
  %3291 = vmatprep.subr.mxu0 0.0
  %3292 = vmatpush1.msra.mxu0 0.0
  %3293 = vmatprep.subr.mxu0 0.0
  %3294 = vmatpush1.msra.mxu0 0.0
  %3295 = vmatprep.subr.mxu0 0.0
  %3296 = vmatpush1.msra.mxu0 0.0
  %3297 = vmatprep.subr.mxu0 0.0
  %3298 = vmatpush1.msra.mxu0 0.0
  %3299 = vmatprep.subr.mxu0 0.0
  %3300 = vmatpush1.msra.mxu0 0.0
  %3301 = vmatprep.subr.mxu0 0.0
  %3302 = vmatpush1.msra.mxu0 0.0
  %3303 = vmatprep.subr.mxu0 0.0
  %3304 = vmatpush1.msra.mxu0 0.0
  %3305 = vmatprep.subr.mxu0 0.0
  %3306 = vmatpush1.msra.mxu0 0.0
  %3307 = vmatprep.mubr.f32.mxu0 0.0
  %3308 = vmatmul.mubr.f32.gmra.mrb[0].mxu0 %v3169
  %v3309 = vpop.f32.mrb[0].mxu0
  %v3310 = vadd.f32 0.0, %v3309
  %v3311 = vpop.f32.mrb[0].mxu0
  %3312 = vdwg.mxu0
  %v3313 = vadd.f32 %v3242, %v3310
  %v3314 = vmul.f32 %v3313, 0.5
  %v3315 = vtanh.pop %v3314
  %v3316 = vmul.f32 %v3315, 0.5
  %v3317 = vadd.f32 %v3316, 0.5
  %s3318 = scalar_lea.vmem %s1, 96
  %v3319 = vld [vmem:[%s3318] sm:$0xff]
  %v3320 = vadd.f32 %v3319, %v3238
  %v3322 = vsel %vm39, %v3317, 0
  %3324 = vmatprep.subr.mxu0 0.0
  %3325 = vmatpush1.msra.mxu0 %v26
  %3326 = vmatprep.subr.mxu0 0.0
  %3327 = vmatpush1.msra.mxu0 %v27
  %3328 = vmatprep.subr.mxu0 0.0
  %3329 = vmatpush1.msra.mxu0 %v28
  %3330 = vmatprep.subr.mxu0 0.0
  %3331 = vmatpush1.msra.mxu0 %v29
  %3332 = vmatprep.subr.mxu0 0.0
  %3333 = vmatpush1.msra.mxu0 0.0
  %3334 = vmatprep.subr.mxu0 0.0
  %3335 = vmatpush1.msra.mxu0 0.0
  %3336 = vmatprep.subr.mxu0 0.0
  %3337 = vmatpush1.msra.mxu0 0.0
  %3338 = vmatprep.subr.mxu0 0.0
  %3339 = vmatpush1.msra.mxu0 0.0
  %3340 = vmatprep.subr.mxu0 0.0
  %3341 = vmatpush1.msra.mxu0 0.0
  %3342 = vmatprep.subr.mxu0 0.0
  %3343 = vmatpush1.msra.mxu0 0.0
  %3344 = vmatprep.subr.mxu0 0.0
  %3345 = vmatpush1.msra.mxu0 0.0
  %3346 = vmatprep.subr.mxu0 0.0
  %3347 = vmatpush1.msra.mxu0 0.0
  %3348 = vmatprep.subr.mxu0 0.0
  %3349 = vmatpush1.msra.mxu0 0.0
  %3350 = vmatprep.subr.mxu0 0.0
  %3351 = vmatpush1.msra.mxu0 0.0
  %3352 = vmatprep.subr.mxu0 0.0
  %3353 = vmatpush1.msra.mxu0 0.0
  %3354 = vmatprep.subr.mxu0 0.0
  %3355 = vmatpush1.msra.mxu0 0.0
  %3356 = vmatprep.subr.mxu0 0.0
  %3357 = vmatpush1.msra.mxu0 0.0
  %3358 = vmatprep.subr.mxu0 0.0
  %3359 = vmatpush1.msra.mxu0 0.0
  %3360 = vmatprep.subr.mxu0 0.0
  %3361 = vmatpush1.msra.mxu0 0.0
  %3362 = vmatprep.subr.mxu0 0.0
  %3363 = vmatpush1.msra.mxu0 0.0
  %3364 = vmatprep.subr.mxu0 0.0
  %3365 = vmatpush1.msra.mxu0 0.0
  %3366 = vmatprep.subr.mxu0 0.0
  %3367 = vmatpush1.msra.mxu0 0.0
  %3368 = vmatprep.subr.mxu0 0.0
  %3369 = vmatpush1.msra.mxu0 0.0
  %3370 = vmatprep.subr.mxu0 0.0
  %3371 = vmatpush1.msra.mxu0 0.0
  %3372 = vmatprep.subr.mxu0 0.0
  %3373 = vmatpush1.msra.mxu0 0.0
  %3374 = vmatprep.subr.mxu0 0.0
  %3375 = vmatpush1.msra.mxu0 0.0
  %3376 = vmatprep.subr.mxu0 0.0
  %3377 = vmatpush1.msra.mxu0 0.0
  %3378 = vmatprep.subr.mxu0 0.0
  %3379 = vmatpush1.msra.mxu0 0.0
  %3380 = vmatprep.subr.mxu0 0.0
  %3381 = vmatpush1.msra.mxu0 0.0
  %3382 = vmatprep.subr.mxu0 0.0
  %3383 = vmatpush1.msra.mxu0 0.0
  %3384 = vmatprep.subr.mxu0 0.0
  %3385 = vmatpush1.msra.mxu0 0.0
  %3386 = vmatprep.subr.mxu0 0.0
  %3387 = vmatpush1.msra.mxu0 0.0
  %3388 = vmatprep.mubr.f32.mxu0 0.0
  %3389 = vmatmul.mubr.f32.gmra.mrb[0].mxu0 %v3322
  %v3390 = vpop.f32.mrb[0].mxu0
  %v3391 = vadd.f32 0.0, %v3390
  %v3392 = vpop.f32.mrb[0].mxu0
  %3393 = vdwg.mxu0
  %v3394 = vadd.f32 %v3320, %v3391
  %v3395 = vmul.f32 %v3394, 0.5
  %v3396 = vsel %vm38, %v3394, %v3395
  %v3397 = vtanh.pop %v3396
  %v3398 = vmul.f32 %v3397, 0.5
  %v3399 = vadd.f32 %v3398, 0.5
  %v3400 = vsel %vm38, %v3397, %v3399
  %v3401 = vmul.f32 %v3400, %v3150
  %3403 = vrot.lane.b32.xlu0 %v3400, 96
  %v3404 = vpop.permute.xlu0 %3403
  %v3406 = vmul.f32 %v3400, %v3404
  %3408 = vrot.lane.b32.xlu0 %v3406, 64
  %v3409 = vpop.permute.xlu0 %3408
  %v3411 = vadd.f32 %v3401, %v3409
  %v3412 = vtanh.pop %v3411
  %3414 = vrot.lane.b32.xlu0 %v3412, 32
  %v3415 = vpop.permute.xlu0 %3414
  %v3417 = vmul.f32 %v3400, %v3415
  %3419 = vrot.lane.b32.xlu0 %v3417, 32
  %v3420 = vpop.permute.xlu0 %3419
  %s3422 = scalar_lea.vmem %s5, 96
  %3423 = vst.msk [vmem:[%s3422] sm:$0xff] %vm39, %v3420
  %3425 = vrot.lane.b32.xlu0 %v3411, 64
  %v3426 = vpop.permute.xlu0 %3425
  %s3428 = scalar_lea.vmem %s6, 96
  %3429 = vst.msk [vmem:[%s3428] sm:$0xff] %vm39, %v3426
  %v3430 = vsel %vm39, %v3420, 0
  %3432 = vmatprep.subr.mxu0 0.0
  %3433 = vmatpush1.msra.mxu0 %v30
  %3434 = vmatprep.subr.mxu0 0.0
  %3435 = vmatpush1.msra.mxu0 %v31
  %3436 = vmatprep.subr.mxu0 0.0
  %3437 = vmatpush1.msra.mxu0 %v32
  %3438 = vmatprep.subr.mxu0 0.0
  %3439 = vmatpush1.msra.mxu0 %v33
  %3440 = vmatprep.subr.mxu0 0.0
  %3441 = vmatpush1.msra.mxu0 0.0
  %3442 = vmatprep.subr.mxu0 0.0
  %3443 = vmatpush1.msra.mxu0 0.0
  %3444 = vmatprep.subr.mxu0 0.0
  %3445 = vmatpush1.msra.mxu0 0.0
  %3446 = vmatprep.subr.mxu0 0.0
  %3447 = vmatpush1.msra.mxu0 0.0
  %3448 = vmatprep.subr.mxu0 0.0
  %3449 = vmatpush1.msra.mxu0 0.0
  %3450 = vmatprep.subr.mxu0 0.0
  %3451 = vmatpush1.msra.mxu0 0.0
  %3452 = vmatprep.subr.mxu0 0.0
  %3453 = vmatpush1.msra.mxu0 0.0
  %3454 = vmatprep.subr.mxu0 0.0
  %3455 = vmatpush1.msra.mxu0 0.0
  %3456 = vmatprep.subr.mxu0 0.0
  %3457 = vmatpush1.msra.mxu0 0.0
  %3458 = vmatprep.subr.mxu0 0.0
  %3459 = vmatpush1.msra.mxu0 0.0
  %3460 = vmatprep.subr.mxu0 0.0
  %3461 = vmatpush1.msra.mxu0 0.0
  %3462 = vmatprep.subr.mxu0 0.0
  %3463 = vmatpush1.msra.mxu0 0.0
  %3464 = vmatprep.subr.mxu0 0.0
  %3465 = vmatpush1.msra.mxu0 0.0
  %3466 = vmatprep.subr.mxu0 0.0
  %3467 = vmatpush1.msra.mxu0 0.0
  %3468 = vmatprep.subr.mxu0 0.0
  %3469 = vmatpush1.msra.mxu0 0.0
  %3470 = vmatprep.subr.mxu0 0.0
  %3471 = vmatpush1.msra.mxu0 0.0
  %3472 = vmatprep.subr.mxu0 0.0
  %3473 = vmatpush1.msra.mxu0 0.0
  %3474 = vmatprep.subr.mxu0 0.0
  %3475 = vmatpush1.msra.mxu0 0.0
  %3476 = vmatprep.subr.mxu0 0.0
  %3477 = vmatpush1.msra.mxu0 0.0
  %3478 = vmatprep.subr.mxu0 0.0
  %3479 = vmatpush1.msra.mxu0 0.0
  %3480 = vmatprep.subr.mxu0 0.0
  %3481 = vmatpush1.msra.mxu0 0.0
  %3482 = vmatprep.subr.mxu0 0.0
  %3483 = vmatpush1.msra.mxu0 0.0
  %3484 = vmatprep.subr.mxu0 0.0
  %3485 = vmatpush1.msra.mxu0 0.0
  %3486 = vmatprep.subr.mxu0 0.0
  %3487 = vmatpush1.msra.mxu0 0.0
  %3488 = vmatprep.subr.mxu0 0.0
  %3489 = vmatpush1.msra.mxu0 0.0
  %3490 = vmatprep.subr.mxu0 0.0
  %3491 = vmatpush1.msra.mxu0 0.0
  %3492 = vmatprep.subr.mxu0 0.0
  %3493 = vmatpush1.msra.mxu0 0.0
  %3494 = vmatprep.subr.mxu0 0.0
  %3495 = vmatpush1.msra.mxu0 0.0
  %3496 = vmatprep.mubr.f32.mxu0 0.0
  %3497 = vmatmul.mubr.f32.gmra.mrb[0].mxu0 %v3430
  %v3498 = vpop.f32.mrb[0].mxu0
  %v3499 = vadd.f32 0.0, %v3498
  %v3500 = vpop.f32.mrb[0].mxu0
  %3501 = vdwg.mxu0
  %s3502 = scalar_lea.vmem %s0, 104
  %v3503 = vld [vmem:[%s3502] sm:$0xff]
  %3504 = vmatprep.subr.mxu0 0.0
  %3505 = vmatpush1.msra.mxu0 %v22
  %3506 = vmatprep.subr.mxu0 0.0
  %3507 = vmatpush1.msra.mxu0 %v23
  %3508 = vmatprep.subr.mxu0 0.0
  %3509 = vmatpush1.msra.mxu0 %v24
  %3510 = vmatprep.subr.mxu0 0.0
  %3511 = vmatpush1.msra.mxu0 %v25
  %3512 = vmatprep.subr.mxu0 0.0
  %3513 = vmatpush1.msra.mxu0 0.0
  %3514 = vmatprep.subr.mxu0 0.0
  %3515 = vmatpush1.msra.mxu0 0.0
  %3516 = vmatprep.subr.mxu0 0.0
  %3517 = vmatpush1.msra.mxu0 0.0
  %3518 = vmatprep.subr.mxu0 0.0
  %3519 = vmatpush1.msra.mxu0 0.0
  %3520 = vmatprep.subr.mxu0 0.0
  %3521 = vmatpush1.msra.mxu0 0.0
  %3522 = vmatprep.subr.mxu0 0.0
  %3523 = vmatpush1.msra.mxu0 0.0
  %3524 = vmatprep.subr.mxu0 0.0
  %3525 = vmatpush1.msra.mxu0 0.0
  %3526 = vmatprep.subr.mxu0 0.0
  %3527 = vmatpush1.msra.mxu0 0.0
  %3528 = vmatprep.subr.mxu0 0.0
  %3529 = vmatpush1.msra.mxu0 0.0
  %3530 = vmatprep.subr.mxu0 0.0
  %3531 = vmatpush1.msra.mxu0 0.0
  %3532 = vmatprep.subr.mxu0 0.0
  %3533 = vmatpush1.msra.mxu0 0.0
  %3534 = vmatprep.subr.mxu0 0.0
  %3535 = vmatpush1.msra.mxu0 0.0
  %3536 = vmatprep.subr.mxu0 0.0
  %3537 = vmatpush1.msra.mxu0 0.0
  %3538 = vmatprep.subr.mxu0 0.0
  %3539 = vmatpush1.msra.mxu0 0.0
  %3540 = vmatprep.subr.mxu0 0.0
  %3541 = vmatpush1.msra.mxu0 0.0
  %3542 = vmatprep.subr.mxu0 0.0
  %3543 = vmatpush1.msra.mxu0 0.0
  %3544 = vmatprep.subr.mxu0 0.0
  %3545 = vmatpush1.msra.mxu0 0.0
  %3546 = vmatprep.subr.mxu0 0.0
  %3547 = vmatpush1.msra.mxu0 0.0
  %3548 = vmatprep.subr.mxu0 0.0
  %3549 = vmatpush1.msra.mxu0 0.0
  %3550 = vmatprep.subr.mxu0 0.0
  %3551 = vmatpush1.msra.mxu0 0.0
  %3552 = vmatprep.subr.mxu0 0.0
  %3553 = vmatpush1.msra.mxu0 0.0
  %3554 = vmatprep.subr.mxu0 0.0
  %3555 = vmatpush1.msra.mxu0 0.0
  %3556 = vmatprep.subr.mxu0 0.0
  %3557 = vmatpush1.msra.mxu0 0.0
  %3558 = vmatprep.subr.mxu0 0.0
  %3559 = vmatpush1.msra.mxu0 0.0
  %3560 = vmatprep.subr.mxu0 0.0
  %3561 = vmatpush1.msra.mxu0 0.0
  %3562 = vmatprep.subr.mxu0 0.0
  %3563 = vmatpush1.msra.mxu0 0.0
  %3564 = vmatprep.subr.mxu0 0.0
  %3565 = vmatpush1.msra.mxu0 0.0
  %3566 = vmatprep.subr.mxu0 0.0
  %3567 = vmatpush1.msra.mxu0 0.0
  %3568 = vmatprep.mubr.f32.mxu0 0.0
  %3569 = vmatmul.mubr.f32.gmra.mrb[0].mxu0 %v3430
  %v3570 = vpop.f32.mrb[0].mxu0
  %v3571 = vadd.f32 0.0, %v3570
  %v3572 = vpop.f32.mrb[0].mxu0
  %3573 = vdwg.mxu0
  %v3574 = vadd.f32 %v3503, %v3571
  %v3575 = vmul.f32 %v3574, 0.5
  %v3576 = vtanh.pop %v3575
  %v3577 = vmul.f32 %v3576, 0.5
  %v3578 = vadd.f32 %v3577, 0.5
  %s3579 = scalar_lea.vmem %s1, 104
  %v3580 = vld [vmem:[%s3579] sm:$0xff]
  %v3581 = vadd.f32 %v3580, %v3499
  %v3583 = vsel %vm39, %v3578, 0
  %3585 = vmatprep.subr.mxu0 0.0
  %3586 = vmatpush1.msra.mxu0 %v26
  %3587 = vmatprep.subr.mxu0 0.0
  %3588 = vmatpush1.msra.mxu0 %v27
  %3589 = vmatprep.subr.mxu0 0.0
  %3590 = vmatpush1.msra.mxu0 %v28
  %3591 = vmatprep.subr.mxu0 0.0
  %3592 = vmatpush1.msra.mxu0 %v29
  %3593 = vmatprep.subr.mxu0 0.0
  %3594 = vmatpush1.msra.mxu0 0.0
  %3595 = vmatprep.subr.mxu0 0.0
  %3596 = vmatpush1.msra.mxu0 0.0
  %3597 = vmatprep.subr.mxu0 0.0
  %3598 = vmatpush1.msra.mxu0 0.0
  %3599 = vmatprep.subr.mxu0 0.0
  %3600 = vmatpush1.msra.mxu0 0.0
  %3601 = vmatprep.subr.mxu0 0.0
  %3602 = vmatpush1.msra.mxu0 0.0
  %3603 = vmatprep.subr.mxu0 0.0
  %3604 = vmatpush1.msra.mxu0 0.0
  %3605 = vmatprep.subr.mxu0 0.0
  %3606 = vmatpush1.msra.mxu0 0.0
  %3607 = vmatprep.subr.mxu0 0.0
  %3608 = vmatpush1.msra.mxu0 0.0
  %3609 = vmatprep.subr.mxu0 0.0
  %3610 = vmatpush1.msra.mxu0 0.0
  %3611 = vmatprep.subr.mxu0 0.0
  %3612 = vmatpush1.msra.mxu0 0.0
  %3613 = vmatprep.subr.mxu0 0.0
  %3614 = vmatpush1.msra.mxu0 0.0
  %3615 = vmatprep.subr.mxu0 0.0
  %3616 = vmatpush1.msra.mxu0 0.0
  %3617 = vmatprep.subr.mxu0 0.0
  %3618 = vmatpush1.msra.mxu0 0.0
  %3619 = vmatprep.subr.mxu0 0.0
  %3620 = vmatpush1.msra.mxu0 0.0
  %3621 = vmatprep.subr.mxu0 0.0
  %3622 = vmatpush1.msra.mxu0 0.0
  %3623 = vmatprep.subr.mxu0 0.0
  %3624 = vmatpush1.msra.mxu0 0.0
  %3625 = vmatprep.subr.mxu0 0.0
  %3626 = vmatpush1.msra.mxu0 0.0
  %3627 = vmatprep.subr.mxu0 0.0
  %3628 = vmatpush1.msra.mxu0 0.0
  %3629 = vmatprep.subr.mxu0 0.0
  %3630 = vmatpush1.msra.mxu0 0.0
  %3631 = vmatprep.subr.mxu0 0.0
  %3632 = vmatpush1.msra.mxu0 0.0
  %3633 = vmatprep.subr.mxu0 0.0
  %3634 = vmatpush1.msra.mxu0 0.0
  %3635 = vmatprep.subr.mxu0 0.0
  %3636 = vmatpush1.msra.mxu0 0.0
  %3637 = vmatprep.subr.mxu0 0.0
  %3638 = vmatpush1.msra.mxu0 0.0
  %3639 = vmatprep.subr.mxu0 0.0
  %3640 = vmatpush1.msra.mxu0 0.0
  %3641 = vmatprep.subr.mxu0 0.0
  %3642 = vmatpush1.msra.mxu0 0.0
  %3643 = vmatprep.subr.mxu0 0.0
  %3644 = vmatpush1.msra.mxu0 0.0
  %3645 = vmatprep.subr.mxu0 0.0
  %3646 = vmatpush1.msra.mxu0 0.0
  %3647 = vmatprep.subr.mxu0 0.0
  %3648 = vmatpush1.msra.mxu0 0.0
  %3649 = vmatprep.mubr.f32.mxu0 0.0
  %3650 = vmatmul.mubr.f32.gmra.mrb[0].mxu0 %v3583
  %v3651 = vpop.f32.mrb[0].mxu0
  %v3652 = vadd.f32 0.0, %v3651
  %v3653 = vpop.f32.mrb[0].mxu0
  %3654 = vdwg.mxu0
  %v3655 = vadd.f32 %v3581, %v3652
  %v3656 = vmul.f32 %v3655, 0.5
  %v3657 = vsel %vm38, %v3655, %v3656
  %v3658 = vtanh.pop %v3657
  %v3659 = vmul.f32 %v3658, 0.5
  %v3660 = vadd.f32 %v3659, 0.5
  %v3661 = vsel %vm38, %v3658, %v3660
  %v3662 = vmul.f32 %v3661, %v3411
  %3664 = vrot.lane.b32.xlu0 %v3661, 96
  %v3665 = vpop.permute.xlu0 %3664
  %v3667 = vmul.f32 %v3661, %v3665
  %3669 = vrot.lane.b32.xlu0 %v3667, 64
  %v3670 = vpop.permute.xlu0 %3669
  %v3672 = vadd.f32 %v3662, %v3670
  %v3673 = vtanh.pop %v3672
  %3675 = vrot.lane.b32.xlu0 %v3673, 32
  %v3676 = vpop.permute.xlu0 %3675
  %v3678 = vmul.f32 %v3661, %v3676
  %3680 = vrot.lane.b32.xlu0 %v3678, 32
  %v3681 = vpop.permute.xlu0 %3680
  %s3683 = scalar_lea.vmem %s5, 104
  %3684 = vst.msk [vmem:[%s3683] sm:$0xff] %vm39, %v3681
  %3686 = vrot.lane.b32.xlu0 %v3672, 64
  %v3687 = vpop.permute.xlu0 %3686
  %s3689 = scalar_lea.vmem %s6, 104
  %3690 = vst.msk [vmem:[%s3689] sm:$0xff] %vm39, %v3687
  %v3691 = vsel %vm39, %v3681, 0
  %3693 = vmatprep.subr.mxu0 0.0
  %3694 = vmatpush1.msra.mxu0 %v30
  %3695 = vmatprep.subr.mxu0 0.0
  %3696 = vmatpush1.msra.mxu0 %v31
  %3697 = vmatprep.subr.mxu0 0.0
  %3698 = vmatpush1.msra.mxu0 %v32
  %3699 = vmatprep.subr.mxu0 0.0
  %3700 = vmatpush1.msra.mxu0 %v33
  %3701 = vmatprep.subr.mxu0 0.0
  %3702 = vmatpush1.msra.mxu0 0.0
  %3703 = vmatprep.subr.mxu0 0.0
  %3704 = vmatpush1.msra.mxu0 0.0
  %3705 = vmatprep.subr.mxu0 0.0
  %3706 = vmatpush1.msra.mxu0 0.0
  %3707 = vmatprep.subr.mxu0 0.0
  %3708 = vmatpush1.msra.mxu0 0.0
  %3709 = vmatprep.subr.mxu0 0.0
  %3710 = vmatpush1.msra.mxu0 0.0
  %3711 = vmatprep.subr.mxu0 0.0
  %3712 = vmatpush1.msra.mxu0 0.0
  %3713 = vmatprep.subr.mxu0 0.0
  %3714 = vmatpush1.msra.mxu0 0.0
  %3715 = vmatprep.subr.mxu0 0.0
  %3716 = vmatpush1.msra.mxu0 0.0
  %3717 = vmatprep.subr.mxu0 0.0
  %3718 = vmatpush1.msra.mxu0 0.0
  %3719 = vmatprep.subr.mxu0 0.0
  %3720 = vmatpush1.msra.mxu0 0.0
  %3721 = vmatprep.subr.mxu0 0.0
  %3722 = vmatpush1.msra.mxu0 0.0
  %3723 = vmatprep.subr.mxu0 0.0
  %3724 = vmatpush1.msra.mxu0 0.0
  %3725 = vmatprep.subr.mxu0 0.0
  %3726 = vmatpush1.msra.mxu0 0.0
  %3727 = vmatprep.subr.mxu0 0.0
  %3728 = vmatpush1.msra.mxu0 0.0
  %3729 = vmatprep.subr.mxu0 0.0
  %3730 = vmatpush1.msra.mxu0 0.0
  %3731 = vmatprep.subr.mxu0 0.0
  %3732 = vmatpush1.msra.mxu0 0.0
  %3733 = vmatprep.subr.mxu0 0.0
  %3734 = vmatpush1.msra.mxu0 0.0
  %3735 = vmatprep.subr.mxu0 0.0
  %3736 = vmatpush1.msra.mxu0 0.0
  %3737 = vmatprep.subr.mxu0 0.0
  %3738 = vmatpush1.msra.mxu0 0.0
  %3739 = vmatprep.subr.mxu0 0.0
  %3740 = vmatpush1.msra.mxu0 0.0
  %3741 = vmatprep.subr.mxu0 0.0
  %3742 = vmatpush1.msra.mxu0 0.0
  %3743 = vmatprep.subr.mxu0 0.0
  %3744 = vmatpush1.msra.mxu0 0.0
  %3745 = vmatprep.subr.mxu0 0.0
  %3746 = vmatpush1.msra.mxu0 0.0
  %3747 = vmatprep.subr.mxu0 0.0
  %3748 = vmatpush1.msra.mxu0 0.0
  %3749 = vmatprep.subr.mxu0 0.0
  %3750 = vmatpush1.msra.mxu0 0.0
  %3751 = vmatprep.subr.mxu0 0.0
  %3752 = vmatpush1.msra.mxu0 0.0
  %3753 = vmatprep.subr.mxu0 0.0
  %3754 = vmatpush1.msra.mxu0 0.0
  %3755 = vmatprep.subr.mxu0 0.0
  %3756 = vmatpush1.msra.mxu0 0.0
  %3757 = vmatprep.mubr.f32.mxu0 0.0
  %3758 = vmatmul.mubr.f32.gmra.mrb[0].mxu0 %v3691
  %v3759 = vpop.f32.mrb[0].mxu0
  %v3760 = vadd.f32 0.0, %v3759
  %v3761 = vpop.f32.mrb[0].mxu0
  %3762 = vdwg.mxu0
  %s3763 = scalar_lea.vmem %s0, 112
  %v3764 = vld [vmem:[%s3763] sm:$0xff]
  %3765 = vmatprep.subr.mxu0 0.0
  %3766 = vmatpush1.msra.mxu0 %v22
  %3767 = vmatprep.subr.mxu0 0.0
  %3768 = vmatpush1.msra.mxu0 %v23
  %3769 = vmatprep.subr.mxu0 0.0
  %3770 = vmatpush1.msra.mxu0 %v24
  %3771 = vmatprep.subr.mxu0 0.0
  %3772 = vmatpush1.msra.mxu0 %v25
  %3773 = vmatprep.subr.mxu0 0.0
  %3774 = vmatpush1.msra.mxu0 0.0
  %3775 = vmatprep.subr.mxu0 0.0
  %3776 = vmatpush1.msra.mxu0 0.0
  %3777 = vmatprep.subr.mxu0 0.0
  %3778 = vmatpush1.msra.mxu0 0.0
  %3779 = vmatprep.subr.mxu0 0.0
  %3780 = vmatpush1.msra.mxu0 0.0
  %3781 = vmatprep.subr.mxu0 0.0
  %3782 = vmatpush1.msra.mxu0 0.0
  %3783 = vmatprep.subr.mxu0 0.0
  %3784 = vmatpush1.msra.mxu0 0.0
  %3785 = vmatprep.subr.mxu0 0.0
  %3786 = vmatpush1.msra.mxu0 0.0
  %3787 = vmatprep.subr.mxu0 0.0
  %3788 = vmatpush1.msra.mxu0 0.0
  %3789 = vmatprep.subr.mxu0 0.0
  %3790 = vmatpush1.msra.mxu0 0.0
  %3791 = vmatprep.subr.mxu0 0.0
  %3792 = vmatpush1.msra.mxu0 0.0
  %3793 = vmatprep.subr.mxu0 0.0
  %3794 = vmatpush1.msra.mxu0 0.0
  %3795 = vmatprep.subr.mxu0 0.0
  %3796 = vmatpush1.msra.mxu0 0.0
  %3797 = vmatprep.subr.mxu0 0.0
  %3798 = vmatpush1.msra.mxu0 0.0
  %3799 = vmatprep.subr.mxu0 0.0
  %3800 = vmatpush1.msra.mxu0 0.0
  %3801 = vmatprep.subr.mxu0 0.0
  %3802 = vmatpush1.msra.mxu0 0.0
  %3803 = vmatprep.subr.mxu0 0.0
  %3804 = vmatpush1.msra.mxu0 0.0
  %3805 = vmatprep.subr.mxu0 0.0
  %3806 = vmatpush1.msra.mxu0 0.0
  %3807 = vmatprep.subr.mxu0 0.0
  %3808 = vmatpush1.msra.mxu0 0.0
  %3809 = vmatprep.subr.mxu0 0.0
  %3810 = vmatpush1.msra.mxu0 0.0
  %3811 = vmatprep.subr.mxu0 0.0
  %3812 = vmatpush1.msra.mxu0 0.0
  %3813 = vmatprep.subr.mxu0 0.0
  %3814 = vmatpush1.msra.mxu0 0.0
  %3815 = vmatprep.subr.mxu0 0.0
  %3816 = vmatpush1.msra.mxu0 0.0
  %3817 = vmatprep.subr.mxu0 0.0
  %3818 = vmatpush1.msra.mxu0 0.0
  %3819 = vmatprep.subr.mxu0 0.0
  %3820 = vmatpush1.msra.mxu0 0.0
  %3821 = vmatprep.subr.mxu0 0.0
  %3822 = vmatpush1.msra.mxu0 0.0
  %3823 = vmatprep.subr.mxu0 0.0
  %3824 = vmatpush1.msra.mxu0 0.0
  %3825 = vmatprep.subr.mxu0 0.0
  %3826 = vmatpush1.msra.mxu0 0.0
  %3827 = vmatprep.subr.mxu0 0.0
  %3828 = vmatpush1.msra.mxu0 0.0
  %3829 = vmatprep.mubr.f32.mxu0 0.0
  %3830 = vmatmul.mubr.f32.gmra.mrb[0].mxu0 %v3691
  %v3831 = vpop.f32.mrb[0].mxu0
  %v3832 = vadd.f32 0.0, %v3831
  %v3833 = vpop.f32.mrb[0].mxu0
  %3834 = vdwg.mxu0
  %v3835 = vadd.f32 %v3764, %v3832
  %v3836 = vmul.f32 %v3835, 0.5
  %v3837 = vtanh.pop %v3836
  %v3838 = vmul.f32 %v3837, 0.5
  %v3839 = vadd.f32 %v3838, 0.5
  %s3840 = scalar_lea.vmem %s1, 112
  %v3841 = vld [vmem:[%s3840] sm:$0xff]
  %v3842 = vadd.f32 %v3841, %v3760
  %v3844 = vsel %vm39, %v3839, 0
  %3846 = vmatprep.subr.mxu0 0.0
  %3847 = vmatpush1.msra.mxu0 %v26
  %3848 = vmatprep.subr.mxu0 0.0
  %3849 = vmatpush1.msra.mxu0 %v27
  %3850 = vmatprep.subr.mxu0 0.0
  %3851 = vmatpush1.msra.mxu0 %v28
  %3852 = vmatprep.subr.mxu0 0.0
  %3853 = vmatpush1.msra.mxu0 %v29
  %3854 = vmatprep.subr.mxu0 0.0
  %3855 = vmatpush1.msra.mxu0 0.0
  %3856 = vmatprep.subr.mxu0 0.0
  %3857 = vmatpush1.msra.mxu0 0.0
  %3858 = vmatprep.subr.mxu0 0.0
  %3859 = vmatpush1.msra.mxu0 0.0
  %3860 = vmatprep.subr.mxu0 0.0
  %3861 = vmatpush1.msra.mxu0 0.0
  %3862 = vmatprep.subr.mxu0 0.0
  %3863 = vmatpush1.msra.mxu0 0.0
  %3864 = vmatprep.subr.mxu0 0.0
  %3865 = vmatpush1.msra.mxu0 0.0
  %3866 = vmatprep.subr.mxu0 0.0
  %3867 = vmatpush1.msra.mxu0 0.0
  %3868 = vmatprep.subr.mxu0 0.0
  %3869 = vmatpush1.msra.mxu0 0.0
  %3870 = vmatprep.subr.mxu0 0.0
  %3871 = vmatpush1.msra.mxu0 0.0
  %3872 = vmatprep.subr.mxu0 0.0
  %3873 = vmatpush1.msra.mxu0 0.0
  %3874 = vmatprep.subr.mxu0 0.0
  %3875 = vmatpush1.msra.mxu0 0.0
  %3876 = vmatprep.subr.mxu0 0.0
  %3877 = vmatpush1.msra.mxu0 0.0
  %3878 = vmatprep.subr.mxu0 0.0
  %3879 = vmatpush1.msra.mxu0 0.0
  %3880 = vmatprep.subr.mxu0 0.0
  %3881 = vmatpush1.msra.mxu0 0.0
  %3882 = vmatprep.subr.mxu0 0.0
  %3883 = vmatpush1.msra.mxu0 0.0
  %3884 = vmatprep.subr.mxu0 0.0
  %3885 = vmatpush1.msra.mxu0 0.0
  %3886 = vmatprep.subr.mxu0 0.0
  %3887 = vmatpush1.msra.mxu0 0.0
  %3888 = vmatprep.subr.mxu0 0.0
  %3889 = vmatpush1.msra.mxu0 0.0
  %3890 = vmatprep.subr.mxu0 0.0
  %3891 = vmatpush1.msra.mxu0 0.0
  %3892 = vmatprep.subr.mxu0 0.0
  %3893 = vmatpush1.msra.mxu0 0.0
  %3894 = vmatprep.subr.mxu0 0.0
  %3895 = vmatpush1.msra.mxu0 0.0
  %3896 = vmatprep.subr.mxu0 0.0
  %3897 = vmatpush1.msra.mxu0 0.0
  %3898 = vmatprep.subr.mxu0 0.0
  %3899 = vmatpush1.msra.mxu0 0.0
  %3900 = vmatprep.subr.mxu0 0.0
  %3901 = vmatpush1.msra.mxu0 0.0
  %3902 = vmatprep.subr.mxu0 0.0
  %3903 = vmatpush1.msra.mxu0 0.0
  %3904 = vmatprep.subr.mxu0 0.0
  %3905 = vmatpush1.msra.mxu0 0.0
  %3906 = vmatprep.subr.mxu0 0.0
  %3907 = vmatpush1.msra.mxu0 0.0
  %3908 = vmatprep.subr.mxu0 0.0
  %3909 = vmatpush1.msra.mxu0 0.0
  %3910 = vmatprep.mubr.f32.mxu0 0.0
  %3911 = vmatmul.mubr.f32.gmra.mrb[0].mxu0 %v3844
  %v3912 = vpop.f32.mrb[0].mxu0
  %v3913 = vadd.f32 0.0, %v3912
  %v3914 = vpop.f32.mrb[0].mxu0
  %3915 = vdwg.mxu0
  %v3916 = vadd.f32 %v3842, %v3913
  %v3917 = vmul.f32 %v3916, 0.5
  %v3918 = vsel %vm38, %v3916, %v3917
  %v3919 = vtanh.pop %v3918
  %v3920 = vmul.f32 %v3919, 0.5
  %v3921 = vadd.f32 %v3920, 0.5
  %v3922 = vsel %vm38, %v3919, %v3921
  %v3923 = vmul.f32 %v3922, %v3672
  %3925 = vrot.lane.b32.xlu0 %v3922, 96
  %v3926 = vpop.permute.xlu0 %3925
  %v3928 = vmul.f32 %v3922, %v3926
  %3930 = vrot.lane.b32.xlu0 %v3928, 64
  %v3931 = vpop.permute.xlu0 %3930
  %v3933 = vadd.f32 %v3923, %v3931
  %v3934 = vtanh.pop %v3933
  %3936 = vrot.lane.b32.xlu0 %v3934, 32
  %v3937 = vpop.permute.xlu0 %3936
  %v3939 = vmul.f32 %v3922, %v3937
  %3941 = vrot.lane.b32.xlu0 %v3939, 32
  %v3942 = vpop.permute.xlu0 %3941
  %s3944 = scalar_lea.vmem %s5, 112
  %3945 = vst.msk [vmem:[%s3944] sm:$0xff] %vm39, %v3942
  %3947 = vrot.lane.b32.xlu0 %v3933, 64
  %v3948 = vpop.permute.xlu0 %3947
  %s3950 = scalar_lea.vmem %s6, 112
  %3951 = vst.msk [vmem:[%s3950] sm:$0xff] %vm39, %v3948
  %v3952 = vsel %vm39, %v3942, 0
  %3954 = vmatprep.subr.mxu0 0.0
  %3955 = vmatpush1.msra.mxu0 %v30
  %3956 = vmatprep.subr.mxu0 0.0
  %3957 = vmatpush1.msra.mxu0 %v31
  %3958 = vmatprep.subr.mxu0 0.0
  %3959 = vmatpush1.msra.mxu0 %v32
  %3960 = vmatprep.subr.mxu0 0.0
  %3961 = vmatpush1.msra.mxu0 %v33
  %3962 = vmatprep.subr.mxu0 0.0
  %3963 = vmatpush1.msra.mxu0 0.0
  %3964 = vmatprep.subr.mxu0 0.0
  %3965 = vmatpush1.msra.mxu0 0.0
  %3966 = vmatprep.subr.mxu0 0.0
  %3967 = vmatpush1.msra.mxu0 0.0
  %3968 = vmatprep.subr.mxu0 0.0
  %3969 = vmatpush1.msra.mxu0 0.0
  %3970 = vmatprep.subr.mxu0 0.0
  %3971 = vmatpush1.msra.mxu0 0.0
  %3972 = vmatprep.subr.mxu0 0.0
  %3973 = vmatpush1.msra.mxu0 0.0
  %3974 = vmatprep.subr.mxu0 0.0
  %3975 = vmatpush1.msra.mxu0 0.0
  %3976 = vmatprep.subr.mxu0 0.0
  %3977 = vmatpush1.msra.mxu0 0.0
  %3978 = vmatprep.subr.mxu0 0.0
  %3979 = vmatpush1.msra.mxu0 0.0
  %3980 = vmatprep.subr.mxu0 0.0
  %3981 = vmatpush1.msra.mxu0 0.0
  %3982 = vmatprep.subr.mxu0 0.0
  %3983 = vmatpush1.msra.mxu0 0.0
  %3984 = vmatprep.subr.mxu0 0.0
  %3985 = vmatpush1.msra.mxu0 0.0
  %3986 = vmatprep.subr.mxu0 0.0
  %3987 = vmatpush1.msra.mxu0 0.0
  %3988 = vmatprep.subr.mxu0 0.0
  %3989 = vmatpush1.msra.mxu0 0.0
  %3990 = vmatprep.subr.mxu0 0.0
  %3991 = vmatpush1.msra.mxu0 0.0
  %3992 = vmatprep.subr.mxu0 0.0
  %3993 = vmatpush1.msra.mxu0 0.0
  %3994 = vmatprep.subr.mxu0 0.0
  %3995 = vmatpush1.msra.mxu0 0.0
  %3996 = vmatprep.subr.mxu0 0.0
  %3997 = vmatpush1.msra.mxu0 0.0
  %3998 = vmatprep.subr.mxu0 0.0
  %3999 = vmatpush1.msra.mxu0 0.0
  %4000 = vmatprep.subr.mxu0 0.0
  %4001 = vmatpush1.msra.mxu0 0.0
  %4002 = vmatprep.subr.mxu0 0.0
  %4003 = vmatpush1.msra.mxu0 0.0
  %4004 = vmatprep.subr.mxu0 0.0
  %4005 = vmatpush1.msra.mxu0 0.0
  %4006 = vmatprep.subr.mxu0 0.0
  %4007 = vmatpush1.msra.mxu0 0.0
  %4008 = vmatprep.subr.mxu0 0.0
  %4009 = vmatpush1.msra.mxu0 0.0
  %4010 = vmatprep.subr.mxu0 0.0
  %4011 = vmatpush1.msra.mxu0 0.0
  %4012 = vmatprep.subr.mxu0 0.0
  %4013 = vmatpush1.msra.mxu0 0.0
  %4014 = vmatprep.subr.mxu0 0.0
  %4015 = vmatpush1.msra.mxu0 0.0
  %4016 = vmatprep.subr.mxu0 0.0
  %4017 = vmatpush1.msra.mxu0 0.0
  %4018 = vmatprep.mubr.f32.mxu0 0.0
  %4019 = vmatmul.mubr.f32.gmra.mrb[0].mxu0 %v3952
  %v4020 = vpop.f32.mrb[0].mxu0
  %v4021 = vadd.f32 0.0, %v4020
  %v4022 = vpop.f32.mrb[0].mxu0
  %4023 = vdwg.mxu0
  %s4024 = scalar_lea.vmem %s0, 120
  %v4025 = vld [vmem:[%s4024] sm:$0xff]
  %4026 = vmatprep.subr.mxu0 0.0
  %4027 = vmatpush1.msra.mxu0 %v22
  %4028 = vmatprep.subr.mxu0 0.0
  %4029 = vmatpush1.msra.mxu0 %v23
  %4030 = vmatprep.subr.mxu0 0.0
  %4031 = vmatpush1.msra.mxu0 %v24
  %4032 = vmatprep.subr.mxu0 0.0
  %4033 = vmatpush1.msra.mxu0 %v25
  %4034 = vmatprep.subr.mxu0 0.0
  %4035 = vmatpush1.msra.mxu0 0.0
  %4036 = vmatprep.subr.mxu0 0.0
  %4037 = vmatpush1.msra.mxu0 0.0
  %4038 = vmatprep.subr.mxu0 0.0
  %4039 = vmatpush1.msra.mxu0 0.0
  %4040 = vmatprep.subr.mxu0 0.0
  %4041 = vmatpush1.msra.mxu0 0.0
  %4042 = vmatprep.subr.mxu0 0.0
  %4043 = vmatpush1.msra.mxu0 0.0
  %4044 = vmatprep.subr.mxu0 0.0
  %4045 = vmatpush1.msra.mxu0 0.0
  %4046 = vmatprep.subr.mxu0 0.0
  %4047 = vmatpush1.msra.mxu0 0.0
  %4048 = vmatprep.subr.mxu0 0.0
  %4049 = vmatpush1.msra.mxu0 0.0
  %4050 = vmatprep.subr.mxu0 0.0
  %4051 = vmatpush1.msra.mxu0 0.0
  %4052 = vmatprep.subr.mxu0 0.0
  %4053 = vmatpush1.msra.mxu0 0.0
  %4054 = vmatprep.subr.mxu0 0.0
  %4055 = vmatpush1.msra.mxu0 0.0
  %4056 = vmatprep.subr.mxu0 0.0
  %4057 = vmatpush1.msra.mxu0 0.0
  %4058 = vmatprep.subr.mxu0 0.0
  %4059 = vmatpush1.msra.mxu0 0.0
  %4060 = vmatprep.subr.mxu0 0.0
  %4061 = vmatpush1.msra.mxu0 0.0
  %4062 = vmatprep.subr.mxu0 0.0
  %4063 = vmatpush1.msra.mxu0 0.0
  %4064 = vmatprep.subr.mxu0 0.0
  %4065 = vmatpush1.msra.mxu0 0.0
  %4066 = vmatprep.subr.mxu0 0.0
  %4067 = vmatpush1.msra.mxu0 0.0
  %4068 = vmatprep.subr.mxu0 0.0
  %4069 = vmatpush1.msra.mxu0 0.0
  %4070 = vmatprep.subr.mxu0 0.0
  %4071 = vmatpush1.msra.mxu0 0.0
  %4072 = vmatprep.subr.mxu0 0.0
  %4073 = vmatpush1.msra.mxu0 0.0
  %4074 = vmatprep.subr.mxu0 0.0
  %4075 = vmatpush1.msra.mxu0 0.0
  %4076 = vmatprep.subr.mxu0 0.0
  %4077 = vmatpush1.msra.mxu0 0.0
  %4078 = vmatprep.subr.mxu0 0.0
  %4079 = vmatpush1.msra.mxu0 0.0
  %4080 = vmatprep.subr.mxu0 0.0
  %4081 = vmatpush1.msra.mxu0 0.0
  %4082 = vmatprep.subr.mxu0 0.0
  %4083 = vmatpush1.msra.mxu0 0.0
  %4084 = vmatprep.subr.mxu0 0.0
  %4085 = vmatpush1.msra.mxu0 0.0
  %4086 = vmatprep.subr.mxu0 0.0
  %4087 = vmatpush1.msra.mxu0 0.0
  %4088 = vmatprep.subr.mxu0 0.0
  %4089 = vmatpush1.msra.mxu0 0.0
  %4090 = vmatprep.mubr.f32.mxu0 0.0
  %4091 = vmatmul.mubr.f32.gmra.mrb[0].mxu0 %v3952
  %v4092 = vpop.f32.mrb[0].mxu0
  %v4093 = vadd.f32 0.0, %v4092
  %v4094 = vpop.f32.mrb[0].mxu0
  %4095 = vdwg.mxu0
  %v4096 = vadd.f32 %v4025, %v4093
  %v4097 = vmul.f32 %v4096, 0.5
  %v4098 = vtanh.pop %v4097
  %v4099 = vmul.f32 %v4098, 0.5
  %v4100 = vadd.f32 %v4099, 0.5
  %s4101 = scalar_lea.vmem %s1, 120
  %v4102 = vld [vmem:[%s4101] sm:$0xff]
  %v4103 = vadd.f32 %v4102, %v4021
  %v4105 = vsel %vm39, %v4100, 0
  %4107 = vmatprep.subr.mxu0 0.0
  %4108 = vmatpush1.msra.mxu0 %v26
  %4109 = vmatprep.subr.mxu0 0.0
  %4110 = vmatpush1.msra.mxu0 %v27
  %4111 = vmatprep.subr.mxu0 0.0
  %4112 = vmatpush1.msra.mxu0 %v28
  %4113 = vmatprep.subr.mxu0 0.0
  %4114 = vmatpush1.msra.mxu0 %v29
  %4115 = vmatprep.subr.mxu0 0.0
  %4116 = vmatpush1.msra.mxu0 0.0
  %4117 = vmatprep.subr.mxu0 0.0
  %4118 = vmatpush1.msra.mxu0 0.0
  %4119 = vmatprep.subr.mxu0 0.0
  %4120 = vmatpush1.msra.mxu0 0.0
  %4121 = vmatprep.subr.mxu0 0.0
  %4122 = vmatpush1.msra.mxu0 0.0
  %4123 = vmatprep.subr.mxu0 0.0
  %4124 = vmatpush1.msra.mxu0 0.0
  %4125 = vmatprep.subr.mxu0 0.0
  %4126 = vmatpush1.msra.mxu0 0.0
  %4127 = vmatprep.subr.mxu0 0.0
  %4128 = vmatpush1.msra.mxu0 0.0
  %4129 = vmatprep.subr.mxu0 0.0
  %4130 = vmatpush1.msra.mxu0 0.0
  %4131 = vmatprep.subr.mxu0 0.0
  %4132 = vmatpush1.msra.mxu0 0.0
  %4133 = vmatprep.subr.mxu0 0.0
  %4134 = vmatpush1.msra.mxu0 0.0
  %4135 = vmatprep.subr.mxu0 0.0
  %4136 = vmatpush1.msra.mxu0 0.0
  %4137 = vmatprep.subr.mxu0 0.0
  %4138 = vmatpush1.msra.mxu0 0.0
  %4139 = vmatprep.subr.mxu0 0.0
  %4140 = vmatpush1.msra.mxu0 0.0
  %4141 = vmatprep.subr.mxu0 0.0
  %4142 = vmatpush1.msra.mxu0 0.0
  %4143 = vmatprep.subr.mxu0 0.0
  %4144 = vmatpush1.msra.mxu0 0.0
  %4145 = vmatprep.subr.mxu0 0.0
  %4146 = vmatpush1.msra.mxu0 0.0
  %4147 = vmatprep.subr.mxu0 0.0
  %4148 = vmatpush1.msra.mxu0 0.0
  %4149 = vmatprep.subr.mxu0 0.0
  %4150 = vmatpush1.msra.mxu0 0.0
  %4151 = vmatprep.subr.mxu0 0.0
  %4152 = vmatpush1.msra.mxu0 0.0
  %4153 = vmatprep.subr.mxu0 0.0
  %4154 = vmatpush1.msra.mxu0 0.0
  %4155 = vmatprep.subr.mxu0 0.0
  %4156 = vmatpush1.msra.mxu0 0.0
  %4157 = vmatprep.subr.mxu0 0.0
  %4158 = vmatpush1.msra.mxu0 0.0
  %4159 = vmatprep.subr.mxu0 0.0
  %4160 = vmatpush1.msra.mxu0 0.0
  %4161 = vmatprep.subr.mxu0 0.0
  %4162 = vmatpush1.msra.mxu0 0.0
  %4163 = vmatprep.subr.mxu0 0.0
  %4164 = vmatpush1.msra.mxu0 0.0
  %4165 = vmatprep.subr.mxu0 0.0
  %4166 = vmatpush1.msra.mxu0 0.0
  %4167 = vmatprep.subr.mxu0 0.0
  %4168 = vmatpush1.msra.mxu0 0.0
  %4169 = vmatprep.subr.mxu0 0.0
  %4170 = vmatpush1.msra.mxu0 0.0
  %4171 = vmatprep.mubr.f32.mxu0 0.0
  %4172 = vmatmul.mubr.f32.gmra.mrb[0].mxu0 %v4105
  %v4173 = vpop.f32.mrb[0].mxu0
  %v4174 = vadd.f32 0.0, %v4173
  %v4175 = vpop.f32.mrb[0].mxu0
  %4176 = vdwg.mxu0
  %v4177 = vadd.f32 %v4103, %v4174
  %v4178 = vmul.f32 %v4177, 0.5
  %v4179 = vsel %vm38, %v4177, %v4178
  %v4180 = vtanh.pop %v4179
  %v4181 = vmul.f32 %v4180, 0.5
  %v4182 = vadd.f32 %v4181, 0.5
  %v4183 = vsel %vm38, %v4180, %v4182
  %v4184 = vmul.f32 %v4183, %v3933
  %4186 = vrot.lane.b32.xlu0 %v4183, 96
  %v4187 = vpop.permute.xlu0 %4186
  %v4189 = vmul.f32 %v4183, %v4187
  %4191 = vrot.lane.b32.xlu0 %v4189, 64
  %v4192 = vpop.permute.xlu0 %4191
  %v4194 = vadd.f32 %v4184, %v4192
  %v4195 = vtanh.pop %v4194
  %4197 = vrot.lane.b32.xlu0 %v4195, 32
  %v4198 = vpop.permute.xlu0 %4197
  %v4200 = vmul.f32 %v4183, %v4198
  %4202 = vrot.lane.b32.xlu0 %v4200, 32
  %v4203 = vpop.permute.xlu0 %4202
  %s4205 = scalar_lea.vmem %s5, 120
  %4206 = vst.msk [vmem:[%s4205] sm:$0xff] %vm39, %v4203
  %4208 = vrot.lane.b32.xlu0 %v4194, 64
  %v4209 = vpop.permute.xlu0 %4208
  %s4211 = scalar_lea.vmem %s6, 120
  %4212 = vst.msk [vmem:[%s4211] sm:$0xff] %vm39, %v4209
  %v4213 = vsel %vm39, %v4203, 0
  %4215 = vmatprep.subr.mxu0 0.0
  %4216 = vmatpush1.msra.mxu0 %v30
  %4217 = vmatprep.subr.mxu0 0.0
  %4218 = vmatpush1.msra.mxu0 %v31
  %4219 = vmatprep.subr.mxu0 0.0
  %4220 = vmatpush1.msra.mxu0 %v32
  %4221 = vmatprep.subr.mxu0 0.0
  %4222 = vmatpush1.msra.mxu0 %v33
  %4223 = vmatprep.subr.mxu0 0.0
  %4224 = vmatpush1.msra.mxu0 0.0
  %4225 = vmatprep.subr.mxu0 0.0
  %4226 = vmatpush1.msra.mxu0 0.0
  %4227 = vmatprep.subr.mxu0 0.0
  %4228 = vmatpush1.msra.mxu0 0.0
  %4229 = vmatprep.subr.mxu0 0.0
  %4230 = vmatpush1.msra.mxu0 0.0
  %4231 = vmatprep.subr.mxu0 0.0
  %4232 = vmatpush1.msra.mxu0 0.0
  %4233 = vmatprep.subr.mxu0 0.0
  %4234 = vmatpush1.msra.mxu0 0.0
  %4235 = vmatprep.subr.mxu0 0.0
  %4236 = vmatpush1.msra.mxu0 0.0
  %4237 = vmatprep.subr.mxu0 0.0
  %4238 = vmatpush1.msra.mxu0 0.0
  %4239 = vmatprep.subr.mxu0 0.0
  %4240 = vmatpush1.msra.mxu0 0.0
  %4241 = vmatprep.subr.mxu0 0.0
  %4242 = vmatpush1.msra.mxu0 0.0
  %4243 = vmatprep.subr.mxu0 0.0
  %4244 = vmatpush1.msra.mxu0 0.0
  %4245 = vmatprep.subr.mxu0 0.0
  %4246 = vmatpush1.msra.mxu0 0.0
  %4247 = vmatprep.subr.mxu0 0.0
  %4248 = vmatpush1.msra.mxu0 0.0
  %4249 = vmatprep.subr.mxu0 0.0
  %4250 = vmatpush1.msra.mxu0 0.0
  %4251 = vmatprep.subr.mxu0 0.0
  %4252 = vmatpush1.msra.mxu0 0.0
  %4253 = vmatprep.subr.mxu0 0.0
  %4254 = vmatpush1.msra.mxu0 0.0
  %4255 = vmatprep.subr.mxu0 0.0
  %4256 = vmatpush1.msra.mxu0 0.0
  %4257 = vmatprep.subr.mxu0 0.0
  %4258 = vmatpush1.msra.mxu0 0.0
  %4259 = vmatprep.subr.mxu0 0.0
  %4260 = vmatpush1.msra.mxu0 0.0
  %4261 = vmatprep.subr.mxu0 0.0
  %4262 = vmatpush1.msra.mxu0 0.0
  %4263 = vmatprep.subr.mxu0 0.0
  %4264 = vmatpush1.msra.mxu0 0.0
  %4265 = vmatprep.subr.mxu0 0.0
  %4266 = vmatpush1.msra.mxu0 0.0
  %4267 = vmatprep.subr.mxu0 0.0
  %4268 = vmatpush1.msra.mxu0 0.0
  %4269 = vmatprep.subr.mxu0 0.0
  %4270 = vmatpush1.msra.mxu0 0.0
  %4271 = vmatprep.subr.mxu0 0.0
  %4272 = vmatpush1.msra.mxu0 0.0
  %4273 = vmatprep.subr.mxu0 0.0
  %4274 = vmatpush1.msra.mxu0 0.0
  %4275 = vmatprep.subr.mxu0 0.0
  %4276 = vmatpush1.msra.mxu0 0.0
  %4277 = vmatprep.subr.mxu0 0.0
  %4278 = vmatpush1.msra.mxu0 0.0
  %4279 = vmatprep.mubr.f32.mxu0 0.0
  %4280 = vmatmul.mubr.f32.gmra.mrb[0].mxu0 %v4213
  %v4281 = vpop.f32.mrb[0].mxu0
  %v4282 = vadd.f32 0.0, %v4281
  %v4283 = vpop.f32.mrb[0].mxu0
  %4284 = vdwg.mxu0
  %s4285 = scalar_lea.vmem %s0, 128
  %v4286 = vld [vmem:[%s4285] sm:$0xff]
  %4287 = vmatprep.subr.mxu0 0.0
  %4288 = vmatpush1.msra.mxu0 %v22
  %4289 = vmatprep.subr.mxu0 0.0
  %4290 = vmatpush1.msra.mxu0 %v23
  %4291 = vmatprep.subr.mxu0 0.0
  %4292 = vmatpush1.msra.mxu0 %v24
  %4293 = vmatprep.subr.mxu0 0.0
  %4294 = vmatpush1.msra.mxu0 %v25
  %4295 = vmatprep.subr.mxu0 0.0
  %4296 = vmatpush1.msra.mxu0 0.0
  %4297 = vmatprep.subr.mxu0 0.0
  %4298 = vmatpush1.msra.mxu0 0.0
  %4299 = vmatprep.subr.mxu0 0.0
  %4300 = vmatpush1.msra.mxu0 0.0
  %4301 = vmatprep.subr.mxu0 0.0
  %4302 = vmatpush1.msra.mxu0 0.0
  %4303 = vmatprep.subr.mxu0 0.0
  %4304 = vmatpush1.msra.mxu0 0.0
  %4305 = vmatprep.subr.mxu0 0.0
  %4306 = vmatpush1.msra.mxu0 0.0
  %4307 = vmatprep.subr.mxu0 0.0
  %4308 = vmatpush1.msra.mxu0 0.0
  %4309 = vmatprep.subr.mxu0 0.0
  %4310 = vmatpush1.msra.mxu0 0.0
  %4311 = vmatprep.subr.mxu0 0.0
  %4312 = vmatpush1.msra.mxu0 0.0
  %4313 = vmatprep.subr.mxu0 0.0
  %4314 = vmatpush1.msra.mxu0 0.0
  %4315 = vmatprep.subr.mxu0 0.0
  %4316 = vmatpush1.msra.mxu0 0.0
  %4317 = vmatprep.subr.mxu0 0.0
  %4318 = vmatpush1.msra.mxu0 0.0
  %4319 = vmatprep.subr.mxu0 0.0
  %4320 = vmatpush1.msra.mxu0 0.0
  %4321 = vmatprep.subr.mxu0 0.0
  %4322 = vmatpush1.msra.mxu0 0.0
  %4323 = vmatprep.subr.mxu0 0.0
  %4324 = vmatpush1.msra.mxu0 0.0
  %4325 = vmatprep.subr.mxu0 0.0
  %4326 = vmatpush1.msra.mxu0 0.0
  %4327 = vmatprep.subr.mxu0 0.0
  %4328 = vmatpush1.msra.mxu0 0.0
  %4329 = vmatprep.subr.mxu0 0.0
  %4330 = vmatpush1.msra.mxu0 0.0
  %4331 = vmatprep.subr.mxu0 0.0
  %4332 = vmatpush1.msra.mxu0 0.0
  %4333 = vmatprep.subr.mxu0 0.0
  %4334 = vmatpush1.msra.mxu0 0.0
  %4335 = vmatprep.subr.mxu0 0.0
  %4336 = vmatpush1.msra.mxu0 0.0
  %4337 = vmatprep.subr.mxu0 0.0
  %4338 = vmatpush1.msra.mxu0 0.0
  %4339 = vmatprep.subr.mxu0 0.0
  %4340 = vmatpush1.msra.mxu0 0.0
  %4341 = vmatprep.subr.mxu0 0.0
  %4342 = vmatpush1.msra.mxu0 0.0
  %4343 = vmatprep.subr.mxu0 0.0
  %4344 = vmatpush1.msra.mxu0 0.0
  %4345 = vmatprep.subr.mxu0 0.0
  %4346 = vmatpush1.msra.mxu0 0.0
  %4347 = vmatprep.subr.mxu0 0.0
  %4348 = vmatpush1.msra.mxu0 0.0
  %4349 = vmatprep.subr.mxu0 0.0
  %4350 = vmatpush1.msra.mxu0 0.0
  %4351 = vmatprep.mubr.f32.mxu0 0.0
  %4352 = vmatmul.mubr.f32.gmra.mrb[0].mxu0 %v4213
  %v4353 = vpop.f32.mrb[0].mxu0
  %v4354 = vadd.f32 0.0, %v4353
  %v4355 = vpop.f32.mrb[0].mxu0
  %4356 = vdwg.mxu0
  %v4357 = vadd.f32 %v4286, %v4354
  %v4358 = vmul.f32 %v4357, 0.5
  %v4359 = vtanh.pop %v4358
  %v4360 = vmul.f32 %v4359, 0.5
  %v4361 = vadd.f32 %v4360, 0.5
  %s4362 = scalar_lea.vmem %s1, 128
  %v4363 = vld [vmem:[%s4362] sm:$0xff]
  %v4364 = vadd.f32 %v4363, %v4282
  %v4366 = vsel %vm39, %v4361, 0
  %4368 = vmatprep.subr.mxu0 0.0
  %4369 = vmatpush1.msra.mxu0 %v26
  %4370 = vmatprep.subr.mxu0 0.0
  %4371 = vmatpush1.msra.mxu0 %v27
  %4372 = vmatprep.subr.mxu0 0.0
  %4373 = vmatpush1.msra.mxu0 %v28
  %4374 = vmatprep.subr.mxu0 0.0
  %4375 = vmatpush1.msra.mxu0 %v29
  %4376 = vmatprep.subr.mxu0 0.0
  %4377 = vmatpush1.msra.mxu0 0.0
  %4378 = vmatprep.subr.mxu0 0.0
  %4379 = vmatpush1.msra.mxu0 0.0
  %4380 = vmatprep.subr.mxu0 0.0
  %4381 = vmatpush1.msra.mxu0 0.0
  %4382 = vmatprep.subr.mxu0 0.0
  %4383 = vmatpush1.msra.mxu0 0.0
  %4384 = vmatprep.subr.mxu0 0.0
  %4385 = vmatpush1.msra.mxu0 0.0
  %4386 = vmatprep.subr.mxu0 0.0
  %4387 = vmatpush1.msra.mxu0 0.0
  %4388 = vmatprep.subr.mxu0 0.0
  %4389 = vmatpush1.msra.mxu0 0.0
  %4390 = vmatprep.subr.mxu0 0.0
  %4391 = vmatpush1.msra.mxu0 0.0
  %4392 = vmatprep.subr.mxu0 0.0
  %4393 = vmatpush1.msra.mxu0 0.0
  %4394 = vmatprep.subr.mxu0 0.0
  %4395 = vmatpush1.msra.mxu0 0.0
  %4396 = vmatprep.subr.mxu0 0.0
  %4397 = vmatpush1.msra.mxu0 0.0
  %4398 = vmatprep.subr.mxu0 0.0
  %4399 = vmatpush1.msra.mxu0 0.0
  %4400 = vmatprep.subr.mxu0 0.0
  %4401 = vmatpush1.msra.mxu0 0.0
  %4402 = vmatprep.subr.mxu0 0.0
  %4403 = vmatpush1.msra.mxu0 0.0
  %4404 = vmatprep.subr.mxu0 0.0
  %4405 = vmatpush1.msra.mxu0 0.0
  %4406 = vmatprep.subr.mxu0 0.0
  %4407 = vmatpush1.msra.mxu0 0.0
  %4408 = vmatprep.subr.mxu0 0.0
  %4409 = vmatpush1.msra.mxu0 0.0
  %4410 = vmatprep.subr.mxu0 0.0
  %4411 = vmatpush1.msra.mxu0 0.0
  %4412 = vmatprep.subr.mxu0 0.0
  %4413 = vmatpush1.msra.mxu0 0.0
  %4414 = vmatprep.subr.mxu0 0.0
  %4415 = vmatpush1.msra.mxu0 0.0
  %4416 = vmatprep.subr.mxu0 0.0
  %4417 = vmatpush1.msra.mxu0 0.0
  %4418 = vmatprep.subr.mxu0 0.0
  %4419 = vmatpush1.msra.mxu0 0.0
  %4420 = vmatprep.subr.mxu0 0.0
  %4421 = vmatpush1.msra.mxu0 0.0
  %4422 = vmatprep.subr.mxu0 0.0
  %4423 = vmatpush1.msra.mxu0 0.0
  %4424 = vmatprep.subr.mxu0 0.0
  %4425 = vmatpush1.msra.mxu0 0.0
  %4426 = vmatprep.subr.mxu0 0.0
  %4427 = vmatpush1.msra.mxu0 0.0
  %4428 = vmatprep.subr.mxu0 0.0
  %4429 = vmatpush1.msra.mxu0 0.0
  %4430 = vmatprep.subr.mxu0 0.0
  %4431 = vmatpush1.msra.mxu0 0.0
  %4432 = vmatprep.mubr.f32.mxu0 0.0
  %4433 = vmatmul.mubr.f32.gmra.mrb[0].mxu0 %v4366
  %v4434 = vpop.f32.mrb[0].mxu0
  %v4435 = vadd.f32 0.0, %v4434
  %v4436 = vpop.f32.mrb[0].mxu0
  %4437 = vdwg.mxu0
  %v4438 = vadd.f32 %v4364, %v4435
  %v4439 = vmul.f32 %v4438, 0.5
  %v4440 = vsel %vm38, %v4438, %v4439
  %v4441 = vtanh.pop %v4440
  %v4442 = vmul.f32 %v4441, 0.5
  %v4443 = vadd.f32 %v4442, 0.5
  %v4444 = vsel %vm38, %v4441, %v4443
  %v4445 = vmul.f32 %v4444, %v4194
  %4447 = vrot.lane.b32.xlu0 %v4444, 96
  %v4448 = vpop.permute.xlu0 %4447
  %v4450 = vmul.f32 %v4444, %v4448
  %4452 = vrot.lane.b32.xlu0 %v4450, 64
  %v4453 = vpop.permute.xlu0 %4452
  %v4455 = vadd.f32 %v4445, %v4453
  %v4456 = vtanh.pop %v4455
  %4458 = vrot.lane.b32.xlu0 %v4456, 32
  %v4459 = vpop.permute.xlu0 %4458
  %v4461 = vmul.f32 %v4444, %v4459
  %4463 = vrot.lane.b32.xlu0 %v4461, 32
  %v4464 = vpop.permute.xlu0 %4463
  %s4466 = scalar_lea.vmem %s5, 128
  %4467 = vst.msk [vmem:[%s4466] sm:$0xff] %vm39, %v4464
  %4469 = vrot.lane.b32.xlu0 %v4455, 64
  %v4470 = vpop.permute.xlu0 %4469
  %s4472 = scalar_lea.vmem %s6, 128
  %4473 = vst.msk [vmem:[%s4472] sm:$0xff] %vm39, %v4470
  %v4474 = vsel %vm39, %v4464, 0
  %4476 = vmatprep.subr.mxu0 0.0
  %4477 = vmatpush1.msra.mxu0 %v30
  %4478 = vmatprep.subr.mxu0 0.0
  %4479 = vmatpush1.msra.mxu0 %v31
  %4480 = vmatprep.subr.mxu0 0.0
  %4481 = vmatpush1.msra.mxu0 %v32
  %4482 = vmatprep.subr.mxu0 0.0
  %4483 = vmatpush1.msra.mxu0 %v33
  %4484 = vmatprep.subr.mxu0 0.0
  %4485 = vmatpush1.msra.mxu0 0.0
  %4486 = vmatprep.subr.mxu0 0.0
  %4487 = vmatpush1.msra.mxu0 0.0
  %4488 = vmatprep.subr.mxu0 0.0
  %4489 = vmatpush1.msra.mxu0 0.0
  %4490 = vmatprep.subr.mxu0 0.0
  %4491 = vmatpush1.msra.mxu0 0.0
  %4492 = vmatprep.subr.mxu0 0.0
  %4493 = vmatpush1.msra.mxu0 0.0
  %4494 = vmatprep.subr.mxu0 0.0
  %4495 = vmatpush1.msra.mxu0 0.0
  %4496 = vmatprep.subr.mxu0 0.0
  %4497 = vmatpush1.msra.mxu0 0.0
  %4498 = vmatprep.subr.mxu0 0.0
  %4499 = vmatpush1.msra.mxu0 0.0
  %4500 = vmatprep.subr.mxu0 0.0
  %4501 = vmatpush1.msra.mxu0 0.0
  %4502 = vmatprep.subr.mxu0 0.0
  %4503 = vmatpush1.msra.mxu0 0.0
  %4504 = vmatprep.subr.mxu0 0.0
  %4505 = vmatpush1.msra.mxu0 0.0
  %4506 = vmatprep.subr.mxu0 0.0
  %4507 = vmatpush1.msra.mxu0 0.0
  %4508 = vmatprep.subr.mxu0 0.0
  %4509 = vmatpush1.msra.mxu0 0.0
  %4510 = vmatprep.subr.mxu0 0.0
  %4511 = vmatpush1.msra.mxu0 0.0
  %4512 = vmatprep.subr.mxu0 0.0
  %4513 = vmatpush1.msra.mxu0 0.0
  %4514 = vmatprep.subr.mxu0 0.0
  %4515 = vmatpush1.msra.mxu0 0.0
  %4516 = vmatprep.subr.mxu0 0.0
  %4517 = vmatpush1.msra.mxu0 0.0
  %4518 = vmatprep.subr.mxu0 0.0
  %4519 = vmatpush1.msra.mxu0 0.0
  %4520 = vmatprep.subr.mxu0 0.0
  %4521 = vmatpush1.msra.mxu0 0.0
  %4522 = vmatprep.subr.mxu0 0.0
  %4523 = vmatpush1.msra.mxu0 0.0
  %4524 = vmatprep.subr.mxu0 0.0
  %4525 = vmatpush1.msra.mxu0 0.0
  %4526 = vmatprep.subr.mxu0 0.0
  %4527 = vmatpush1.msra.mxu0 0.0
  %4528 = vmatprep.subr.mxu0 0.0
  %4529 = vmatpush1.msra.mxu0 0.0
  %4530 = vmatprep.subr.mxu0 0.0
  %4531 = vmatpush1.msra.mxu0 0.0
  %4532 = vmatprep.subr.mxu0 0.0
  %4533 = vmatpush1.msra.mxu0 0.0
  %4534 = vmatprep.subr.mxu0 0.0
  %4535 = vmatpush1.msra.mxu0 0.0
  %4536 = vmatprep.subr.mxu0 0.0
  %4537 = vmatpush1.msra.mxu0 0.0
  %4538 = vmatprep.subr.mxu0 0.0
  %4539 = vmatpush1.msra.mxu0 0.0
  %4540 = vmatprep.mubr.f32.mxu0 0.0
  %4541 = vmatmul.mubr.f32.gmra.mrb[0].mxu0 %v4474
  %v4542 = vpop.f32.mrb[0].mxu0
  %v4543 = vadd.f32 0.0, %v4542
  %v4544 = vpop.f32.mrb[0].mxu0
  %4545 = vdwg.mxu0
  %s4546 = scalar_lea.vmem %s0, 136
  %v4547 = vld [vmem:[%s4546] sm:$0xff]
  %4548 = vmatprep.subr.mxu0 0.0
  %4549 = vmatpush1.msra.mxu0 %v22
  %4550 = vmatprep.subr.mxu0 0.0
  %4551 = vmatpush1.msra.mxu0 %v23
  %4552 = vmatprep.subr.mxu0 0.0
  %4553 = vmatpush1.msra.mxu0 %v24
  %4554 = vmatprep.subr.mxu0 0.0
  %4555 = vmatpush1.msra.mxu0 %v25
  %4556 = vmatprep.subr.mxu0 0.0
  %4557 = vmatpush1.msra.mxu0 0.0
  %4558 = vmatprep.subr.mxu0 0.0
  %4559 = vmatpush1.msra.mxu0 0.0
  %4560 = vmatprep.subr.mxu0 0.0
  %4561 = vmatpush1.msra.mxu0 0.0
  %4562 = vmatprep.subr.mxu0 0.0
  %4563 = vmatpush1.msra.mxu0 0.0
  %4564 = vmatprep.subr.mxu0 0.0
  %4565 = vmatpush1.msra.mxu0 0.0
  %4566 = vmatprep.subr.mxu0 0.0
  %4567 = vmatpush1.msra.mxu0 0.0
  %4568 = vmatprep.subr.mxu0 0.0
  %4569 = vmatpush1.msra.mxu0 0.0
  %4570 = vmatprep.subr.mxu0 0.0
  %4571 = vmatpush1.msra.mxu0 0.0
  %4572 = vmatprep.subr.mxu0 0.0
  %4573 = vmatpush1.msra.mxu0 0.0
  %4574 = vmatprep.subr.mxu0 0.0
  %4575 = vmatpush1.msra.mxu0 0.0
  %4576 = vmatprep.subr.mxu0 0.0
  %4577 = vmatpush1.msra.mxu0 0.0
  %4578 = vmatprep.subr.mxu0 0.0
  %4579 = vmatpush1.msra.mxu0 0.0
  %4580 = vmatprep.subr.mxu0 0.0
  %4581 = vmatpush1.msra.mxu0 0.0
  %4582 = vmatprep.subr.mxu0 0.0
  %4583 = vmatpush1.msra.mxu0 0.0
  %4584 = vmatprep.subr.mxu0 0.0
  %4585 = vmatpush1.msra.mxu0 0.0
  %4586 = vmatprep.subr.mxu0 0.0
  %4587 = vmatpush1.msra.mxu0 0.0
  %4588 = vmatprep.subr.mxu0 0.0
  %4589 = vmatpush1.msra.mxu0 0.0
  %4590 = vmatprep.subr.mxu0 0.0
  %4591 = vmatpush1.msra.mxu0 0.0
  %4592 = vmatprep.subr.mxu0 0.0
  %4593 = vmatpush1.msra.mxu0 0.0
  %4594 = vmatprep.subr.mxu0 0.0
  %4595 = vmatpush1.msra.mxu0 0.0
  %4596 = vmatprep.subr.mxu0 0.0
  %4597 = vmatpush1.msra.mxu0 0.0
  %4598 = vmatprep.subr.mxu0 0.0
  %4599 = vmatpush1.msra.mxu0 0.0
  %4600 = vmatprep.subr.mxu0 0.0
  %4601 = vmatpush1.msra.mxu0 0.0
  %4602 = vmatprep.subr.mxu0 0.0
  %4603 = vmatpush1.msra.mxu0 0.0
  %4604 = vmatprep.subr.mxu0 0.0
  %4605 = vmatpush1.msra.mxu0 0.0
  %4606 = vmatprep.subr.mxu0 0.0
  %4607 = vmatpush1.msra.mxu0 0.0
  %4608 = vmatprep.subr.mxu0 0.0
  %4609 = vmatpush1.msra.mxu0 0.0
  %4610 = vmatprep.subr.mxu0 0.0
  %4611 = vmatpush1.msra.mxu0 0.0
  %4612 = vmatprep.mubr.f32.mxu0 0.0
  %4613 = vmatmul.mubr.f32.gmra.mrb[0].mxu0 %v4474
  %v4614 = vpop.f32.mrb[0].mxu0
  %v4615 = vadd.f32 0.0, %v4614
  %v4616 = vpop.f32.mrb[0].mxu0
  %4617 = vdwg.mxu0
  %v4618 = vadd.f32 %v4547, %v4615
  %v4619 = vmul.f32 %v4618, 0.5
  %v4620 = vtanh.pop %v4619
  %v4621 = vmul.f32 %v4620, 0.5
  %v4622 = vadd.f32 %v4621, 0.5
  %s4623 = scalar_lea.vmem %s1, 136
  %v4624 = vld [vmem:[%s4623] sm:$0xff]
  %v4625 = vadd.f32 %v4624, %v4543
  %v4627 = vsel %vm39, %v4622, 0
  %4629 = vmatprep.subr.mxu0 0.0
  %4630 = vmatpush1.msra.mxu0 %v26
  %4631 = vmatprep.subr.mxu0 0.0
  %4632 = vmatpush1.msra.mxu0 %v27
  %4633 = vmatprep.subr.mxu0 0.0
  %4634 = vmatpush1.msra.mxu0 %v28
  %4635 = vmatprep.subr.mxu0 0.0
  %4636 = vmatpush1.msra.mxu0 %v29
  %4637 = vmatprep.subr.mxu0 0.0
  %4638 = vmatpush1.msra.mxu0 0.0
  %4639 = vmatprep.subr.mxu0 0.0
  %4640 = vmatpush1.msra.mxu0 0.0
  %4641 = vmatprep.subr.mxu0 0.0
  %4642 = vmatpush1.msra.mxu0 0.0
  %4643 = vmatprep.subr.mxu0 0.0
  %4644 = vmatpush1.msra.mxu0 0.0
  %4645 = vmatprep.subr.mxu0 0.0
  %4646 = vmatpush1.msra.mxu0 0.0
  %4647 = vmatprep.subr.mxu0 0.0
  %4648 = vmatpush1.msra.mxu0 0.0
  %4649 = vmatprep.subr.mxu0 0.0
  %4650 = vmatpush1.msra.mxu0 0.0
  %4651 = vmatprep.subr.mxu0 0.0
  %4652 = vmatpush1.msra.mxu0 0.0
  %4653 = vmatprep.subr.mxu0 0.0
  %4654 = vmatpush1.msra.mxu0 0.0
  %4655 = vmatprep.subr.mxu0 0.0
  %4656 = vmatpush1.msra.mxu0 0.0
  %4657 = vmatprep.subr.mxu0 0.0
  %4658 = vmatpush1.msra.mxu0 0.0
  %4659 = vmatprep.subr.mxu0 0.0
  %4660 = vmatpush1.msra.mxu0 0.0
  %4661 = vmatprep.subr.mxu0 0.0
  %4662 = vmatpush1.msra.mxu0 0.0
  %4663 = vmatprep.subr.mxu0 0.0
  %4664 = vmatpush1.msra.mxu0 0.0
  %4665 = vmatprep.subr.mxu0 0.0
  %4666 = vmatpush1.msra.mxu0 0.0
  %4667 = vmatprep.subr.mxu0 0.0
  %4668 = vmatpush1.msra.mxu0 0.0
  %4669 = vmatprep.subr.mxu0 0.0
  %4670 = vmatpush1.msra.mxu0 0.0
  %4671 = vmatprep.subr.mxu0 0.0
  %4672 = vmatpush1.msra.mxu0 0.0
  %4673 = vmatprep.subr.mxu0 0.0
  %4674 = vmatpush1.msra.mxu0 0.0
  %4675 = vmatprep.subr.mxu0 0.0
  %4676 = vmatpush1.msra.mxu0 0.0
  %4677 = vmatprep.subr.mxu0 0.0
  %4678 = vmatpush1.msra.mxu0 0.0
  %4679 = vmatprep.subr.mxu0 0.0
  %4680 = vmatpush1.msra.mxu0 0.0
  %4681 = vmatprep.subr.mxu0 0.0
  %4682 = vmatpush1.msra.mxu0 0.0
  %4683 = vmatprep.subr.mxu0 0.0
  %4684 = vmatpush1.msra.mxu0 0.0
  %4685 = vmatprep.subr.mxu0 0.0
  %4686 = vmatpush1.msra.mxu0 0.0
  %4687 = vmatprep.subr.mxu0 0.0
  %4688 = vmatpush1.msra.mxu0 0.0
  %4689 = vmatprep.subr.mxu0 0.0
  %4690 = vmatpush1.msra.mxu0 0.0
  %4691 = vmatprep.subr.mxu0 0.0
  %4692 = vmatpush1.msra.mxu0 0.0
  %4693 = vmatprep.mubr.f32.mxu0 0.0
  %4694 = vmatmul.mubr.f32.gmra.mrb[0].mxu0 %v4627
  %v4695 = vpop.f32.mrb[0].mxu0
  %v4696 = vadd.f32 0.0, %v4695
  %v4697 = vpop.f32.mrb[0].mxu0
  %4698 = vdwg.mxu0
  %v4699 = vadd.f32 %v4625, %v4696
  %v4700 = vmul.f32 %v4699, 0.5
  %v4701 = vsel %vm38, %v4699, %v4700
  %v4702 = vtanh.pop %v4701
  %v4703 = vmul.f32 %v4702, 0.5
  %v4704 = vadd.f32 %v4703, 0.5
  %v4705 = vsel %vm38, %v4702, %v4704
  %v4706 = vmul.f32 %v4705, %v4455
  %4708 = vrot.lane.b32.xlu0 %v4705, 96
  %v4709 = vpop.permute.xlu0 %4708
  %v4711 = vmul.f32 %v4705, %v4709
  %4713 = vrot.lane.b32.xlu0 %v4711, 64
  %v4714 = vpop.permute.xlu0 %4713
  %v4716 = vadd.f32 %v4706, %v4714
  %v4717 = vtanh.pop %v4716
  %4719 = vrot.lane.b32.xlu0 %v4717, 32
  %v4720 = vpop.permute.xlu0 %4719
  %v4722 = vmul.f32 %v4705, %v4720
  %4724 = vrot.lane.b32.xlu0 %v4722, 32
  %v4725 = vpop.permute.xlu0 %4724
  %s4727 = scalar_lea.vmem %s5, 136
  %4728 = vst.msk [vmem:[%s4727] sm:$0xff] %vm39, %v4725
  %4730 = vrot.lane.b32.xlu0 %v4716, 64
  %v4731 = vpop.permute.xlu0 %4730
  %s4733 = scalar_lea.vmem %s6, 136
  %4734 = vst.msk [vmem:[%s4733] sm:$0xff] %vm39, %v4731
  %v4735 = vsel %vm39, %v4725, 0
  %4737 = vmatprep.subr.mxu0 0.0
  %4738 = vmatpush1.msra.mxu0 %v30
  %4739 = vmatprep.subr.mxu0 0.0
  %4740 = vmatpush1.msra.mxu0 %v31
  %4741 = vmatprep.subr.mxu0 0.0
  %4742 = vmatpush1.msra.mxu0 %v32
  %4743 = vmatprep.subr.mxu0 0.0
  %4744 = vmatpush1.msra.mxu0 %v33
  %4745 = vmatprep.subr.mxu0 0.0
  %4746 = vmatpush1.msra.mxu0 0.0
  %4747 = vmatprep.subr.mxu0 0.0
  %4748 = vmatpush1.msra.mxu0 0.0
  %4749 = vmatprep.subr.mxu0 0.0
  %4750 = vmatpush1.msra.mxu0 0.0
  %4751 = vmatprep.subr.mxu0 0.0
  %4752 = vmatpush1.msra.mxu0 0.0
  %4753 = vmatprep.subr.mxu0 0.0
  %4754 = vmatpush1.msra.mxu0 0.0
  %4755 = vmatprep.subr.mxu0 0.0
  %4756 = vmatpush1.msra.mxu0 0.0
  %4757 = vmatprep.subr.mxu0 0.0
  %4758 = vmatpush1.msra.mxu0 0.0
  %4759 = vmatprep.subr.mxu0 0.0
  %4760 = vmatpush1.msra.mxu0 0.0
  %4761 = vmatprep.subr.mxu0 0.0
  %4762 = vmatpush1.msra.mxu0 0.0
  %4763 = vmatprep.subr.mxu0 0.0
  %4764 = vmatpush1.msra.mxu0 0.0
  %4765 = vmatprep.subr.mxu0 0.0
  %4766 = vmatpush1.msra.mxu0 0.0
  %4767 = vmatprep.subr.mxu0 0.0
  %4768 = vmatpush1.msra.mxu0 0.0
  %4769 = vmatprep.subr.mxu0 0.0
  %4770 = vmatpush1.msra.mxu0 0.0
  %4771 = vmatprep.subr.mxu0 0.0
  %4772 = vmatpush1.msra.mxu0 0.0
  %4773 = vmatprep.subr.mxu0 0.0
  %4774 = vmatpush1.msra.mxu0 0.0
  %4775 = vmatprep.subr.mxu0 0.0
  %4776 = vmatpush1.msra.mxu0 0.0
  %4777 = vmatprep.subr.mxu0 0.0
  %4778 = vmatpush1.msra.mxu0 0.0
  %4779 = vmatprep.subr.mxu0 0.0
  %4780 = vmatpush1.msra.mxu0 0.0
  %4781 = vmatprep.subr.mxu0 0.0
  %4782 = vmatpush1.msra.mxu0 0.0
  %4783 = vmatprep.subr.mxu0 0.0
  %4784 = vmatpush1.msra.mxu0 0.0
  %4785 = vmatprep.subr.mxu0 0.0
  %4786 = vmatpush1.msra.mxu0 0.0
  %4787 = vmatprep.subr.mxu0 0.0
  %4788 = vmatpush1.msra.mxu0 0.0
  %4789 = vmatprep.subr.mxu0 0.0
  %4790 = vmatpush1.msra.mxu0 0.0
  %4791 = vmatprep.subr.mxu0 0.0
  %4792 = vmatpush1.msra.mxu0 0.0
  %4793 = vmatprep.subr.mxu0 0.0
  %4794 = vmatpush1.msra.mxu0 0.0
  %4795 = vmatprep.subr.mxu0 0.0
  %4796 = vmatpush1.msra.mxu0 0.0
  %4797 = vmatprep.subr.mxu0 0.0
  %4798 = vmatpush1.msra.mxu0 0.0
  %4799 = vmatprep.subr.mxu0 0.0
  %4800 = vmatpush1.msra.mxu0 0.0
  %4801 = vmatprep.mubr.f32.mxu0 0.0
  %4802 = vmatmul.mubr.f32.gmra.mrb[0].mxu0 %v4735
  %v4803 = vpop.f32.mrb[0].mxu0
  %v4804 = vadd.f32 0.0, %v4803
  %v4805 = vpop.f32.mrb[0].mxu0
  %4806 = vdwg.mxu0
  %s4807 = scalar_lea.vmem %s0, 144
  %v4808 = vld [vmem:[%s4807] sm:$0xff]
  %4809 = vmatprep.subr.mxu0 0.0
  %4810 = vmatpush1.msra.mxu0 %v22
  %4811 = vmatprep.subr.mxu0 0.0
  %4812 = vmatpush1.msra.mxu0 %v23
  %4813 = vmatprep.subr.mxu0 0.0
  %4814 = vmatpush1.msra.mxu0 %v24
  %4815 = vmatprep.subr.mxu0 0.0
  %4816 = vmatpush1.msra.mxu0 %v25
  %4817 = vmatprep.subr.mxu0 0.0
  %4818 = vmatpush1.msra.mxu0 0.0
  %4819 = vmatprep.subr.mxu0 0.0
  %4820 = vmatpush1.msra.mxu0 0.0
  %4821 = vmatprep.subr.mxu0 0.0
  %4822 = vmatpush1.msra.mxu0 0.0
  %4823 = vmatprep.subr.mxu0 0.0
  %4824 = vmatpush1.msra.mxu0 0.0
  %4825 = vmatprep.subr.mxu0 0.0
  %4826 = vmatpush1.msra.mxu0 0.0
  %4827 = vmatprep.subr.mxu0 0.0
  %4828 = vmatpush1.msra.mxu0 0.0
  %4829 = vmatprep.subr.mxu0 0.0
  %4830 = vmatpush1.msra.mxu0 0.0
  %4831 = vmatprep.subr.mxu0 0.0
  %4832 = vmatpush1.msra.mxu0 0.0
  %4833 = vmatprep.subr.mxu0 0.0
  %4834 = vmatpush1.msra.mxu0 0.0
  %4835 = vmatprep.subr.mxu0 0.0
  %4836 = vmatpush1.msra.mxu0 0.0
  %4837 = vmatprep.subr.mxu0 0.0
  %4838 = vmatpush1.msra.mxu0 0.0
  %4839 = vmatprep.subr.mxu0 0.0
  %4840 = vmatpush1.msra.mxu0 0.0
  %4841 = vmatprep.subr.mxu0 0.0
  %4842 = vmatpush1.msra.mxu0 0.0
  %4843 = vmatprep.subr.mxu0 0.0
  %4844 = vmatpush1.msra.mxu0 0.0
  %4845 = vmatprep.subr.mxu0 0.0
  %4846 = vmatpush1.msra.mxu0 0.0
  %4847 = vmatprep.subr.mxu0 0.0
  %4848 = vmatpush1.msra.mxu0 0.0
  %4849 = vmatprep.subr.mxu0 0.0
  %4850 = vmatpush1.msra.mxu0 0.0
  %4851 = vmatprep.subr.mxu0 0.0
  %4852 = vmatpush1.msra.mxu0 0.0
  %4853 = vmatprep.subr.mxu0 0.0
  %4854 = vmatpush1.msra.mxu0 0.0
  %4855 = vmatprep.subr.mxu0 0.0
  %4856 = vmatpush1.msra.mxu0 0.0
  %4857 = vmatprep.subr.mxu0 0.0
  %4858 = vmatpush1.msra.mxu0 0.0
  %4859 = vmatprep.subr.mxu0 0.0
  %4860 = vmatpush1.msra.mxu0 0.0
  %4861 = vmatprep.subr.mxu0 0.0
  %4862 = vmatpush1.msra.mxu0 0.0
  %4863 = vmatprep.subr.mxu0 0.0
  %4864 = vmatpush1.msra.mxu0 0.0
  %4865 = vmatprep.subr.mxu0 0.0
  %4866 = vmatpush1.msra.mxu0 0.0
  %4867 = vmatprep.subr.mxu0 0.0
  %4868 = vmatpush1.msra.mxu0 0.0
  %4869 = vmatprep.subr.mxu0 0.0
  %4870 = vmatpush1.msra.mxu0 0.0
  %4871 = vmatprep.subr.mxu0 0.0
  %4872 = vmatpush1.msra.mxu0 0.0
  %4873 = vmatprep.mubr.f32.mxu0 0.0
  %4874 = vmatmul.mubr.f32.gmra.mrb[0].mxu0 %v4735
  %v4875 = vpop.f32.mrb[0].mxu0
  %v4876 = vadd.f32 0.0, %v4875
  %v4877 = vpop.f32.mrb[0].mxu0
  %4878 = vdwg.mxu0
  %v4879 = vadd.f32 %v4808, %v4876
  %v4880 = vmul.f32 %v4879, 0.5
  %v4881 = vtanh.pop %v4880
  %v4882 = vmul.f32 %v4881, 0.5
  %v4883 = vadd.f32 %v4882, 0.5
  %s4884 = scalar_lea.vmem %s1, 144
  %v4885 = vld [vmem:[%s4884] sm:$0xff]
  %v4886 = vadd.f32 %v4885, %v4804
  %v4888 = vsel %vm39, %v4883, 0
  %4890 = vmatprep.subr.mxu0 0.0
  %4891 = vmatpush1.msra.mxu0 %v26
  %4892 = vmatprep.subr.mxu0 0.0
  %4893 = vmatpush1.msra.mxu0 %v27
  %4894 = vmatprep.subr.mxu0 0.0
  %4895 = vmatpush1.msra.mxu0 %v28
  %4896 = vmatprep.subr.mxu0 0.0
  %4897 = vmatpush1.msra.mxu0 %v29
  %4898 = vmatprep.subr.mxu0 0.0
  %4899 = vmatpush1.msra.mxu0 0.0
  %4900 = vmatprep.subr.mxu0 0.0
  %4901 = vmatpush1.msra.mxu0 0.0
  %4902 = vmatprep.subr.mxu0 0.0
  %4903 = vmatpush1.msra.mxu0 0.0
  %4904 = vmatprep.subr.mxu0 0.0
  %4905 = vmatpush1.msra.mxu0 0.0
  %4906 = vmatprep.subr.mxu0 0.0
  %4907 = vmatpush1.msra.mxu0 0.0
  %4908 = vmatprep.subr.mxu0 0.0
  %4909 = vmatpush1.msra.mxu0 0.0
  %4910 = vmatprep.subr.mxu0 0.0
  %4911 = vmatpush1.msra.mxu0 0.0
  %4912 = vmatprep.subr.mxu0 0.0
  %4913 = vmatpush1.msra.mxu0 0.0
  %4914 = vmatprep.subr.mxu0 0.0
  %4915 = vmatpush1.msra.mxu0 0.0
  %4916 = vmatprep.subr.mxu0 0.0
  %4917 = vmatpush1.msra.mxu0 0.0
  %4918 = vmatprep.subr.mxu0 0.0
  %4919 = vmatpush1.msra.mxu0 0.0
  %4920 = vmatprep.subr.mxu0 0.0
  %4921 = vmatpush1.msra.mxu0 0.0
  %4922 = vmatprep.subr.mxu0 0.0
  %4923 = vmatpush1.msra.mxu0 0.0
  %4924 = vmatprep.subr.mxu0 0.0
  %4925 = vmatpush1.msra.mxu0 0.0
  %4926 = vmatprep.subr.mxu0 0.0
  %4927 = vmatpush1.msra.mxu0 0.0
  %4928 = vmatprep.subr.mxu0 0.0
  %4929 = vmatpush1.msra.mxu0 0.0
  %4930 = vmatprep.subr.mxu0 0.0
  %4931 = vmatpush1.msra.mxu0 0.0
  %4932 = vmatprep.subr.mxu0 0.0
  %4933 = vmatpush1.msra.mxu0 0.0
  %4934 = vmatprep.subr.mxu0 0.0
  %4935 = vmatpush1.msra.mxu0 0.0
  %4936 = vmatprep.subr.mxu0 0.0
  %4937 = vmatpush1.msra.mxu0 0.0
  %4938 = vmatprep.subr.mxu0 0.0
  %4939 = vmatpush1.msra.mxu0 0.0
  %4940 = vmatprep.subr.mxu0 0.0
  %4941 = vmatpush1.msra.mxu0 0.0
  %4942 = vmatprep.subr.mxu0 0.0
  %4943 = vmatpush1.msra.mxu0 0.0
  %4944 = vmatprep.subr.mxu0 0.0
  %4945 = vmatpush1.msra.mxu0 0.0
  %4946 = vmatprep.subr.mxu0 0.0
  %4947 = vmatpush1.msra.mxu0 0.0
  %4948 = vmatprep.subr.mxu0 0.0
  %4949 = vmatpush1.msra.mxu0 0.0
  %4950 = vmatprep.subr.mxu0 0.0
  %4951 = vmatpush1.msra.mxu0 0.0
  %4952 = vmatprep.subr.mxu0 0.0
  %4953 = vmatpush1.msra.mxu0 0.0
  %4954 = vmatprep.mubr.f32.mxu0 0.0
  %4955 = vmatmul.mubr.f32.gmra.mrb[0].mxu0 %v4888
  %v4956 = vpop.f32.mrb[0].mxu0
  %v4957 = vadd.f32 0.0, %v4956
  %v4958 = vpop.f32.mrb[0].mxu0
  %4959 = vdwg.mxu0
  %v4960 = vadd.f32 %v4886, %v4957
  %v4961 = vmul.f32 %v4960, 0.5
  %v4962 = vsel %vm38, %v4960, %v4961
  %v4963 = vtanh.pop %v4962
  %v4964 = vmul.f32 %v4963, 0.5
  %v4965 = vadd.f32 %v4964, 0.5
  %v4966 = vsel %vm38, %v4963, %v4965
  %v4967 = vmul.f32 %v4966, %v4716
  %4969 = vrot.lane.b32.xlu0 %v4966, 96
  %v4970 = vpop.permute.xlu0 %4969
  %v4972 = vmul.f32 %v4966, %v4970
  %4974 = vrot.lane.b32.xlu0 %v4972, 64
  %v4975 = vpop.permute.xlu0 %4974
  %v4977 = vadd.f32 %v4967, %v4975
  %v4978 = vtanh.pop %v4977
  %4980 = vrot.lane.b32.xlu0 %v4978, 32
  %v4981 = vpop.permute.xlu0 %4980
  %v4983 = vmul.f32 %v4966, %v4981
  %4985 = vrot.lane.b32.xlu0 %v4983, 32
  %v4986 = vpop.permute.xlu0 %4985
  %s4988 = scalar_lea.vmem %s5, 144
  %4989 = vst.msk [vmem:[%s4988] sm:$0xff] %vm39, %v4986
  %4991 = vrot.lane.b32.xlu0 %v4977, 64
  %v4992 = vpop.permute.xlu0 %4991
  %s4994 = scalar_lea.vmem %s6, 144
  %4995 = vst.msk [vmem:[%s4994] sm:$0xff] %vm39, %v4992
  %v4996 = vsel %vm39, %v4986, 0
  %4998 = vmatprep.subr.mxu0 0.0
  %4999 = vmatpush1.msra.mxu0 %v30
  %5000 = vmatprep.subr.mxu0 0.0
  %5001 = vmatpush1.msra.mxu0 %v31
  %5002 = vmatprep.subr.mxu0 0.0
  %5003 = vmatpush1.msra.mxu0 %v32
  %5004 = vmatprep.subr.mxu0 0.0
  %5005 = vmatpush1.msra.mxu0 %v33
  %5006 = vmatprep.subr.mxu0 0.0
  %5007 = vmatpush1.msra.mxu0 0.0
  %5008 = vmatprep.subr.mxu0 0.0
  %5009 = vmatpush1.msra.mxu0 0.0
  %5010 = vmatprep.subr.mxu0 0.0
  %5011 = vmatpush1.msra.mxu0 0.0
  %5012 = vmatprep.subr.mxu0 0.0
  %5013 = vmatpush1.msra.mxu0 0.0
  %5014 = vmatprep.subr.mxu0 0.0
  %5015 = vmatpush1.msra.mxu0 0.0
  %5016 = vmatprep.subr.mxu0 0.0
  %5017 = vmatpush1.msra.mxu0 0.0
  %5018 = vmatprep.subr.mxu0 0.0
  %5019 = vmatpush1.msra.mxu0 0.0
  %5020 = vmatprep.subr.mxu0 0.0
  %5021 = vmatpush1.msra.mxu0 0.0
  %5022 = vmatprep.subr.mxu0 0.0
  %5023 = vmatpush1.msra.mxu0 0.0
  %5024 = vmatprep.subr.mxu0 0.0
  %5025 = vmatpush1.msra.mxu0 0.0
  %5026 = vmatprep.subr.mxu0 0.0
  %5027 = vmatpush1.msra.mxu0 0.0
  %5028 = vmatprep.subr.mxu0 0.0
  %5029 = vmatpush1.msra.mxu0 0.0
  %5030 = vmatprep.subr.mxu0 0.0
  %5031 = vmatpush1.msra.mxu0 0.0
  %5032 = vmatprep.subr.mxu0 0.0
  %5033 = vmatpush1.msra.mxu0 0.0
  %5034 = vmatprep.subr.mxu0 0.0
  %5035 = vmatpush1.msra.mxu0 0.0
  %5036 = vmatprep.subr.mxu0 0.0
  %5037 = vmatpush1.msra.mxu0 0.0
  %5038 = vmatprep.subr.mxu0 0.0
  %5039 = vmatpush1.msra.mxu0 0.0
  %5040 = vmatprep.subr.mxu0 0.0
  %5041 = vmatpush1.msra.mxu0 0.0
  %5042 = vmatprep.subr.mxu0 0.0
  %5043 = vmatpush1.msra.mxu0 0.0
  %5044 = vmatprep.subr.mxu0 0.0
  %5045 = vmatpush1.msra.mxu0 0.0
  %5046 = vmatprep.subr.mxu0 0.0
  %5047 = vmatpush1.msra.mxu0 0.0
  %5048 = vmatprep.subr.mxu0 0.0
  %5049 = vmatpush1.msra.mxu0 0.0
  %5050 = vmatprep.subr.mxu0 0.0
  %5051 = vmatpush1.msra.mxu0 0.0
  %5052 = vmatprep.subr.mxu0 0.0
  %5053 = vmatpush1.msra.mxu0 0.0
  %5054 = vmatprep.subr.mxu0 0.0
  %5055 = vmatpush1.msra.mxu0 0.0
  %5056 = vmatprep.subr.mxu0 0.0
  %5057 = vmatpush1.msra.mxu0 0.0
  %5058 = vmatprep.subr.mxu0 0.0
  %5059 = vmatpush1.msra.mxu0 0.0
  %5060 = vmatprep.subr.mxu0 0.0
  %5061 = vmatpush1.msra.mxu0 0.0
  %5062 = vmatprep.mubr.f32.mxu0 0.0
  %5063 = vmatmul.mubr.f32.gmra.mrb[0].mxu0 %v4996
  %v5064 = vpop.f32.mrb[0].mxu0
  %v5065 = vadd.f32 0.0, %v5064
  %v5066 = vpop.f32.mrb[0].mxu0
  %5067 = vdwg.mxu0
  %s5068 = scalar_lea.vmem %s0, 152
  %v5069 = vld [vmem:[%s5068] sm:$0xff]
  %5070 = vmatprep.subr.mxu0 0.0
  %5071 = vmatpush1.msra.mxu0 %v22
  %5072 = vmatprep.subr.mxu0 0.0
  %5073 = vmatpush1.msra.mxu0 %v23
  %5074 = vmatprep.subr.mxu0 0.0
  %5075 = vmatpush1.msra.mxu0 %v24
  %5076 = vmatprep.subr.mxu0 0.0
  %5077 = vmatpush1.msra.mxu0 %v25
  %5078 = vmatprep.subr.mxu0 0.0
  %5079 = vmatpush1.msra.mxu0 0.0
  %5080 = vmatprep.subr.mxu0 0.0
  %5081 = vmatpush1.msra.mxu0 0.0
  %5082 = vmatprep.subr.mxu0 0.0
  %5083 = vmatpush1.msra.mxu0 0.0
  %5084 = vmatprep.subr.mxu0 0.0
  %5085 = vmatpush1.msra.mxu0 0.0
  %5086 = vmatprep.subr.mxu0 0.0
  %5087 = vmatpush1.msra.mxu0 0.0
  %5088 = vmatprep.subr.mxu0 0.0
  %5089 = vmatpush1.msra.mxu0 0.0
  %5090 = vmatprep.subr.mxu0 0.0
  %5091 = vmatpush1.msra.mxu0 0.0
  %5092 = vmatprep.subr.mxu0 0.0
  %5093 = vmatpush1.msra.mxu0 0.0
  %5094 = vmatprep.subr.mxu0 0.0
  %5095 = vmatpush1.msra.mxu0 0.0
  %5096 = vmatprep.subr.mxu0 0.0
  %5097 = vmatpush1.msra.mxu0 0.0
  %5098 = vmatprep.subr.mxu0 0.0
  %5099 = vmatpush1.msra.mxu0 0.0
  %5100 = vmatprep.subr.mxu0 0.0
  %5101 = vmatpush1.msra.mxu0 0.0
  %5102 = vmatprep.subr.mxu0 0.0
  %5103 = vmatpush1.msra.mxu0 0.0
  %5104 = vmatprep.subr.mxu0 0.0
  %5105 = vmatpush1.msra.mxu0 0.0
  %5106 = vmatprep.subr.mxu0 0.0
  %5107 = vmatpush1.msra.mxu0 0.0
  %5108 = vmatprep.subr.mxu0 0.0
  %5109 = vmatpush1.msra.mxu0 0.0
  %5110 = vmatprep.subr.mxu0 0.0
  %5111 = vmatpush1.msra.mxu0 0.0
  %5112 = vmatprep.subr.mxu0 0.0
  %5113 = vmatpush1.msra.mxu0 0.0
  %5114 = vmatprep.subr.mxu0 0.0
  %5115 = vmatpush1.msra.mxu0 0.0
  %5116 = vmatprep.subr.mxu0 0.0
  %5117 = vmatpush1.msra.mxu0 0.0
  %5118 = vmatprep.subr.mxu0 0.0
  %5119 = vmatpush1.msra.mxu0 0.0
  %5120 = vmatprep.subr.mxu0 0.0
  %5121 = vmatpush1.msra.mxu0 0.0
  %5122 = vmatprep.subr.mxu0 0.0
  %5123 = vmatpush1.msra.mxu0 0.0
  %5124 = vmatprep.subr.mxu0 0.0
  %5125 = vmatpush1.msra.mxu0 0.0
  %5126 = vmatprep.subr.mxu0 0.0
  %5127 = vmatpush1.msra.mxu0 0.0
  %5128 = vmatprep.subr.mxu0 0.0
  %5129 = vmatpush1.msra.mxu0 0.0
  %5130 = vmatprep.subr.mxu0 0.0
  %5131 = vmatpush1.msra.mxu0 0.0
  %5132 = vmatprep.subr.mxu0 0.0
  %5133 = vmatpush1.msra.mxu0 0.0
  %5134 = vmatprep.mubr.f32.mxu0 0.0
  %5135 = vmatmul.mubr.f32.gmra.mrb[0].mxu0 %v4996
  %v5136 = vpop.f32.mrb[0].mxu0
  %v5137 = vadd.f32 0.0, %v5136
  %v5138 = vpop.f32.mrb[0].mxu0
  %5139 = vdwg.mxu0
  %v5140 = vadd.f32 %v5069, %v5137
  %v5141 = vmul.f32 %v5140, 0.5
  %v5142 = vtanh.pop %v5141
  %v5143 = vmul.f32 %v5142, 0.5
  %v5144 = vadd.f32 %v5143, 0.5
  %s5145 = scalar_lea.vmem %s1, 152
  %v5146 = vld [vmem:[%s5145] sm:$0xff]
  %v5147 = vadd.f32 %v5146, %v5065
  %v5149 = vsel %vm39, %v5144, 0
  %5151 = vmatprep.subr.mxu0 0.0
  %5152 = vmatpush1.msra.mxu0 %v26
  %5153 = vmatprep.subr.mxu0 0.0
  %5154 = vmatpush1.msra.mxu0 %v27
  %5155 = vmatprep.subr.mxu0 0.0
  %5156 = vmatpush1.msra.mxu0 %v28
  %5157 = vmatprep.subr.mxu0 0.0
  %5158 = vmatpush1.msra.mxu0 %v29
  %5159 = vmatprep.subr.mxu0 0.0
  %5160 = vmatpush1.msra.mxu0 0.0
  %5161 = vmatprep.subr.mxu0 0.0
  %5162 = vmatpush1.msra.mxu0 0.0
  %5163 = vmatprep.subr.mxu0 0.0
  %5164 = vmatpush1.msra.mxu0 0.0
  %5165 = vmatprep.subr.mxu0 0.0
  %5166 = vmatpush1.msra.mxu0 0.0
  %5167 = vmatprep.subr.mxu0 0.0
  %5168 = vmatpush1.msra.mxu0 0.0
  %5169 = vmatprep.subr.mxu0 0.0
  %5170 = vmatpush1.msra.mxu0 0.0
  %5171 = vmatprep.subr.mxu0 0.0
  %5172 = vmatpush1.msra.mxu0 0.0
  %5173 = vmatprep.subr.mxu0 0.0
  %5174 = vmatpush1.msra.mxu0 0.0
  %5175 = vmatprep.subr.mxu0 0.0
  %5176 = vmatpush1.msra.mxu0 0.0
  %5177 = vmatprep.subr.mxu0 0.0
  %5178 = vmatpush1.msra.mxu0 0.0
  %5179 = vmatprep.subr.mxu0 0.0
  %5180 = vmatpush1.msra.mxu0 0.0
  %5181 = vmatprep.subr.mxu0 0.0
  %5182 = vmatpush1.msra.mxu0 0.0
  %5183 = vmatprep.subr.mxu0 0.0
  %5184 = vmatpush1.msra.mxu0 0.0
  %5185 = vmatprep.subr.mxu0 0.0
  %5186 = vmatpush1.msra.mxu0 0.0
  %5187 = vmatprep.subr.mxu0 0.0
  %5188 = vmatpush1.msra.mxu0 0.0
  %5189 = vmatprep.subr.mxu0 0.0
  %5190 = vmatpush1.msra.mxu0 0.0
  %5191 = vmatprep.subr.mxu0 0.0
  %5192 = vmatpush1.msra.mxu0 0.0
  %5193 = vmatprep.subr.mxu0 0.0
  %5194 = vmatpush1.msra.mxu0 0.0
  %5195 = vmatprep.subr.mxu0 0.0
  %5196 = vmatpush1.msra.mxu0 0.0
  %5197 = vmatprep.subr.mxu0 0.0
  %5198 = vmatpush1.msra.mxu0 0.0
  %5199 = vmatprep.subr.mxu0 0.0
  %5200 = vmatpush1.msra.mxu0 0.0
  %5201 = vmatprep.subr.mxu0 0.0
  %5202 = vmatpush1.msra.mxu0 0.0
  %5203 = vmatprep.subr.mxu0 0.0
  %5204 = vmatpush1.msra.mxu0 0.0
  %5205 = vmatprep.subr.mxu0 0.0
  %5206 = vmatpush1.msra.mxu0 0.0
  %5207 = vmatprep.subr.mxu0 0.0
  %5208 = vmatpush1.msra.mxu0 0.0
  %5209 = vmatprep.subr.mxu0 0.0
  %5210 = vmatpush1.msra.mxu0 0.0
  %5211 = vmatprep.subr.mxu0 0.0
  %5212 = vmatpush1.msra.mxu0 0.0
  %5213 = vmatprep.subr.mxu0 0.0
  %5214 = vmatpush1.msra.mxu0 0.0
  %5215 = vmatprep.mubr.f32.mxu0 0.0
  %5216 = vmatmul.mubr.f32.gmra.mrb[0].mxu0 %v5149
  %v5217 = vpop.f32.mrb[0].mxu0
  %v5218 = vadd.f32 0.0, %v5217
  %v5219 = vpop.f32.mrb[0].mxu0
  %5220 = vdwg.mxu0
  %v5221 = vadd.f32 %v5147, %v5218
  %v5222 = vmul.f32 %v5221, 0.5
  %v5223 = vsel %vm38, %v5221, %v5222
  %v5224 = vtanh.pop %v5223
  %v5225 = vmul.f32 %v5224, 0.5
  %v5226 = vadd.f32 %v5225, 0.5
  %v5227 = vsel %vm38, %v5224, %v5226
  %v5228 = vmul.f32 %v5227, %v4977
  %5230 = vrot.lane.b32.xlu0 %v5227, 96
  %v5231 = vpop.permute.xlu0 %5230
  %v5233 = vmul.f32 %v5227, %v5231
  %5235 = vrot.lane.b32.xlu0 %v5233, 64
  %v5236 = vpop.permute.xlu0 %5235
  %v5238 = vadd.f32 %v5228, %v5236
  %v5239 = vtanh.pop %v5238
  %5241 = vrot.lane.b32.xlu0 %v5239, 32
  %v5242 = vpop.permute.xlu0 %5241
  %v5244 = vmul.f32 %v5227, %v5242
  %5246 = vrot.lane.b32.xlu0 %v5244, 32
  %v5247 = vpop.permute.xlu0 %5246
  %s5249 = scalar_lea.vmem %s5, 152
  %5250 = vst.msk [vmem:[%s5249] sm:$0xff] %vm39, %v5247
  %5252 = vrot.lane.b32.xlu0 %v5238, 64
  %v5253 = vpop.permute.xlu0 %5252
  %s5255 = scalar_lea.vmem %s6, 152
  %5256 = vst.msk [vmem:[%s5255] sm:$0xff] %vm39, %v5253
  %v5257 = vsel %vm39, %v5247, 0
  %5259 = vmatprep.subr.mxu0 0.0
  %5260 = vmatpush1.msra.mxu0 %v30
  %5261 = vmatprep.subr.mxu0 0.0
  %5262 = vmatpush1.msra.mxu0 %v31
  %5263 = vmatprep.subr.mxu0 0.0
  %5264 = vmatpush1.msra.mxu0 %v32
  %5265 = vmatprep.subr.mxu0 0.0
  %5266 = vmatpush1.msra.mxu0 %v33
  %5267 = vmatprep.subr.mxu0 0.0
  %5268 = vmatpush1.msra.mxu0 0.0
  %5269 = vmatprep.subr.mxu0 0.0
  %5270 = vmatpush1.msra.mxu0 0.0
  %5271 = vmatprep.subr.mxu0 0.0
  %5272 = vmatpush1.msra.mxu0 0.0
  %5273 = vmatprep.subr.mxu0 0.0
  %5274 = vmatpush1.msra.mxu0 0.0
  %5275 = vmatprep.subr.mxu0 0.0
  %5276 = vmatpush1.msra.mxu0 0.0
  %5277 = vmatprep.subr.mxu0 0.0
  %5278 = vmatpush1.msra.mxu0 0.0
  %5279 = vmatprep.subr.mxu0 0.0
  %5280 = vmatpush1.msra.mxu0 0.0
  %5281 = vmatprep.subr.mxu0 0.0
  %5282 = vmatpush1.msra.mxu0 0.0
  %5283 = vmatprep.subr.mxu0 0.0
  %5284 = vmatpush1.msra.mxu0 0.0
  %5285 = vmatprep.subr.mxu0 0.0
  %5286 = vmatpush1.msra.mxu0 0.0
  %5287 = vmatprep.subr.mxu0 0.0
  %5288 = vmatpush1.msra.mxu0 0.0
  %5289 = vmatprep.subr.mxu0 0.0
  %5290 = vmatpush1.msra.mxu0 0.0
  %5291 = vmatprep.subr.mxu0 0.0
  %5292 = vmatpush1.msra.mxu0 0.0
  %5293 = vmatprep.subr.mxu0 0.0
  %5294 = vmatpush1.msra.mxu0 0.0
  %5295 = vmatprep.subr.mxu0 0.0
  %5296 = vmatpush1.msra.mxu0 0.0
  %5297 = vmatprep.subr.mxu0 0.0
  %5298 = vmatpush1.msra.mxu0 0.0
  %5299 = vmatprep.subr.mxu0 0.0
  %5300 = vmatpush1.msra.mxu0 0.0
  %5301 = vmatprep.subr.mxu0 0.0
  %5302 = vmatpush1.msra.mxu0 0.0
  %5303 = vmatprep.subr.mxu0 0.0
  %5304 = vmatpush1.msra.mxu0 0.0
  %5305 = vmatprep.subr.mxu0 0.0
  %5306 = vmatpush1.msra.mxu0 0.0
  %5307 = vmatprep.subr.mxu0 0.0
  %5308 = vmatpush1.msra.mxu0 0.0
  %5309 = vmatprep.subr.mxu0 0.0
  %5310 = vmatpush1.msra.mxu0 0.0
  %5311 = vmatprep.subr.mxu0 0.0
  %5312 = vmatpush1.msra.mxu0 0.0
  %5313 = vmatprep.subr.mxu0 0.0
  %5314 = vmatpush1.msra.mxu0 0.0
  %5315 = vmatprep.subr.mxu0 0.0
  %5316 = vmatpush1.msra.mxu0 0.0
  %5317 = vmatprep.subr.mxu0 0.0
  %5318 = vmatpush1.msra.mxu0 0.0
  %5319 = vmatprep.subr.mxu0 0.0
  %5320 = vmatpush1.msra.mxu0 0.0
  %5321 = vmatprep.subr.mxu0 0.0
  %5322 = vmatpush1.msra.mxu0 0.0
  %5323 = vmatprep.mubr.f32.mxu0 0.0
  %5324 = vmatmul.mubr.f32.gmra.mrb[0].mxu0 %v5257
  %v5325 = vpop.f32.mrb[0].mxu0
  %v5326 = vadd.f32 0.0, %v5325
  %v5327 = vpop.f32.mrb[0].mxu0
  %5328 = vdwg.mxu0
  %s5329 = scalar_lea.vmem %s0, 160
  %v5330 = vld [vmem:[%s5329] sm:$0xff]
  %5331 = vmatprep.subr.mxu0 0.0
  %5332 = vmatpush1.msra.mxu0 %v22
  %5333 = vmatprep.subr.mxu0 0.0
  %5334 = vmatpush1.msra.mxu0 %v23
  %5335 = vmatprep.subr.mxu0 0.0
  %5336 = vmatpush1.msra.mxu0 %v24
  %5337 = vmatprep.subr.mxu0 0.0
  %5338 = vmatpush1.msra.mxu0 %v25
  %5339 = vmatprep.subr.mxu0 0.0
  %5340 = vmatpush1.msra.mxu0 0.0
  %5341 = vmatprep.subr.mxu0 0.0
  %5342 = vmatpush1.msra.mxu0 0.0
  %5343 = vmatprep.subr.mxu0 0.0
  %5344 = vmatpush1.msra.mxu0 0.0
  %5345 = vmatprep.subr.mxu0 0.0
  %5346 = vmatpush1.msra.mxu0 0.0
  %5347 = vmatprep.subr.mxu0 0.0
  %5348 = vmatpush1.msra.mxu0 0.0
  %5349 = vmatprep.subr.mxu0 0.0
  %5350 = vmatpush1.msra.mxu0 0.0
  %5351 = vmatprep.subr.mxu0 0.0
  %5352 = vmatpush1.msra.mxu0 0.0
  %5353 = vmatprep.subr.mxu0 0.0
  %5354 = vmatpush1.msra.mxu0 0.0
  %5355 = vmatprep.subr.mxu0 0.0
  %5356 = vmatpush1.msra.mxu0 0.0
  %5357 = vmatprep.subr.mxu0 0.0
  %5358 = vmatpush1.msra.mxu0 0.0
  %5359 = vmatprep.subr.mxu0 0.0
  %5360 = vmatpush1.msra.mxu0 0.0
  %5361 = vmatprep.subr.mxu0 0.0
  %5362 = vmatpush1.msra.mxu0 0.0
  %5363 = vmatprep.subr.mxu0 0.0
  %5364 = vmatpush1.msra.mxu0 0.0
  %5365 = vmatprep.subr.mxu0 0.0
  %5366 = vmatpush1.msra.mxu0 0.0
  %5367 = vmatprep.subr.mxu0 0.0
  %5368 = vmatpush1.msra.mxu0 0.0
  %5369 = vmatprep.subr.mxu0 0.0
  %5370 = vmatpush1.msra.mxu0 0.0
  %5371 = vmatprep.subr.mxu0 0.0
  %5372 = vmatpush1.msra.mxu0 0.0
  %5373 = vmatprep.subr.mxu0 0.0
  %5374 = vmatpush1.msra.mxu0 0.0
  %5375 = vmatprep.subr.mxu0 0.0
  %5376 = vmatpush1.msra.mxu0 0.0
  %5377 = vmatprep.subr.mxu0 0.0
  %5378 = vmatpush1.msra.mxu0 0.0
  %5379 = vmatprep.subr.mxu0 0.0
  %5380 = vmatpush1.msra.mxu0 0.0
  %5381 = vmatprep.subr.mxu0 0.0
  %5382 = vmatpush1.msra.mxu0 0.0
  %5383 = vmatprep.subr.mxu0 0.0
  %5384 = vmatpush1.msra.mxu0 0.0
  %5385 = vmatprep.subr.mxu0 0.0
  %5386 = vmatpush1.msra.mxu0 0.0
  %5387 = vmatprep.subr.mxu0 0.0
  %5388 = vmatpush1.msra.mxu0 0.0
  %5389 = vmatprep.subr.mxu0 0.0
  %5390 = vmatpush1.msra.mxu0 0.0
  %5391 = vmatprep.subr.mxu0 0.0
  %5392 = vmatpush1.msra.mxu0 0.0
  %5393 = vmatprep.subr.mxu0 0.0
  %5394 = vmatpush1.msra.mxu0 0.0
  %5395 = vmatprep.mubr.f32.mxu0 0.0
  %5396 = vmatmul.mubr.f32.gmra.mrb[0].mxu0 %v5257
  %v5397 = vpop.f32.mrb[0].mxu0
  %v5398 = vadd.f32 0.0, %v5397
  %v5399 = vpop.f32.mrb[0].mxu0
  %5400 = vdwg.mxu0
  %v5401 = vadd.f32 %v5330, %v5398
  %v5402 = vmul.f32 %v5401, 0.5
  %v5403 = vtanh.pop %v5402
  %v5404 = vmul.f32 %v5403, 0.5
  %v5405 = vadd.f32 %v5404, 0.5
  %s5406 = scalar_lea.vmem %s1, 160
  %v5407 = vld [vmem:[%s5406] sm:$0xff]
  %v5408 = vadd.f32 %v5407, %v5326
  %v5410 = vsel %vm39, %v5405, 0
  %5412 = vmatprep.subr.mxu0 0.0
  %5413 = vmatpush1.msra.mxu0 %v26
  %5414 = vmatprep.subr.mxu0 0.0
  %5415 = vmatpush1.msra.mxu0 %v27
  %5416 = vmatprep.subr.mxu0 0.0
  %5417 = vmatpush1.msra.mxu0 %v28
  %5418 = vmatprep.subr.mxu0 0.0
  %5419 = vmatpush1.msra.mxu0 %v29
  %5420 = vmatprep.subr.mxu0 0.0
  %5421 = vmatpush1.msra.mxu0 0.0
  %5422 = vmatprep.subr.mxu0 0.0
  %5423 = vmatpush1.msra.mxu0 0.0
  %5424 = vmatprep.subr.mxu0 0.0
  %5425 = vmatpush1.msra.mxu0 0.0
  %5426 = vmatprep.subr.mxu0 0.0
  %5427 = vmatpush1.msra.mxu0 0.0
  %5428 = vmatprep.subr.mxu0 0.0
  %5429 = vmatpush1.msra.mxu0 0.0
  %5430 = vmatprep.subr.mxu0 0.0
  %5431 = vmatpush1.msra.mxu0 0.0
  %5432 = vmatprep.subr.mxu0 0.0
  %5433 = vmatpush1.msra.mxu0 0.0
  %5434 = vmatprep.subr.mxu0 0.0
  %5435 = vmatpush1.msra.mxu0 0.0
  %5436 = vmatprep.subr.mxu0 0.0
  %5437 = vmatpush1.msra.mxu0 0.0
  %5438 = vmatprep.subr.mxu0 0.0
  %5439 = vmatpush1.msra.mxu0 0.0
  %5440 = vmatprep.subr.mxu0 0.0
  %5441 = vmatpush1.msra.mxu0 0.0
  %5442 = vmatprep.subr.mxu0 0.0
  %5443 = vmatpush1.msra.mxu0 0.0
  %5444 = vmatprep.subr.mxu0 0.0
  %5445 = vmatpush1.msra.mxu0 0.0
  %5446 = vmatprep.subr.mxu0 0.0
  %5447 = vmatpush1.msra.mxu0 0.0
  %5448 = vmatprep.subr.mxu0 0.0
  %5449 = vmatpush1.msra.mxu0 0.0
  %5450 = vmatprep.subr.mxu0 0.0
  %5451 = vmatpush1.msra.mxu0 0.0
  %5452 = vmatprep.subr.mxu0 0.0
  %5453 = vmatpush1.msra.mxu0 0.0
  %5454 = vmatprep.subr.mxu0 0.0
  %5455 = vmatpush1.msra.mxu0 0.0
  %5456 = vmatprep.subr.mxu0 0.0
  %5457 = vmatpush1.msra.mxu0 0.0
  %5458 = vmatprep.subr.mxu0 0.0
  %5459 = vmatpush1.msra.mxu0 0.0
  %5460 = vmatprep.subr.mxu0 0.0
  %5461 = vmatpush1.msra.mxu0 0.0
  %5462 = vmatprep.subr.mxu0 0.0
  %5463 = vmatpush1.msra.mxu0 0.0
  %5464 = vmatprep.subr.mxu0 0.0
  %5465 = vmatpush1.msra.mxu0 0.0
  %5466 = vmatprep.subr.mxu0 0.0
  %5467 = vmatpush1.msra.mxu0 0.0
  %5468 = vmatprep.subr.mxu0 0.0
  %5469 = vmatpush1.msra.mxu0 0.0
  %5470 = vmatprep.subr.mxu0 0.0
  %5471 = vmatpush1.msra.mxu0 0.0
  %5472 = vmatprep.subr.mxu0 0.0
  %5473 = vmatpush1.msra.mxu0 0.0
  %5474 = vmatprep.subr.mxu0 0.0
  %5475 = vmatpush1.msra.mxu0 0.0
  %5476 = vmatprep.mubr.f32.mxu0 0.0
  %5477 = vmatmul.mubr.f32.gmra.mrb[0].mxu0 %v5410
  %v5478 = vpop.f32.mrb[0].mxu0
  %v5479 = vadd.f32 0.0, %v5478
  %v5480 = vpop.f32.mrb[0].mxu0
  %5481 = vdwg.mxu0
  %v5482 = vadd.f32 %v5408, %v5479
  %v5483 = vmul.f32 %v5482, 0.5
  %v5484 = vsel %vm38, %v5482, %v5483
  %v5485 = vtanh.pop %v5484
  %v5486 = vmul.f32 %v5485, 0.5
  %v5487 = vadd.f32 %v5486, 0.5
  %v5488 = vsel %vm38, %v5485, %v5487
  %v5489 = vmul.f32 %v5488, %v5238
  %5491 = vrot.lane.b32.xlu0 %v5488, 96
  %v5492 = vpop.permute.xlu0 %5491
  %v5494 = vmul.f32 %v5488, %v5492
  %5496 = vrot.lane.b32.xlu0 %v5494, 64
  %v5497 = vpop.permute.xlu0 %5496
  %v5499 = vadd.f32 %v5489, %v5497
  %v5500 = vtanh.pop %v5499
  %5502 = vrot.lane.b32.xlu0 %v5500, 32
  %v5503 = vpop.permute.xlu0 %5502
  %v5505 = vmul.f32 %v5488, %v5503
  %5507 = vrot.lane.b32.xlu0 %v5505, 32
  %v5508 = vpop.permute.xlu0 %5507
  %s5510 = scalar_lea.vmem %s5, 160
  %5511 = vst.msk [vmem:[%s5510] sm:$0xff] %vm39, %v5508
  %5513 = vrot.lane.b32.xlu0 %v5499, 64
  %v5514 = vpop.permute.xlu0 %5513
  %s5516 = scalar_lea.vmem %s6, 160
  %5517 = vst.msk [vmem:[%s5516] sm:$0xff] %vm39, %v5514
  %v5518 = vsel %vm39, %v5508, 0
  %5520 = vmatprep.subr.mxu0 0.0
  %5521 = vmatpush1.msra.mxu0 %v30
  %5522 = vmatprep.subr.mxu0 0.0
  %5523 = vmatpush1.msra.mxu0 %v31
  %5524 = vmatprep.subr.mxu0 0.0
  %5525 = vmatpush1.msra.mxu0 %v32
  %5526 = vmatprep.subr.mxu0 0.0
  %5527 = vmatpush1.msra.mxu0 %v33
  %5528 = vmatprep.subr.mxu0 0.0
  %5529 = vmatpush1.msra.mxu0 0.0
  %5530 = vmatprep.subr.mxu0 0.0
  %5531 = vmatpush1.msra.mxu0 0.0
  %5532 = vmatprep.subr.mxu0 0.0
  %5533 = vmatpush1.msra.mxu0 0.0
  %5534 = vmatprep.subr.mxu0 0.0
  %5535 = vmatpush1.msra.mxu0 0.0
  %5536 = vmatprep.subr.mxu0 0.0
  %5537 = vmatpush1.msra.mxu0 0.0
  %5538 = vmatprep.subr.mxu0 0.0
  %5539 = vmatpush1.msra.mxu0 0.0
  %5540 = vmatprep.subr.mxu0 0.0
  %5541 = vmatpush1.msra.mxu0 0.0
  %5542 = vmatprep.subr.mxu0 0.0
  %5543 = vmatpush1.msra.mxu0 0.0
  %5544 = vmatprep.subr.mxu0 0.0
  %5545 = vmatpush1.msra.mxu0 0.0
  %5546 = vmatprep.subr.mxu0 0.0
  %5547 = vmatpush1.msra.mxu0 0.0
  %5548 = vmatprep.subr.mxu0 0.0
  %5549 = vmatpush1.msra.mxu0 0.0
  %5550 = vmatprep.subr.mxu0 0.0
  %5551 = vmatpush1.msra.mxu0 0.0
  %5552 = vmatprep.subr.mxu0 0.0
  %5553 = vmatpush1.msra.mxu0 0.0
  %5554 = vmatprep.subr.mxu0 0.0
  %5555 = vmatpush1.msra.mxu0 0.0
  %5556 = vmatprep.subr.mxu0 0.0
  %5557 = vmatpush1.msra.mxu0 0.0
  %5558 = vmatprep.subr.mxu0 0.0
  %5559 = vmatpush1.msra.mxu0 0.0
  %5560 = vmatprep.subr.mxu0 0.0
  %5561 = vmatpush1.msra.mxu0 0.0
  %5562 = vmatprep.subr.mxu0 0.0
  %5563 = vmatpush1.msra.mxu0 0.0
  %5564 = vmatprep.subr.mxu0 0.0
  %5565 = vmatpush1.msra.mxu0 0.0
  %5566 = vmatprep.subr.mxu0 0.0
  %5567 = vmatpush1.msra.mxu0 0.0
  %5568 = vmatprep.subr.mxu0 0.0
  %5569 = vmatpush1.msra.mxu0 0.0
  %5570 = vmatprep.subr.mxu0 0.0
  %5571 = vmatpush1.msra.mxu0 0.0
  %5572 = vmatprep.subr.mxu0 0.0
  %5573 = vmatpush1.msra.mxu0 0.0
  %5574 = vmatprep.subr.mxu0 0.0
  %5575 = vmatpush1.msra.mxu0 0.0
  %5576 = vmatprep.subr.mxu0 0.0
  %5577 = vmatpush1.msra.mxu0 0.0
  %5578 = vmatprep.subr.mxu0 0.0
  %5579 = vmatpush1.msra.mxu0 0.0
  %5580 = vmatprep.subr.mxu0 0.0
  %5581 = vmatpush1.msra.mxu0 0.0
  %5582 = vmatprep.subr.mxu0 0.0
  %5583 = vmatpush1.msra.mxu0 0.0
  %5584 = vmatprep.mubr.f32.mxu0 0.0
  %5585 = vmatmul.mubr.f32.gmra.mrb[0].mxu0 %v5518
  %v5586 = vpop.f32.mrb[0].mxu0
  %v5587 = vadd.f32 0.0, %v5586
  %v5588 = vpop.f32.mrb[0].mxu0
  %5589 = vdwg.mxu0
  %s5590 = scalar_lea.vmem %s0, 168
  %v5591 = vld [vmem:[%s5590] sm:$0xff]
  %5592 = vmatprep.subr.mxu0 0.0
  %5593 = vmatpush1.msra.mxu0 %v22
  %5594 = vmatprep.subr.mxu0 0.0
  %5595 = vmatpush1.msra.mxu0 %v23
  %5596 = vmatprep.subr.mxu0 0.0
  %5597 = vmatpush1.msra.mxu0 %v24
  %5598 = vmatprep.subr.mxu0 0.0
  %5599 = vmatpush1.msra.mxu0 %v25
  %5600 = vmatprep.subr.mxu0 0.0
  %5601 = vmatpush1.msra.mxu0 0.0
  %5602 = vmatprep.subr.mxu0 0.0
  %5603 = vmatpush1.msra.mxu0 0.0
  %5604 = vmatprep.subr.mxu0 0.0
  %5605 = vmatpush1.msra.mxu0 0.0
  %5606 = vmatprep.subr.mxu0 0.0
  %5607 = vmatpush1.msra.mxu0 0.0
  %5608 = vmatprep.subr.mxu0 0.0
  %5609 = vmatpush1.msra.mxu0 0.0
  %5610 = vmatprep.subr.mxu0 0.0
  %5611 = vmatpush1.msra.mxu0 0.0
  %5612 = vmatprep.subr.mxu0 0.0
  %5613 = vmatpush1.msra.mxu0 0.0
  %5614 = vmatprep.subr.mxu0 0.0
  %5615 = vmatpush1.msra.mxu0 0.0
  %5616 = vmatprep.subr.mxu0 0.0
  %5617 = vmatpush1.msra.mxu0 0.0
  %5618 = vmatprep.subr.mxu0 0.0
  %5619 = vmatpush1.msra.mxu0 0.0
  %5620 = vmatprep.subr.mxu0 0.0
  %5621 = vmatpush1.msra.mxu0 0.0
  %5622 = vmatprep.subr.mxu0 0.0
  %5623 = vmatpush1.msra.mxu0 0.0
  %5624 = vmatprep.subr.mxu0 0.0
  %5625 = vmatpush1.msra.mxu0 0.0
  %5626 = vmatprep.subr.mxu0 0.0
  %5627 = vmatpush1.msra.mxu0 0.0
  %5628 = vmatprep.subr.mxu0 0.0
  %5629 = vmatpush1.msra.mxu0 0.0
  %5630 = vmatprep.subr.mxu0 0.0
  %5631 = vmatpush1.msra.mxu0 0.0
  %5632 = vmatprep.subr.mxu0 0.0
  %5633 = vmatpush1.msra.mxu0 0.0
  %5634 = vmatprep.subr.mxu0 0.0
  %5635 = vmatpush1.msra.mxu0 0.0
  %5636 = vmatprep.subr.mxu0 0.0
  %5637 = vmatpush1.msra.mxu0 0.0
  %5638 = vmatprep.subr.mxu0 0.0
  %5639 = vmatpush1.msra.mxu0 0.0
  %5640 = vmatprep.subr.mxu0 0.0
  %5641 = vmatpush1.msra.mxu0 0.0
  %5642 = vmatprep.subr.mxu0 0.0
  %5643 = vmatpush1.msra.mxu0 0.0
  %5644 = vmatprep.subr.mxu0 0.0
  %5645 = vmatpush1.msra.mxu0 0.0
  %5646 = vmatprep.subr.mxu0 0.0
  %5647 = vmatpush1.msra.mxu0 0.0
  %5648 = vmatprep.subr.mxu0 0.0
  %5649 = vmatpush1.msra.mxu0 0.0
  %5650 = vmatprep.subr.mxu0 0.0
  %5651 = vmatpush1.msra.mxu0 0.0
  %5652 = vmatprep.subr.mxu0 0.0
  %5653 = vmatpush1.msra.mxu0 0.0
  %5654 = vmatprep.subr.mxu0 0.0
  %5655 = vmatpush1.msra.mxu0 0.0
  %5656 = vmatprep.mubr.f32.mxu0 0.0
  %5657 = vmatmul.mubr.f32.gmra.mrb[0].mxu0 %v5518
  %v5658 = vpop.f32.mrb[0].mxu0
  %v5659 = vadd.f32 0.0, %v5658
  %v5660 = vpop.f32.mrb[0].mxu0
  %5661 = vdwg.mxu0
  %v5662 = vadd.f32 %v5591, %v5659
  %v5663 = vmul.f32 %v5662, 0.5
  %v5664 = vtanh.pop %v5663
  %v5665 = vmul.f32 %v5664, 0.5
  %v5666 = vadd.f32 %v5665, 0.5
  %s5667 = scalar_lea.vmem %s1, 168
  %v5668 = vld [vmem:[%s5667] sm:$0xff]
  %v5669 = vadd.f32 %v5668, %v5587
  %v5671 = vsel %vm39, %v5666, 0
  %5673 = vmatprep.subr.mxu0 0.0
  %5674 = vmatpush1.msra.mxu0 %v26
  %5675 = vmatprep.subr.mxu0 0.0
  %5676 = vmatpush1.msra.mxu0 %v27
  %5677 = vmatprep.subr.mxu0 0.0
  %5678 = vmatpush1.msra.mxu0 %v28
  %5679 = vmatprep.subr.mxu0 0.0
  %5680 = vmatpush1.msra.mxu0 %v29
  %5681 = vmatprep.subr.mxu0 0.0
  %5682 = vmatpush1.msra.mxu0 0.0
  %5683 = vmatprep.subr.mxu0 0.0
  %5684 = vmatpush1.msra.mxu0 0.0
  %5685 = vmatprep.subr.mxu0 0.0
  %5686 = vmatpush1.msra.mxu0 0.0
  %5687 = vmatprep.subr.mxu0 0.0
  %5688 = vmatpush1.msra.mxu0 0.0
  %5689 = vmatprep.subr.mxu0 0.0
  %5690 = vmatpush1.msra.mxu0 0.0
  %5691 = vmatprep.subr.mxu0 0.0
  %5692 = vmatpush1.msra.mxu0 0.0
  %5693 = vmatprep.subr.mxu0 0.0
  %5694 = vmatpush1.msra.mxu0 0.0
  %5695 = vmatprep.subr.mxu0 0.0
  %5696 = vmatpush1.msra.mxu0 0.0
  %5697 = vmatprep.subr.mxu0 0.0
  %5698 = vmatpush1.msra.mxu0 0.0
  %5699 = vmatprep.subr.mxu0 0.0
  %5700 = vmatpush1.msra.mxu0 0.0
  %5701 = vmatprep.subr.mxu0 0.0
  %5702 = vmatpush1.msra.mxu0 0.0
  %5703 = vmatprep.subr.mxu0 0.0
  %5704 = vmatpush1.msra.mxu0 0.0
  %5705 = vmatprep.subr.mxu0 0.0
  %5706 = vmatpush1.msra.mxu0 0.0
  %5707 = vmatprep.subr.mxu0 0.0
  %5708 = vmatpush1.msra.mxu0 0.0
  %5709 = vmatprep.subr.mxu0 0.0
  %5710 = vmatpush1.msra.mxu0 0.0
  %5711 = vmatprep.subr.mxu0 0.0
  %5712 = vmatpush1.msra.mxu0 0.0
  %5713 = vmatprep.subr.mxu0 0.0
  %5714 = vmatpush1.msra.mxu0 0.0
  %5715 = vmatprep.subr.mxu0 0.0
  %5716 = vmatpush1.msra.mxu0 0.0
  %5717 = vmatprep.subr.mxu0 0.0
  %5718 = vmatpush1.msra.mxu0 0.0
  %5719 = vmatprep.subr.mxu0 0.0
  %5720 = vmatpush1.msra.mxu0 0.0
  %5721 = vmatprep.subr.mxu0 0.0
  %5722 = vmatpush1.msra.mxu0 0.0
  %5723 = vmatprep.subr.mxu0 0.0
  %5724 = vmatpush1.msra.mxu0 0.0
  %5725 = vmatprep.subr.mxu0 0.0
  %5726 = vmatpush1.msra.mxu0 0.0
  %5727 = vmatprep.subr.mxu0 0.0
  %5728 = vmatpush1.msra.mxu0 0.0
  %5729 = vmatprep.subr.mxu0 0.0
  %5730 = vmatpush1.msra.mxu0 0.0
  %5731 = vmatprep.subr.mxu0 0.0
  %5732 = vmatpush1.msra.mxu0 0.0
  %5733 = vmatprep.subr.mxu0 0.0
  %5734 = vmatpush1.msra.mxu0 0.0
  %5735 = vmatprep.subr.mxu0 0.0
  %5736 = vmatpush1.msra.mxu0 0.0
  %5737 = vmatprep.mubr.f32.mxu0 0.0
  %5738 = vmatmul.mubr.f32.gmra.mrb[0].mxu0 %v5671
  %v5739 = vpop.f32.mrb[0].mxu0
  %v5740 = vadd.f32 0.0, %v5739
  %v5741 = vpop.f32.mrb[0].mxu0
  %5742 = vdwg.mxu0
  %v5743 = vadd.f32 %v5669, %v5740
  %v5744 = vmul.f32 %v5743, 0.5
  %v5745 = vsel %vm38, %v5743, %v5744
  %v5746 = vtanh.pop %v5745
  %v5747 = vmul.f32 %v5746, 0.5
  %v5748 = vadd.f32 %v5747, 0.5
  %v5749 = vsel %vm38, %v5746, %v5748
  %v5750 = vmul.f32 %v5749, %v5499
  %5752 = vrot.lane.b32.xlu0 %v5749, 96
  %v5753 = vpop.permute.xlu0 %5752
  %v5755 = vmul.f32 %v5749, %v5753
  %5757 = vrot.lane.b32.xlu0 %v5755, 64
  %v5758 = vpop.permute.xlu0 %5757
  %v5760 = vadd.f32 %v5750, %v5758
  %v5761 = vtanh.pop %v5760
  %5763 = vrot.lane.b32.xlu0 %v5761, 32
  %v5764 = vpop.permute.xlu0 %5763
  %v5766 = vmul.f32 %v5749, %v5764
  %5768 = vrot.lane.b32.xlu0 %v5766, 32
  %v5769 = vpop.permute.xlu0 %5768
  %s5771 = scalar_lea.vmem %s5, 168
  %5772 = vst.msk [vmem:[%s5771] sm:$0xff] %vm39, %v5769
  %5774 = vrot.lane.b32.xlu0 %v5760, 64
  %v5775 = vpop.permute.xlu0 %5774
  %s5777 = scalar_lea.vmem %s6, 168
  %5778 = vst.msk [vmem:[%s5777] sm:$0xff] %vm39, %v5775
  %v5779 = vsel %vm39, %v5769, 0
  %5781 = vmatprep.subr.mxu0 0.0
  %5782 = vmatpush1.msra.mxu0 %v30
  %5783 = vmatprep.subr.mxu0 0.0
  %5784 = vmatpush1.msra.mxu0 %v31
  %5785 = vmatprep.subr.mxu0 0.0
  %5786 = vmatpush1.msra.mxu0 %v32
  %5787 = vmatprep.subr.mxu0 0.0
  %5788 = vmatpush1.msra.mxu0 %v33
  %5789 = vmatprep.subr.mxu0 0.0
  %5790 = vmatpush1.msra.mxu0 0.0
  %5791 = vmatprep.subr.mxu0 0.0
  %5792 = vmatpush1.msra.mxu0 0.0
  %5793 = vmatprep.subr.mxu0 0.0
  %5794 = vmatpush1.msra.mxu0 0.0
  %5795 = vmatprep.subr.mxu0 0.0
  %5796 = vmatpush1.msra.mxu0 0.0
  %5797 = vmatprep.subr.mxu0 0.0
  %5798 = vmatpush1.msra.mxu0 0.0
  %5799 = vmatprep.subr.mxu0 0.0
  %5800 = vmatpush1.msra.mxu0 0.0
  %5801 = vmatprep.subr.mxu0 0.0
  %5802 = vmatpush1.msra.mxu0 0.0
  %5803 = vmatprep.subr.mxu0 0.0
  %5804 = vmatpush1.msra.mxu0 0.0
  %5805 = vmatprep.subr.mxu0 0.0
  %5806 = vmatpush1.msra.mxu0 0.0
  %5807 = vmatprep.subr.mxu0 0.0
  %5808 = vmatpush1.msra.mxu0 0.0
  %5809 = vmatprep.subr.mxu0 0.0
  %5810 = vmatpush1.msra.mxu0 0.0
  %5811 = vmatprep.subr.mxu0 0.0
  %5812 = vmatpush1.msra.mxu0 0.0
  %5813 = vmatprep.subr.mxu0 0.0
  %5814 = vmatpush1.msra.mxu0 0.0
  %5815 = vmatprep.subr.mxu0 0.0
  %5816 = vmatpush1.msra.mxu0 0.0
  %5817 = vmatprep.subr.mxu0 0.0
  %5818 = vmatpush1.msra.mxu0 0.0
  %5819 = vmatprep.subr.mxu0 0.0
  %5820 = vmatpush1.msra.mxu0 0.0
  %5821 = vmatprep.subr.mxu0 0.0
  %5822 = vmatpush1.msra.mxu0 0.0
  %5823 = vmatprep.subr.mxu0 0.0
  %5824 = vmatpush1.msra.mxu0 0.0
  %5825 = vmatprep.subr.mxu0 0.0
  %5826 = vmatpush1.msra.mxu0 0.0
  %5827 = vmatprep.subr.mxu0 0.0
  %5828 = vmatpush1.msra.mxu0 0.0
  %5829 = vmatprep.subr.mxu0 0.0
  %5830 = vmatpush1.msra.mxu0 0.0
  %5831 = vmatprep.subr.mxu0 0.0
  %5832 = vmatpush1.msra.mxu0 0.0
  %5833 = vmatprep.subr.mxu0 0.0
  %5834 = vmatpush1.msra.mxu0 0.0
  %5835 = vmatprep.subr.mxu0 0.0
  %5836 = vmatpush1.msra.mxu0 0.0
  %5837 = vmatprep.subr.mxu0 0.0
  %5838 = vmatpush1.msra.mxu0 0.0
  %5839 = vmatprep.subr.mxu0 0.0
  %5840 = vmatpush1.msra.mxu0 0.0
  %5841 = vmatprep.subr.mxu0 0.0
  %5842 = vmatpush1.msra.mxu0 0.0
  %5843 = vmatprep.subr.mxu0 0.0
  %5844 = vmatpush1.msra.mxu0 0.0
  %5845 = vmatprep.mubr.f32.mxu0 0.0
  %5846 = vmatmul.mubr.f32.gmra.mrb[0].mxu0 %v5779
  %v5847 = vpop.f32.mrb[0].mxu0
  %v5848 = vadd.f32 0.0, %v5847
  %v5849 = vpop.f32.mrb[0].mxu0
  %5850 = vdwg.mxu0
  %s5851 = scalar_lea.vmem %s0, 176
  %v5852 = vld [vmem:[%s5851] sm:$0xff]
  %5853 = vmatprep.subr.mxu0 0.0
  %5854 = vmatpush1.msra.mxu0 %v22
  %5855 = vmatprep.subr.mxu0 0.0
  %5856 = vmatpush1.msra.mxu0 %v23
  %5857 = vmatprep.subr.mxu0 0.0
  %5858 = vmatpush1.msra.mxu0 %v24
  %5859 = vmatprep.subr.mxu0 0.0
  %5860 = vmatpush1.msra.mxu0 %v25
  %5861 = vmatprep.subr.mxu0 0.0
  %5862 = vmatpush1.msra.mxu0 0.0
  %5863 = vmatprep.subr.mxu0 0.0
  %5864 = vmatpush1.msra.mxu0 0.0
  %5865 = vmatprep.subr.mxu0 0.0
  %5866 = vmatpush1.msra.mxu0 0.0
  %5867 = vmatprep.subr.mxu0 0.0
  %5868 = vmatpush1.msra.mxu0 0.0
  %5869 = vmatprep.subr.mxu0 0.0
  %5870 = vmatpush1.msra.mxu0 0.0
  %5871 = vmatprep.subr.mxu0 0.0
  %5872 = vmatpush1.msra.mxu0 0.0
  %5873 = vmatprep.subr.mxu0 0.0
  %5874 = vmatpush1.msra.mxu0 0.0
  %5875 = vmatprep.subr.mxu0 0.0
  %5876 = vmatpush1.msra.mxu0 0.0
  %5877 = vmatprep.subr.mxu0 0.0
  %5878 = vmatpush1.msra.mxu0 0.0
  %5879 = vmatprep.subr.mxu0 0.0
  %5880 = vmatpush1.msra.mxu0 0.0
  %5881 = vmatprep.subr.mxu0 0.0
  %5882 = vmatpush1.msra.mxu0 0.0
  %5883 = vmatprep.subr.mxu0 0.0
  %5884 = vmatpush1.msra.mxu0 0.0
  %5885 = vmatprep.subr.mxu0 0.0
  %5886 = vmatpush1.msra.mxu0 0.0
  %5887 = vmatprep.subr.mxu0 0.0
  %5888 = vmatpush1.msra.mxu0 0.0
  %5889 = vmatprep.subr.mxu0 0.0
  %5890 = vmatpush1.msra.mxu0 0.0
  %5891 = vmatprep.subr.mxu0 0.0
  %5892 = vmatpush1.msra.mxu0 0.0
  %5893 = vmatprep.subr.mxu0 0.0
  %5894 = vmatpush1.msra.mxu0 0.0
  %5895 = vmatprep.subr.mxu0 0.0
  %5896 = vmatpush1.msra.mxu0 0.0
  %5897 = vmatprep.subr.mxu0 0.0
  %5898 = vmatpush1.msra.mxu0 0.0
  %5899 = vmatprep.subr.mxu0 0.0
  %5900 = vmatpush1.msra.mxu0 0.0
  %5901 = vmatprep.subr.mxu0 0.0
  %5902 = vmatpush1.msra.mxu0 0.0
  %5903 = vmatprep.subr.mxu0 0.0
  %5904 = vmatpush1.msra.mxu0 0.0
  %5905 = vmatprep.subr.mxu0 0.0
  %5906 = vmatpush1.msra.mxu0 0.0
  %5907 = vmatprep.subr.mxu0 0.0
  %5908 = vmatpush1.msra.mxu0 0.0
  %5909 = vmatprep.subr.mxu0 0.0
  %5910 = vmatpush1.msra.mxu0 0.0
  %5911 = vmatprep.subr.mxu0 0.0
  %5912 = vmatpush1.msra.mxu0 0.0
  %5913 = vmatprep.subr.mxu0 0.0
  %5914 = vmatpush1.msra.mxu0 0.0
  %5915 = vmatprep.subr.mxu0 0.0
  %5916 = vmatpush1.msra.mxu0 0.0
  %5917 = vmatprep.mubr.f32.mxu0 0.0
  %5918 = vmatmul.mubr.f32.gmra.mrb[0].mxu0 %v5779
  %v5919 = vpop.f32.mrb[0].mxu0
  %v5920 = vadd.f32 0.0, %v5919
  %v5921 = vpop.f32.mrb[0].mxu0
  %5922 = vdwg.mxu0
  %v5923 = vadd.f32 %v5852, %v5920
  %v5924 = vmul.f32 %v5923, 0.5
  %v5925 = vtanh.pop %v5924
  %v5926 = vmul.f32 %v5925, 0.5
  %v5927 = vadd.f32 %v5926, 0.5
  %s5928 = scalar_lea.vmem %s1, 176
  %v5929 = vld [vmem:[%s5928] sm:$0xff]
  %v5930 = vadd.f32 %v5929, %v5848
  %v5932 = vsel %vm39, %v5927, 0
  %5934 = vmatprep.subr.mxu0 0.0
  %5935 = vmatpush1.msra.mxu0 %v26
  %5936 = vmatprep.subr.mxu0 0.0
  %5937 = vmatpush1.msra.mxu0 %v27
  %5938 = vmatprep.subr.mxu0 0.0
  %5939 = vmatpush1.msra.mxu0 %v28
  %5940 = vmatprep.subr.mxu0 0.0
  %5941 = vmatpush1.msra.mxu0 %v29
  %5942 = vmatprep.subr.mxu0 0.0
  %5943 = vmatpush1.msra.mxu0 0.0
  %5944 = vmatprep.subr.mxu0 0.0
  %5945 = vmatpush1.msra.mxu0 0.0
  %5946 = vmatprep.subr.mxu0 0.0
  %5947 = vmatpush1.msra.mxu0 0.0
  %5948 = vmatprep.subr.mxu0 0.0
  %5949 = vmatpush1.msra.mxu0 0.0
  %5950 = vmatprep.subr.mxu0 0.0
  %5951 = vmatpush1.msra.mxu0 0.0
  %5952 = vmatprep.subr.mxu0 0.0
  %5953 = vmatpush1.msra.mxu0 0.0
  %5954 = vmatprep.subr.mxu0 0.0
  %5955 = vmatpush1.msra.mxu0 0.0
  %5956 = vmatprep.subr.mxu0 0.0
  %5957 = vmatpush1.msra.mxu0 0.0
  %5958 = vmatprep.subr.mxu0 0.0
  %5959 = vmatpush1.msra.mxu0 0.0
  %5960 = vmatprep.subr.mxu0 0.0
  %5961 = vmatpush1.msra.mxu0 0.0
  %5962 = vmatprep.subr.mxu0 0.0
  %5963 = vmatpush1.msra.mxu0 0.0
  %5964 = vmatprep.subr.mxu0 0.0
  %5965 = vmatpush1.msra.mxu0 0.0
  %5966 = vmatprep.subr.mxu0 0.0
  %5967 = vmatpush1.msra.mxu0 0.0
  %5968 = vmatprep.subr.mxu0 0.0
  %5969 = vmatpush1.msra.mxu0 0.0
  %5970 = vmatprep.subr.mxu0 0.0
  %5971 = vmatpush1.msra.mxu0 0.0
  %5972 = vmatprep.subr.mxu0 0.0
  %5973 = vmatpush1.msra.mxu0 0.0
  %5974 = vmatprep.subr.mxu0 0.0
  %5975 = vmatpush1.msra.mxu0 0.0
  %5976 = vmatprep.subr.mxu0 0.0
  %5977 = vmatpush1.msra.mxu0 0.0
  %5978 = vmatprep.subr.mxu0 0.0
  %5979 = vmatpush1.msra.mxu0 0.0
  %5980 = vmatprep.subr.mxu0 0.0
  %5981 = vmatpush1.msra.mxu0 0.0
  %5982 = vmatprep.subr.mxu0 0.0
  %5983 = vmatpush1.msra.mxu0 0.0
  %5984 = vmatprep.subr.mxu0 0.0
  %5985 = vmatpush1.msra.mxu0 0.0
  %5986 = vmatprep.subr.mxu0 0.0
  %5987 = vmatpush1.msra.mxu0 0.0
  %5988 = vmatprep.subr.mxu0 0.0
  %5989 = vmatpush1.msra.mxu0 0.0
  %5990 = vmatprep.subr.mxu0 0.0
  %5991 = vmatpush1.msra.mxu0 0.0
  %5992 = vmatprep.subr.mxu0 0.0
  %5993 = vmatpush1.msra.mxu0 0.0
  %5994 = vmatprep.subr.mxu0 0.0
  %5995 = vmatpush1.msra.mxu0 0.0
  %5996 = vmatprep.subr.mxu0 0.0
  %5997 = vmatpush1.msra.mxu0 0.0
  %5998 = vmatprep.mubr.f32.mxu0 0.0
  %5999 = vmatmul.mubr.f32.gmra.mrb[0].mxu0 %v5932
  %v6000 = vpop.f32.mrb[0].mxu0
  %v6001 = vadd.f32 0.0, %v6000
  %v6002 = vpop.f32.mrb[0].mxu0
  %6003 = vdwg.mxu0
  %v6004 = vadd.f32 %v5930, %v6001
  %v6005 = vmul.f32 %v6004, 0.5
  %v6006 = vsel %vm38, %v6004, %v6005
  %v6007 = vtanh.pop %v6006
  %v6008 = vmul.f32 %v6007, 0.5
  %v6009 = vadd.f32 %v6008, 0.5
  %v6010 = vsel %vm38, %v6007, %v6009
  %v6011 = vmul.f32 %v6010, %v5760
  %6013 = vrot.lane.b32.xlu0 %v6010, 96
  %v6014 = vpop.permute.xlu0 %6013
  %v6016 = vmul.f32 %v6010, %v6014
  %6018 = vrot.lane.b32.xlu0 %v6016, 64
  %v6019 = vpop.permute.xlu0 %6018
  %v6021 = vadd.f32 %v6011, %v6019
  %v6022 = vtanh.pop %v6021
  %6024 = vrot.lane.b32.xlu0 %v6022, 32
  %v6025 = vpop.permute.xlu0 %6024
  %v6027 = vmul.f32 %v6010, %v6025
  %6029 = vrot.lane.b32.xlu0 %v6027, 32
  %v6030 = vpop.permute.xlu0 %6029
  %s6032 = scalar_lea.vmem %s5, 176
  %6033 = vst.msk [vmem:[%s6032] sm:$0xff] %vm39, %v6030
  %6035 = vrot.lane.b32.xlu0 %v6021, 64
  %v6036 = vpop.permute.xlu0 %6035
  %s6038 = scalar_lea.vmem %s6, 176
  %6039 = vst.msk [vmem:[%s6038] sm:$0xff] %vm39, %v6036
  %v6040 = vsel %vm39, %v6030, 0
  %6042 = vmatprep.subr.mxu0 0.0
  %6043 = vmatpush1.msra.mxu0 %v30
  %6044 = vmatprep.subr.mxu0 0.0
  %6045 = vmatpush1.msra.mxu0 %v31
  %6046 = vmatprep.subr.mxu0 0.0
  %6047 = vmatpush1.msra.mxu0 %v32
  %6048 = vmatprep.subr.mxu0 0.0
  %6049 = vmatpush1.msra.mxu0 %v33
  %6050 = vmatprep.subr.mxu0 0.0
  %6051 = vmatpush1.msra.mxu0 0.0
  %6052 = vmatprep.subr.mxu0 0.0
  %6053 = vmatpush1.msra.mxu0 0.0
  %6054 = vmatprep.subr.mxu0 0.0
  %6055 = vmatpush1.msra.mxu0 0.0
  %6056 = vmatprep.subr.mxu0 0.0
  %6057 = vmatpush1.msra.mxu0 0.0
  %6058 = vmatprep.subr.mxu0 0.0
  %6059 = vmatpush1.msra.mxu0 0.0
  %6060 = vmatprep.subr.mxu0 0.0
  %6061 = vmatpush1.msra.mxu0 0.0
  %6062 = vmatprep.subr.mxu0 0.0
  %6063 = vmatpush1.msra.mxu0 0.0
  %6064 = vmatprep.subr.mxu0 0.0
  %6065 = vmatpush1.msra.mxu0 0.0
  %6066 = vmatprep.subr.mxu0 0.0
  %6067 = vmatpush1.msra.mxu0 0.0
  %6068 = vmatprep.subr.mxu0 0.0
  %6069 = vmatpush1.msra.mxu0 0.0
  %6070 = vmatprep.subr.mxu0 0.0
  %6071 = vmatpush1.msra.mxu0 0.0
  %6072 = vmatprep.subr.mxu0 0.0
  %6073 = vmatpush1.msra.mxu0 0.0
  %6074 = vmatprep.subr.mxu0 0.0
  %6075 = vmatpush1.msra.mxu0 0.0
  %6076 = vmatprep.subr.mxu0 0.0
  %6077 = vmatpush1.msra.mxu0 0.0
  %6078 = vmatprep.subr.mxu0 0.0
  %6079 = vmatpush1.msra.mxu0 0.0
  %6080 = vmatprep.subr.mxu0 0.0
  %6081 = vmatpush1.msra.mxu0 0.0
  %6082 = vmatprep.subr.mxu0 0.0
  %6083 = vmatpush1.msra.mxu0 0.0
  %6084 = vmatprep.subr.mxu0 0.0
  %6085 = vmatpush1.msra.mxu0 0.0
  %6086 = vmatprep.subr.mxu0 0.0
  %6087 = vmatpush1.msra.mxu0 0.0
  %6088 = vmatprep.subr.mxu0 0.0
  %6089 = vmatpush1.msra.mxu0 0.0
  %6090 = vmatprep.subr.mxu0 0.0
  %6091 = vmatpush1.msra.mxu0 0.0
  %6092 = vmatprep.subr.mxu0 0.0
  %6093 = vmatpush1.msra.mxu0 0.0
  %6094 = vmatprep.subr.mxu0 0.0
  %6095 = vmatpush1.msra.mxu0 0.0
  %6096 = vmatprep.subr.mxu0 0.0
  %6097 = vmatpush1.msra.mxu0 0.0
  %6098 = vmatprep.subr.mxu0 0.0
  %6099 = vmatpush1.msra.mxu0 0.0
  %6100 = vmatprep.subr.mxu0 0.0
  %6101 = vmatpush1.msra.mxu0 0.0
  %6102 = vmatprep.subr.mxu0 0.0
  %6103 = vmatpush1.msra.mxu0 0.0
  %6104 = vmatprep.subr.mxu0 0.0
  %6105 = vmatpush1.msra.mxu0 0.0
  %6106 = vmatprep.mubr.f32.mxu0 0.0
  %6107 = vmatmul.mubr.f32.gmra.mrb[0].mxu0 %v6040
  %v6108 = vpop.f32.mrb[0].mxu0
  %v6109 = vadd.f32 0.0, %v6108
  %v6110 = vpop.f32.mrb[0].mxu0
  %6111 = vdwg.mxu0
  %s6112 = scalar_lea.vmem %s0, 184
  %v6113 = vld [vmem:[%s6112] sm:$0xff]
  %6114 = vmatprep.subr.mxu0 0.0
  %6115 = vmatpush1.msra.mxu0 %v22
  %6116 = vmatprep.subr.mxu0 0.0
  %6117 = vmatpush1.msra.mxu0 %v23
  %6118 = vmatprep.subr.mxu0 0.0
  %6119 = vmatpush1.msra.mxu0 %v24
  %6120 = vmatprep.subr.mxu0 0.0
  %6121 = vmatpush1.msra.mxu0 %v25
  %6122 = vmatprep.subr.mxu0 0.0
  %6123 = vmatpush1.msra.mxu0 0.0
  %6124 = vmatprep.subr.mxu0 0.0
  %6125 = vmatpush1.msra.mxu0 0.0
  %6126 = vmatprep.subr.mxu0 0.0
  %6127 = vmatpush1.msra.mxu0 0.0
  %6128 = vmatprep.subr.mxu0 0.0
  %6129 = vmatpush1.msra.mxu0 0.0
  %6130 = vmatprep.subr.mxu0 0.0
  %6131 = vmatpush1.msra.mxu0 0.0
  %6132 = vmatprep.subr.mxu0 0.0
  %6133 = vmatpush1.msra.mxu0 0.0
  %6134 = vmatprep.subr.mxu0 0.0
  %6135 = vmatpush1.msra.mxu0 0.0
  %6136 = vmatprep.subr.mxu0 0.0
  %6137 = vmatpush1.msra.mxu0 0.0
  %6138 = vmatprep.subr.mxu0 0.0
  %6139 = vmatpush1.msra.mxu0 0.0
  %6140 = vmatprep.subr.mxu0 0.0
  %6141 = vmatpush1.msra.mxu0 0.0
  %6142 = vmatprep.subr.mxu0 0.0
  %6143 = vmatpush1.msra.mxu0 0.0
  %6144 = vmatprep.subr.mxu0 0.0
  %6145 = vmatpush1.msra.mxu0 0.0
  %6146 = vmatprep.subr.mxu0 0.0
  %6147 = vmatpush1.msra.mxu0 0.0
  %6148 = vmatprep.subr.mxu0 0.0
  %6149 = vmatpush1.msra.mxu0 0.0
  %6150 = vmatprep.subr.mxu0 0.0
  %6151 = vmatpush1.msra.mxu0 0.0
  %6152 = vmatprep.subr.mxu0 0.0
  %6153 = vmatpush1.msra.mxu0 0.0
  %6154 = vmatprep.subr.mxu0 0.0
  %6155 = vmatpush1.msra.mxu0 0.0
  %6156 = vmatprep.subr.mxu0 0.0
  %6157 = vmatpush1.msra.mxu0 0.0
  %6158 = vmatprep.subr.mxu0 0.0
  %6159 = vmatpush1.msra.mxu0 0.0
  %6160 = vmatprep.subr.mxu0 0.0
  %6161 = vmatpush1.msra.mxu0 0.0
  %6162 = vmatprep.subr.mxu0 0.0
  %6163 = vmatpush1.msra.mxu0 0.0
  %6164 = vmatprep.subr.mxu0 0.0
  %6165 = vmatpush1.msra.mxu0 0.0
  %6166 = vmatprep.subr.mxu0 0.0
  %6167 = vmatpush1.msra.mxu0 0.0
  %6168 = vmatprep.subr.mxu0 0.0
  %6169 = vmatpush1.msra.mxu0 0.0
  %6170 = vmatprep.subr.mxu0 0.0
  %6171 = vmatpush1.msra.mxu0 0.0
  %6172 = vmatprep.subr.mxu0 0.0
  %6173 = vmatpush1.msra.mxu0 0.0
  %6174 = vmatprep.subr.mxu0 0.0
  %6175 = vmatpush1.msra.mxu0 0.0
  %6176 = vmatprep.subr.mxu0 0.0
  %6177 = vmatpush1.msra.mxu0 0.0
  %6178 = vmatprep.mubr.f32.mxu0 0.0
  %6179 = vmatmul.mubr.f32.gmra.mrb[0].mxu0 %v6040
  %v6180 = vpop.f32.mrb[0].mxu0
  %v6181 = vadd.f32 0.0, %v6180
  %v6182 = vpop.f32.mrb[0].mxu0
  %6183 = vdwg.mxu0
  %v6184 = vadd.f32 %v6113, %v6181
  %v6185 = vmul.f32 %v6184, 0.5
  %v6186 = vtanh.pop %v6185
  %v6187 = vmul.f32 %v6186, 0.5
  %v6188 = vadd.f32 %v6187, 0.5
  %s6189 = scalar_lea.vmem %s1, 184
  %v6190 = vld [vmem:[%s6189] sm:$0xff]
  %v6191 = vadd.f32 %v6190, %v6109
  %v6193 = vsel %vm39, %v6188, 0
  %6195 = vmatprep.subr.mxu0 0.0
  %6196 = vmatpush1.msra.mxu0 %v26
  %6197 = vmatprep.subr.mxu0 0.0
  %6198 = vmatpush1.msra.mxu0 %v27
  %6199 = vmatprep.subr.mxu0 0.0
  %6200 = vmatpush1.msra.mxu0 %v28
  %6201 = vmatprep.subr.mxu0 0.0
  %6202 = vmatpush1.msra.mxu0 %v29
  %6203 = vmatprep.subr.mxu0 0.0
  %6204 = vmatpush1.msra.mxu0 0.0
  %6205 = vmatprep.subr.mxu0 0.0
  %6206 = vmatpush1.msra.mxu0 0.0
  %6207 = vmatprep.subr.mxu0 0.0
  %6208 = vmatpush1.msra.mxu0 0.0
  %6209 = vmatprep.subr.mxu0 0.0
  %6210 = vmatpush1.msra.mxu0 0.0
  %6211 = vmatprep.subr.mxu0 0.0
  %6212 = vmatpush1.msra.mxu0 0.0
  %6213 = vmatprep.subr.mxu0 0.0
  %6214 = vmatpush1.msra.mxu0 0.0
  %6215 = vmatprep.subr.mxu0 0.0
  %6216 = vmatpush1.msra.mxu0 0.0
  %6217 = vmatprep.subr.mxu0 0.0
  %6218 = vmatpush1.msra.mxu0 0.0
  %6219 = vmatprep.subr.mxu0 0.0
  %6220 = vmatpush1.msra.mxu0 0.0
  %6221 = vmatprep.subr.mxu0 0.0
  %6222 = vmatpush1.msra.mxu0 0.0
  %6223 = vmatprep.subr.mxu0 0.0
  %6224 = vmatpush1.msra.mxu0 0.0
  %6225 = vmatprep.subr.mxu0 0.0
  %6226 = vmatpush1.msra.mxu0 0.0
  %6227 = vmatprep.subr.mxu0 0.0
  %6228 = vmatpush1.msra.mxu0 0.0
  %6229 = vmatprep.subr.mxu0 0.0
  %6230 = vmatpush1.msra.mxu0 0.0
  %6231 = vmatprep.subr.mxu0 0.0
  %6232 = vmatpush1.msra.mxu0 0.0
  %6233 = vmatprep.subr.mxu0 0.0
  %6234 = vmatpush1.msra.mxu0 0.0
  %6235 = vmatprep.subr.mxu0 0.0
  %6236 = vmatpush1.msra.mxu0 0.0
  %6237 = vmatprep.subr.mxu0 0.0
  %6238 = vmatpush1.msra.mxu0 0.0
  %6239 = vmatprep.subr.mxu0 0.0
  %6240 = vmatpush1.msra.mxu0 0.0
  %6241 = vmatprep.subr.mxu0 0.0
  %6242 = vmatpush1.msra.mxu0 0.0
  %6243 = vmatprep.subr.mxu0 0.0
  %6244 = vmatpush1.msra.mxu0 0.0
  %6245 = vmatprep.subr.mxu0 0.0
  %6246 = vmatpush1.msra.mxu0 0.0
  %6247 = vmatprep.subr.mxu0 0.0
  %6248 = vmatpush1.msra.mxu0 0.0
  %6249 = vmatprep.subr.mxu0 0.0
  %6250 = vmatpush1.msra.mxu0 0.0
  %6251 = vmatprep.subr.mxu0 0.0
  %6252 = vmatpush1.msra.mxu0 0.0
  %6253 = vmatprep.subr.mxu0 0.0
  %6254 = vmatpush1.msra.mxu0 0.0
  %6255 = vmatprep.subr.mxu0 0.0
  %6256 = vmatpush1.msra.mxu0 0.0
  %6257 = vmatprep.subr.mxu0 0.0
  %6258 = vmatpush1.msra.mxu0 0.0
  %6259 = vmatprep.mubr.f32.mxu0 0.0
  %6260 = vmatmul.mubr.f32.gmra.mrb[0].mxu0 %v6193
  %v6261 = vpop.f32.mrb[0].mxu0
  %v6262 = vadd.f32 0.0, %v6261
  %v6263 = vpop.f32.mrb[0].mxu0
  %6264 = vdwg.mxu0
  %v6265 = vadd.f32 %v6191, %v6262
  %v6266 = vmul.f32 %v6265, 0.5
  %v6267 = vsel %vm38, %v6265, %v6266
  %v6268 = vtanh.pop %v6267
  %v6269 = vmul.f32 %v6268, 0.5
  %v6270 = vadd.f32 %v6269, 0.5
  %v6271 = vsel %vm38, %v6268, %v6270
  %v6272 = vmul.f32 %v6271, %v6021
  %6274 = vrot.lane.b32.xlu0 %v6271, 96
  %v6275 = vpop.permute.xlu0 %6274
  %v6277 = vmul.f32 %v6271, %v6275
  %6279 = vrot.lane.b32.xlu0 %v6277, 64
  %v6280 = vpop.permute.xlu0 %6279
  %v6282 = vadd.f32 %v6272, %v6280
  %v6283 = vtanh.pop %v6282
  %6285 = vrot.lane.b32.xlu0 %v6283, 32
  %v6286 = vpop.permute.xlu0 %6285
  %v6288 = vmul.f32 %v6271, %v6286
  %6290 = vrot.lane.b32.xlu0 %v6288, 32
  %v6291 = vpop.permute.xlu0 %6290
  %s6293 = scalar_lea.vmem %s5, 184
  %6294 = vst.msk [vmem:[%s6293] sm:$0xff] %vm39, %v6291
  %6296 = vrot.lane.b32.xlu0 %v6282, 64
  %v6297 = vpop.permute.xlu0 %6296
  %s6299 = scalar_lea.vmem %s6, 184
  %6300 = vst.msk [vmem:[%s6299] sm:$0xff] %vm39, %v6297
  // Predicated region
  $region22: #{pew_lstm_forward.1} parent=0 // pred_check
    _
  $region23: #{pew_lstm_forward.1} parent=0 // pred_check_branch
    %6302 = sbr.rel (0) target = $region25
  $region24: #{pew_lstm_forward.1} parent=0 // pred_region
    _
  $region25: #{pew_lstm_forward.1} parent=0 // pred_fallthru
    _
  // Predicated region
  $region26: #{pew_lstm_forward.1} parent=0 // pred_check
    _
  $region27: #{pew_lstm_forward.1} parent=0 // pred_check_branch
    %6304 = sbr.rel (0) target = $region29
  $region28: #{pew_lstm_forward.1} parent=0 // pred_region
    _
  $region29: #{pew_lstm_forward.1} parent=0 // pred_fallthru
    _
  // Predicated region
  $region30: #{pew_lstm_forward.1} parent=0 // pred_check
    _
  $region31: #{pew_lstm_forward.1} parent=0 // pred_check_branch
    %6306 = sbr.rel (0) target = $region33
  $region32: #{pew_lstm_forward.1} parent=0 // pred_region
    _
  $region33: #{pew_lstm_forward.1} parent=0 // pred_fallthru
    _
  // Predicated region
  $region34: #{pew_lstm_forward.1} parent=0 // pred_check
    _
  $region35: #{pew_lstm_forward.1} parent=0 // pred_check_branch
    %6308 = sbr.rel (0) target = $region37
  $region36: #{pew_lstm_forward.1} parent=0 // pred_region
    _
  $region37: #{pew_lstm_forward.1} parent=0 // pred_fallthru
    _

</llo_original>
